<compile_context>
chip_gen: v7x
topology: tpu7x:2x2x1
jax: 0.10.0
libtpu: 0.0.40
codegen_flags: <defaults>
</compile_context>

<pallas_src>
import math
import functools
import numpy as np
import jax
import jax.numpy as jnp
from jax.experimental import pallas as pl
from jax.experimental.pallas import tpu as pltpu


@functools.lru_cache(maxsize=None)
def _vmem_limit_bytes():
    """Generation-aware scoped-VMEM budget (leaves headroom for Mosaic internal scratch)."""
    phys = None
    if hasattr(pltpu, "get_tpu_info"):
        try:
            phys = int(getattr(pltpu.get_tpu_info(), "vmem_capacity_bytes", 0)) or None
        except Exception:
            phys = None
    if phys is None:
        try:
            kind = jax.devices()[0].device_kind.lower()
        except Exception:
            kind = ""
        phys = 64 * 1024 * 1024 if "v7" in kind else 128 * 1024 * 1024
    # ~80% of physical, capped at 100 MiB: ~51 MiB on v7x, 100 MiB on v5e/v6e.
    return min(int(phys * 0.8), 100 * 1024 * 1024)


def _round_up(x, m):
    return ((x + m - 1) // m) * m


# ----------------------------------------------------------------------------
# Positional-embedding helpers (numpy ports of the PyTorch reference)
# ----------------------------------------------------------------------------
def get_1d_sincos_pos_embed_from_grid(embed_dim, pos):
    assert embed_dim % 2 == 0
    omega = np.arange(embed_dim // 2, dtype=np.float64)
    omega /= embed_dim / 2.0
    omega = 1.0 / 10000 ** omega
    pos = pos.reshape(-1)
    out = np.einsum('m,d->md', pos, omega)
    return np.concatenate([np.sin(out), np.cos(out)], axis=1)


def get_2d_sincos_pos_embed_from_grid(embed_dim, grid):
    assert embed_dim % 2 == 0
    emb_h = get_1d_sincos_pos_embed_from_grid(embed_dim // 2, grid[0])
    emb_w = get_1d_sincos_pos_embed_from_grid(embed_dim // 2, grid[1])
    return np.concatenate([emb_h, emb_w], axis=1)


def get_2d_sincos_pos_embed(embed_dim, grid_size):
    grid_h = np.arange(grid_size, dtype=np.float32)
    grid_w = np.arange(grid_size, dtype=np.float32)
    grid = np.meshgrid(grid_w, grid_h)
    grid = np.stack(grid, axis=0)
    grid = grid.reshape([2, 1, grid_size, grid_size])
    return get_2d_sincos_pos_embed_from_grid(embed_dim, grid)


def positionalencoding1d(d_model, length):
    if d_model % 2 != 0:
        raise ValueError("odd dim")
    pe = np.zeros((length, d_model), dtype=np.float32)
    position = np.arange(0, length)[:, None].astype(np.float32)
    div_term = np.exp(np.arange(0, d_model, 2, dtype=np.float32) *
                      -(math.log(10000.0) / d_model))
    pe[:, 0::2] = np.sin(position * div_term)
    pe[:, 1::2] = np.cos(position * div_term)
    return pe


# ----------------------------------------------------------------------------
# Pallas kernels
# ----------------------------------------------------------------------------
def _layernorm(v, eps=1e-6):
    mu = jnp.mean(v, axis=-1, keepdims=True)
    var = jnp.mean((v - mu) ** 2, axis=-1, keepdims=True)
    return (v - mu) * jax.lax.rsqrt(var + eps)


def linear_kernel(x_ref, w_ref, b_ref, o_ref):
    # o = x @ w + b   (bf16 MXU matmul, f32 accumulate)
    o_ref[...] = (jnp.dot(x_ref[...].astype(jnp.bfloat16), w_ref[...],
                          preferred_element_type=jnp.float32) + b_ref[...])


def linear_pallas(x2d, w, b, *, tm=256):
    M, K = x2d.shape
    Nout = w.shape[1]
    tm = min(tm, _round_up(M, 8))
    return pl.pallas_call(
        linear_kernel,
        out_shape=jax.ShapeDtypeStruct((M, Nout), jnp.float32),
        grid=(pl.cdiv(M, tm),),
        in_specs=[pl.BlockSpec((tm, K), lambda i: (i, 0)),
                  pl.BlockSpec((K, Nout), lambda i: (0, 0)),
                  pl.BlockSpec((1, Nout), lambda i: (0, 0))],
        out_specs=pl.BlockSpec((tm, Nout), lambda i: (i, 0)),
        compiler_params=pltpu.CompilerParams(
            dimension_semantics=("parallel",),
            vmem_limit_bytes=_vmem_limit_bytes()),
    )(x2d, w, b)


def adaln_kernel(tf_ref, mz_ref, wt1_ref, bt1_ref, wt2_ref, bt2_ref,
                 w_ref, b_ref, o_ref, c_sc):
    # Grid step 0: c = SiLU-MLP(t_freq) + mean(z), kept resident in VMEM scratch.
    @pl.when(pl.program_id(0) == 0)
    def _():
        h = jnp.dot(tf_ref[...].astype(jnp.bfloat16), wt1_ref[...],
                    preferred_element_type=jnp.float32) + bt1_ref[...]
        h = h * jax.nn.sigmoid(h)
        t_emb = jnp.dot(h.astype(jnp.bfloat16), wt2_ref[...],
                        preferred_element_type=jnp.float32) + bt2_ref[...]
        c_sc[...] = t_emb + mz_ref[...]

    # Every step: SiLU(c) @ W_ada[d] + b_ada[d]  ->  (N, 6D) modulation for layer d.
    c = c_sc[...]
    ca = (c * jax.nn.sigmoid(c)).astype(jnp.bfloat16)
    o_ref[0] = jnp.dot(ca, w_ref[0],
                       preferred_element_type=jnp.float32) + b_ref[0]


def run_adaln_fused(t_freq, mean_z, P, w_ada_all, b_ada_all):
    n_layers, D, O = w_ada_all.shape
    N, F = t_freq.shape
    return pl.pallas_call(
        adaln_kernel,
        out_shape=jax.ShapeDtypeStruct((n_layers, N, O), jnp.float32),
        grid=(n_layers,),
        in_specs=[pl.BlockSpec((N, F), lambda d: (0, 0)),
                  pl.BlockSpec((N, D), lambda d: (0, 0)),
                  pl.BlockSpec((F, D), lambda d: (0, 0)),
                  pl.BlockSpec((1, D), lambda d: (0, 0)),
                  pl.BlockSpec((D, D), lambda d: (0, 0)),
                  pl.BlockSpec((1, D), lambda d: (0, 0)),
                  pl.BlockSpec((1, D, O), lambda d: (d, 0, 0)),
                  pl.BlockSpec((1, 1, O), lambda d: (d, 0, 0))],
        out_specs=pl.BlockSpec((1, N, O), lambda d: (d, 0, 0)),
        scratch_shapes=[pltpu.VMEM((N, D), jnp.float32)],
        compiler_params=pltpu.CompilerParams(
            dimension_semantics=("arbitrary",),
            vmem_limit_bytes=_vmem_limit_bytes()),
    )(t_freq, mean_z, P['w_t1'], P['b_t1'], P['w_t2'], P['b_t2'],
      w_ada_all, b_ada_all)


def sit_blocks_kernel(x_ref, ada_ref,
                      w_qkv_ref, b_qkv_ref, w_proj_ref, b_proj_ref,
                      w_fc1_ref, b_fc1_ref, w_fc2_ref, b_fc2_ref,
                      o_ref, x_acc, *, num_heads):
    # grid = (batch_tiles, depth); x_acc keeps the (bt, S, D) residual stream resident
    # in VMEM across the depth sweep; weights are streamed once per batch tile.
    d = pl.program_id(1)

    @pl.when(d == 0)
    def _():
        x_acc[...] = x_ref[...]

    x = x_acc[...]                                     # (bt, S, D) f32
    bt, S, D = x.shape
    hd = D // num_heads
    M = bt * S

    ada = ada_ref[0]                                   # (bt, 6, D) f32, precomputed adaLN
    shift_msa, scale_msa, gate_msa = ada[:, 0:1, :], ada[:, 1:2, :], ada[:, 2:3, :]
    shift_mlp, scale_mlp, gate_mlp = ada[:, 3:4, :], ada[:, 4:5, :], ada[:, 5:6, :]

    # --- attention branch (fused qkv GEMM over the whole batch tile) ---
    xm = _layernorm(x) * (1.0 + scale_msa) + shift_msa            # (bt, S, D) f32
    xm2d = xm.reshape(M, D).astype(jnp.bfloat16)
    qkv = jnp.dot(xm2d, w_qkv_ref[0],
                  preferred_element_type=jnp.float32) + b_qkv_ref[0]   # (M, 3D) f32
    q = qkv[:, :D] * (hd ** -0.5)                       # 128-aligned lane slices
    k = qkv[:, D:2 * D]
    v = qkv[:, 2 * D:]

    # Per-sample batched-head attention (static unroll over the small batch tile).
    ctx_rows = []
    for b in range(bt):
        qb = q[b * S:(b + 1) * S, :]
        kb = k[b * S:(b + 1) * S, :]
        vb = v[b * S:(b + 1) * S, :]
        qh = jnp.transpose(qb.reshape(S, num_heads, hd), (1, 0, 2)).astype(jnp.bfloat16)
        kh = jnp.transpose(kb.reshape(S, num_heads, hd), (1, 0, 2)).astype(jnp.bfloat16)
        vh = jnp.transpose(vb.reshape(S, num_heads, hd), (1, 0, 2)).astype(jnp.bfloat16)
        s = jnp.einsum('hqe,hke->hqk', qh, kh,
                       preferred_element_type=jnp.float32)        # (H, S, S) f32
        m = jnp.max(s, axis=-1, keepdims=True)
        e = jnp.exp(s - m)
        l = jnp.sum(e, axis=-1, keepdims=True)
        p_attn = (e * pl.reciprocal(l, approx=True)).astype(jnp.bfloat16)
        cb = jnp.einsum('hqk,hke->hqe', p_attn, vh,
                        preferred_element_type=jnp.float32)       # (H, S, hd) f32
        ctx_rows.append(jnp.transpose(cb, (1, 0, 2)).reshape(S, D))
    ctx = jnp.concatenate(ctx_rows, axis=0).astype(jnp.bfloat16)  # (M, D)

    attn_out = jnp.dot(ctx, w_proj_ref[0],
                       preferred_element_type=jnp.float32) + b_proj_ref[0]
    x = x + gate_msa * attn_out.reshape(bt, S, D)

    # --- MLP branch (GELU tanh approx) ---
    xm2 = _layernorm(x) * (1.0 + scale_mlp) + shift_mlp
    xm2d = xm2.reshape(M, D).astype(jnp.bfloat16)
    h1 = jnp.dot(xm2d, w_fc1_ref[0],
                 preferred_element_type=jnp.float32) + b_fc1_ref[0]
    h1 = jax.nn.gelu(h1, approximate=True).astype(jnp.bfloat16)
    h2 = jnp.dot(h1, w_fc2_ref[0],
                 preferred_element_type=jnp.float32) + b_fc2_ref[0]
    x = x + gate_mlp * h2.reshape(bt, S, D)

    x_acc[...] = x

    @pl.when(d == pl.num_programs(1) - 1)
    def _():
        o_ref[...] = x_acc[...]


def run_sit_blocks(x, ada_all, P, num_heads):
    N, S, D = x.shape
    depth = P['w_qkv'].shape[0]
    MH = P['w_fc1'].shape[2]

    # Batch tile (divisor of N, <=4): amortizes the per-layer weight DMA over bt samples.
    bt = min(N, 4)
    while N % bt:
        bt -= 1
    n_tiles = pl.cdiv(N, bt)

    weights = [P['w_qkv'], P['b_qkv'], P['w_proj'], P['b_proj'],
               P['w_fc1'], P['b_fc1'], P['w_fc2'], P['b_fc2']]
    w_specs = [pl.BlockSpec((1,) + w.shape[1:], lambda b, d: (d, 0, 0))
               for w in weights]

    # Cost estimate reflecting actual streaming under the (batch_tile, depth) grid.
    w_bytes = depth * ((3 * D * D + D * D + 2 * D * MH) * 2       # bf16 weights
                       + (3 * D + 2 * D + MH) * 4)                # f32 biases
    bytes_acc = (n_tiles * w_bytes                                # weights once per tile
                 + 2 * N * S * D * 4                              # x in + out
                 + depth * N * 6 * D * 4)                         # adaLN params
    flops = N * depth * (2 * S * D * (4 * D + 2 * MH) + 4 * S * S * D)
    transc = N * depth * (num_heads * S * S + S * MH)

    return pl.pallas_call(
        functools.partial(sit_blocks_kernel, num_heads=num_heads),
        out_shape=jax.ShapeDtypeStruct((N, S, D), jnp.float32),
        grid=(n_tiles, depth),
        in_specs=[pl.BlockSpec((bt, S, D), lambda b, d: (b, 0, 0)),
                  pl.BlockSpec((1, bt, 6, D), lambda b, d: (d, b, 0, 0))]
                 + w_specs,
        out_specs=pl.BlockSpec((bt, S, D), lambda b, d: (b, 0, 0)),
        scratch_shapes=[pltpu.VMEM((bt, S, D), jnp.float32)],
        compiler_params=pltpu.CompilerParams(
            dimension_semantics=("parallel", "arbitrary"),
            vmem_limit_bytes=_vmem_limit_bytes()),
        cost_estimate=pl.CostEstimate(flops=flops, transcendentals=transc,
                                      bytes_accessed=bytes_acc),
    )(x, ada_all, *weights)


def final_layer_kernel(x_ref, ada_ref, w_lin_ref, b_lin_ref, o_ref):
    x = x_ref[0]                                       # (T, D) f32
    ada = ada_ref[0]                                   # (2, D) f32 : [shift, scale]
    shift = ada[0:1, :]
    scale = ada[1:2, :]
    xm = (_layernorm(x) * (1.0 + scale) + shift).astype(jnp.bfloat16)
    o_ref[0] = (jnp.dot(xm, w_lin_ref[...],
                        preferred_element_type=jnp.float32) + b_lin_ref[...])


def run_final_layer(x, ada_fin, w_lin, b_lin):
    N, T, D = x.shape
    out_dim = w_lin.shape[1]
    out_pad = _round_up(out_dim, 128)                  # lane-dense stores
    if out_pad != out_dim:
        w_lin = jnp.pad(w_lin, ((0, 0), (0, out_pad - out_dim)))
        b_lin = jnp.pad(b_lin, ((0, 0), (0, out_pad - out_dim)))
    out = pl.pallas_call(
        final_layer_kernel,
        out_shape=jax.ShapeDtypeStruct((N, T, out_pad), jnp.float32),
        grid=(N,),
        in_specs=[pl.BlockSpec((1, T, D), lambda b: (b, 0, 0)),
                  pl.BlockSpec((1, 2, D), lambda b: (b, 0, 0)),
                  pl.BlockSpec((D, out_pad), lambda b: (0, 0)),
                  pl.BlockSpec((1, out_pad), lambda b: (0, 0))],
        out_specs=pl.BlockSpec((1, T, out_pad), lambda b: (b, 0, 0)),
        compiler_params=pltpu.CompilerParams(
            dimension_semantics=("parallel",),
            vmem_limit_bytes=_vmem_limit_bytes()),
    )(x, ada_fin, w_lin, b_lin)
    return out[:, :, :out_dim]


# ----------------------------------------------------------------------------
# JAX glue: patch extraction / unpatchify / forward
# ----------------------------------------------------------------------------
def extract_patches(x, p):
    # x: (N, C, H, W) -> (N, T, C*p*p); same flattening order as Conv2d(kernel=p, stride=p).
    N, C, H, W = x.shape
    h, w = H // p, W // p
    x = x.reshape(N, C, h, p, w, p)
    x = x.transpose(0, 2, 4, 1, 3, 5)                  # (N, h, w, C, p, p)
    return x.reshape(N, h * w, C * p * p)


def unpatchify(x, p, c):
    # x: (N, T, p*p*c) -> (N, c, H, W)
    N, T, _ = x.shape
    h = w = int(round(T ** 0.5))
    x = x.reshape(N, h, w, p, p, c)
    x = x.transpose(0, 5, 1, 3, 2, 4)                  # nhwpqc -> nchpwq
    return x.reshape(N, c, h * p, w * p)


def sit_forward(x_img, t, y, P, cfg):
    N = x_img.shape[0]
    p = cfg['patch_size']
    D = cfg['hidden']
    Cin = cfg['in_channels']
    Tn = cfg['num_patches']
    L = cfg['num_latent_tokens']
    depth = cfg['depth']

    # --- patch embed (Conv2d stride=p == patch flatten + linear) ---
    patches = extract_patches(x_img, p)                            # (N, T, C*p*p)
    xe = linear_pallas(patches.reshape(N * Tn, -1), P['w_patch'], P['b_patch'])
    xe = xe.reshape(N, Tn, D) + P['x_pos_embed']

    # --- timestep frequency embedding (plain JAX, tiny) ---
    half = cfg['freq_dim'] // 2
    freqs = jnp.exp(-math.log(10000.0) *
                    jnp.arange(half, dtype=jnp.float32) / half)
    args = t[:, None].astype(jnp.float32) * freqs[None]
    t_freq = jnp.concatenate([jnp.cos(args), jnp.sin(args)], axis=-1)

    # --- latent token embedding ---
    z = linear_pallas(y.reshape(N * L, -1), P['w_y'], P['b_y']).reshape(N, L, D)
    z = z + P['y_pos_embed']

    # --- concat + learned pos embed ---
    xcat = jnp.concatenate([xe, z], axis=1) + P['pos_embed']       # (N, T+L, D)
    mean_z = jnp.mean(z, axis=1)                                   # (N, D)

    # --- fused: t-embedder MLP + c + adaLN modulation for every block AND the final layer ---
    w_ada_all = jnp.concatenate(
        [P['w_ada'], jnp.pad(P['w_final_ada'], ((0, 0), (0, 0), (0, 4 * D)))], axis=0)
    b_ada_all = jnp.concatenate(
        [P['b_ada'], jnp.pad(P['b_final_ada'], ((0, 0), (0, 0), (0, 4 * D)))], axis=0)
    ada_out = run_adaln_fused(t_freq, mean_z, P, w_ada_all, b_ada_all)  # (depth+1, N, 6D)
    ada_blocks = ada_out[:depth].reshape(depth, N, 6, D)
    ada_fin = ada_out[depth, :, :2 * D].reshape(N, 2, D)

    # --- all transformer blocks fused into a single (batch_tile, depth) grid ---
    xcat = run_sit_blocks(xcat, ada_blocks, P, cfg['num_heads'])

    # --- final layer adaLN + linear + unpatchify ---
    out_tok = run_final_layer(xcat[:, :Tn], ada_fin,
                              P['w_final_lin'], P['b_final_lin'])  # (N, T, p*p*C)
    return unpatchify(out_tok, p, Cin)


# ----------------------------------------------------------------------------
# Deterministic synthetic parameter init (weights bf16, biases f32)
# ----------------------------------------------------------------------------
def init_params(key, cfg):
    D = cfg['hidden']
    p = cfg['patch_size']
    Cin = cfg['in_channels']
    MH = int(D * cfg['mlp_ratio'])
    Tn = cfg['num_patches']
    L = cfg['num_latent_tokens']
    depth = cfg['depth']

    def lin(k, fin, fout, std=0.02):
        kw, kb = jax.random.split(k)
        w = (jax.random.normal(kw, (fin, fout), jnp.float32) * std).astype(jnp.bfloat16)
        b = jax.random.normal(kb, (1, fout), jnp.float32) * 0.01
        return w, b

    keys = iter(jax.random.split(key, 7 * depth + 16))
    P = {}
    P['w_patch'], P['b_patch'] = lin(next(keys), Cin * p * p, D)
    P['w_t1'], P['b_t1'] = lin(next(keys), cfg['freq_dim'], D)
    P['w_t2'], P['b_t2'] = lin(next(keys), D, D)
    P['w_y'], P['b_y'] = lin(next(keys), cfg['latent_channels'], D)

    P['x_pos_embed'] = jnp.asarray(
        get_2d_sincos_pos_embed(D, int(Tn ** 0.5)), jnp.float32)[None]   # (1, T, D)
    P['y_pos_embed'] = jnp.asarray(
        positionalencoding1d(D, L), jnp.float32)[None]                   # (1, L, D)
    P['pos_embed'] = jax.random.normal(next(keys), (1, Tn + L, D),
                                       jnp.float32) * 0.02

    def stacked(fin, fout):
        ws, bs = [], []
        for _ in range(depth):
            w, b = lin(next(keys), fin, fout)
            ws.append(w)
            bs.append(b)
        return jnp.stack(ws), jnp.stack(bs)        # (depth, fin, fout), (depth, 1, fout)

    P['w_ada'], P['b_ada'] = stacked(D, 6 * D)
    P['w_qkv'], P['b_qkv'] = stacked(D, 3 * D)     # fused q/k/v (PyTorch qkv Linear layout)
    P['w_proj'], P['b_proj'] = stacked(D, D)
    P['w_fc1'], P['b_fc1'] = stacked(D, MH)
    P['w_fc2'], P['b_fc2'] = stacked(MH, D)

    # NOTE: decoder_hidden_size is taken == hidden_size (the PyTorch defaults would
    # otherwise be shape-inconsistent inside FinalLayer).
    wf, bf = lin(next(keys), D, 2 * D)
    P['w_final_ada'], P['b_final_ada'] = wf[None], bf[None]              # (1, D, 2D)
    P['w_final_lin'], P['b_final_lin'] = lin(next(keys), D, p * p * Cin)
    return P


# ----------------------------------------------------------------------------
if __name__ == "__main__":
    cfg = dict(
        image_size=16,
        patch_size=4,
        in_channels=4,
        hidden=128,           # lane-dense hidden dim (multiple of 128)
        num_heads=4,
        mlp_ratio=4.0,
        latent_channels=8,
        num_latent_tokens=8,
        depth=2,
        freq_dim=256,         # matches TimestepEmbedder default
    )
    cfg['num_patches'] = (cfg['image_size'] // cfg['patch_size']) ** 2

    root = jax.random.PRNGKey(0)
    kparams, kx, kt, ky = jax.random.split(root, 4)

    params = init_params(kparams, cfg)

    x = jax.random.normal(kx, (2, cfg['in_channels'],
                               cfg['image_size'], cfg['image_size']), jnp.float32)
    t = jax.random.uniform(kt, (2,), jnp.float32) * 1000.0
    y = jax.random.normal(ky, (2, cfg['num_latent_tokens'],
                               cfg['latent_channels']), jnp.float32)

    fwd = jax.jit(lambda xi, ti, yi, Pp: sit_forward(xi, ti, yi, Pp, cfg))
    out = fwd(x, t, y, params)
    out = jax.block_until_ready(out)
    assert out.shape == (2, cfg['in_channels'], cfg['image_size'], cfg['image_size'])
    assert bool(jnp.all(jnp.isfinite(out)))
    print("KERNEL_OK")
</pallas_src>

<mosaic_0001>
module attributes {stable_mosaic.version = 11 : i64} {
  func.func @linear_kernel(%arg0: i32, %arg1: memref<16x8xf32, #tpu.memory_space<vmem>>, %arg2: memref<8x128xbf16, #tpu.memory_space<vmem>>, %arg3: memref<1x128xf32, #tpu.memory_space<vmem>>, %arg4: memref<16x128xf32, #tpu.memory_space<vmem>>) attributes {dimension_semantics = [#tpu.dimension_semantics<parallel>], iteration_bounds = array<i64: 1>, scalar_prefetch = 0 : i64, scratch_operands = 0 : i64, tpu.core_type = #tpu.core_type<tc>, window_params = [{transform_indices = @transform_0, window_bounds = array<i64: 16, 8>}, {pipeline_mode = #tpu.pipeline_mode<synchronous>, transform_indices = @transform_1, window_bounds = array<i64: 8, 128>}, {pipeline_mode = #tpu.pipeline_mode<synchronous>, transform_indices = @transform_2, window_bounds = array<i64: 1, 128>}, {transform_indices = @transform_3, window_bounds = array<i64: 16, 128>}]} {
    %c0 = arith.constant 0 : index
    %c0_0 = arith.constant 0 : index
    %0 = vector.load %arg1[%c0, %c0_0] : memref<16x8xf32, #tpu.memory_space<vmem>>, vector<16x8xf32>
    %1 = arith.truncf %0 : vector<16x8xf32> to vector<16x8xbf16>
    %c0_1 = arith.constant 0 : index
    %c0_2 = arith.constant 0 : index
    %2 = vector.load %arg2[%c0_1, %c0_2] : memref<8x128xbf16, #tpu.memory_space<vmem>>, vector<8x128xbf16>
    %cst = arith.constant dense<0.000000e+00> : vector<16x128xf32>
    %3 = tpu.matmul %1, %2, %cst {dimension_numbers = #tpu.dot_dimension_numbers<[1], [0], [0], [1], [0, 0, 1, 1], [], []>} : vector<16x8xbf16>, vector<8x128xbf16>, vector<16x128xf32> -> vector<16x128xf32>
    %c0_3 = arith.constant 0 : index
    %c0_4 = arith.constant 0 : index
    %4 = vector.load %arg3[%c0_3, %c0_4] : memref<1x128xf32, #tpu.memory_space<vmem>>, vector<1x128xf32>
    %5 = vector.broadcast %4 : vector<1x128xf32> to vector<16x128xf32>
    %6 = arith.addf %3, %5 : vector<16x128xf32>
    %c0_5 = arith.constant 0 : index
    %c0_6 = arith.constant 0 : index
    %7 = vector.load %arg4[%c0_5, %c0_6] : memref<16x128xf32, #tpu.memory_space<vmem>>, vector<16x128xf32>
    tpu.vector_store %arg4[%c0_5, %c0_6], %6 {strides = array<i32>} : memref<16x128xf32, #tpu.memory_space<vmem>>, vector<16x128xf32>,
    return
  }
  func.func @transform_0(%arg0: i32) -> (i32, i32) {
    %c0_i32 = arith.constant 0 : i32
    %c0_i32_0 = arith.constant 0 : i32
    return %arg0, %c0_i32 : i32, i32
  }
  func.func @transform_1(%arg0: i32) -> (i32, i32) {
    %c0_i32 = arith.constant 0 : i32
    %c0_i32_0 = arith.constant 0 : i32
    %c0_i32_1 = arith.constant 0 : i32
    return %c0_i32, %c0_i32_0 : i32, i32
  }
  func.func @transform_2(%arg0: i32) -> (i32, i32) {
    %c0_i32 = arith.constant 0 : i32
    %c0_i32_0 = arith.constant 0 : i32
    %c0_i32_1 = arith.constant 0 : i32
    return %c0_i32, %c0_i32_0 : i32, i32
  }
  func.func @transform_3(%arg0: i32) -> (i32, i32) {
    %c0_i32 = arith.constant 0 : i32
    %c0_i32_0 = arith.constant 0 : i32
    return %arg0, %c0_i32 : i32, i32
  }
}

module attributes {stable_mosaic.version = 11 : i64} {
  func.func @adaln_kernel(%arg0: i32, %arg1: memref<2x256xf32, #tpu.memory_space<vmem>>, %arg2: memref<2x128xf32, #tpu.memory_space<vmem>>, %arg3: memref<256x128xbf16, #tpu.memory_space<vmem>>, %arg4: memref<1x128xf32, #tpu.memory_space<vmem>>, %arg5: memref<128x128xbf16, #tpu.memory_space<vmem>>, %arg6: memref<1x128xf32, #tpu.memory_space<vmem>>, %arg7: memref<1x128x768xbf16, #tpu.memory_space<vmem>>, %arg8: memref<1x1x768xf32, #tpu.memory_space<vmem>>, %arg9: memref<1x2x768xf32, #tpu.memory_space<vmem>>, %arg10: memref<2x128xf32, #tpu.memory_space<vmem>>) attributes {dimension_semantics = [#tpu.dimension_semantics<arbitrary>], iteration_bounds = array<i64: 3>, scalar_prefetch = 0 : i64, scratch_operands = 1 : i64, tpu.core_type = #tpu.core_type<tc>, window_params = [{pipeline_mode = #tpu.pipeline_mode<synchronous>, transform_indices = @transform_0, window_bounds = array<i64: 2, 256>}, {pipeline_mode = #tpu.pipeline_mode<synchronous>, transform_indices = @transform_1, window_bounds = array<i64: 2, 128>}, {pipeline_mode = #tpu.pipeline_mode<synchronous>, transform_indices = @transform_2, window_bounds = array<i64: 256, 128>}, {pipeline_mode = #tpu.pipeline_mode<synchronous>, transform_indices = @transform_3, window_bounds = array<i64: 1, 128>}, {pipeline_mode = #tpu.pipeline_mode<synchronous>, transform_indices = @transform_4, window_bounds = array<i64: 128, 128>}, {pipeline_mode = #tpu.pipeline_mode<synchronous>, transform_indices = @transform_5, window_bounds = array<i64: 1, 128>}, {transform_indices = @transform_6, window_bounds = array<i64: 1, 128, 768>}, {transform_indices = @transform_7, window_bounds = array<i64: 1, 1, 768>}, {transform_indices = @transform_8, window_bounds = array<i64: 1, 2, 768>}]} {
    %c0_i32 = arith.constant 0 : i32
    %0 = arith.cmpi eq, %arg0, %c0_i32 : i32
    %1 = arith.extui %0 : i1 to i32
    %c0_i32_0 = arith.constant 0 : i32
    %2 = arith.cmpi ne, %1, %c0_i32_0 : i32
    scf.if %2 {
      %c0_12 = arith.constant 0 : index
      %c0_13 = arith.constant 0 : index
      %21 = vector.load %arg1[%c0_12, %c0_13] : memref<2x256xf32, #tpu.memory_space<vmem>>, vector<2x256xf32>
      %22 = arith.truncf %21 : vector<2x256xf32> to vector<2x256xbf16>
      %c0_14 = arith.constant 0 : index
      %c0_15 = arith.constant 0 : index
      %23 = vector.load %arg3[%c0_14, %c0_15] : memref<256x128xbf16, #tpu.memory_space<vmem>>, vector<256x128xbf16>
      %cst_16 = arith.constant dense<0.000000e+00> : vector<2x128xf32>
      %24 = tpu.matmul %22, %23, %cst_16 {dimension_numbers = #tpu.dot_dimension_numbers<[1], [0], [0], [1], [0, 0, 1, 1], [], []>} : vector<2x256xbf16>, vector<256x128xbf16>, vector<2x128xf32> -> vector<2x128xf32>
      %c0_17 = arith.constant 0 : index
      %c0_18 = arith.constant 0 : index
      %25 = vector.load %arg4[%c0_17, %c0_18] : memref<1x128xf32, #tpu.memory_space<vmem>>, vector<1x128xf32>
      %26 = vector.broadcast %25 : vector<1x128xf32> to vector<2x128xf32>
      %27 = arith.addf %24, %26 : vector<2x128xf32>
      %28 = arith.negf %27 : vector<2x128xf32>
      %29 = math.exp %28 : vector<2x128xf32>
      %cst_19 = arith.constant 1.000000e+00 : f32
      %30 = vector.broadcast %cst_19 : f32 to vector<2x128xf32>
      %31 = arith.addf %30, %29 : vector<2x128xf32>
      %32 = arith.divf %30, %31 : vector<2x128xf32>
      %33 = arith.mulf %27, %32 : vector<2x128xf32>
      %34 = arith.truncf %33 : vector<2x128xf32> to vector<2x128xbf16>
      %c0_20 = arith.constant 0 : index
      %c0_21 = arith.constant 0 : index
      %35 = vector.load %arg5[%c0_20, %c0_21] : memref<128x128xbf16, #tpu.memory_space<vmem>>, vector<128x128xbf16>
      %cst_22 = arith.constant dense<0.000000e+00> : vector<2x128xf32>
      %36 = tpu.matmul %34, %35, %cst_22 {dimension_numbers = #tpu.dot_dimension_numbers<[1], [0], [0], [1], [0, 0, 1, 1], [], []>} : vector<2x128xbf16>, vector<128x128xbf16>, vector<2x128xf32> -> vector<2x128xf32>
      %c0_23 = arith.constant 0 : index
      %c0_24 = arith.constant 0 : index
      %37 = vector.load %arg6[%c0_23, %c0_24] : memref<1x128xf32, #tpu.memory_space<vmem>>, vector<1x128xf32>
      %38 = vector.broadcast %37 : vector<1x128xf32> to vector<2x128xf32>
      %39 = arith.addf %36, %38 : vector<2x128xf32>
      %c0_25 = arith.constant 0 : index
      %c0_26 = arith.constant 0 : index
      %40 = vector.load %arg2[%c0_25, %c0_26] : memref<2x128xf32, #tpu.memory_space<vmem>>, vector<2x128xf32>
      %41 = arith.addf %39, %40 : vector<2x128xf32>
      %c0_27 = arith.constant 0 : index
      %c0_28 = arith.constant 0 : index
      %42 = vector.load %arg10[%c0_27, %c0_28] : memref<2x128xf32, #tpu.memory_space<vmem>>, vector<2x128xf32>
      tpu.vector_store %arg10[%c0_27, %c0_28], %41 {strides = array<i32>} : memref<2x128xf32, #tpu.memory_space<vmem>>, vector<2x128xf32>,
    } else {
    }
    %c0 = arith.constant 0 : index
    %c0_1 = arith.constant 0 : index
    %3 = vector.load %arg10[%c0, %c0_1] : memref<2x128xf32, #tpu.memory_space<vmem>>, vector<2x128xf32>
    %4 = arith.negf %3 : vector<2x128xf32>
    %5 = math.exp %4 : vector<2x128xf32>
    %cst = arith.constant 1.000000e+00 : f32
    %6 = vector.broadcast %cst : f32 to vector<2x128xf32>
    %7 = arith.addf %6, %5 : vector<2x128xf32>
    %8 = arith.divf %6, %7 : vector<2x128xf32>
    %9 = arith.mulf %3, %8 : vector<2x128xf32>
    %10 = arith.truncf %9 : vector<2x128xf32> to vector<2x128xbf16>
    %c0_2 = arith.constant 0 : index
    %c0_3 = arith.constant 0 : index
    %c0_4 = arith.constant 0 : index
    %11 = vector.load %arg7[%c0_2, %c0_3, %c0_4] : memref<1x128x768xbf16, #tpu.memory_space<vmem>>, vector<1x128x768xbf16>
    %12 = vector.shape_cast %11 : vector<1x128x768xbf16> to vector<128x768xbf16>
    %cst_5 = arith.constant dense<0.000000e+00> : vector<2x768xf32>
    %13 = tpu.matmul %10, %12, %cst_5 {dimension_numbers = #tpu.dot_dimension_numbers<[1], [0], [0], [1], [0, 0, 1, 1], [], []>} : vector<2x128xbf16>, vector<128x768xbf16>, vector<2x768xf32> -> vector<2x768xf32>
    %c0_6 = arith.constant 0 : index
    %c0_7 = arith.constant 0 : index
    %c0_8 = arith.constant 0 : index
    %14 = vector.load %arg8[%c0_6, %c0_7, %c0_8] : memref<1x1x768xf32, #tpu.memory_space<vmem>>, vector<1x1x768xf32>
    %15 = vector.shape_cast %14 : vector<1x1x768xf32> to vector<1x768xf32>
    %16 = vector.broadcast %15 : vector<1x768xf32> to vector<2x768xf32>
    %17 = arith.addf %13, %16 : vector<2x768xf32>
    %c0_9 = arith.constant 0 : index
    %c0_10 = arith.constant 0 : index
    %c0_11 = arith.constant 0 : index
    %18 = vector.load %arg9[%c0_9, %c0_10, %c0_11] : memref<1x2x768xf32, #tpu.memory_space<vmem>>, vector<1x2x768xf32>
    %19 = vector.shape_cast %18 : vector<1x2x768xf32> to vector<2x768xf32>
    %20 = vector.shape_cast %17 : vector<2x768xf32> to vector<1x2x768xf32>
    tpu.vector_store %arg9[%c0_9, %c0_10, %c0_11], %20 {strides = array<i32>} : memref<1x2x768xf32, #tpu.memory_space<vmem>>, vector<1x2x768xf32>,
    return
  }
  func.func @transform_0(%arg0: i32) -> (i32, i32) {
    %c0_i32 = arith.constant 0 : i32
    %c0_i32_0 = arith.constant 0 : i32
    %c0_i32_1 = arith.constant 0 : i32
    return %c0_i32, %c0_i32_0 : i32, i32
  }
  func.func @transform_1(%arg0: i32) -> (i32, i32) {
    %c0_i32 = arith.constant 0 : i32
    %c0_i32_0 = arith.constant 0 : i32
    %c0_i32_1 = arith.constant 0 : i32
    return %c0_i32, %c0_i32_0 : i32, i32
  }
  func.func @transform_2(%arg0: i32) -> (i32, i32) {
    %c0_i32 = arith.constant 0 : i32
    %c0_i32_0 = arith.constant 0 : i32
    %c0_i32_1 = arith.constant 0 : i32
    return %c0_i32, %c0_i32_0 : i32, i32
  }
  func.func @transform_3(%arg0: i32) -> (i32, i32) {
    %c0_i32 = arith.constant 0 : i32
    %c0_i32_0 = arith.constant 0 : i32
    %c0_i32_1 = arith.constant 0 : i32
    return %c0_i32, %c0_i32_0 : i32, i32
  }
  func.func @transform_4(%arg0: i32) -> (i32, i32) {
    %c0_i32 = arith.constant 0 : i32
    %c0_i32_0 = arith.constant 0 : i32
    %c0_i32_1 = arith.constant 0 : i32
    return %c0_i32, %c0_i32_0 : i32, i32
  }
  func.func @transform_5(%arg0: i32) -> (i32, i32) {
    %c0_i32 = arith.constant 0 : i32
    %c0_i32_0 = arith.constant 0 : i32
    %c0_i32_1 = arith.constant 0 : i32
    return %c0_i32, %c0_i32_0 : i32, i32
  }
  func.func @transform_6(%arg0: i32) -> (i32, i32, i32) {
    %c0_i32 = arith.constant 0 : i32
    %c0_i32_0 = arith.constant 0 : i32
    %c0_i32_1 = arith.constant 0 : i32
    return %arg0, %c0_i32, %c0_i32_0 : i32, i32, i32
  }
  func.func @transform_7(%arg0: i32) -> (i32, i32, i32) {
    %c0_i32 = arith.constant 0 : i32
    %c0_i32_0 = arith.constant 0 : i32
    %c0_i32_1 = arith.constant 0 : i32
    return %arg0, %c0_i32, %c0_i32_0 : i32, i32, i32
  }
  func.func @transform_8(%arg0: i32) -> (i32, i32, i32) {
    %c0_i32 = arith.constant 0 : i32
    %c0_i32_0 = arith.constant 0 : i32
    %c0_i32_1 = arith.constant 0 : i32
    return %arg0, %c0_i32, %c0_i32_0 : i32, i32, i32
  }
}

module attributes {stable_mosaic.version = 11 : i64} {
  func.func @linear_kernel(%arg0: i32, %arg1: memref<32x64xf32, #tpu.memory_space<vmem>>, %arg2: memref<64x128xbf16, #tpu.memory_space<vmem>>, %arg3: memref<1x128xf32, #tpu.memory_space<vmem>>, %arg4: memref<32x128xf32, #tpu.memory_space<vmem>>) attributes {dimension_semantics = [#tpu.dimension_semantics<parallel>], iteration_bounds = array<i64: 1>, scalar_prefetch = 0 : i64, scratch_operands = 0 : i64, tpu.core_type = #tpu.core_type<tc>, window_params = [{transform_indices = @transform_0, window_bounds = array<i64: 32, 64>}, {pipeline_mode = #tpu.pipeline_mode<synchronous>, transform_indices = @transform_1, window_bounds = array<i64: 64, 128>}, {pipeline_mode = #tpu.pipeline_mode<synchronous>, transform_indices = @transform_2, window_bounds = array<i64: 1, 128>}, {transform_indices = @transform_3, window_bounds = array<i64: 32, 128>}]} {
    %c0 = arith.constant 0 : index
    %c0_0 = arith.constant 0 : index
    %0 = vector.load %arg1[%c0, %c0_0] : memref<32x64xf32, #tpu.memory_space<vmem>>, vector<32x64xf32>
    %1 = arith.truncf %0 : vector<32x64xf32> to vector<32x64xbf16>
    %c0_1 = arith.constant 0 : index
    %c0_2 = arith.constant 0 : index
    %2 = vector.load %arg2[%c0_1, %c0_2] : memref<64x128xbf16, #tpu.memory_space<vmem>>, vector<64x128xbf16>
    %cst = arith.constant dense<0.000000e+00> : vector<32x128xf32>
    %3 = tpu.matmul %1, %2, %cst {dimension_numbers = #tpu.dot_dimension_numbers<[1], [0], [0], [1], [0, 0, 1, 1], [], []>} : vector<32x64xbf16>, vector<64x128xbf16>, vector<32x128xf32> -> vector<32x128xf32>
    %c0_3 = arith.constant 0 : index
    %c0_4 = arith.constant 0 : index
    %4 = vector.load %arg3[%c0_3, %c0_4] : memref<1x128xf32, #tpu.memory_space<vmem>>, vector<1x128xf32>
    %5 = vector.broadcast %4 : vector<1x128xf32> to vector<32x128xf32>
    %6 = arith.addf %3, %5 : vector<32x128xf32>
    %c0_5 = arith.constant 0 : index
    %c0_6 = arith.constant 0 : index
    %7 = vector.load %arg4[%c0_5, %c0_6] : memref<32x128xf32, #tpu.memory_space<vmem>>, vector<32x128xf32>
    tpu.vector_store %arg4[%c0_5, %c0_6], %6 {strides = array<i32>} : memref<32x128xf32, #tpu.memory_space<vmem>>, vector<32x128xf32>,
    return
  }
  func.func @transform_0(%arg0: i32) -> (i32, i32) {
    %c0_i32 = arith.constant 0 : i32
    %c0_i32_0 = arith.constant 0 : i32
    return %arg0, %c0_i32 : i32, i32
  }
  func.func @transform_1(%arg0: i32) -> (i32, i32) {
    %c0_i32 = arith.constant 0 : i32
    %c0_i32_0 = arith.constant 0 : i32
    %c0_i32_1 = arith.constant 0 : i32
    return %c0_i32, %c0_i32_0 : i32, i32
  }
  func.func @transform_2(%arg0: i32) -> (i32, i32) {
    %c0_i32 = arith.constant 0 : i32
    %c0_i32_0 = arith.constant 0 : i32
    %c0_i32_1 = arith.constant 0 : i32
    return %c0_i32, %c0_i32_0 : i32, i32
  }
  func.func @transform_3(%arg0: i32) -> (i32, i32) {
    %c0_i32 = arith.constant 0 : i32
    %c0_i32_0 = arith.constant 0 : i32
    return %arg0, %c0_i32 : i32, i32
  }
}

module attributes {stable_mosaic.version = 11 : i64} {
  func.func @sit_blocks_kernel(%arg0: i32, %arg1: i32, %arg2: memref<2x24x128xf32, #tpu.memory_space<vmem>>, %arg3: memref<1x2x6x128xf32, #tpu.memory_space<vmem>>, %arg4: memref<1x128x384xbf16, #tpu.memory_space<vmem>>, %arg5: memref<1x1x384xf32, #tpu.memory_space<vmem>>, %arg6: memref<1x128x128xbf16, #tpu.memory_space<vmem>>, %arg7: memref<1x1x128xf32, #tpu.memory_space<vmem>>, %arg8: memref<1x128x512xbf16, #tpu.memory_space<vmem>>, %arg9: memref<1x1x512xf32, #tpu.memory_space<vmem>>, %arg10: memref<1x512x128xbf16, #tpu.memory_space<vmem>>, %arg11: memref<1x1x128xf32, #tpu.memory_space<vmem>>, %arg12: memref<2x24x128xf32, #tpu.memory_space<vmem>>, %arg13: memref<2x24x128xf32, #tpu.memory_space<vmem>>) attributes {dimension_semantics = [#tpu.dimension_semantics<parallel>, #tpu.dimension_semantics<arbitrary>], iteration_bounds = array<i64: 1, 2>, scalar_prefetch = 0 : i64, scratch_operands = 1 : i64, tpu.core_type = #tpu.core_type<tc>, window_params = [{transform_indices = @transform_0, window_bounds = array<i64: 2, 24, 128>}, {transform_indices = @transform_1, window_bounds = array<i64: 1, 2, 6, 128>}, {transform_indices = @transform_2, window_bounds = array<i64: 1, 128, 384>}, {transform_indices = @transform_3, window_bounds = array<i64: 1, 1, 384>}, {transform_indices = @transform_4, window_bounds = array<i64: 1, 128, 128>}, {transform_indices = @transform_5, window_bounds = array<i64: 1, 1, 128>}, {transform_indices = @transform_6, window_bounds = array<i64: 1, 128, 512>}, {transform_indices = @transform_7, window_bounds = array<i64: 1, 1, 512>}, {transform_indices = @transform_8, window_bounds = array<i64: 1, 512, 128>}, {transform_indices = @transform_9, window_bounds = array<i64: 1, 1, 128>}, {transform_indices = @transform_10, window_bounds = array<i64: 2, 24, 128>}]} {
    %c0_i32 = arith.constant 0 : i32
    %0 = arith.cmpi eq, %arg1, %c0_i32 : i32
    %1 = arith.extui %0 : i1 to i32
    %c0_i32_0 = arith.constant 0 : i32
    %2 = arith.cmpi ne, %1, %c0_i32_0 : i32
    scf.if %2 {
      %c0_63 = arith.constant 0 : index
      %c0_64 = arith.constant 0 : index
      %c0_65 = arith.constant 0 : index
      %179 = vector.load %arg2[%c0_63, %c0_64, %c0_65] : memref<2x24x128xf32, #tpu.memory_space<vmem>>, vector<2x24x128xf32>
      %c0_66 = arith.constant 0 : index
      %c0_67 = arith.constant 0 : index
      %c0_68 = arith.constant 0 : index
      %180 = vector.load %arg13[%c0_66, %c0_67, %c0_68] : memref<2x24x128xf32, #tpu.memory_space<vmem>>, vector<2x24x128xf32>
      tpu.vector_store %arg13[%c0_66, %c0_67, %c0_68], %179 {strides = array<i32>} : memref<2x24x128xf32, #tpu.memory_space<vmem>>, vector<2x24x128xf32>,
    } else {
    }
    %c0 = arith.constant 0 : index
    %c0_1 = arith.constant 0 : index
    %c0_2 = arith.constant 0 : index
    %3 = vector.load %arg13[%c0, %c0_1, %c0_2] : memref<2x24x128xf32, #tpu.memory_space<vmem>>, vector<2x24x128xf32>
    %c0_3 = arith.constant 0 : index
    %c0_4 = arith.constant 0 : index
    %c0_5 = arith.constant 0 : index
    %c0_6 = arith.constant 0 : index
    %4 = vector.load %arg3[%c0_3, %c0_4, %c0_5, %c0_6] : memref<1x2x6x128xf32, #tpu.memory_space<vmem>>, vector<1x2x6x128xf32>
    %5 = vector.shape_cast %4 : vector<1x2x6x128xf32> to vector<2x6x128xf32>
    %6 = vector.extract_strided_slice %5 {offsets = [0, 0, 0], sizes = [2, 1, 128], strides = [1, 1, 1]} : vector<2x6x128xf32> to vector<2x1x128xf32>
    %7 = vector.extract_strided_slice %5 {offsets = [0, 1, 0], sizes = [2, 1, 128], strides = [1, 1, 1]} : vector<2x6x128xf32> to vector<2x1x128xf32>
    %8 = vector.extract_strided_slice %5 {offsets = [0, 2, 0], sizes = [2, 1, 128], strides = [1, 1, 1]} : vector<2x6x128xf32> to vector<2x1x128xf32>
    %9 = vector.extract_strided_slice %5 {offsets = [0, 3, 0], sizes = [2, 1, 128], strides = [1, 1, 1]} : vector<2x6x128xf32> to vector<2x1x128xf32>
    %10 = vector.extract_strided_slice %5 {offsets = [0, 4, 0], sizes = [2, 1, 128], strides = [1, 1, 1]} : vector<2x6x128xf32> to vector<2x1x128xf32>
    %11 = vector.extract_strided_slice %5 {offsets = [0, 5, 0], sizes = [2, 1, 128], strides = [1, 1, 1]} : vector<2x6x128xf32> to vector<2x1x128xf32>
    %cst = arith.constant dense<0.000000e+00> : vector<2x24xf32>
    %12 = vector.multi_reduction <add>, %3, %cst [2] : vector<2x24x128xf32> to vector<2x24xf32>
    %13 = vector.shape_cast %12 : vector<2x24xf32> to vector<2x24x1xf32>
    %cst_7 = arith.constant 1.280000e+02 : f32
    %14 = vector.broadcast %cst_7 : f32 to vector<2x24x1xf32>
    %15 = arith.divf %13, %14 : vector<2x24x1xf32>
    %16 = vector.broadcast %15 : vector<2x24x1xf32> to vector<2x24x128xf32>
    %17 = arith.subf %3, %16 : vector<2x24x128xf32>
    %18 = arith.mulf %17, %17 : vector<2x24x128xf32>
    %cst_8 = arith.constant dense<0.000000e+00> : vector<2x24xf32>
    %19 = vector.multi_reduction <add>, %18, %cst_8 [2] : vector<2x24x128xf32> to vector<2x24xf32>
    %20 = vector.shape_cast %19 : vector<2x24xf32> to vector<2x24x1xf32>
    %cst_9 = arith.constant 1.280000e+02 : f32
    %21 = vector.broadcast %cst_9 : f32 to vector<2x24x1xf32>
    %22 = arith.divf %20, %21 : vector<2x24x1xf32>
    %23 = vector.broadcast %15 : vector<2x24x1xf32> to vector<2x24x128xf32>
    %24 = arith.subf %3, %23 : vector<2x24x128xf32>
    %cst_10 = arith.constant 9.99999997E-7 : f32
    %25 = vector.broadcast %cst_10 : f32 to vector<2x24x1xf32>
    %26 = arith.addf %22, %25 : vector<2x24x1xf32>
    %27 = math.rsqrt %26 : vector<2x24x1xf32>
    %28 = vector.broadcast %27 : vector<2x24x1xf32> to vector<2x24x128xf32>
    %29 = arith.mulf %24, %28 : vector<2x24x128xf32>
    %cst_11 = arith.constant 1.000000e+00 : f32
    %30 = vector.broadcast %cst_11 : f32 to vector<2x1x128xf32>
    %31 = arith.addf %30, %7 : vector<2x1x128xf32>
    %32 = vector.broadcast %31 : vector<2x1x128xf32> to vector<2x24x128xf32>
    %33 = arith.mulf %29, %32 : vector<2x24x128xf32>
    %34 = vector.broadcast %6 : vector<2x1x128xf32> to vector<2x24x128xf32>
    %35 = arith.addf %33, %34 : vector<2x24x128xf32>
    %36 = vector.shape_cast %35 : vector<2x24x128xf32> to vector<48x128xf32>
    %37 = arith.truncf %36 : vector<48x128xf32> to vector<48x128xbf16>
    %c0_12 = arith.constant 0 : index
    %c0_13 = arith.constant 0 : index
    %c0_14 = arith.constant 0 : index
    %38 = vector.load %arg4[%c0_12, %c0_13, %c0_14] : memref<1x128x384xbf16, #tpu.memory_space<vmem>>, vector<1x128x384xbf16>
    %39 = vector.shape_cast %38 : vector<1x128x384xbf16> to vector<128x384xbf16>
    %cst_15 = arith.constant dense<0.000000e+00> : vector<48x384xf32>
    %40 = tpu.matmul %37, %39, %cst_15 {dimension_numbers = #tpu.dot_dimension_numbers<[1], [0], [0], [1], [0, 0, 1, 1], [], []>} : vector<48x128xbf16>, vector<128x384xbf16>, vector<48x384xf32> -> vector<48x384xf32>
    %c0_16 = arith.constant 0 : index
    %c0_17 = arith.constant 0 : index
    %c0_18 = arith.constant 0 : index
    %41 = vector.load %arg5[%c0_16, %c0_17, %c0_18] : memref<1x1x384xf32, #tpu.memory_space<vmem>>, vector<1x1x384xf32>
    %42 = vector.shape_cast %41 : vector<1x1x384xf32> to vector<1x384xf32>
    %43 = vector.broadcast %42 : vector<1x384xf32> to vector<48x384xf32>
    %44 = arith.addf %40, %43 : vector<48x384xf32>
    %45 = vector.extract_strided_slice %44 {offsets = [0, 0], sizes = [48, 128], strides = [1, 1]} : vector<48x384xf32> to vector<48x128xf32>
    %cst_19 = arith.constant 0.176776692 : f32
    %46 = vector.broadcast %cst_19 : f32 to vector<48x128xf32>
    %47 = arith.mulf %45, %46 : vector<48x128xf32>
    %48 = vector.extract_strided_slice %44 {offsets = [0, 128], sizes = [48, 128], strides = [1, 1]} : vector<48x384xf32> to vector<48x128xf32>
    %49 = vector.extract_strided_slice %44 {offsets = [0, 256], sizes = [48, 128], strides = [1, 1]} : vector<48x384xf32> to vector<48x128xf32>
    %50 = vector.extract_strided_slice %47 {offsets = [0, 0], sizes = [24, 128], strides = [1, 1]} : vector<48x128xf32> to vector<24x128xf32>
    %51 = vector.extract_strided_slice %48 {offsets = [0, 0], sizes = [24, 128], strides = [1, 1]} : vector<48x128xf32> to vector<24x128xf32>
    %52 = vector.extract_strided_slice %49 {offsets = [0, 0], sizes = [24, 128], strides = [1, 1]} : vector<48x128xf32> to vector<24x128xf32>
    %53 = vector.shape_cast %50 : vector<24x128xf32> to vector<24x4x32xf32>
    %54 = tpu.transpose %53, [1, 0, 2] : vector<24x4x32xf32> -> vector<4x24x32xf32>
    %55 = arith.truncf %54 : vector<4x24x32xf32> to vector<4x24x32xbf16>
    %56 = vector.shape_cast %51 : vector<24x128xf32> to vector<24x4x32xf32>
    %57 = tpu.transpose %56, [1, 0, 2] : vector<24x4x32xf32> -> vector<4x24x32xf32>
    %58 = arith.truncf %57 : vector<4x24x32xf32> to vector<4x24x32xbf16>
    %59 = vector.shape_cast %52 : vector<24x128xf32> to vector<24x4x32xf32>
    %60 = tpu.transpose %59, [1, 0, 2] : vector<24x4x32xf32> -> vector<4x24x32xf32>
    %61 = arith.truncf %60 : vector<4x24x32xf32> to vector<4x24x32xbf16>
    "tpu.trace_start"() <{level = 10 : i32, message = "hqe,hke->hqk"}> : () -> ()
    %cst_20 = arith.constant dense<0.000000e+00> : vector<4x24x24xf32>
    %62 = tpu.matmul %55, %58, %cst_20 {dimension_numbers = #tpu.dot_dimension_numbers<[2], [2], [1], [1], [0, 0, 0, 1, 1, 1], [0], [0]>} : vector<4x24x32xbf16>, vector<4x24x32xbf16>, vector<4x24x24xf32> -> vector<4x24x24xf32>
    "tpu.trace_stop"() : () -> ()
    %cst_21 = arith.constant dense<0xFF800000> : vector<4x24xf32>
    %63 = vector.multi_reduction <maximumf>, %62, %cst_21 [2] : vector<4x24x24xf32> to vector<4x24xf32>
    %64 = vector.shape_cast %63 : vector<4x24xf32> to vector<4x24x1xf32>
    %65 = vector.broadcast %64 : vector<4x24x1xf32> to vector<4x24x24xf32>
    %66 = arith.subf %62, %65 : vector<4x24x24xf32>
    %67 = math.exp %66 : vector<4x24x24xf32>
    %cst_22 = arith.constant dense<0.000000e+00> : vector<4x24xf32>
    %68 = vector.multi_reduction <add>, %67, %cst_22 [2] : vector<4x24x24xf32> to vector<4x24xf32>
    %69 = vector.shape_cast %68 : vector<4x24xf32> to vector<4x24x1xf32>
    %70 = tpu.reciprocal %69 {approx = true} : vector<4x24x1xf32> -> vector<4x24x1xf32>
    %71 = vector.broadcast %70 : vector<4x24x1xf32> to vector<4x24x24xf32>
    %72 = arith.mulf %67, %71 : vector<4x24x24xf32>
    %73 = arith.truncf %72 : vector<4x24x24xf32> to vector<4x24x24xbf16>
    "tpu.trace_start"() <{level = 10 : i32, message = "hqk,hke->hqe"}> : () -> ()
    %cst_23 = arith.constant dense<0.000000e+00> : vector<4x24x32xf32>
    %74 = tpu.matmul %73, %61, %cst_23 {dimension_numbers = #tpu.dot_dimension_numbers<[2], [1], [1], [2], [0, 0, 0, 1, 1, 2], [0], [0]>} : vector<4x24x24xbf16>, vector<4x24x32xbf16>, vector<4x24x32xf32> -> vector<4x24x32xf32>
    "tpu.trace_stop"() : () -> ()
    %75 = tpu.transpose %74, [1, 0, 2] : vector<4x24x32xf32> -> vector<24x4x32xf32>
    %76 = vector.shape_cast %75 : vector<24x4x32xf32> to vector<24x128xf32>
    %77 = vector.extract_strided_slice %47 {offsets = [24, 0], sizes = [24, 128], strides = [1, 1]} : vector<48x128xf32> to vector<24x128xf32>
    %78 = vector.extract_strided_slice %48 {offsets = [24, 0], sizes = [24, 128], strides = [1, 1]} : vector<48x128xf32> to vector<24x128xf32>
    %79 = vector.extract_strided_slice %49 {offsets = [24, 0], sizes = [24, 128], strides = [1, 1]} : vector<48x128xf32> to vector<24x128xf32>
    %80 = vector.shape_cast %77 : vector<24x128xf32> to vector<24x4x32xf32>
    %81 = tpu.transpose %80, [1, 0, 2] : vector<24x4x32xf32> -> vector<4x24x32xf32>
    %82 = arith.truncf %81 : vector<4x24x32xf32> to vector<4x24x32xbf16>
    %83 = vector.shape_cast %78 : vector<24x128xf32> to vector<24x4x32xf32>
    %84 = tpu.transpose %83, [1, 0, 2] : vector<24x4x32xf32> -> vector<4x24x32xf32>
    %85 = arith.truncf %84 : vector<4x24x32xf32> to vector<4x24x32xbf16>
    %86 = vector.shape_cast %79 : vector<24x128xf32> to vector<24x4x32xf32>
    %87 = tpu.transpose %86, [1, 0, 2] : vector<24x4x32xf32> -> vector<4x24x32xf32>
    %88 = arith.truncf %87 : vector<4x24x32xf32> to vector<4x24x32xbf16>
    "tpu.trace_start"() <{level = 10 : i32, message = "hqe,hke->hqk"}> : () -> ()
    %cst_24 = arith.constant dense<0.000000e+00> : vector<4x24x24xf32>
    %89 = tpu.matmul %82, %85, %cst_24 {dimension_numbers = #tpu.dot_dimension_numbers<[2], [2], [1], [1], [0, 0, 0, 1, 1, 1], [0], [0]>} : vector<4x24x32xbf16>, vector<4x24x32xbf16>, vector<4x24x24xf32> -> vector<4x24x24xf32>
    "tpu.trace_stop"() : () -> ()
    %cst_25 = arith.constant dense<0xFF800000> : vector<4x24xf32>
    %90 = vector.multi_reduction <maximumf>, %89, %cst_25 [2] : vector<4x24x24xf32> to vector<4x24xf32>
    %91 = vector.shape_cast %90 : vector<4x24xf32> to vector<4x24x1xf32>
    %92 = vector.broadcast %91 : vector<4x24x1xf32> to vector<4x24x24xf32>
    %93 = arith.subf %89, %92 : vector<4x24x24xf32>
    %94 = math.exp %93 : vector<4x24x24xf32>
    %cst_26 = arith.constant dense<0.000000e+00> : vector<4x24xf32>
    %95 = vector.multi_reduction <add>, %94, %cst_26 [2] : vector<4x24x24xf32> to vector<4x24xf32>
    %96 = vector.shape_cast %95 : vector<4x24xf32> to vector<4x24x1xf32>
    %97 = tpu.reciprocal %96 {approx = true} : vector<4x24x1xf32> -> vector<4x24x1xf32>
    %98 = vector.broadcast %97 : vector<4x24x1xf32> to vector<4x24x24xf32>
    %99 = arith.mulf %94, %98 : vector<4x24x24xf32>
    %100 = arith.truncf %99 : vector<4x24x24xf32> to vector<4x24x24xbf16>
    "tpu.trace_start"() <{level = 10 : i32, message = "hqk,hke->hqe"}> : () -> ()
    %cst_27 = arith.constant dense<0.000000e+00> : vector<4x24x32xf32>
    %101 = tpu.matmul %100, %88, %cst_27 {dimension_numbers = #tpu.dot_dimension_numbers<[2], [1], [1], [2], [0, 0, 0, 1, 1, 2], [0], [0]>} : vector<4x24x24xbf16>, vector<4x24x32xbf16>, vector<4x24x32xf32> -> vector<4x24x32xf32>
    "tpu.trace_stop"() : () -> ()
    %102 = tpu.transpose %101, [1, 0, 2] : vector<4x24x32xf32> -> vector<24x4x32xf32>
    %103 = vector.shape_cast %102 : vector<24x4x32xf32> to vector<24x128xf32>
    %104 = tpu.concatenate %76, %103 in 0 : vector<24x128xf32>, vector<24x128xf32> -> vector<48x128xf32>
    %105 = arith.truncf %104 : vector<48x128xf32> to vector<48x128xbf16>
    %c0_28 = arith.constant 0 : index
    %c0_29 = arith.constant 0 : index
    %c0_30 = arith.constant 0 : index
    %106 = vector.load %arg6[%c0_28, %c0_29, %c0_30] : memref<1x128x128xbf16, #tpu.memory_space<vmem>>, vector<1x128x128xbf16>
    %107 = vector.shape_cast %106 : vector<1x128x128xbf16> to vector<128x128xbf16>
    %cst_31 = arith.constant dense<0.000000e+00> : vector<48x128xf32>
    %108 = tpu.matmul %105, %107, %cst_31 {dimension_numbers = #tpu.dot_dimension_numbers<[1], [0], [0], [1], [0, 0, 1, 1], [], []>} : vector<48x128xbf16>, vector<128x128xbf16>, vector<48x128xf32> -> vector<48x128xf32>
    %c0_32 = arith.constant 0 : index
    %c0_33 = arith.constant 0 : index
    %c0_34 = arith.constant 0 : index
    %109 = vector.load %arg7[%c0_32, %c0_33, %c0_34] : memref<1x1x128xf32, #tpu.memory_space<vmem>>, vector<1x1x128xf32>
    %110 = vector.shape_cast %109 : vector<1x1x128xf32> to vector<1x128xf32>
    %111 = vector.broadcast %110 : vector<1x128xf32> to vector<48x128xf32>
    %112 = arith.addf %108, %111 : vector<48x128xf32>
    %113 = vector.shape_cast %112 : vector<48x128xf32> to vector<2x24x128xf32>
    %114 = vector.broadcast %8 : vector<2x1x128xf32> to vector<2x24x128xf32>
    %115 = arith.mulf %114, %113 : vector<2x24x128xf32>
    %116 = arith.addf %3, %115 : vector<2x24x128xf32>
    %cst_35 = arith.constant dense<0.000000e+00> : vector<2x24xf32>
    %117 = vector.multi_reduction <add>, %116, %cst_35 [2] : vector<2x24x128xf32> to vector<2x24xf32>
    %118 = vector.shape_cast %117 : vector<2x24xf32> to vector<2x24x1xf32>
    %cst_36 = arith.constant 1.280000e+02 : f32
    %119 = vector.broadcast %cst_36 : f32 to vector<2x24x1xf32>
    %120 = arith.divf %118, %119 : vector<2x24x1xf32>
    %121 = vector.broadcast %120 : vector<2x24x1xf32> to vector<2x24x128xf32>
    %122 = arith.subf %116, %121 : vector<2x24x128xf32>
    %123 = arith.mulf %122, %122 : vector<2x24x128xf32>
    %cst_37 = arith.constant dense<0.000000e+00> : vector<2x24xf32>
    %124 = vector.multi_reduction <add>, %123, %cst_37 [2] : vector<2x24x128xf32> to vector<2x24xf32>
    %125 = vector.shape_cast %124 : vector<2x24xf32> to vector<2x24x1xf32>
    %cst_38 = arith.constant 1.280000e+02 : f32
    %126 = vector.broadcast %cst_38 : f32 to vector<2x24x1xf32>
    %127 = arith.divf %125, %126 : vector<2x24x1xf32>
    %128 = vector.broadcast %120 : vector<2x24x1xf32> to vector<2x24x128xf32>
    %129 = arith.subf %116, %128 : vector<2x24x128xf32>
    %cst_39 = arith.constant 9.99999997E-7 : f32
    %130 = vector.broadcast %cst_39 : f32 to vector<2x24x1xf32>
    %131 = arith.addf %127, %130 : vector<2x24x1xf32>
    %132 = math.rsqrt %131 : vector<2x24x1xf32>
    %133 = vector.broadcast %132 : vector<2x24x1xf32> to vector<2x24x128xf32>
    %134 = arith.mulf %129, %133 : vector<2x24x128xf32>
    %cst_40 = arith.constant 1.000000e+00 : f32
    %135 = vector.broadcast %cst_40 : f32 to vector<2x1x128xf32>
    %136 = arith.addf %135, %10 : vector<2x1x128xf32>
    %137 = vector.broadcast %136 : vector<2x1x128xf32> to vector<2x24x128xf32>
    %138 = arith.mulf %134, %137 : vector<2x24x128xf32>
    %139 = vector.broadcast %9 : vector<2x1x128xf32> to vector<2x24x128xf32>
    %140 = arith.addf %138, %139 : vector<2x24x128xf32>
    %141 = vector.shape_cast %140 : vector<2x24x128xf32> to vector<48x128xf32>
    %142 = arith.truncf %141 : vector<48x128xf32> to vector<48x128xbf16>
    %c0_41 = arith.constant 0 : index
    %c0_42 = arith.constant 0 : index
    %c0_43 = arith.constant 0 : index
    %143 = vector.load %arg8[%c0_41, %c0_42, %c0_43] : memref<1x128x512xbf16, #tpu.memory_space<vmem>>, vector<1x128x512xbf16>
    %144 = vector.shape_cast %143 : vector<1x128x512xbf16> to vector<128x512xbf16>
    %cst_44 = arith.constant dense<0.000000e+00> : vector<48x512xf32>
    %145 = tpu.matmul %142, %144, %cst_44 {dimension_numbers = #tpu.dot_dimension_numbers<[1], [0], [0], [1], [0, 0, 1, 1], [], []>} : vector<48x128xbf16>, vector<128x512xbf16>, vector<48x512xf32> -> vector<48x512xf32>
    %c0_45 = arith.constant 0 : index
    %c0_46 = arith.constant 0 : index
    %c0_47 = arith.constant 0 : index
    %146 = vector.load %arg9[%c0_45, %c0_46, %c0_47] : memref<1x1x512xf32, #tpu.memory_space<vmem>>, vector<1x1x512xf32>
    %147 = vector.shape_cast %146 : vector<1x1x512xf32> to vector<1x512xf32>
    %148 = vector.broadcast %147 : vector<1x512xf32> to vector<48x512xf32>
    %149 = arith.addf %145, %148 : vector<48x512xf32>
    %150 = arith.mulf %149, %149 : vector<48x512xf32>
    %151 = arith.mulf %149, %150 : vector<48x512xf32>
    %cst_48 = arith.constant 4.471500e-02 : f32
    %152 = vector.broadcast %cst_48 : f32 to vector<48x512xf32>
    %153 = arith.mulf %152, %151 : vector<48x512xf32>
    %154 = arith.addf %149, %153 : vector<48x512xf32>
    %cst_49 = arith.constant 0.797884583 : f32
    %155 = vector.broadcast %cst_49 : f32 to vector<48x512xf32>
    %156 = arith.mulf %155, %154 : vector<48x512xf32>
    %157 = math.tanh %156 : vector<48x512xf32>
    %cst_50 = arith.constant 1.000000e+00 : f32
    %158 = vector.broadcast %cst_50 : f32 to vector<48x512xf32>
    %159 = arith.addf %158, %157 : vector<48x512xf32>
    %cst_51 = arith.constant 5.000000e-01 : f32
    %160 = vector.broadcast %cst_51 : f32 to vector<48x512xf32>
    %161 = arith.mulf %160, %159 : vector<48x512xf32>
    %162 = arith.mulf %149, %161 : vector<48x512xf32>
    %163 = arith.truncf %162 : vector<48x512xf32> to vector<48x512xbf16>
    %c0_52 = arith.constant 0 : index
    %c0_53 = arith.constant 0 : index
    %c0_54 = arith.constant 0 : index
    %164 = vector.load %arg10[%c0_52, %c0_53, %c0_54] : memref<1x512x128xbf16, #tpu.memory_space<vmem>>, vector<1x512x128xbf16>
    %165 = vector.shape_cast %164 : vector<1x512x128xbf16> to vector<512x128xbf16>
    %cst_55 = arith.constant dense<0.000000e+00> : vector<48x128xf32>
    %166 = tpu.matmul %163, %165, %cst_55 {dimension_numbers = #tpu.dot_dimension_numbers<[1], [0], [0], [1], [0, 0, 1, 1], [], []>} : vector<48x512xbf16>, vector<512x128xbf16>, vector<48x128xf32> -> vector<48x128xf32>
    %c0_56 = arith.constant 0 : index
    %c0_57 = arith.constant 0 : index
    %c0_58 = arith.constant 0 : index
    %167 = vector.load %arg11[%c0_56, %c0_57, %c0_58] : memref<1x1x128xf32, #tpu.memory_space<vmem>>, vector<1x1x128xf32>
    %168 = vector.shape_cast %167 : vector<1x1x128xf32> to vector<1x128xf32>
    %169 = vector.broadcast %168 : vector<1x128xf32> to vector<48x128xf32>
    %170 = arith.addf %166, %169 : vector<48x128xf32>
    %171 = vector.shape_cast %170 : vector<48x128xf32> to vector<2x24x128xf32>
    %172 = vector.broadcast %11 : vector<2x1x128xf32> to vector<2x24x128xf32>
    %173 = arith.mulf %172, %171 : vector<2x24x128xf32>
    %174 = arith.addf %116, %173 : vector<2x24x128xf32>
    %c0_59 = arith.constant 0 : index
    %c0_60 = arith.constant 0 : index
    %c0_61 = arith.constant 0 : index
    %175 = vector.load %arg13[%c0_59, %c0_60, %c0_61] : memref<2x24x128xf32, #tpu.memory_space<vmem>>, vector<2x24x128xf32>
    tpu.vector_store %arg13[%c0_59, %c0_60, %c0_61], %174 {strides = array<i32>} : memref<2x24x128xf32, #tpu.memory_space<vmem>>, vector<2x24x128xf32>,
    %c1_i32 = arith.constant 1 : i32
    %176 = arith.cmpi eq, %arg1, %c1_i32 : i32
    %177 = arith.extui %176 : i1 to i32
    %c0_i32_62 = arith.constant 0 : i32
    %178 = arith.cmpi ne, %177, %c0_i32_62 : i32
    scf.if %178 {
      %c0_63 = arith.constant 0 : index
      %c0_64 = arith.constant 0 : index
      %c0_65 = arith.constant 0 : index
      %179 = vector.load %arg13[%c0_63, %c0_64, %c0_65] : memref<2x24x128xf32, #tpu.memory_space<vmem>>, vector<2x24x128xf32>
      %c0_66 = arith.constant 0 : index
      %c0_67 = arith.constant 0 : index
      %c0_68 = arith.constant 0 : index
      %180 = vector.load %arg12[%c0_66, %c0_67, %c0_68] : memref<2x24x128xf32, #tpu.memory_space<vmem>>, vector<2x24x128xf32>
      tpu.vector_store %arg12[%c0_66, %c0_67, %c0_68], %179 {strides = array<i32>} : memref<2x24x128xf32, #tpu.memory_space<vmem>>, vector<2x24x128xf32>,
    } else {
    }
    return
  }
  func.func @transform_0(%arg0: i32, %arg1: i32) -> (i32, i32, i32) {
    %c0_i32 = arith.constant 0 : i32
    %c0_i32_0 = arith.constant 0 : i32
    %c0_i32_1 = arith.constant 0 : i32
    return %arg0, %c0_i32, %c0_i32_0 : i32, i32, i32
  }
  func.func @transform_1(%arg0: i32, %arg1: i32) -> (i32, i32, i32, i32) {
    %c0_i32 = arith.constant 0 : i32
    %c0_i32_0 = arith.constant 0 : i32
    %c0_i32_1 = arith.constant 0 : i32
    return %arg1, %arg0, %c0_i32, %c0_i32_0 : i32, i32, i32, i32
  }
  func.func @transform_2(%arg0: i32, %arg1: i32) -> (i32, i32, i32) {
    %c0_i32 = arith.constant 0 : i32
    %c0_i32_0 = arith.constant 0 : i32
    %c0_i32_1 = arith.constant 0 : i32
    return %arg1, %c0_i32, %c0_i32_0 : i32, i32, i32
  }
  func.func @transform_3(%arg0: i32, %arg1: i32) -> (i32, i32, i32) {
    %c0_i32 = arith.constant 0 : i32
    %c0_i32_0 = arith.constant 0 : i32
    %c0_i32_1 = arith.constant 0 : i32
    return %arg1, %c0_i32, %c0_i32_0 : i32, i32, i32
  }
  func.func @transform_4(%arg0: i32, %arg1: i32) -> (i32, i32, i32) {
    %c0_i32 = arith.constant 0 : i32
    %c0_i32_0 = arith.constant 0 : i32
    %c0_i32_1 = arith.constant 0 : i32
    return %arg1, %c0_i32, %c0_i32_0 : i32, i32, i32
  }
  func.func @transform_5(%arg0: i32, %arg1: i32) -> (i32, i32, i32) {
    %c0_i32 = arith.constant 0 : i32
    %c0_i32_0 = arith.constant 0 : i32
    %c0_i32_1 = arith.constant 0 : i32
    return %arg1, %c0_i32, %c0_i32_0 : i32, i32, i32
  }
  func.func @transform_6(%arg0: i32, %arg1: i32) -> (i32, i32, i32) {
    %c0_i32 = arith.constant 0 : i32
    %c0_i32_0 = arith.constant 0 : i32
    %c0_i32_1 = arith.constant 0 : i32
    return %arg1, %c0_i32, %c0_i32_0 : i32, i32, i32
  }
  func.func @transform_7(%arg0: i32, %arg1: i32) -> (i32, i32, i32) {
    %c0_i32 = arith.constant 0 : i32
    %c0_i32_0 = arith.constant 0 : i32
    %c0_i32_1 = arith.constant 0 : i32
    return %arg1, %c0_i32, %c0_i32_0 : i32, i32, i32
  }
  func.func @transform_8(%arg0: i32, %arg1: i32) -> (i32, i32, i32) {
    %c0_i32 = arith.constant 0 : i32
    %c0_i32_0 = arith.constant 0 : i32
    %c0_i32_1 = arith.constant 0 : i32
    return %arg1, %c0_i32, %c0_i32_0 : i32, i32, i32
  }
  func.func @transform_9(%arg0: i32, %arg1: i32) -> (i32, i32, i32) {
    %c0_i32 = arith.constant 0 : i32
    %c0_i32_0 = arith.constant 0 : i32
    %c0_i32_1 = arith.constant 0 : i32
    return %arg1, %c0_i32, %c0_i32_0 : i32, i32, i32
  }
  func.func @transform_10(%arg0: i32, %arg1: i32) -> (i32, i32, i32) {
    %c0_i32 = arith.constant 0 : i32
    %c0_i32_0 = arith.constant 0 : i32
    %c0_i32_1 = arith.constant 0 : i32
    return %arg0, %c0_i32, %c0_i32_0 : i32, i32, i32
  }
}

module attributes {stable_mosaic.version = 11 : i64} {
  func.func @final_layer_kernel(%arg0: i32, %arg1: memref<1x16x128xf32, #tpu.memory_space<vmem>>, %arg2: memref<1x2x128xf32, #tpu.memory_space<vmem>>, %arg3: memref<128x128xbf16, #tpu.memory_space<vmem>>, %arg4: memref<1x128xf32, #tpu.memory_space<vmem>>, %arg5: memref<1x16x128xf32, #tpu.memory_space<vmem>>) attributes {dimension_semantics = [#tpu.dimension_semantics<parallel>], iteration_bounds = array<i64: 2>, scalar_prefetch = 0 : i64, scratch_operands = 0 : i64, tpu.core_type = #tpu.core_type<tc>, window_params = [{transform_indices = @transform_0, window_bounds = array<i64: 1, 16, 128>}, {transform_indices = @transform_1, window_bounds = array<i64: 1, 2, 128>}, {pipeline_mode = #tpu.pipeline_mode<synchronous>, transform_indices = @transform_2, window_bounds = array<i64: 128, 128>}, {pipeline_mode = #tpu.pipeline_mode<synchronous>, transform_indices = @transform_3, window_bounds = array<i64: 1, 128>}, {transform_indices = @transform_4, window_bounds = array<i64: 1, 16, 128>}]} {
    %c0 = arith.constant 0 : index
    %c0_0 = arith.constant 0 : index
    %c0_1 = arith.constant 0 : index
    %0 = vector.load %arg1[%c0, %c0_0, %c0_1] : memref<1x16x128xf32, #tpu.memory_space<vmem>>, vector<1x16x128xf32>
    %1 = vector.shape_cast %0 : vector<1x16x128xf32> to vector<16x128xf32>
    %c0_2 = arith.constant 0 : index
    %c0_3 = arith.constant 0 : index
    %c0_4 = arith.constant 0 : index
    %2 = vector.load %arg2[%c0_2, %c0_3, %c0_4] : memref<1x2x128xf32, #tpu.memory_space<vmem>>, vector<1x2x128xf32>
    %3 = vector.shape_cast %2 : vector<1x2x128xf32> to vector<2x128xf32>
    %4 = vector.extract_strided_slice %3 {offsets = [0, 0], sizes = [1, 128], strides = [1, 1]} : vector<2x128xf32> to vector<1x128xf32>
    %5 = vector.extract_strided_slice %3 {offsets = [1, 0], sizes = [1, 128], strides = [1, 1]} : vector<2x128xf32> to vector<1x128xf32>
    %cst = arith.constant dense<0.000000e+00> : vector<16xf32>
    %6 = vector.multi_reduction <add>, %1, %cst [1] : vector<16x128xf32> to vector<16xf32>
    %7 = vector.shape_cast %6 : vector<16xf32> to vector<16x1xf32>
    %cst_5 = arith.constant 1.280000e+02 : f32
    %8 = vector.broadcast %cst_5 : f32 to vector<16x1xf32>
    %9 = arith.divf %7, %8 : vector<16x1xf32>
    %10 = vector.broadcast %9 : vector<16x1xf32> to vector<16x128xf32>
    %11 = arith.subf %1, %10 : vector<16x128xf32>
    %12 = arith.mulf %11, %11 : vector<16x128xf32>
    %cst_6 = arith.constant dense<0.000000e+00> : vector<16xf32>
    %13 = vector.multi_reduction <add>, %12, %cst_6 [1] : vector<16x128xf32> to vector<16xf32>
    %14 = vector.shape_cast %13 : vector<16xf32> to vector<16x1xf32>
    %cst_7 = arith.constant 1.280000e+02 : f32
    %15 = vector.broadcast %cst_7 : f32 to vector<16x1xf32>
    %16 = arith.divf %14, %15 : vector<16x1xf32>
    %17 = vector.broadcast %9 : vector<16x1xf32> to vector<16x128xf32>
    %18 = arith.subf %1, %17 : vector<16x128xf32>
    %cst_8 = arith.constant 9.99999997E-7 : f32
    %19 = vector.broadcast %cst_8 : f32 to vector<16x1xf32>
    %20 = arith.addf %16, %19 : vector<16x1xf32>
    %21 = math.rsqrt %20 : vector<16x1xf32>
    %22 = vector.broadcast %21 : vector<16x1xf32> to vector<16x128xf32>
    %23 = arith.mulf %18, %22 : vector<16x128xf32>
    %cst_9 = arith.constant 1.000000e+00 : f32
    %24 = vector.broadcast %cst_9 : f32 to vector<1x128xf32>
    %25 = arith.addf %24, %5 : vector<1x128xf32>
    %26 = vector.broadcast %25 : vector<1x128xf32> to vector<16x128xf32>
    %27 = arith.mulf %23, %26 : vector<16x128xf32>
    %28 = vector.broadcast %4 : vector<1x128xf32> to vector<16x128xf32>
    %29 = arith.addf %27, %28 : vector<16x128xf32>
    %30 = arith.truncf %29 : vector<16x128xf32> to vector<16x128xbf16>
    %c0_10 = arith.constant 0 : index
    %c0_11 = arith.constant 0 : index
    %31 = vector.load %arg3[%c0_10, %c0_11] : memref<128x128xbf16, #tpu.memory_space<vmem>>, vector<128x128xbf16>
    %cst_12 = arith.constant dense<0.000000e+00> : vector<16x128xf32>
    %32 = tpu.matmul %30, %31, %cst_12 {dimension_numbers = #tpu.dot_dimension_numbers<[1], [0], [0], [1], [0, 0, 1, 1], [], []>} : vector<16x128xbf16>, vector<128x128xbf16>, vector<16x128xf32> -> vector<16x128xf32>
    %c0_13 = arith.constant 0 : index
    %c0_14 = arith.constant 0 : index
    %33 = vector.load %arg4[%c0_13, %c0_14] : memref<1x128xf32, #tpu.memory_space<vmem>>, vector<1x128xf32>
    %34 = vector.broadcast %33 : vector<1x128xf32> to vector<16x128xf32>
    %35 = arith.addf %32, %34 : vector<16x128xf32>
    %c0_15 = arith.constant 0 : index
    %c0_16 = arith.constant 0 : index
    %c0_17 = arith.constant 0 : index
    %36 = vector.load %arg5[%c0_15, %c0_16, %c0_17] : memref<1x16x128xf32, #tpu.memory_space<vmem>>, vector<1x16x128xf32>
    %37 = vector.shape_cast %36 : vector<1x16x128xf32> to vector<16x128xf32>
    %38 = vector.shape_cast %35 : vector<16x128xf32> to vector<1x16x128xf32>
    tpu.vector_store %arg5[%c0_15, %c0_16, %c0_17], %38 {strides = array<i32>} : memref<1x16x128xf32, #tpu.memory_space<vmem>>, vector<1x16x128xf32>,
    return
  }
  func.func @transform_0(%arg0: i32) -> (i32, i32, i32) {
    %c0_i32 = arith.constant 0 : i32
    %c0_i32_0 = arith.constant 0 : i32
    %c0_i32_1 = arith.constant 0 : i32
    return %arg0, %c0_i32, %c0_i32_0 : i32, i32, i32
  }
  func.func @transform_1(%arg0: i32) -> (i32, i32, i32) {
    %c0_i32 = arith.constant 0 : i32
    %c0_i32_0 = arith.constant 0 : i32
    %c0_i32_1 = arith.constant 0 : i32
    return %arg0, %c0_i32, %c0_i32_0 : i32, i32, i32
  }
  func.func @transform_2(%arg0: i32) -> (i32, i32) {
    %c0_i32 = arith.constant 0 : i32
    %c0_i32_0 = arith.constant 0 : i32
    %c0_i32_1 = arith.constant 0 : i32
    return %c0_i32, %c0_i32_0 : i32, i32
  }
  func.func @transform_3(%arg0: i32) -> (i32, i32) {
    %c0_i32 = arith.constant 0 : i32
    %c0_i32_0 = arith.constant 0 : i32
    %c0_i32_1 = arith.constant 0 : i32
    return %c0_i32, %c0_i32_0 : i32, i32
  }
  func.func @transform_4(%arg0: i32) -> (i32, i32, i32) {
    %c0_i32 = arith.constant 0 : i32
    %c0_i32_0 = arith.constant 0 : i32
    %c0_i32_1 = arith.constant 0 : i32
    return %arg0, %c0_i32, %c0_i32_0 : i32, i32, i32
  }
}

</mosaic_0001>

<llo_original>
// kernel: _lambda_.6
$region0: #{_lambda_.6}
  #allocation0 [shape = 'u32[]', space=smem, size = 0x4, offset = 0x4, fixed_abs, tag = 'smem constant byte address 0x4 - core index']
  #allocation1 [shape = 'u32[144,128]{1,0:T(1,128)}', space=vmem, size = 0x12000, scoped, tag = 'internal scratch']
  %s0 = inlined_call_operand.hbm [shape: f32[16,8], index: 0, kind: input, shape index: {}]
  %s1 = inlined_call_operand.hbm [shape: bf16[8,128], index: 1, kind: input, shape index: {}]
  %s2 = inlined_call_operand.hbm [shape: f32[1,128], index: 2, kind: input, shape index: {}]
  %s3 = inlined_call_operand.hbm [shape: f32[16,128], index: 3, kind: output, shape index: {}]
  %s4 = sld [smem:[#allocation0]]
  $region34: #{_lambda_.6} parent=0
    _
  %s6 = ssub.s32 1, %s4
  %s7 = scalar_select 0, %s6, %s4
  $region1: #{_lambda_.6} parent=0
    #allocation2 [shape = 'u8[8192]{0}', space=vmem, size = 0x2000, scoped, tag = 'input window, operand 0, single buffered']
    #allocation3 [shape = 's32[1]{0}', space=sflag, size = 0x4, scoped, tag = 'scoped memory for _lambda_.6']
    #allocation4 [shape = 's32[1]{0}', space=sflag, size = 0x4, scoped, tag = 'scoped memory for _lambda_.6']
    #allocation5 [shape = 'u8[2048]{0}', space=vmem, size = 0x800, scoped, tag = 'input window, operand 1, single buffered']
    #allocation6 [shape = 's32[1]{0}', space=sflag, size = 0x4, scoped, tag = 'scoped memory for _lambda_.6']
    #allocation7 [shape = 'u8[512]{0}', space=vmem, size = 0x400, scoped, tag = 'input window, operand 2, single buffered']
    #allocation8 [shape = 'u8[8192]{0}', space=vmem, size = 0x2000, scoped, tag = 'output window, operand 0, single buffered']
    %8 = vsyncpa [#allocation3], 0
    %9 = vsyncpa [#allocation6], 0
    %10 = vsyncpa [#allocation4], 0
    // Predicated region
    $region2: #{_lambda_.6} parent=1 // pred_check
      _
    $region3: #{_lambda_.6} parent=1 // pred_check_branch
      %12 = sbr.rel (0) target = $region5
    $region4: #{_lambda_.6} parent=1 // pred_region
      %s14 = ssub.s32 256, 256
      %15 = vsyncadd [#allocation3], %s14
      %s16 = sshll.u32 [#allocation2], 4
      %s17 = int_to_ptr.vmem [resolvable:$true] %s16
      %22 = dma.hbm_to_vmem [thread:$0]  %s0, 256, %s17, [#allocation3], 128, 128, 8
    $region5: #{_lambda_.6} parent=1 // pred_fallthru
      _
    // Predicated region
    $region6: #{_lambda_.6} parent=1 // pred_check
      _
    $region7: #{_lambda_.6} parent=1 // pred_check_branch
      %24 = sbr.rel (0) target = $region9
    $region8: #{_lambda_.6} parent=1 // pred_region
      %s26 = ssub.s32 64, 64
      %27 = vsyncadd [#allocation6], %s26
      %s29 = sshll.u32 [#allocation5], 4
      %s30 = int_to_ptr.vmem [resolvable:$true] %s29
      %32 = dma.hbm_to_vmem [thread:$0]  %s1, 64, %s30, [#allocation6]
    $region9: #{_lambda_.6} parent=1 // pred_fallthru
      _
    // Predicated region
    $region10: #{_lambda_.6} parent=1 // pred_check
      _
    $region11: #{_lambda_.6} parent=1 // pred_check_branch
      %34 = sbr.rel (0) target = $region13
    $region12: #{_lambda_.6} parent=1 // pred_region
      %s36 = ssub.s32 16, 16
      %37 = vsyncadd [#allocation6], %s36
      %s39 = sshll.u32 [#allocation7], 4
      %s40 = int_to_ptr.vmem [resolvable:$true] %s39
      %42 = dma.hbm_to_vmem [thread:$0]  %s2, 16, %s40, [#allocation6]
    $region13: #{_lambda_.6} parent=1 // pred_fallthru
      _
    // Predicated region
    $region14: #{_lambda_.6} parent=1 // pred_check
      _
    $region15: #{_lambda_.6} parent=1 // pred_check_branch
      %44 = sbr.rel (0) target = $region17
    $region16: #{_lambda_.6} parent=1 // pred_region
      %45 = dma.done [#allocation3], 256
    $region17: #{_lambda_.6} parent=1 // pred_fallthru
      _
    // Predicated region
    $region18: #{_lambda_.6} parent=1 // pred_check
      _
    $region19: #{_lambda_.6} parent=1 // pred_check_branch
      %47 = sbr.rel (0) target = $region21
    $region20: #{_lambda_.6} parent=1 // pred_region
      %48 = dma.done [#allocation6], 64
    $region21: #{_lambda_.6} parent=1 // pred_fallthru
      _
    // Predicated region
    $region22: #{_lambda_.6} parent=1 // pred_check
      _
    $region23: #{_lambda_.6} parent=1 // pred_check_branch
      %50 = sbr.rel (0) target = $region25
    $region24: #{_lambda_.6} parent=1 // pred_region
      %51 = dma.done [#allocation6], 16
    $region25: #{_lambda_.6} parent=1 // pred_fallthru
      _
    %v53 = vld [vmem:[#allocation2] sm:$0xff]
    %v54 = vld [vmem:[#allocation2 + $0x8] sm:$0xff]
    %v55 = vpack.c.bf16 %v54, %v53
    %v56 = vld [vmem:[#allocation5] sm:$0xf]
    %v57 = vld [vmem:[#allocation7] sm:$0x1]
    %v59 = vlaneseq
    %v60 = vshrl.u32 %v59, 7
    %v61 = vsub.s32 0, %v60
    %v62 = vrot.slane %v57, %v61
    %vm64 = vcmask 64512
    %v66 = vsel %vm64, %v55, 0
    %vm68 = vcmask 1043456
    %v70 = vsel %vm68, %v56, 0
    %72 = vmatprep.subr.bf16.mxu0 0
    %73 = vmatpush1.bf16.msra.mxu0 %v70
    %74 = vmatprep.subr.bf16.mxu0 0
    %75 = vmatpush1.bf16.msra.mxu0 0
    %76 = vmatprep.subr.bf16.mxu0 0
    %77 = vmatpush1.bf16.msra.mxu0 0
    %78 = vmatprep.subr.bf16.mxu0 0
    %79 = vmatpush1.bf16.msra.mxu0 0
    %80 = vmatprep.subr.bf16.mxu0 0
    %81 = vmatpush1.bf16.msra.mxu0 0
    %82 = vmatprep.subr.bf16.mxu0 0
    %83 = vmatpush1.bf16.msra.mxu0 0
    %84 = vmatprep.subr.bf16.mxu0 0
    %85 = vmatpush1.bf16.msra.mxu0 0
    %86 = vmatprep.subr.bf16.mxu0 0
    %87 = vmatpush1.bf16.msra.mxu0 0
    %88 = vmatprep.subr.bf16.mxu0 0
    %89 = vmatpush1.bf16.msra.mxu0 0
    %90 = vmatprep.subr.bf16.mxu0 0
    %91 = vmatpush1.bf16.msra.mxu0 0
    %92 = vmatprep.subr.bf16.mxu0 0
    %93 = vmatpush1.bf16.msra.mxu0 0
    %94 = vmatprep.subr.bf16.mxu0 0
    %95 = vmatpush1.bf16.msra.mxu0 0
    %96 = vmatprep.subr.bf16.mxu0 0
    %97 = vmatpush1.bf16.msra.mxu0 0
    %98 = vmatprep.subr.bf16.mxu0 0
    %99 = vmatpush1.bf16.msra.mxu0 0
    %100 = vmatprep.subr.bf16.mxu0 0
    %101 = vmatpush1.bf16.msra.mxu0 0
    %102 = vmatprep.subr.bf16.mxu0 0
    %103 = vmatpush1.bf16.msra.mxu0 0
    %104 = vmatprep.mubr.bf16.mxu0 0
    %105 = vmatmul.mubr.bf16.gmra.mrb[0].mxu0 %v66
    %v106 = vpop.f32.mrb[0].mxu0
    %v107 = vadd.f32 %v62, %v106
    %v108 = vpop.f32.mrb[0].mxu0
    %v109 = vpop.f32.mrb[0].mxu0
    %v110 = vadd.f32 %v62, %v109
    %v111 = vpop.f32.mrb[0].mxu0
    %112 = vdwg.mxu0
    %113 = vst [vmem:[#allocation8] sm:$0xff] %v107
    %114 = vst [vmem:[#allocation8 + $0x8] sm:$0xff] %v110
    // Predicated region
    $region26: #{_lambda_.6} parent=1 // pred_check
      _
    $region27: #{_lambda_.6} parent=1 // pred_check_branch
      %116 = sbr.rel (0) target = $region29
    $region28: #{_lambda_.6} parent=1 // pred_region
      %s118 = ssub.s32 256, 256
      %119 = vsyncadd [#allocation4], %s118
      %s120 = sshll.u32 [#allocation8], 4
      %s121 = int_to_ptr.vmem [resolvable:$true] %s120
      %126 = dma.vmem_to_hbm [thread:$0]  %s121, 256, %s3, [#allocation4], 128, 128, 8
    $region29: #{_lambda_.6} parent=1 // pred_fallthru
      _
    // Predicated region
    $region30: #{_lambda_.6} parent=1 // pred_check
      _
    $region31: #{_lambda_.6} parent=1 // pred_check_branch
      %128 = sbr.rel (0) target = $region33
    $region32: #{_lambda_.6} parent=1 // pred_region
      %129 = dma.done [#allocation4], 256
    $region33: #{_lambda_.6} parent=1 // pred_fallthru
      _
    %130 = vsyncpa [#allocation3], 1
    %131 = vsyncpa [#allocation6], 1
    %132 = vsyncpa [#allocation4], 1

// kernel: _lambda_.7
$region0: #{_lambda_.7}
  #allocation0 [shape = 'u32[]', space=smem, size = 0x4, offset = 0x4, fixed_abs, tag = 'smem constant byte address 0x4 - core index']
  #allocation1 [shape = 'u32[144,128]{1,0:T(1,128)}', space=vmem, size = 0x12000, scoped, tag = 'internal scratch']
  #allocation2 [shape = 'f32[2,128]{1,0:T(2,128)}', space=vmem, size = 0x400, scoped, tag = 'scratch operand']
  %s0 = inlined_call_operand.hbm [shape: f32[2,256], index: 0, kind: input, shape index: {}]
  %s1 = inlined_call_operand.hbm [shape: f32[2,128], index: 1, kind: input, shape index: {}]
  %s2 = inlined_call_operand.hbm [shape: bf16[256,128], index: 2, kind: input, shape index: {}]
  %s3 = inlined_call_operand.hbm [shape: f32[1,128], index: 3, kind: input, shape index: {}]
  %s4 = inlined_call_operand.hbm [shape: bf16[128,128], index: 4, kind: input, shape index: {}]
  %s5 = inlined_call_operand.hbm [shape: f32[1,128], index: 5, kind: input, shape index: {}]
  %s6 = inlined_call_operand.hbm [shape: bf16[3,128,768], index: 6, kind: input, shape index: {}]
  %s7 = inlined_call_operand.hbm [shape: f32[3,1,768], index: 7, kind: input, shape index: {}]
  %s8 = inlined_call_operand.hbm [shape: f32[3,2,768], index: 8, kind: output, shape index: {}]
  %s9 = sld [smem:[#allocation0]]
  $region101: #{_lambda_.7} parent=0
    _
  %s11 = ssub.s32 1, %s9
  %s12 = scalar_select 0, %s11, %s9
  $region1: #{_lambda_.7} parent=0
    #allocation3 [shape = 'u8[2048]{0}', space=vmem, size = 0x800, scoped, tag = 'input window, operand 0, single buffered']
    #allocation4 [shape = 's32[2]{0}', space=sflag, size = 0x8, scoped, tag = 'scoped memory for _lambda_.7']
    #allocation5 [shape = 's32[2]{0}', space=sflag, size = 0x8, scoped, tag = 'scoped memory for _lambda_.7']
    #allocation6 [shape = 'u8[1024]{0}', space=vmem, size = 0x400, scoped, tag = 'input window, operand 1, single buffered']
    #allocation7 [shape = 's32[1]{0}', space=sflag, size = 0x4, scoped, tag = 'scoped memory for _lambda_.7']
    #allocation8 [shape = 'u8[65536]{0}', space=vmem, size = 0x10000, scoped, tag = 'input window, operand 2, single buffered']
    #allocation9 [shape = 'u8[512]{0}', space=vmem, size = 0x400, scoped, tag = 'input window, operand 3, single buffered']
    #allocation10 [shape = 's32[1]{0}', space=sflag, size = 0x4, scoped, tag = 'scoped memory for _lambda_.7']
    #allocation11 [shape = 'u8[32768]{0}', space=vmem, size = 0x8000, scoped, tag = 'input window, operand 4, single buffered']
    #allocation12 [shape = 'u8[512]{0}', space=vmem, size = 0x400, scoped, tag = 'input window, operand 5, single buffered']
    #allocation13 [shape = 's32[1]{0}', space=sflag, size = 0x4, scoped, tag = 'scoped memory for _lambda_.7']
    #allocation14 [shape = 'u8[393216]{0}', space=vmem, size = 0x60000, scoped, tag = 'input window, operand 6']
    #allocation15 [shape = 'u8[6144]{0}', space=vmem, size = 0x1800, scoped, tag = 'input window, operand 7']
    #allocation16 [shape = 'u8[12288]{0}', space=vmem, size = 0x3000, scoped, tag = 'output window, operand 0']
    %13 = vsyncpa [#allocation4], 0
    %14 = vsyncpa [#allocation7], 0
    %15 = vsyncpa [#allocation10], 0
    %16 = vsyncpa [#allocation13], 0
    %17 = vsyncpa [#allocation5], 0
    %s18 = scalar_lea.sflag [#allocation5], 1
    %19 = vsyncpa %s18, 0
    loop: start=0, step=1, limit=5
    $region2: #{_lambda_.7} parent=1 // loop_pre_header
      _
    $region3: #{_lambda_.7} parent=1 // loop_header
      %s21 = sphi 0, %s25
      %p22 = scmp.ge.s32.totalorder %s21, 5
      %s29 = sphi 0, %s29
      %s31 = sphi 0, %s29
      %s32 = sphi 0, %s31
      %s46 = sphi 0, %s32
      %s50 = sphi 0, %s50
      %s52 = sphi 0, %s50
      %s53 = sphi 0, %s52
      %s67 = sphi 0, %s53
      %s71 = sphi 0, %s71
      %s73 = sphi 0, %s71
      %s74 = sphi 0, %s73
      %s88 = sphi 0, %s74
      %s92 = sphi 0, %s92
      %s94 = sphi 0, %s92
      %s95 = sphi 0, %s94
      %s109 = sphi 0, %s95
      %s113 = sphi 0, %s113
      %s115 = sphi 0, %s113
      %s116 = sphi 0, %s115
      %s130 = sphi 0, %s116
      %s134 = sphi 0, %s134
      %s136 = sphi 0, %s134
      %s137 = sphi 0, %s136
      %s151 = sphi 0, %s137
      %s157 = sphi 0, %s159
      %s160 = sphi 0, %s157
      %s161 = sphi 0, %s160
      %s177 = sphi 0, %s161
      %s183 = sphi 0, %s185
      %s186 = sphi 0, %s183
      %s187 = sphi 0, %s186
      %s203 = sphi 0, %s187
      %s209 = sphi 0, %s211
      %s212 = sphi 0, %s209
      %s213 = sphi 0, %s212
      %s229 = sphi 0, %s213
    $region4: #{_lambda_.7} parent=1 // loop_header_branch
      %24 = sbr.rel (%p22) target = $region8
    $region5: #{_lambda_.7} parent=1 // loop_body
      %s26 = ssub.s32 %s21, 1
      %s27 = ssub.s32 %s21, 2
      %s28 = sadd.s32 %s21, 1
      %s30 = sadd.s32 %s29, 1
      %p33 = scmp.eq.s32.totalorder %s21, 2
      %p34 = scmp.ne.s32.totalorder %s29, %s31
      %p35 = scmp.eq.s32.totalorder %s21, 0
      %p36 = por %p34, %p35
      %p37 = scmp.ne.s32.totalorder %s29, %s31
      %p38 = scmp.eq.s32.totalorder %s26, 2
      %p39 = por %p37, %p38
      %p40 = scmp.ne.s32.totalorder %s31, %s32
      %p41 = scmp.eq.s32.totalorder %s26, 0
      %p42 = por %p40, %p41
      %p43 = scmp.ne.s32.totalorder %s31, %s32
      %p44 = scmp.eq.s32.totalorder %s27, 2
      %p45 = por %p43, %p44
      %p47 = scmp.ne.s32.totalorder %s32, %s46
      %p48 = scmp.eq.s32.totalorder %s27, 0
      %p49 = por %p47, %p48
      %s51 = sadd.s32 %s50, 1
      %p54 = scmp.eq.s32.totalorder %s21, 2
      %p55 = scmp.ne.s32.totalorder %s50, %s52
      %p56 = scmp.eq.s32.totalorder %s21, 0
      %p57 = por %p55, %p56
      %p58 = scmp.ne.s32.totalorder %s50, %s52
      %p59 = scmp.eq.s32.totalorder %s26, 2
      %p60 = por %p58, %p59
      %p61 = scmp.ne.s32.totalorder %s52, %s53
      %p62 = scmp.eq.s32.totalorder %s26, 0
      %p63 = por %p61, %p62
      %p64 = scmp.ne.s32.totalorder %s52, %s53
      %p65 = scmp.eq.s32.totalorder %s27, 2
      %p66 = por %p64, %p65
      %p68 = scmp.ne.s32.totalorder %s53, %s67
      %p69 = scmp.eq.s32.totalorder %s27, 0
      %p70 = por %p68, %p69
      %s72 = sadd.s32 %s71, 1
      %p75 = scmp.eq.s32.totalorder %s21, 2
      %p76 = scmp.ne.s32.totalorder %s71, %s73
      %p77 = scmp.eq.s32.totalorder %s21, 0
      %p78 = por %p76, %p77
      %p79 = scmp.ne.s32.totalorder %s71, %s73
      %p80 = scmp.eq.s32.totalorder %s26, 2
      %p81 = por %p79, %p80
      %p82 = scmp.ne.s32.totalorder %s73, %s74
      %p83 = scmp.eq.s32.totalorder %s26, 0
      %p84 = por %p82, %p83
      %p85 = scmp.ne.s32.totalorder %s73, %s74
      %p86 = scmp.eq.s32.totalorder %s27, 2
      %p87 = por %p85, %p86
      %p89 = scmp.ne.s32.totalorder %s74, %s88
      %p90 = scmp.eq.s32.totalorder %s27, 0
      %p91 = por %p89, %p90
      %s93 = sadd.s32 %s92, 1
      %p96 = scmp.eq.s32.totalorder %s21, 2
      %p97 = scmp.ne.s32.totalorder %s92, %s94
      %p98 = scmp.eq.s32.totalorder %s21, 0
      %p99 = por %p97, %p98
      %p100 = scmp.ne.s32.totalorder %s92, %s94
      %p101 = scmp.eq.s32.totalorder %s26, 2
      %p102 = por %p100, %p101
      %p103 = scmp.ne.s32.totalorder %s94, %s95
      %p104 = scmp.eq.s32.totalorder %s26, 0
      %p105 = por %p103, %p104
      %p106 = scmp.ne.s32.totalorder %s94, %s95
      %p107 = scmp.eq.s32.totalorder %s27, 2
      %p108 = por %p106, %p107
      %p110 = scmp.ne.s32.totalorder %s95, %s109
      %p111 = scmp.eq.s32.totalorder %s27, 0
      %p112 = por %p110, %p111
      %s114 = sadd.s32 %s113, 1
      %p117 = scmp.eq.s32.totalorder %s21, 2
      %p118 = scmp.ne.s32.totalorder %s113, %s115
      %p119 = scmp.eq.s32.totalorder %s21, 0
      %p120 = por %p118, %p119
      %p121 = scmp.ne.s32.totalorder %s113, %s115
      %p122 = scmp.eq.s32.totalorder %s26, 2
      %p123 = por %p121, %p122
      %p124 = scmp.ne.s32.totalorder %s115, %s116
      %p125 = scmp.eq.s32.totalorder %s26, 0
      %p126 = por %p124, %p125
      %p127 = scmp.ne.s32.totalorder %s115, %s116
      %p128 = scmp.eq.s32.totalorder %s27, 2
      %p129 = por %p127, %p128
      %p131 = scmp.ne.s32.totalorder %s116, %s130
      %p132 = scmp.eq.s32.totalorder %s27, 0
      %p133 = por %p131, %p132
      %s135 = sadd.s32 %s134, 1
      %p138 = scmp.eq.s32.totalorder %s21, 2
      %p139 = scmp.ne.s32.totalorder %s134, %s136
      %p140 = scmp.eq.s32.totalorder %s21, 0
      %p141 = por %p139, %p140
      %p142 = scmp.ne.s32.totalorder %s134, %s136
      %p143 = scmp.eq.s32.totalorder %s26, 2
      %p144 = por %p142, %p143
      %p145 = scmp.ne.s32.totalorder %s136, %s137
      %p146 = scmp.eq.s32.totalorder %s26, 0
      %p147 = por %p145, %p146
      %p148 = scmp.ne.s32.totalorder %s136, %s137
      %p149 = scmp.eq.s32.totalorder %s27, 2
      %p150 = por %p148, %p149
      %p152 = scmp.ne.s32.totalorder %s137, %s151
      %p153 = scmp.eq.s32.totalorder %s27, 0
      %p154 = por %p152, %p153
      %s155 = ssub.s32 %s21, %s28
      %p156 = scmp.eq.s32.totalorder %s155, 0
      %s158 = sadd.s32 %s157, 1
      %s159 = scalar_select %p156, %s157, %s158
      %p162 = pneg %p156
      %p163 = scmp.eq.s32.totalorder %s21, 2
      %p164 = por %p162, %p163
      %p165 = scmp.ne.s32.totalorder %s157, %s160
      %p166 = scmp.eq.s32.totalorder %s21, 0
      %p167 = por %p165, %p166
      %p168 = scmp.ne.s32.totalorder %s157, %s160
      %p169 = scmp.eq.s32.totalorder %s26, 2
      %p170 = por %p168, %p169
      %p171 = scmp.ne.s32.totalorder %s160, %s161
      %p172 = scmp.eq.s32.totalorder %s26, 0
      %p173 = por %p171, %p172
      %p174 = scmp.ne.s32.totalorder %s160, %s161
      %p175 = scmp.eq.s32.totalorder %s27, 2
      %p176 = por %p174, %p175
      %p178 = scmp.ne.s32.totalorder %s161, %s177
      %p179 = scmp.eq.s32.totalorder %s27, 0
      %p180 = por %p178, %p179
      %s181 = ssub.s32 %s21, %s28
      %p182 = scmp.eq.s32.totalorder %s181, 0
      %s184 = sadd.s32 %s183, 1
      %s185 = scalar_select %p182, %s183, %s184
      %p188 = pneg %p182
      %p189 = scmp.eq.s32.totalorder %s21, 2
      %p190 = por %p188, %p189
      %p191 = scmp.ne.s32.totalorder %s183, %s186
      %p192 = scmp.eq.s32.totalorder %s21, 0
      %p193 = por %p191, %p192
      %p194 = scmp.ne.s32.totalorder %s183, %s186
      %p195 = scmp.eq.s32.totalorder %s26, 2
      %p196 = por %p194, %p195
      %p197 = scmp.ne.s32.totalorder %s186, %s187
      %p198 = scmp.eq.s32.totalorder %s26, 0
      %p199 = por %p197, %p198
      %p200 = scmp.ne.s32.totalorder %s186, %s187
      %p201 = scmp.eq.s32.totalorder %s27, 2
      %p202 = por %p200, %p201
      %p204 = scmp.ne.s32.totalorder %s187, %s203
      %p205 = scmp.eq.s32.totalorder %s27, 0
      %p206 = por %p204, %p205
      %s207 = ssub.s32 %s21, %s28
      %p208 = scmp.eq.s32.totalorder %s207, 0
      %s210 = sadd.s32 %s209, 1
      %s211 = scalar_select %p208, %s209, %s210
      %p214 = pneg %p208
      %p215 = scmp.eq.s32.totalorder %s21, 2
      %p216 = por %p214, %p215
      %p217 = scmp.ne.s32.totalorder %s209, %s212
      %p218 = scmp.eq.s32.totalorder %s21, 0
      %p219 = por %p217, %p218
      %p220 = scmp.ne.s32.totalorder %s209, %s212
      %p221 = scmp.eq.s32.totalorder %s26, 2
      %p222 = por %p220, %p221
      %p223 = scmp.ne.s32.totalorder %s212, %s213
      %p224 = scmp.eq.s32.totalorder %s26, 0
      %p225 = por %p223, %p224
      %p226 = scmp.ne.s32.totalorder %s212, %s213
      %p227 = scmp.eq.s32.totalorder %s27, 2
      %p228 = por %p226, %p227
      %p230 = scmp.ne.s32.totalorder %s213, %s229
      %p231 = scmp.eq.s32.totalorder %s27, 0
      %p232 = por %p230, %p231
      %p233 = scmp.le.s32.totalorder 1, %s21
      %p234 = scmp.lt.s32.totalorder %s21, 4
      %p235 = pnand %p233, %p234
      %p236 = pneg %p235
      // Predicated region
      $region9: #{_lambda_.7} parent=5 // pred_check
        _
      $region10: #{_lambda_.7} parent=5 // pred_check_branch
        %238 = sbr.rel (%p235) target = $region12
      $region11: #{_lambda_.7} parent=5 // pred_region
        %s239 = ssub.s32 %s21, 1
        // Predicated region
        $region13: #{_lambda_.7} parent=11 // pred_check
          %p240 = pneg %p42
        $region14: #{_lambda_.7} parent=11 // pred_check_branch
          %242 = sbr.rel (%p240) target = $region16
        $region15: #{_lambda_.7} parent=11 // pred_region
          %s244 = ssub.s32 64, 64
          %245 = vsyncadd [#allocation4], %s244
          %s247 = sshll.u32 [#allocation3], 4
          %s248 = int_to_ptr.vmem [resolvable:$true] %s247
          %250 = dma.hbm_to_vmem [thread:$0]  %s0, 64, %s248, [#allocation4]
        $region16: #{_lambda_.7} parent=11 // pred_fallthru
          _
        // Predicated region
        $region17: #{_lambda_.7} parent=11 // pred_check
          %p251 = pneg %p63
        $region18: #{_lambda_.7} parent=11 // pred_check_branch
          %253 = sbr.rel (%p251) target = $region20
        $region19: #{_lambda_.7} parent=11 // pred_region
          %s255 = ssub.s32 32, 32
          %256 = vsyncadd [#allocation7], %s255
          %s258 = sshll.u32 [#allocation6], 4
          %s259 = int_to_ptr.vmem [resolvable:$true] %s258
          %261 = dma.hbm_to_vmem [thread:$0]  %s1, 32, %s259, [#allocation7]
        $region20: #{_lambda_.7} parent=11 // pred_fallthru
          _
        // Predicated region
        $region21: #{_lambda_.7} parent=11 // pred_check
          %p262 = pneg %p84
        $region22: #{_lambda_.7} parent=11 // pred_check_branch
          %264 = sbr.rel (%p262) target = $region24
        $region23: #{_lambda_.7} parent=11 // pred_region
          %s266 = ssub.s32 2048, 2048
          %267 = vsyncadd [#allocation7], %s266
          %s268 = sshll.u32 [#allocation8], 4
          %s269 = int_to_ptr.vmem [resolvable:$true] %s268
          %274 = dma.hbm_to_vmem [thread:$0]  %s2, 2048, %s269, [#allocation7], 64, 64, 4
        $region24: #{_lambda_.7} parent=11 // pred_fallthru
          _
        // Predicated region
        $region25: #{_lambda_.7} parent=11 // pred_check
          %p275 = pneg %p105
        $region26: #{_lambda_.7} parent=11 // pred_check_branch
          %277 = sbr.rel (%p275) target = $region28
        $region27: #{_lambda_.7} parent=11 // pred_region
          %s279 = ssub.s32 16, 16
          %280 = vsyncadd [#allocation10], %s279
          %s282 = sshll.u32 [#allocation9], 4
          %s283 = int_to_ptr.vmem [resolvable:$true] %s282
          %285 = dma.hbm_to_vmem [thread:$0]  %s3, 16, %s283, [#allocation10]
        $region28: #{_lambda_.7} parent=11 // pred_fallthru
          _
        // Predicated region
        $region29: #{_lambda_.7} parent=11 // pred_check
          %p286 = pneg %p126
        $region30: #{_lambda_.7} parent=11 // pred_check_branch
          %288 = sbr.rel (%p286) target = $region32
        $region31: #{_lambda_.7} parent=11 // pred_region
          %s290 = ssub.s32 1024, 1024
          %291 = vsyncadd [#allocation10], %s290
          %s292 = sshll.u32 [#allocation11], 4
          %s293 = int_to_ptr.vmem [resolvable:$true] %s292
          %298 = dma.hbm_to_vmem [thread:$0]  %s4, 1024, %s293, [#allocation10], 64, 64, 4
        $region32: #{_lambda_.7} parent=11 // pred_fallthru
          _
        // Predicated region
        $region33: #{_lambda_.7} parent=11 // pred_check
          %p299 = pneg %p147
        $region34: #{_lambda_.7} parent=11 // pred_check_branch
          %301 = sbr.rel (%p299) target = $region36
        $region35: #{_lambda_.7} parent=11 // pred_region
          %s303 = ssub.s32 16, 16
          %304 = vsyncadd [#allocation13], %s303
          %s306 = sshll.u32 [#allocation12], 4
          %s307 = int_to_ptr.vmem [resolvable:$true] %s306
          %309 = dma.hbm_to_vmem [thread:$0]  %s5, 16, %s307, [#allocation13]
        $region36: #{_lambda_.7} parent=11 // pred_fallthru
          _
      $region12: #{_lambda_.7} parent=5 // pred_fallthru
        _
      %p310 = scmp.lt.s32.totalorder %s21, 3
      // Predicated region
      $region37: #{_lambda_.7} parent=5 // pred_check
        %p311 = pneg %p310
      $region38: #{_lambda_.7} parent=5 // pred_check_branch
        %313 = sbr.rel (%p311) target = $region40
      $region39: #{_lambda_.7} parent=5 // pred_region
        // Predicated region
        $region41: #{_lambda_.7} parent=39 // pred_check
          %p314 = pneg %p167
        $region42: #{_lambda_.7} parent=39 // pred_check_branch
          %316 = sbr.rel (%p314) target = $region44
        $region43: #{_lambda_.7} parent=39 // pred_region
          %s317 = sand.u32 %s21, 1
          %s318 = scalar_lea.sflag [#allocation4], %s317
          %s319 = sand.u32 %s157, 1
          %s320 = smul.addr %s319, 384
          %s321 = scalar_lea.vmem [#allocation14], %s320
          %s323 = ssub.s32 6144, 6144
          %324 = vsyncadd %s318, %s323
          %s325 = smul.addr %s21, 96
          %s326 = smul.addr %s325, 64
          %s327 = scalar_lea.hbm %s6, %s326
          %s328 = sshll.u32 %s321, 4
          %s329 = int_to_ptr.vmem [resolvable:$true] %s328
          %334 = dma.hbm_to_vmem [thread:$0]  %s327, 6144, %s329, %s318, 384, 384, 24
        $region44: #{_lambda_.7} parent=39 // pred_fallthru
          _
        // Predicated region
        $region45: #{_lambda_.7} parent=39 // pred_check
          %p335 = pneg %p193
        $region46: #{_lambda_.7} parent=39 // pred_check_branch
          %337 = sbr.rel (%p335) target = $region48
        $region47: #{_lambda_.7} parent=39 // pred_region
          %s338 = sand.u32 %s21, 1
          %s339 = scalar_lea.sflag [#allocation4], %s338
          %s340 = sand.u32 %s183, 1
          %s341 = smul.addr %s340, 6
          %s342 = scalar_lea.vmem [#allocation15], %s341
          %s344 = ssub.s32 96, 96
          %345 = vsyncadd %s339, %s344
          %s346 = smul.addr %s21, 6
          %s347 = smul.addr %s346, 16
          %s348 = scalar_lea.hbm %s7, %s347
          %s350 = sshll.u32 %s342, 4
          %s351 = int_to_ptr.vmem [resolvable:$true] %s350
          %353 = dma.hbm_to_vmem [thread:$0]  %s348, 96, %s351, %s339
        $region48: #{_lambda_.7} parent=39 // pred_fallthru
          _
      $region40: #{_lambda_.7} parent=5 // pred_fallthru
        _
      %p354 = scmp.le.s32.totalorder 1, %s21
      %p355 = scmp.lt.s32.totalorder %s21, 4
      %p356 = pnand %p354, %p355
      %p357 = pneg %p356
      // Predicated region
      $region49: #{_lambda_.7} parent=5 // pred_check
        _
      $region50: #{_lambda_.7} parent=5 // pred_check_branch
        %359 = sbr.rel (%p356) target = $region52
      $region51: #{_lambda_.7} parent=5 // pred_region
        %s360 = ssub.s32 %s21, 1
        // Predicated region
        $region53: #{_lambda_.7} parent=51 // pred_check
          %p361 = pneg %p42
        $region54: #{_lambda_.7} parent=51 // pred_check_branch
          %363 = sbr.rel (%p361) target = $region56
        $region55: #{_lambda_.7} parent=51 // pred_region
          %364 = dma.done [#allocation4], 64
        $region56: #{_lambda_.7} parent=51 // pred_fallthru
          _
        // Predicated region
        $region57: #{_lambda_.7} parent=51 // pred_check
          %p365 = pneg %p63
        $region58: #{_lambda_.7} parent=51 // pred_check_branch
          %367 = sbr.rel (%p365) target = $region60
        $region59: #{_lambda_.7} parent=51 // pred_region
          %368 = dma.done [#allocation7], 32
        $region60: #{_lambda_.7} parent=51 // pred_fallthru
          _
        // Predicated region
        $region61: #{_lambda_.7} parent=51 // pred_check
          %p369 = pneg %p84
        $region62: #{_lambda_.7} parent=51 // pred_check_branch
          %371 = sbr.rel (%p369) target = $region64
        $region63: #{_lambda_.7} parent=51 // pred_region
          %372 = dma.done [#allocation7], 2048
        $region64: #{_lambda_.7} parent=51 // pred_fallthru
          _
        // Predicated region
        $region65: #{_lambda_.7} parent=51 // pred_check
          %p373 = pneg %p105
        $region66: #{_lambda_.7} parent=51 // pred_check_branch
          %375 = sbr.rel (%p373) target = $region68
        $region67: #{_lambda_.7} parent=51 // pred_region
          %376 = dma.done [#allocation10], 16
        $region68: #{_lambda_.7} parent=51 // pred_fallthru
          _
        // Predicated region
        $region69: #{_lambda_.7} parent=51 // pred_check
          %p377 = pneg %p126
        $region70: #{_lambda_.7} parent=51 // pred_check_branch
          %379 = sbr.rel (%p377) target = $region72
        $region71: #{_lambda_.7} parent=51 // pred_region
          %380 = dma.done [#allocation10], 1024
        $region72: #{_lambda_.7} parent=51 // pred_fallthru
          _
        // Predicated region
        $region73: #{_lambda_.7} parent=51 // pred_check
          %p381 = pneg %p147
        $region74: #{_lambda_.7} parent=51 // pred_check_branch
          %383 = sbr.rel (%p381) target = $region76
        $region75: #{_lambda_.7} parent=51 // pred_region
          %384 = dma.done [#allocation13], 16
        $region76: #{_lambda_.7} parent=51 // pred_fallthru
          _
        %s385 = sand.u32 %s26, 1
        %s386 = scalar_lea.sflag [#allocation4], %s385
        %s387 = sand.u32 %s160, 1
        %s388 = smul.addr %s387, 384
        %s389 = scalar_lea.vmem [#allocation14], %s388
        // Predicated region
        $region77: #{_lambda_.7} parent=51 // pred_check
          %p390 = pneg %p173
        $region78: #{_lambda_.7} parent=51 // pred_check_branch
          %392 = sbr.rel (%p390) target = $region80
        $region79: #{_lambda_.7} parent=51 // pred_region
          %393 = dma.done %s386, 6144
        $region80: #{_lambda_.7} parent=51 // pred_fallthru
          _
        %s394 = sand.u32 %s26, 1
        %s395 = scalar_lea.sflag [#allocation4], %s394
        %s396 = sand.u32 %s186, 1
        %s397 = smul.addr %s396, 6
        %s398 = scalar_lea.vmem [#allocation15], %s397
        // Predicated region
        $region81: #{_lambda_.7} parent=51 // pred_check
          %p399 = pneg %p199
        $region82: #{_lambda_.7} parent=51 // pred_check_branch
          %401 = sbr.rel (%p399) target = $region84
        $region83: #{_lambda_.7} parent=51 // pred_region
          %402 = dma.done %s395, 96
        $region84: #{_lambda_.7} parent=51 // pred_fallthru
          _
        %p403 = pneg %p42
        %p404 = pneg %p39
        %p405 = pneg %p63
        %p406 = pneg %p60
        %p407 = pneg %p84
        %p408 = pneg %p81
        %p409 = pneg %p105
        %p410 = pneg %p102
        %p411 = pneg %p126
        %p412 = pneg %p123
        %p413 = pneg %p147
        %p414 = pneg %p144
        %s415 = sand.u32 %s26, 1
        %s416 = scalar_lea.sflag [#allocation4], %s415
        %s417 = sand.u32 %s160, 1
        %s418 = smul.addr %s417, 384
        %s419 = scalar_lea.vmem [#allocation14], %s418
        %p420 = pneg %p173
        %p421 = pneg %p170
        %s422 = sand.u32 %s26, 1
        %s423 = scalar_lea.sflag [#allocation4], %s422
        %s424 = sand.u32 %s186, 1
        %s425 = smul.addr %s424, 6
        %s426 = scalar_lea.vmem [#allocation15], %s425
        %p427 = pneg %p199
        %p428 = pneg %p196
        %p429 = pneg %p225
        %p430 = pneg %p222
        %s431 = sand.u32 %s212, 1
        %s432 = scalar_lea.sflag [#allocation5], %s431
        %s433 = sand.u32 %s212, 1
        %s434 = smul.addr %s433, 12
        %s435 = scalar_lea.vmem [#allocation16], %s434
        %p437 = scmp.eq.s32.totalorder %s26, 0
        // Predicated region
        $region85: #{_lambda_.7} parent=51 // pred_check
          %p438 = pneg %p437
        $region86: #{_lambda_.7} parent=51 // pred_check_branch
          %440 = sbr.rel (%p438) target = $region88
        $region87: #{_lambda_.7} parent=51 // pred_region
          %v441 = vld [vmem:[#allocation3] sm:$0xf]
          %v444 = vunpack.c.l.s4 1983009808
          %v445 = vunpack.c.0.s8 %v444
          %v446 = vlaneseq
          %v447 = vshrl.u32 %v446, 7
          %v448 = vsub.s32 %v445, %v447
          %v449 = vrot.slane %v441, %v448
          %v450 = vcombine.high %v449, %v449
          %v453 = vpack.c.bf16 %v449, %v449
          %v454 = vpack.c.bf16 %v450, %v450
          %v455 = vld [vmem:[#allocation8] sm:$0xf]
          %v456 = vld [vmem:[#allocation8 + $0x4] sm:$0xf]
          %v457 = vld [vmem:[#allocation8 + $0x8] sm:$0xf]
          %v458 = vld [vmem:[#allocation8 + $0xc] sm:$0xf]
          %v459 = vld [vmem:[#allocation8 + $0x10] sm:$0xf]
          %v460 = vld [vmem:[#allocation8 + $0x14] sm:$0xf]
          %v461 = vld [vmem:[#allocation8 + $0x18] sm:$0xf]
          %v462 = vld [vmem:[#allocation8 + $0x1c] sm:$0xf]
          %v463 = vld [vmem:[#allocation8 + $0x20] sm:$0xf]
          %v464 = vld [vmem:[#allocation8 + $0x24] sm:$0xf]
          %v465 = vld [vmem:[#allocation8 + $0x28] sm:$0xf]
          %v466 = vld [vmem:[#allocation8 + $0x2c] sm:$0xf]
          %v467 = vld [vmem:[#allocation8 + $0x30] sm:$0xf]
          %v468 = vld [vmem:[#allocation8 + $0x34] sm:$0xf]
          %v469 = vld [vmem:[#allocation8 + $0x38] sm:$0xf]
          %v470 = vld [vmem:[#allocation8 + $0x3c] sm:$0xf]
          %v471 = vld [vmem:[#allocation8 + $0x40] sm:$0xf]
          %v472 = vld [vmem:[#allocation8 + $0x44] sm:$0xf]
          %v473 = vld [vmem:[#allocation8 + $0x48] sm:$0xf]
          %v474 = vld [vmem:[#allocation8 + $0x4c] sm:$0xf]
          %v475 = vld [vmem:[#allocation8 + $0x50] sm:$0xf]
          %v476 = vld [vmem:[#allocation8 + $0x54] sm:$0xf]
          %v477 = vld [vmem:[#allocation8 + $0x58] sm:$0xf]
          %v478 = vld [vmem:[#allocation8 + $0x5c] sm:$0xf]
          %v479 = vld [vmem:[#allocation8 + $0x60] sm:$0xf]
          %v480 = vld [vmem:[#allocation8 + $0x64] sm:$0xf]
          %v481 = vld [vmem:[#allocation8 + $0x68] sm:$0xf]
          %v482 = vld [vmem:[#allocation8 + $0x6c] sm:$0xf]
          %v483 = vld [vmem:[#allocation8 + $0x70] sm:$0xf]
          %v484 = vld [vmem:[#allocation8 + $0x74] sm:$0xf]
          %v485 = vld [vmem:[#allocation8 + $0x78] sm:$0xf]
          %v486 = vld [vmem:[#allocation8 + $0x7c] sm:$0xf]
          %v487 = vld [vmem:[#allocation9] sm:$0x1]
          %v489 = vlaneseq
          %v490 = vshrl.u32 %v489, 7
          %v491 = vsub.s32 0, %v490
          %v492 = vrot.slane %v487, %v491
          %v526 = vunpack.c.l.b16 %v455
          %v527 = vunpack.c.l.b16 %v456
          %v528 = vunpack.c.l.b16 %v457
          %v529 = vunpack.c.l.b16 %v458
          %v530 = vunpack.c.l.b16 %v459
          %v531 = vunpack.c.l.b16 %v460
          %v532 = vunpack.c.l.b16 %v461
          %v533 = vunpack.c.l.b16 %v462
          %v534 = vunpack.c.l.b16 %v463
          %v535 = vunpack.c.l.b16 %v464
          %v536 = vunpack.c.l.b16 %v465
          %v537 = vunpack.c.l.b16 %v466
          %v538 = vunpack.c.l.b16 %v467
          %v539 = vunpack.c.l.b16 %v468
          %v540 = vunpack.c.l.b16 %v469
          %v541 = vunpack.c.l.b16 %v470
          %v542 = vunpack.c.l.b16 %v471
          %v543 = vunpack.c.l.b16 %v472
          %v544 = vunpack.c.l.b16 %v473
          %v545 = vunpack.c.l.b16 %v474
          %v546 = vunpack.c.l.b16 %v475
          %v547 = vunpack.c.l.b16 %v476
          %v548 = vunpack.c.l.b16 %v477
          %v549 = vunpack.c.l.b16 %v478
          %v550 = vunpack.c.l.b16 %v479
          %v551 = vunpack.c.l.b16 %v480
          %v552 = vunpack.c.l.b16 %v481
          %v553 = vunpack.c.l.b16 %v482
          %v554 = vunpack.c.l.b16 %v483
          %v555 = vunpack.c.l.b16 %v484
          %v556 = vunpack.c.l.b16 %v485
          %v557 = vunpack.c.l.b16 %v486
          %v558 = vpack.c.b16 %v527, %v526
          %v559 = vpack.c.b16 %v529, %v528
          %v560 = vpack.c.b16 %v531, %v530
          %v561 = vpack.c.b16 %v533, %v532
          %v562 = vpack.c.b16 %v535, %v534
          %v563 = vpack.c.b16 %v537, %v536
          %v564 = vpack.c.b16 %v539, %v538
          %v565 = vpack.c.b16 %v541, %v540
          %v566 = vpack.c.b16 %v543, %v542
          %v567 = vpack.c.b16 %v545, %v544
          %v568 = vpack.c.b16 %v547, %v546
          %v569 = vpack.c.b16 %v549, %v548
          %v570 = vpack.c.b16 %v551, %v550
          %v571 = vpack.c.b16 %v553, %v552
          %v572 = vpack.c.b16 %v555, %v554
          %v573 = vpack.c.b16 %v557, %v556
          %590 = vmatprep.subr.bf16.mxu0 0
          %591 = vmatpush1.bf16.msra.mxu0 %v558
          %592 = vmatprep.subr.bf16.mxu0 0
          %593 = vmatpush1.bf16.msra.mxu0 %v559
          %594 = vmatprep.subr.bf16.mxu0 0
          %595 = vmatpush1.bf16.msra.mxu0 %v560
          %596 = vmatprep.subr.bf16.mxu0 0
          %597 = vmatpush1.bf16.msra.mxu0 %v561
          %598 = vmatprep.subr.bf16.mxu0 0
          %599 = vmatpush1.bf16.msra.mxu0 %v562
          %600 = vmatprep.subr.bf16.mxu0 0
          %601 = vmatpush1.bf16.msra.mxu0 %v563
          %602 = vmatprep.subr.bf16.mxu0 0
          %603 = vmatpush1.bf16.msra.mxu0 %v564
          %604 = vmatprep.subr.bf16.mxu0 0
          %605 = vmatpush1.bf16.msra.mxu0 %v565
          %606 = vmatprep.subr.bf16.mxu0 0
          %607 = vmatpush1.bf16.msra.mxu0 %v566
          %608 = vmatprep.subr.bf16.mxu0 0
          %609 = vmatpush1.bf16.msra.mxu0 %v567
          %610 = vmatprep.subr.bf16.mxu0 0
          %611 = vmatpush1.bf16.msra.mxu0 %v568
          %612 = vmatprep.subr.bf16.mxu0 0
          %613 = vmatpush1.bf16.msra.mxu0 %v569
          %614 = vmatprep.subr.bf16.mxu0 0
          %615 = vmatpush1.bf16.msra.mxu0 %v570
          %616 = vmatprep.subr.bf16.mxu0 0
          %617 = vmatpush1.bf16.msra.mxu0 %v571
          %618 = vmatprep.subr.bf16.mxu0 0
          %619 = vmatpush1.bf16.msra.mxu0 %v572
          %620 = vmatprep.subr.bf16.mxu0 0
          %621 = vmatpush1.bf16.msra.mxu0 %v573
          %622 = vmatprep.mubr.bf16.mxu0 %v454
          %623 = vmatmul.mubr.bf16.gmra.mrb[0].mxu0 %v453
          %v624 = vpop.f32.mrb[0].mxu0
          %v625 = vadd.f32 %v492, %v624
          %v626 = vpop.f32.mrb[0].mxu0
          %v627 = vpop.f32.mrb[0].mxu0
          %v628 = vpop.f32.mrb[0].mxu0
          %629 = vdwg.mxu0
          %v630 = vxor.u32 %v625, 2147483648
          %v631 = vmul.f32 %v630, 1.442695
          %v632 = vpow.pop %v631
          %v633 = vadd.f32 %v632, 1.0
          %v634 = vrcp.pop %v633
          %v635 = vmul.f32 1.0, %v634
          %v636 = vmul.f32 %v625, %v635
          %v637 = vpack.c.bf16 %v636, %v636
          %v638 = vld [vmem:[#allocation11] sm:$0xf]
          %v639 = vld [vmem:[#allocation11 + $0x4] sm:$0xf]
          %v640 = vld [vmem:[#allocation11 + $0x8] sm:$0xf]
          %v641 = vld [vmem:[#allocation11 + $0xc] sm:$0xf]
          %v642 = vld [vmem:[#allocation11 + $0x10] sm:$0xf]
          %v643 = vld [vmem:[#allocation11 + $0x14] sm:$0xf]
          %v644 = vld [vmem:[#allocation11 + $0x18] sm:$0xf]
          %v645 = vld [vmem:[#allocation11 + $0x1c] sm:$0xf]
          %v646 = vld [vmem:[#allocation11 + $0x20] sm:$0xf]
          %v647 = vld [vmem:[#allocation11 + $0x24] sm:$0xf]
          %v648 = vld [vmem:[#allocation11 + $0x28] sm:$0xf]
          %v649 = vld [vmem:[#allocation11 + $0x2c] sm:$0xf]
          %v650 = vld [vmem:[#allocation11 + $0x30] sm:$0xf]
          %v651 = vld [vmem:[#allocation11 + $0x34] sm:$0xf]
          %v652 = vld [vmem:[#allocation11 + $0x38] sm:$0xf]
          %v653 = vld [vmem:[#allocation11 + $0x3c] sm:$0xf]
          %v654 = vld [vmem:[#allocation12] sm:$0x1]
          %v656 = vlaneseq
          %v657 = vshrl.u32 %v656, 7
          %v658 = vsub.s32 0, %v657
          %v659 = vrot.slane %v654, %v658
          %v677 = vunpack.c.l.b16 %v638
          %v678 = vunpack.c.l.b16 %v639
          %v679 = vunpack.c.l.b16 %v640
          %v680 = vunpack.c.l.b16 %v641
          %v681 = vunpack.c.l.b16 %v642
          %v682 = vunpack.c.l.b16 %v643
          %v683 = vunpack.c.l.b16 %v644
          %v684 = vunpack.c.l.b16 %v645
          %v685 = vunpack.c.l.b16 %v646
          %v686 = vunpack.c.l.b16 %v647
          %v687 = vunpack.c.l.b16 %v648
          %v688 = vunpack.c.l.b16 %v649
          %v689 = vunpack.c.l.b16 %v650
          %v690 = vunpack.c.l.b16 %v651
          %v691 = vunpack.c.l.b16 %v652
          %v692 = vunpack.c.l.b16 %v653
          %v693 = vpack.c.b16 %v678, %v677
          %v694 = vpack.c.b16 %v680, %v679
          %v695 = vpack.c.b16 %v682, %v681
          %v696 = vpack.c.b16 %v684, %v683
          %v697 = vpack.c.b16 %v686, %v685
          %v698 = vpack.c.b16 %v688, %v687
          %v699 = vpack.c.b16 %v690, %v689
          %v700 = vpack.c.b16 %v692, %v691
          %709 = vmatprep.subr.bf16.mxu0 0
          %710 = vmatpush1.bf16.msra.mxu0 %v693
          %711 = vmatprep.subr.bf16.mxu0 0
          %712 = vmatpush1.bf16.msra.mxu0 %v694
          %713 = vmatprep.subr.bf16.mxu0 0
          %714 = vmatpush1.bf16.msra.mxu0 %v695
          %715 = vmatprep.subr.bf16.mxu0 0
          %716 = vmatpush1.bf16.msra.mxu0 %v696
          %717 = vmatprep.subr.bf16.mxu0 0
          %718 = vmatpush1.bf16.msra.mxu0 %v697
          %719 = vmatprep.subr.bf16.mxu0 0
          %720 = vmatpush1.bf16.msra.mxu0 %v698
          %721 = vmatprep.subr.bf16.mxu0 0
          %722 = vmatpush1.bf16.msra.mxu0 %v699
          %723 = vmatprep.subr.bf16.mxu0 0
          %724 = vmatpush1.bf16.msra.mxu0 %v700
          %725 = vmatprep.subr.bf16.mxu0 0
          %726 = vmatpush1.bf16.msra.mxu0 0
          %727 = vmatprep.subr.bf16.mxu0 0
          %728 = vmatpush1.bf16.msra.mxu0 0
          %729 = vmatprep.subr.bf16.mxu0 0
          %730 = vmatpush1.bf16.msra.mxu0 0
          %731 = vmatprep.subr.bf16.mxu0 0
          %732 = vmatpush1.bf16.msra.mxu0 0
          %733 = vmatprep.subr.bf16.mxu0 0
          %734 = vmatpush1.bf16.msra.mxu0 0
          %735 = vmatprep.subr.bf16.mxu0 0
          %736 = vmatpush1.bf16.msra.mxu0 0
          %737 = vmatprep.subr.bf16.mxu0 0
          %738 = vmatpush1.bf16.msra.mxu0 0
          %739 = vmatprep.subr.bf16.mxu0 0
          %740 = vmatpush1.bf16.msra.mxu0 0
          %741 = vmatprep.mubr.bf16.mxu0 0
          %742 = vmatmul.mubr.bf16.gmra.mrb[0].mxu0 %v637
          %v743 = vpop.f32.mrb[0].mxu0
          %v744 = vadd.f32 %v659, %v743
          %v745 = vpop.f32.mrb[0].mxu0
          %v746 = vpop.f32.mrb[0].mxu0
          %v747 = vpop.f32.mrb[0].mxu0
          %748 = vdwg.mxu0
          %v749 = vld [vmem:[#allocation6] sm:$0x3]
          %v750 = vadd.f32 %v744, %v749
          %751 = vst [vmem:[#allocation2] sm:$0x3] %v750
        $region88: #{_lambda_.7} parent=51 // pred_fallthru
          _
        %v752 = vld [vmem:[#allocation2] sm:$0x3]
        %v753 = vxor.u32 %v752, 2147483648
        %v754 = vmul.f32 %v753, 1.442695
        %v755 = vpow.pop %v754
        %v756 = vadd.f32 %v755, 1.0
        %v757 = vrcp.pop %v756
        %v758 = vmul.f32 1.0, %v757
        %v759 = vmul.f32 %v752, %v758
        %v760 = vpack.c.bf16 %v759, %v759
        %v761 = vld [vmem:[%s389] sm:$0xff]
        %v762 = vld [vmem:[%s389 + $0x8] sm:$0xff]
        %v763 = vld [vmem:[%s389 + $0x10] sm:$0xff]
        %v764 = vld [vmem:[%s389 + $0x18] sm:$0xff]
        %v765 = vld [vmem:[%s389 + $0x20] sm:$0xff]
        %v766 = vld [vmem:[%s389 + $0x28] sm:$0xff]
        %v767 = vld [vmem:[%s389 + $0x30] sm:$0xff]
        %v768 = vld [vmem:[%s389 + $0x38] sm:$0xff]
        %v769 = vld [vmem:[%s389 + $0x40] sm:$0xff]
        %v770 = vld [vmem:[%s389 + $0x48] sm:$0xff]
        %v771 = vld [vmem:[%s389 + $0x50] sm:$0xff]
        %v772 = vld [vmem:[%s389 + $0x58] sm:$0xff]
        %v773 = vld [vmem:[%s389 + $0x60] sm:$0xff]
        %v774 = vld [vmem:[%s389 + $0x68] sm:$0xff]
        %v775 = vld [vmem:[%s389 + $0x70] sm:$0xff]
        %v776 = vld [vmem:[%s389 + $0x78] sm:$0xff]
        %v777 = vld [vmem:[%s389 + $0x80] sm:$0xff]
        %v778 = vld [vmem:[%s389 + $0x88] sm:$0xff]
        %v779 = vld [vmem:[%s389 + $0x90] sm:$0xff]
        %v780 = vld [vmem:[%s389 + $0x98] sm:$0xff]
        %v781 = vld [vmem:[%s389 + $0xa0] sm:$0xff]
        %v782 = vld [vmem:[%s389 + $0xa8] sm:$0xff]
        %v783 = vld [vmem:[%s389 + $0xb0] sm:$0xff]
        %v784 = vld [vmem:[%s389 + $0xb8] sm:$0xff]
        %v785 = vld [vmem:[%s389 + $0xc0] sm:$0xff]
        %v786 = vld [vmem:[%s389 + $0xc8] sm:$0xff]
        %v787 = vld [vmem:[%s389 + $0xd0] sm:$0xff]
        %v788 = vld [vmem:[%s389 + $0xd8] sm:$0xff]
        %v789 = vld [vmem:[%s389 + $0xe0] sm:$0xff]
        %v790 = vld [vmem:[%s389 + $0xe8] sm:$0xff]
        %v791 = vld [vmem:[%s389 + $0xf0] sm:$0xff]
        %v792 = vld [vmem:[%s389 + $0xf8] sm:$0xff]
        %v793 = vld [vmem:[%s389 + $0x100] sm:$0xff]
        %v794 = vld [vmem:[%s389 + $0x108] sm:$0xff]
        %v795 = vld [vmem:[%s389 + $0x110] sm:$0xff]
        %v796 = vld [vmem:[%s389 + $0x118] sm:$0xff]
        %v797 = vld [vmem:[%s389 + $0x120] sm:$0xff]
        %v798 = vld [vmem:[%s389 + $0x128] sm:$0xff]
        %v799 = vld [vmem:[%s389 + $0x130] sm:$0xff]
        %v800 = vld [vmem:[%s389 + $0x138] sm:$0xff]
        %v801 = vld [vmem:[%s389 + $0x140] sm:$0xff]
        %v802 = vld [vmem:[%s389 + $0x148] sm:$0xff]
        %v803 = vld [vmem:[%s389 + $0x150] sm:$0xff]
        %v804 = vld [vmem:[%s389 + $0x158] sm:$0xff]
        %v805 = vld [vmem:[%s389 + $0x160] sm:$0xff]
        %v806 = vld [vmem:[%s389 + $0x168] sm:$0xff]
        %v807 = vld [vmem:[%s389 + $0x170] sm:$0xff]
        %v808 = vld [vmem:[%s389 + $0x178] sm:$0xff]
        %v809 = vld [vmem:[%s398] sm:$0x3f]
        %v811 = vlaneseq
        %v812 = vshrl.u32 %v811, 7
        %v813 = vsub.s32 0, %v812
        %v814 = vrot.slane %v809, %v813
        %v815 = vlaneseq
        %v816 = vshrl.u32 %v815, 7
        %v817 = vsub.s32 1, %v816
        %v818 = vrot.slane %v809, %v817
        %v819 = vlaneseq
        %v820 = vshrl.u32 %v819, 7
        %v821 = vsub.s32 2, %v820
        %v822 = vrot.slane %v809, %v821
        %v823 = vlaneseq
        %v824 = vshrl.u32 %v823, 7
        %v825 = vsub.s32 3, %v824
        %v826 = vrot.slane %v809, %v825
        %v827 = vlaneseq
        %v828 = vshrl.u32 %v827, 7
        %v829 = vsub.s32 4, %v828
        %v830 = vrot.slane %v809, %v829
        %v831 = vlaneseq
        %v832 = vshrl.u32 %v831, 7
        %v833 = vsub.s32 5, %v832
        %v834 = vrot.slane %v809, %v833
        %v889 = vunpack.c.l.b16 %v761
        %v890 = vunpack.c.h.b16 %v761
        %v891 = vunpack.c.l.b16 %v762
        %v892 = vunpack.c.h.b16 %v762
        %v893 = vunpack.c.l.b16 %v763
        %v894 = vunpack.c.h.b16 %v763
        %v895 = vunpack.c.l.b16 %v764
        %v896 = vunpack.c.h.b16 %v764
        %v897 = vunpack.c.l.b16 %v765
        %v898 = vunpack.c.h.b16 %v765
        %v899 = vunpack.c.l.b16 %v766
        %v900 = vunpack.c.h.b16 %v766
        %v901 = vunpack.c.l.b16 %v767
        %v902 = vunpack.c.h.b16 %v767
        %v903 = vunpack.c.l.b16 %v768
        %v904 = vunpack.c.h.b16 %v768
        %v905 = vunpack.c.l.b16 %v769
        %v906 = vunpack.c.h.b16 %v769
        %v907 = vunpack.c.l.b16 %v770
        %v908 = vunpack.c.h.b16 %v770
        %v909 = vunpack.c.l.b16 %v771
        %v910 = vunpack.c.h.b16 %v771
        %v911 = vunpack.c.l.b16 %v772
        %v912 = vunpack.c.h.b16 %v772
        %v913 = vunpack.c.l.b16 %v773
        %v914 = vunpack.c.h.b16 %v773
        %v915 = vunpack.c.l.b16 %v774
        %v916 = vunpack.c.h.b16 %v774
        %v917 = vunpack.c.l.b16 %v775
        %v918 = vunpack.c.h.b16 %v775
        %v919 = vunpack.c.l.b16 %v776
        %v920 = vunpack.c.h.b16 %v776
        %v921 = vunpack.c.l.b16 %v777
        %v922 = vunpack.c.h.b16 %v777
        %v923 = vunpack.c.l.b16 %v778
        %v924 = vunpack.c.h.b16 %v778
        %v925 = vunpack.c.l.b16 %v779
        %v926 = vunpack.c.h.b16 %v779
        %v927 = vunpack.c.l.b16 %v780
        %v928 = vunpack.c.h.b16 %v780
        %v929 = vunpack.c.l.b16 %v781
        %v930 = vunpack.c.h.b16 %v781
        %v931 = vunpack.c.l.b16 %v782
        %v932 = vunpack.c.h.b16 %v782
        %v933 = vunpack.c.l.b16 %v783
        %v934 = vunpack.c.h.b16 %v783
        %v935 = vunpack.c.l.b16 %v784
        %v936 = vunpack.c.h.b16 %v784
        %v937 = vunpack.c.l.b16 %v785
        %v938 = vunpack.c.h.b16 %v785
        %v939 = vunpack.c.l.b16 %v786
        %v940 = vunpack.c.h.b16 %v786
        %v941 = vunpack.c.l.b16 %v787
        %v942 = vunpack.c.h.b16 %v787
        %v943 = vunpack.c.l.b16 %v788
        %v944 = vunpack.c.h.b16 %v788
        %v945 = vunpack.c.l.b16 %v789
        %v946 = vunpack.c.h.b16 %v789
        %v947 = vunpack.c.l.b16 %v790
        %v948 = vunpack.c.h.b16 %v790
        %v949 = vunpack.c.l.b16 %v791
        %v950 = vunpack.c.h.b16 %v791
        %v951 = vunpack.c.l.b16 %v792
        %v952 = vunpack.c.h.b16 %v792
        %v953 = vunpack.c.l.b16 %v793
        %v954 = vunpack.c.h.b16 %v793
        %v955 = vunpack.c.l.b16 %v794
        %v956 = vunpack.c.h.b16 %v794
        %v957 = vunpack.c.l.b16 %v795
        %v958 = vunpack.c.h.b16 %v795
        %v959 = vunpack.c.l.b16 %v796
        %v960 = vunpack.c.h.b16 %v796
        %v961 = vunpack.c.l.b16 %v797
        %v962 = vunpack.c.h.b16 %v797
        %v963 = vunpack.c.l.b16 %v798
        %v964 = vunpack.c.h.b16 %v798
        %v965 = vunpack.c.l.b16 %v799
        %v966 = vunpack.c.h.b16 %v799
        %v967 = vunpack.c.l.b16 %v800
        %v968 = vunpack.c.h.b16 %v800
        %v969 = vunpack.c.l.b16 %v801
        %v970 = vunpack.c.h.b16 %v801
        %v971 = vunpack.c.l.b16 %v802
        %v972 = vunpack.c.h.b16 %v802
        %v973 = vunpack.c.l.b16 %v803
        %v974 = vunpack.c.h.b16 %v803
        %v975 = vunpack.c.l.b16 %v804
        %v976 = vunpack.c.h.b16 %v804
        %v977 = vunpack.c.l.b16 %v805
        %v978 = vunpack.c.h.b16 %v805
        %v979 = vunpack.c.l.b16 %v806
        %v980 = vunpack.c.h.b16 %v806
        %v981 = vunpack.c.l.b16 %v807
        %v982 = vunpack.c.h.b16 %v807
        %v983 = vunpack.c.l.b16 %v808
        %v984 = vunpack.c.h.b16 %v808
        %v985 = vpack.c.b16 %v895, %v889
        %v986 = vpack.c.b16 %v896, %v890
        %v987 = vpack.c.b16 %v897, %v891
        %v988 = vpack.c.b16 %v898, %v892
        %v989 = vpack.c.b16 %v899, %v893
        %v990 = vpack.c.b16 %v900, %v894
        %v991 = vpack.c.b16 %v907, %v901
        %v992 = vpack.c.b16 %v908, %v902
        %v993 = vpack.c.b16 %v909, %v903
        %v994 = vpack.c.b16 %v910, %v904
        %v995 = vpack.c.b16 %v911, %v905
        %v996 = vpack.c.b16 %v912, %v906
        %v997 = vpack.c.b16 %v919, %v913
        %v998 = vpack.c.b16 %v920, %v914
        %v999 = vpack.c.b16 %v921, %v915
        %v1000 = vpack.c.b16 %v922, %v916
        %v1001 = vpack.c.b16 %v923, %v917
        %v1002 = vpack.c.b16 %v924, %v918
        %v1003 = vpack.c.b16 %v931, %v925
        %v1004 = vpack.c.b16 %v932, %v926
        %v1005 = vpack.c.b16 %v933, %v927
        %v1006 = vpack.c.b16 %v934, %v928
        %v1007 = vpack.c.b16 %v935, %v929
        %v1008 = vpack.c.b16 %v936, %v930
        %v1009 = vpack.c.b16 %v943, %v937
        %v1010 = vpack.c.b16 %v944, %v938
        %v1011 = vpack.c.b16 %v945, %v939
        %v1012 = vpack.c.b16 %v946, %v940
        %v1013 = vpack.c.b16 %v947, %v941
        %v1014 = vpack.c.b16 %v948, %v942
        %v1015 = vpack.c.b16 %v955, %v949
        %v1016 = vpack.c.b16 %v956, %v950
        %v1017 = vpack.c.b16 %v957, %v951
        %v1018 = vpack.c.b16 %v958, %v952
        %v1019 = vpack.c.b16 %v959, %v953
        %v1020 = vpack.c.b16 %v960, %v954
        %v1021 = vpack.c.b16 %v967, %v961
        %v1022 = vpack.c.b16 %v968, %v962
        %v1023 = vpack.c.b16 %v969, %v963
        %v1024 = vpack.c.b16 %v970, %v964
        %v1025 = vpack.c.b16 %v971, %v965
        %v1026 = vpack.c.b16 %v972, %v966
        %v1027 = vpack.c.b16 %v979, %v973
        %v1028 = vpack.c.b16 %v980, %v974
        %v1029 = vpack.c.b16 %v981, %v975
        %v1030 = vpack.c.b16 %v982, %v976
        %v1031 = vpack.c.b16 %v983, %v977
        %v1032 = vpack.c.b16 %v984, %v978
        %1081 = vmatprep.subr.bf16.mxu0 %v986
        %1082 = vmatpush1.bf16.msra.mxu0 %v985
        %1083 = vmatprep.subr.bf16.mxu0 %v992
        %1084 = vmatpush1.bf16.msra.mxu0 %v991
        %1085 = vmatprep.subr.bf16.mxu0 %v998
        %1086 = vmatpush1.bf16.msra.mxu0 %v997
        %1087 = vmatprep.subr.bf16.mxu0 %v1004
        %1088 = vmatpush1.bf16.msra.mxu0 %v1003
        %1089 = vmatprep.subr.bf16.mxu0 %v1010
        %1090 = vmatpush1.bf16.msra.mxu0 %v1009
        %1091 = vmatprep.subr.bf16.mxu0 %v1016
        %1092 = vmatpush1.bf16.msra.mxu0 %v1015
        %1093 = vmatprep.subr.bf16.mxu0 %v1022
        %1094 = vmatpush1.bf16.msra.mxu0 %v1021
        %1095 = vmatprep.subr.bf16.mxu0 %v1028
        %1096 = vmatpush1.bf16.msra.mxu0 %v1027
        %1097 = vmatprep.subr.bf16.mxu0 0
        %1098 = vmatpush1.bf16.msra.mxu0 0
        %1099 = vmatprep.subr.bf16.mxu0 0
        %1100 = vmatpush1.bf16.msra.mxu0 0
        %1101 = vmatprep.subr.bf16.mxu0 0
        %1102 = vmatpush1.bf16.msra.mxu0 0
        %1103 = vmatprep.subr.bf16.mxu0 0
        %1104 = vmatpush1.bf16.msra.mxu0 0
        %1105 = vmatprep.subr.bf16.mxu0 0
        %1106 = vmatpush1.bf16.msra.mxu0 0
        %1107 = vmatprep.subr.bf16.mxu0 0
        %1108 = vmatpush1.bf16.msra.mxu0 0
        %1109 = vmatprep.subr.bf16.mxu0 0
        %1110 = vmatpush1.bf16.msra.mxu0 0
        %1111 = vmatprep.subr.bf16.mxu0 0
        %1112 = vmatpush1.bf16.msra.mxu0 0
        %1113 = vmatprep.mubr.bf16.mxu0 0
        %1114 = vmatmul.mubr.bf16.gmra.mrb[0].mxu0 %v760
        %v1115 = vpop.f32.mrb[0].mxu0
        %v1116 = vadd.f32 %v814, %v1115
        %v1117 = vpop.f32.mrb[0].mxu0
        %v1118 = vadd.f32 %v818, %v1117
        %v1119 = vpop.f32.mrb[0].mxu0
        %v1120 = vpop.f32.mrb[0].mxu0
        %1121 = vdwg.mxu0
        %1122 = vmatprep.subr.bf16.mxu0 %v988
        %1123 = vmatpush1.bf16.msra.mxu0 %v987
        %1124 = vmatprep.subr.bf16.mxu0 %v994
        %1125 = vmatpush1.bf16.msra.mxu0 %v993
        %1126 = vmatprep.subr.bf16.mxu0 %v1000
        %1127 = vmatpush1.bf16.msra.mxu0 %v999
        %1128 = vmatprep.subr.bf16.mxu0 %v1006
        %1129 = vmatpush1.bf16.msra.mxu0 %v1005
        %1130 = vmatprep.subr.bf16.mxu0 %v1012
        %1131 = vmatpush1.bf16.msra.mxu0 %v1011
        %1132 = vmatprep.subr.bf16.mxu0 %v1018
        %1133 = vmatpush1.bf16.msra.mxu0 %v1017
        %1134 = vmatprep.subr.bf16.mxu0 %v1024
        %1135 = vmatpush1.bf16.msra.mxu0 %v1023
        %1136 = vmatprep.subr.bf16.mxu0 %v1030
        %1137 = vmatpush1.bf16.msra.mxu0 %v1029
        %1138 = vmatprep.subr.bf16.mxu0 0
        %1139 = vmatpush1.bf16.msra.mxu0 0
        %1140 = vmatprep.subr.bf16.mxu0 0
        %1141 = vmatpush1.bf16.msra.mxu0 0
        %1142 = vmatprep.subr.bf16.mxu0 0
        %1143 = vmatpush1.bf16.msra.mxu0 0
        %1144 = vmatprep.subr.bf16.mxu0 0
        %1145 = vmatpush1.bf16.msra.mxu0 0
        %1146 = vmatprep.subr.bf16.mxu0 0
        %1147 = vmatpush1.bf16.msra.mxu0 0
        %1148 = vmatprep.subr.bf16.mxu0 0
        %1149 = vmatpush1.bf16.msra.mxu0 0
        %1150 = vmatprep.subr.bf16.mxu0 0
        %1151 = vmatpush1.bf16.msra.mxu0 0
        %1152 = vmatprep.subr.bf16.mxu0 0
        %1153 = vmatpush1.bf16.msra.mxu0 0
        %1154 = vmatprep.mubr.bf16.mxu0 0
        %1155 = vmatmul.mubr.bf16.gmra.mrb[0].mxu0 %v760
        %v1156 = vpop.f32.mrb[0].mxu0
        %v1157 = vadd.f32 %v822, %v1156
        %v1158 = vpop.f32.mrb[0].mxu0
        %v1159 = vadd.f32 %v826, %v1158
        %v1160 = vpop.f32.mrb[0].mxu0
        %v1161 = vpop.f32.mrb[0].mxu0
        %1162 = vdwg.mxu0
        %1163 = vmatprep.subr.bf16.mxu0 %v990
        %1164 = vmatpush1.bf16.msra.mxu0 %v989
        %1165 = vmatprep.subr.bf16.mxu0 %v996
        %1166 = vmatpush1.bf16.msra.mxu0 %v995
        %1167 = vmatprep.subr.bf16.mxu0 %v1002
        %1168 = vmatpush1.bf16.msra.mxu0 %v1001
        %1169 = vmatprep.subr.bf16.mxu0 %v1008
        %1170 = vmatpush1.bf16.msra.mxu0 %v1007
        %1171 = vmatprep.subr.bf16.mxu0 %v1014
        %1172 = vmatpush1.bf16.msra.mxu0 %v1013
        %1173 = vmatprep.subr.bf16.mxu0 %v1020
        %1174 = vmatpush1.bf16.msra.mxu0 %v1019
        %1175 = vmatprep.subr.bf16.mxu0 %v1026
        %1176 = vmatpush1.bf16.msra.mxu0 %v1025
        %1177 = vmatprep.subr.bf16.mxu0 %v1032
        %1178 = vmatpush1.bf16.msra.mxu0 %v1031
        %1179 = vmatprep.subr.bf16.mxu0 0
        %1180 = vmatpush1.bf16.msra.mxu0 0
        %1181 = vmatprep.subr.bf16.mxu0 0
        %1182 = vmatpush1.bf16.msra.mxu0 0
        %1183 = vmatprep.subr.bf16.mxu0 0
        %1184 = vmatpush1.bf16.msra.mxu0 0
        %1185 = vmatprep.subr.bf16.mxu0 0
        %1186 = vmatpush1.bf16.msra.mxu0 0
        %1187 = vmatprep.subr.bf16.mxu0 0
        %1188 = vmatpush1.bf16.msra.mxu0 0
        %1189 = vmatprep.subr.bf16.mxu0 0
        %1190 = vmatpush1.bf16.msra.mxu0 0
        %1191 = vmatprep.subr.bf16.mxu0 0
        %1192 = vmatpush1.bf16.msra.mxu0 0
        %1193 = vmatprep.subr.bf16.mxu0 0
        %1194 = vmatpush1.bf16.msra.mxu0 0
        %1195 = vmatprep.mubr.bf16.mxu0 0
        %1196 = vmatmul.mubr.bf16.gmra.mrb[0].mxu0 %v760
        %v1197 = vpop.f32.mrb[0].mxu0
        %v1198 = vadd.f32 %v830, %v1197
        %v1199 = vpop.f32.mrb[0].mxu0
        %v1200 = vadd.f32 %v834, %v1199
        %v1201 = vpop.f32.mrb[0].mxu0
        %v1202 = vpop.f32.mrb[0].mxu0
        %1203 = vdwg.mxu0
        %v1210 = vcombine.low %v1116, %v1118
        %v1211 = vcombine.low %v1157, %v1159
        %v1213 = vunpack.c.l.s4 1983009808
        %v1214 = vunpack.c.0.s8 %v1213
        %v1215 = vlaneseq
        %v1216 = vshrl.u32 %v1215, 7
        %v1217 = vsub.s32 %v1214, %v1216
        %v1218 = vrot.slane %v1210, %v1217
        %v1220 = vunpack.c.l.s4 1983009808
        %v1221 = vunpack.c.0.s8 %v1220
        %v1222 = vlaneseq
        %v1223 = vshrl.u32 %v1222, 7
        %v1224 = vsub.s32 %v1221, %v1223
        %v1225 = vrot.slane %v1211, %v1224
        %v1226 = vcombine.low %v1218, %v1225
        %v1227 = vcombine.low %v1198, %v1200
        %v1229 = vunpack.c.l.s4 1983009808
        %v1230 = vunpack.c.0.s8 %v1229
        %v1231 = vlaneseq
        %v1232 = vshrl.u32 %v1231, 7
        %v1233 = vsub.s32 %v1230, %v1232
        %v1234 = vrot.slane %v1227, %v1233
        %1237 = vst [vmem:[%s435] sm:$0xff] %v1226
        %1238 = vst [vmem:[%s435 + $0x8] sm:$0xf] %v1234
        %s1239 = sand.u32 %s212, 1
        %s1240 = scalar_lea.sflag [#allocation5], %s1239
        %s1241 = sand.u32 %s212, 1
        %s1242 = smul.addr %s1241, 12
        %s1243 = scalar_lea.vmem [#allocation16], %s1242
        // Predicated region
        $region89: #{_lambda_.7} parent=51 // pred_check
          %p1244 = pneg %p222
        $region90: #{_lambda_.7} parent=51 // pred_check_branch
          %1246 = sbr.rel (%p1244) target = $region92
        $region91: #{_lambda_.7} parent=51 // pred_region
          %s1248 = ssub.s32 192, 192
          %1249 = vsyncadd %s1240, %s1248
          %s1250 = smul.addr %s26, 6
          %s1251 = smul.addr %s1250, 32
          %s1252 = scalar_lea.hbm %s8, %s1251
          %s1254 = sshll.u32 %s1243, 4
          %s1255 = int_to_ptr.vmem [resolvable:$true] %s1254
          %1257 = dma.vmem_to_hbm [thread:$0]  %s1255, 192, %s1252, %s1240
        $region92: #{_lambda_.7} parent=51 // pred_fallthru
          _
      $region52: #{_lambda_.7} parent=5 // pred_fallthru
        _
      %p1258 = scmp.le.s32.totalorder 2, %s21
      // Predicated region
      $region93: #{_lambda_.7} parent=5 // pred_check
        %p1259 = pneg %p1258
      $region94: #{_lambda_.7} parent=5 // pred_check_branch
        %1261 = sbr.rel (%p1259) target = $region96
      $region95: #{_lambda_.7} parent=5 // pred_region
        %s1262 = ssub.s32 %s21, 2
        // Predicated region
        $region97: #{_lambda_.7} parent=95 // pred_check
          %p1263 = pneg %p228
        $region98: #{_lambda_.7} parent=95 // pred_check_branch
          %1265 = sbr.rel (%p1263) target = $region100
        $region99: #{_lambda_.7} parent=95 // pred_region
          %s1266 = sand.u32 %s213, 1
          %s1267 = scalar_lea.sflag [#allocation5], %s1266
          %s1268 = sand.u32 %s213, 1
          %s1269 = smul.addr %s1268, 12
          %s1270 = scalar_lea.vmem [#allocation16], %s1269
          %1271 = dma.done %s1267, 192
        $region100: #{_lambda_.7} parent=95 // pred_fallthru
          _
      $region96: #{_lambda_.7} parent=5 // pred_fallthru
        _
    $region6: #{_lambda_.7} parent=1 // loop_footer
      %s25 = sadd.s32 1, %s21
    $region7: #{_lambda_.7} parent=1 // loop_footer_branch
      %20 = sbr.rel target = $region3
    $region8: #{_lambda_.7} parent=1 // loop_exit
      _
    %1272 = vsyncpa [#allocation4], 1
    %s1273 = scalar_lea.sflag [#allocation4], 1
    %1274 = vsyncpa %s1273, 1
    %1275 = vsyncpa [#allocation7], 1
    %1276 = vsyncpa [#allocation10], 1
    %1277 = vsyncpa [#allocation13], 1
    %1278 = vsyncpa [#allocation5], 1
    %s1279 = scalar_lea.sflag [#allocation5], 1
    %1280 = vsyncpa %s1279, 1

// kernel: _lambda_.5
$region0: #{_lambda_.5}
  #allocation0 [shape = 'u32[]', space=smem, size = 0x4, offset = 0x4, fixed_abs, tag = 'smem constant byte address 0x4 - core index']
  #allocation1 [shape = 'u32[144,128]{1,0:T(1,128)}', space=vmem, size = 0x12000, scoped, tag = 'internal scratch']
  %s0 = inlined_call_operand.hbm [shape: f32[32,64], index: 0, kind: input, shape index: {}]
  %s1 = inlined_call_operand.hbm [shape: bf16[64,128], index: 1, kind: input, shape index: {}]
  %s2 = inlined_call_operand.hbm [shape: f32[1,128], index: 2, kind: input, shape index: {}]
  %s3 = inlined_call_operand.hbm [shape: f32[32,128], index: 3, kind: output, shape index: {}]
  %s4 = sld [smem:[#allocation0]]
  $region34: #{_lambda_.5} parent=0
    _
  %s6 = ssub.s32 1, %s4
  %s7 = scalar_select 0, %s6, %s4
  $region1: #{_lambda_.5} parent=0
    #allocation2 [shape = 'u8[16384]{0}', space=vmem, size = 0x4000, scoped, tag = 'input window, operand 0, single buffered']
    #allocation3 [shape = 's32[1]{0}', space=sflag, size = 0x4, scoped, tag = 'scoped memory for _lambda_.5']
    #allocation4 [shape = 's32[1]{0}', space=sflag, size = 0x4, scoped, tag = 'scoped memory for _lambda_.5']
    #allocation5 [shape = 'u8[16384]{0}', space=vmem, size = 0x4000, scoped, tag = 'input window, operand 1, single buffered']
    #allocation6 [shape = 's32[1]{0}', space=sflag, size = 0x4, scoped, tag = 'scoped memory for _lambda_.5']
    #allocation7 [shape = 'u8[512]{0}', space=vmem, size = 0x400, scoped, tag = 'input window, operand 2, single buffered']
    #allocation8 [shape = 'u8[16384]{0}', space=vmem, size = 0x4000, scoped, tag = 'output window, operand 0, single buffered']
    %8 = vsyncpa [#allocation3], 0
    %9 = vsyncpa [#allocation6], 0
    %10 = vsyncpa [#allocation4], 0
    // Predicated region
    $region2: #{_lambda_.5} parent=1 // pred_check
      _
    $region3: #{_lambda_.5} parent=1 // pred_check_branch
      %12 = sbr.rel (0) target = $region5
    $region4: #{_lambda_.5} parent=1 // pred_region
      %s14 = ssub.s32 512, 512
      %15 = vsyncadd [#allocation3], %s14
      %s16 = sshll.u32 [#allocation2], 4
      %s17 = int_to_ptr.vmem [resolvable:$true] %s16
      %22 = dma.hbm_to_vmem [thread:$0]  %s0, 512, %s17, [#allocation3], 128, 128, 8
    $region5: #{_lambda_.5} parent=1 // pred_fallthru
      _
    // Predicated region
    $region6: #{_lambda_.5} parent=1 // pred_check
      _
    $region7: #{_lambda_.5} parent=1 // pred_check_branch
      %24 = sbr.rel (0) target = $region9
    $region8: #{_lambda_.5} parent=1 // pred_region
      %s26 = ssub.s32 512, 512
      %27 = vsyncadd [#allocation6], %s26
      %s28 = sshll.u32 [#allocation5], 4
      %s29 = int_to_ptr.vmem [resolvable:$true] %s28
      %34 = dma.hbm_to_vmem [thread:$0]  %s1, 512, %s29, [#allocation6], 64, 64, 4
    $region9: #{_lambda_.5} parent=1 // pred_fallthru
      _
    // Predicated region
    $region10: #{_lambda_.5} parent=1 // pred_check
      _
    $region11: #{_lambda_.5} parent=1 // pred_check_branch
      %36 = sbr.rel (0) target = $region13
    $region12: #{_lambda_.5} parent=1 // pred_region
      %s38 = ssub.s32 16, 16
      %39 = vsyncadd [#allocation6], %s38
      %s41 = sshll.u32 [#allocation7], 4
      %s42 = int_to_ptr.vmem [resolvable:$true] %s41
      %44 = dma.hbm_to_vmem [thread:$0]  %s2, 16, %s42, [#allocation6]
    $region13: #{_lambda_.5} parent=1 // pred_fallthru
      _
    // Predicated region
    $region14: #{_lambda_.5} parent=1 // pred_check
      _
    $region15: #{_lambda_.5} parent=1 // pred_check_branch
      %46 = sbr.rel (0) target = $region17
    $region16: #{_lambda_.5} parent=1 // pred_region
      %47 = dma.done [#allocation3], 512
    $region17: #{_lambda_.5} parent=1 // pred_fallthru
      _
    // Predicated region
    $region18: #{_lambda_.5} parent=1 // pred_check
      _
    $region19: #{_lambda_.5} parent=1 // pred_check_branch
      %49 = sbr.rel (0) target = $region21
    $region20: #{_lambda_.5} parent=1 // pred_region
      %50 = dma.done [#allocation6], 512
    $region21: #{_lambda_.5} parent=1 // pred_fallthru
      _
    // Predicated region
    $region22: #{_lambda_.5} parent=1 // pred_check
      _
    $region23: #{_lambda_.5} parent=1 // pred_check_branch
      %52 = sbr.rel (0) target = $region25
    $region24: #{_lambda_.5} parent=1 // pred_region
      %53 = dma.done [#allocation6], 16
    $region25: #{_lambda_.5} parent=1 // pred_fallthru
      _
    %v55 = vld [vmem:[#allocation2] sm:$0xff]
    %v56 = vld [vmem:[#allocation2 + $0x8] sm:$0xff]
    %v57 = vld [vmem:[#allocation2 + $0x10] sm:$0xff]
    %v58 = vld [vmem:[#allocation2 + $0x18] sm:$0xff]
    %v59 = vpack.c.bf16 %v56, %v55
    %v60 = vpack.c.bf16 %v58, %v57
    %v61 = vld [vmem:[#allocation5] sm:$0xf]
    %v62 = vld [vmem:[#allocation5 + $0x4] sm:$0xf]
    %v63 = vld [vmem:[#allocation5 + $0x8] sm:$0xf]
    %v64 = vld [vmem:[#allocation5 + $0xc] sm:$0xf]
    %v65 = vld [vmem:[#allocation5 + $0x10] sm:$0xf]
    %v66 = vld [vmem:[#allocation5 + $0x14] sm:$0xf]
    %v67 = vld [vmem:[#allocation5 + $0x18] sm:$0xf]
    %v68 = vld [vmem:[#allocation5 + $0x1c] sm:$0xf]
    %v69 = vld [vmem:[#allocation7] sm:$0x1]
    %v71 = vlaneseq
    %v72 = vshrl.u32 %v71, 7
    %v73 = vsub.s32 0, %v72
    %v74 = vrot.slane %v69, %v73
    %v84 = vunpack.c.l.b16 %v61
    %v85 = vunpack.c.l.b16 %v62
    %v86 = vunpack.c.l.b16 %v63
    %v87 = vunpack.c.l.b16 %v64
    %v88 = vunpack.c.l.b16 %v65
    %v89 = vunpack.c.l.b16 %v66
    %v90 = vunpack.c.l.b16 %v67
    %v91 = vunpack.c.l.b16 %v68
    %v92 = vpack.c.b16 %v85, %v84
    %v93 = vpack.c.b16 %v87, %v86
    %v94 = vpack.c.b16 %v89, %v88
    %v95 = vpack.c.b16 %v91, %v90
    %vm100 = vcmask 523264
    %v102 = vsel %vm100, %v59, 0
    %v105 = vsel %vm100, %v60, 0
    %107 = vmatprep.subr.bf16.mxu0 0
    %108 = vmatpush1.bf16.msra.mxu0 %v92
    %109 = vmatprep.subr.bf16.mxu0 0
    %110 = vmatpush1.bf16.msra.mxu0 %v93
    %111 = vmatprep.subr.bf16.mxu0 0
    %112 = vmatpush1.bf16.msra.mxu0 %v94
    %113 = vmatprep.subr.bf16.mxu0 0
    %114 = vmatpush1.bf16.msra.mxu0 %v95
    %115 = vmatprep.subr.bf16.mxu0 0
    %116 = vmatpush1.bf16.msra.mxu0 0
    %117 = vmatprep.subr.bf16.mxu0 0
    %118 = vmatpush1.bf16.msra.mxu0 0
    %119 = vmatprep.subr.bf16.mxu0 0
    %120 = vmatpush1.bf16.msra.mxu0 0
    %121 = vmatprep.subr.bf16.mxu0 0
    %122 = vmatpush1.bf16.msra.mxu0 0
    %123 = vmatprep.subr.bf16.mxu0 0
    %124 = vmatpush1.bf16.msra.mxu0 0
    %125 = vmatprep.subr.bf16.mxu0 0
    %126 = vmatpush1.bf16.msra.mxu0 0
    %127 = vmatprep.subr.bf16.mxu0 0
    %128 = vmatpush1.bf16.msra.mxu0 0
    %129 = vmatprep.subr.bf16.mxu0 0
    %130 = vmatpush1.bf16.msra.mxu0 0
    %131 = vmatprep.subr.bf16.mxu0 0
    %132 = vmatpush1.bf16.msra.mxu0 0
    %133 = vmatprep.subr.bf16.mxu0 0
    %134 = vmatpush1.bf16.msra.mxu0 0
    %135 = vmatprep.subr.bf16.mxu0 0
    %136 = vmatpush1.bf16.msra.mxu0 0
    %137 = vmatprep.subr.bf16.mxu0 0
    %138 = vmatpush1.bf16.msra.mxu0 0
    %139 = vmatprep.mubr.bf16.mxu0 0
    %140 = vmatmul.mubr.bf16.gmra.mrb[0].mxu0 %v102
    %v141 = vpop.f32.mrb[0].mxu0
    %v142 = vadd.f32 %v74, %v141
    %v143 = vpop.f32.mrb[0].mxu0
    %v144 = vpop.f32.mrb[0].mxu0
    %v145 = vadd.f32 %v74, %v144
    %v146 = vpop.f32.mrb[0].mxu0
    %147 = vmatprep.mubr.bf16.mxu0 0
    %148 = vmatmul.mubr.bf16.gmra.mrb[0].mxu0 %v105
    %v149 = vpop.f32.mrb[0].mxu0
    %v150 = vadd.f32 %v74, %v149
    %v151 = vpop.f32.mrb[0].mxu0
    %v152 = vpop.f32.mrb[0].mxu0
    %v153 = vadd.f32 %v74, %v152
    %v154 = vpop.f32.mrb[0].mxu0
    %155 = vdwg.mxu0
    %156 = vst [vmem:[#allocation8] sm:$0xff] %v142
    %157 = vst [vmem:[#allocation8 + $0x8] sm:$0xff] %v145
    %158 = vst [vmem:[#allocation8 + $0x10] sm:$0xff] %v150
    %159 = vst [vmem:[#allocation8 + $0x18] sm:$0xff] %v153
    // Predicated region
    $region26: #{_lambda_.5} parent=1 // pred_check
      _
    $region27: #{_lambda_.5} parent=1 // pred_check_branch
      %161 = sbr.rel (0) target = $region29
    $region28: #{_lambda_.5} parent=1 // pred_region
      %s163 = ssub.s32 512, 512
      %164 = vsyncadd [#allocation4], %s163
      %s165 = sshll.u32 [#allocation8], 4
      %s166 = int_to_ptr.vmem [resolvable:$true] %s165
      %171 = dma.vmem_to_hbm [thread:$0]  %s166, 512, %s3, [#allocation4], 128, 128, 8
    $region29: #{_lambda_.5} parent=1 // pred_fallthru
      _
    // Predicated region
    $region30: #{_lambda_.5} parent=1 // pred_check
      _
    $region31: #{_lambda_.5} parent=1 // pred_check_branch
      %173 = sbr.rel (0) target = $region33
    $region32: #{_lambda_.5} parent=1 // pred_region
      %174 = dma.done [#allocation4], 512
    $region33: #{_lambda_.5} parent=1 // pred_fallthru
      _
    %175 = vsyncpa [#allocation3], 1
    %176 = vsyncpa [#allocation6], 1
    %177 = vsyncpa [#allocation4], 1

// kernel: squeeze.1
$region0: #{squeeze.1}
  %s0 = inlined_call_operand.vmem [shape: f32[1,2,256], index: 0, kind: input, shape index: {}]
  %s1 = inlined_call_operand.hbm [shape: f32[2,2,128], index: 1, kind: output, shape index: {}]
  $region1: #{squeeze.1} parent=0
    #allocation0 [shape = 'u8[2048]{0}', space=vmem, size = 0x800, scoped, tag = 'operand span for operand 1']
    #allocation1 [shape = 's32[1]{0}', space=sflag, size = 0x4, scoped, tag = 'scoped memory for squeeze.1']
    #allocation2 [shape = 'u8[8192]{0}', space=vmem, size = 0x2000, scoped, tag = 'scoped mem for output reshape']
    #allocation3 [shape = 'u8[8192]{0}', space=vmem, size = 0x2000, scoped, tag = 'scoped mem for input reshape']
    %2 = vsyncpa [#allocation1], 0
    %s4 = sshllo.u32 0, 2
    %s5 = scalar_lea.vmem %s0, 2
    %v6 = vld [vmem:[%s5] sm:%s4]
    %s7 = scalar_lea.vmem [#allocation3], 8
    %8 = vst [vmem:[%s7] sm:%s4] %v6
    %v9 = vld [vmem:[%s0] sm:%s4]
    %10 = vst [vmem:[#allocation3] sm:%s4] %v9
    %v11 = vld [vmem:[#allocation3] sm:$0x3]
    %12 = vst [vmem:[#allocation2] ss:$8 sm:$0x3] %v11
    %s13 = scalar_lea.vmem [#allocation3], 8
    %v14 = vld [vmem:[%s13] sm:$0x3]
    %s15 = scalar_lea.vmem [#allocation2], 1
    %16 = vst [vmem:[%s15] ss:$8 sm:$0x3] %v14
    %s18 = sshllo.u32 0, 2
    %v20 = vld [vmem:[#allocation2] sm:%s18]
    %s21 = sshllo.u32 0, 2
    %22 = vst [vmem:[#allocation0] sm:%s21] %v20
    %s23 = scalar_lea.vmem [#allocation2], 8
    %v24 = vld [vmem:[%s23] sm:%s18]
    %s25 = sshllo.u32 0, 2
    %s26 = scalar_lea.vmem [#allocation0], 2
    %27 = vst [vmem:[%s26] sm:%s25] %v24
    %s29 = ssub.s32 64, 64
    %30 = vsyncadd [#allocation1], %s29
    %s32 = sshll.u32 [#allocation0], 4
    %s33 = int_to_ptr.vmem [resolvable:$true] %s32
    %35 = dma.vmem_to_hbm [thread:$0]  %s33, 64, %s1, [#allocation1]
    %36 = dma.done [#allocation1], 64
    %37 = vsyncpa [#allocation1], 1

// kernel: _lambda_.9
$region0: #{_lambda_.9}
  #allocation0 [shape = 'u32[]', space=smem, size = 0x4, offset = 0x4, fixed_abs, tag = 'smem constant byte address 0x4 - core index']
  #allocation1 [shape = 'u32[144,128]{1,0:T(1,128)}', space=vmem, size = 0x12000, scoped, tag = 'internal scratch']
  %s0 = inlined_call_operand.hbm [shape: f32[2,16,128], index: 0, kind: input, shape index: {}]
  %s1 = inlined_call_operand.hbm [shape: f32[2,2,128], index: 1, kind: input, shape index: {}]
  %s2 = inlined_call_operand.hbm [shape: bf16[128,128], index: 2, kind: input, shape index: {}]
  %s3 = inlined_call_operand.hbm [shape: f32[1,128], index: 3, kind: input, shape index: {}]
  %s4 = inlined_call_operand.hbm [shape: f32[2,16,128], index: 4, kind: output, shape index: {}]
  %s5 = sld [smem:[#allocation0]]
  $region65: #{_lambda_.9} parent=0
    _
  %s7 = ssub.s32 1, %s5
  %s8 = scalar_select 0, %s7, %s5
  $region1: #{_lambda_.9} parent=0
    #allocation2 [shape = 'u8[16384]{0}', space=vmem, size = 0x4000, scoped, tag = 'input window, operand 0']
    #allocation3 [shape = 's32[2]{0}', space=sflag, size = 0x8, scoped, tag = 'scoped memory for _lambda_.9']
    #allocation4 [shape = 's32[2]{0}', space=sflag, size = 0x8, scoped, tag = 'scoped memory for _lambda_.9']
    #allocation5 [shape = 'u8[2048]{0}', space=vmem, size = 0x800, scoped, tag = 'input window, operand 1']
    #allocation6 [shape = 's32[2]{0}', space=sflag, size = 0x8, scoped, tag = 'scoped memory for _lambda_.9']
    #allocation7 [shape = 'u8[32768]{0}', space=vmem, size = 0x8000, scoped, tag = 'input window, operand 2, single buffered']
    #allocation8 [shape = 'u8[512]{0}', space=vmem, size = 0x400, scoped, tag = 'input window, operand 3, single buffered']
    #allocation9 [shape = 's32[1]{0}', space=sflag, size = 0x4, scoped, tag = 'scoped memory for _lambda_.9']
    #allocation10 [shape = 'u8[16384]{0}', space=vmem, size = 0x4000, scoped, tag = 'output window, operand 0']
    %9 = vsyncpa [#allocation3], 0
    %s10 = scalar_lea.sflag [#allocation3], 1
    %11 = vsyncpa %s10, 0
    %12 = vsyncpa [#allocation6], 0
    %s13 = scalar_lea.sflag [#allocation6], 1
    %14 = vsyncpa %s13, 0
    %15 = vsyncpa [#allocation9], 0
    %16 = vsyncpa [#allocation4], 0
    %s17 = scalar_lea.sflag [#allocation4], 1
    %18 = vsyncpa %s17, 0
    loop: start=0, step=1, limit=4
    $region2: #{_lambda_.9} parent=1 // loop_pre_header
      _
    $region3: #{_lambda_.9} parent=1 // loop_header
      %s20 = sphi 0, %s24
      %p21 = scmp.ge.s32.totalorder %s20, 4
      %s30 = sphi 0, %s32
      %s33 = sphi 0, %s30
      %s34 = sphi 0, %s33
      %s50 = sphi 0, %s34
      %s56 = sphi 0, %s58
      %s59 = sphi 0, %s56
      %s60 = sphi 0, %s59
      %s76 = sphi 0, %s60
      %s80 = sphi 0, %s80
      %s82 = sphi 0, %s80
      %s83 = sphi 0, %s82
      %s97 = sphi 0, %s83
      %s101 = sphi 0, %s101
      %s103 = sphi 0, %s101
      %s104 = sphi 0, %s103
      %s118 = sphi 0, %s104
      %s124 = sphi 0, %s126
      %s127 = sphi 0, %s124
      %s128 = sphi 0, %s127
      %s144 = sphi 0, %s128
    $region4: #{_lambda_.9} parent=1 // loop_header_branch
      %23 = sbr.rel (%p21) target = $region8
    $region5: #{_lambda_.9} parent=1 // loop_body
      %s25 = ssub.s32 %s20, 1
      %s26 = ssub.s32 %s20, 2
      %s27 = sadd.s32 %s20, 1
      %s28 = ssub.s32 %s20, %s27
      %p29 = scmp.eq.s32.totalorder %s28, 0
      %s31 = sadd.s32 %s30, 1
      %s32 = scalar_select %p29, %s30, %s31
      %p35 = pneg %p29
      %p36 = scmp.eq.s32.totalorder %s20, 1
      %p37 = por %p35, %p36
      %p38 = scmp.ne.s32.totalorder %s30, %s33
      %p39 = scmp.eq.s32.totalorder %s20, 0
      %p40 = por %p38, %p39
      %p41 = scmp.ne.s32.totalorder %s30, %s33
      %p42 = scmp.eq.s32.totalorder %s25, 1
      %p43 = por %p41, %p42
      %p44 = scmp.ne.s32.totalorder %s33, %s34
      %p45 = scmp.eq.s32.totalorder %s25, 0
      %p46 = por %p44, %p45
      %p47 = scmp.ne.s32.totalorder %s33, %s34
      %p48 = scmp.eq.s32.totalorder %s26, 1
      %p49 = por %p47, %p48
      %p51 = scmp.ne.s32.totalorder %s34, %s50
      %p52 = scmp.eq.s32.totalorder %s26, 0
      %p53 = por %p51, %p52
      %s54 = ssub.s32 %s20, %s27
      %p55 = scmp.eq.s32.totalorder %s54, 0
      %s57 = sadd.s32 %s56, 1
      %s58 = scalar_select %p55, %s56, %s57
      %p61 = pneg %p55
      %p62 = scmp.eq.s32.totalorder %s20, 1
      %p63 = por %p61, %p62
      %p64 = scmp.ne.s32.totalorder %s56, %s59
      %p65 = scmp.eq.s32.totalorder %s20, 0
      %p66 = por %p64, %p65
      %p67 = scmp.ne.s32.totalorder %s56, %s59
      %p68 = scmp.eq.s32.totalorder %s25, 1
      %p69 = por %p67, %p68
      %p70 = scmp.ne.s32.totalorder %s59, %s60
      %p71 = scmp.eq.s32.totalorder %s25, 0
      %p72 = por %p70, %p71
      %p73 = scmp.ne.s32.totalorder %s59, %s60
      %p74 = scmp.eq.s32.totalorder %s26, 1
      %p75 = por %p73, %p74
      %p77 = scmp.ne.s32.totalorder %s60, %s76
      %p78 = scmp.eq.s32.totalorder %s26, 0
      %p79 = por %p77, %p78
      %s81 = sadd.s32 %s80, 1
      %p84 = scmp.eq.s32.totalorder %s20, 1
      %p85 = scmp.ne.s32.totalorder %s80, %s82
      %p86 = scmp.eq.s32.totalorder %s20, 0
      %p87 = por %p85, %p86
      %p88 = scmp.ne.s32.totalorder %s80, %s82
      %p89 = scmp.eq.s32.totalorder %s25, 1
      %p90 = por %p88, %p89
      %p91 = scmp.ne.s32.totalorder %s82, %s83
      %p92 = scmp.eq.s32.totalorder %s25, 0
      %p93 = por %p91, %p92
      %p94 = scmp.ne.s32.totalorder %s82, %s83
      %p95 = scmp.eq.s32.totalorder %s26, 1
      %p96 = por %p94, %p95
      %p98 = scmp.ne.s32.totalorder %s83, %s97
      %p99 = scmp.eq.s32.totalorder %s26, 0
      %p100 = por %p98, %p99
      %s102 = sadd.s32 %s101, 1
      %p105 = scmp.eq.s32.totalorder %s20, 1
      %p106 = scmp.ne.s32.totalorder %s101, %s103
      %p107 = scmp.eq.s32.totalorder %s20, 0
      %p108 = por %p106, %p107
      %p109 = scmp.ne.s32.totalorder %s101, %s103
      %p110 = scmp.eq.s32.totalorder %s25, 1
      %p111 = por %p109, %p110
      %p112 = scmp.ne.s32.totalorder %s103, %s104
      %p113 = scmp.eq.s32.totalorder %s25, 0
      %p114 = por %p112, %p113
      %p115 = scmp.ne.s32.totalorder %s103, %s104
      %p116 = scmp.eq.s32.totalorder %s26, 1
      %p117 = por %p115, %p116
      %p119 = scmp.ne.s32.totalorder %s104, %s118
      %p120 = scmp.eq.s32.totalorder %s26, 0
      %p121 = por %p119, %p120
      %s122 = ssub.s32 %s20, %s27
      %p123 = scmp.eq.s32.totalorder %s122, 0
      %s125 = sadd.s32 %s124, 1
      %s126 = scalar_select %p123, %s124, %s125
      %p129 = pneg %p123
      %p130 = scmp.eq.s32.totalorder %s20, 1
      %p131 = por %p129, %p130
      %p132 = scmp.ne.s32.totalorder %s124, %s127
      %p133 = scmp.eq.s32.totalorder %s20, 0
      %p134 = por %p132, %p133
      %p135 = scmp.ne.s32.totalorder %s124, %s127
      %p136 = scmp.eq.s32.totalorder %s25, 1
      %p137 = por %p135, %p136
      %p138 = scmp.ne.s32.totalorder %s127, %s128
      %p139 = scmp.eq.s32.totalorder %s25, 0
      %p140 = por %p138, %p139
      %p141 = scmp.ne.s32.totalorder %s127, %s128
      %p142 = scmp.eq.s32.totalorder %s26, 1
      %p143 = por %p141, %p142
      %p145 = scmp.ne.s32.totalorder %s128, %s144
      %p146 = scmp.eq.s32.totalorder %s26, 0
      %p147 = por %p145, %p146
      %p148 = scmp.le.s32.totalorder 1, %s20
      %p149 = scmp.lt.s32.totalorder %s20, 3
      %p150 = pnand %p148, %p149
      %p151 = pneg %p150
      // Predicated region
      $region9: #{_lambda_.9} parent=5 // pred_check
        _
      $region10: #{_lambda_.9} parent=5 // pred_check_branch
        %153 = sbr.rel (%p150) target = $region12
      $region11: #{_lambda_.9} parent=5 // pred_region
        %s154 = ssub.s32 %s20, 1
        // Predicated region
        $region13: #{_lambda_.9} parent=11 // pred_check
          %p155 = pneg %p93
        $region14: #{_lambda_.9} parent=11 // pred_check_branch
          %157 = sbr.rel (%p155) target = $region16
        $region15: #{_lambda_.9} parent=11 // pred_region
          %s159 = ssub.s32 1024, 1024
          %160 = vsyncadd [#allocation6], %s159
          %s161 = sshll.u32 [#allocation7], 4
          %s162 = int_to_ptr.vmem [resolvable:$true] %s161
          %167 = dma.hbm_to_vmem [thread:$0]  %s2, 1024, %s162, [#allocation6], 64, 64, 4
        $region16: #{_lambda_.9} parent=11 // pred_fallthru
          _
        // Predicated region
        $region17: #{_lambda_.9} parent=11 // pred_check
          %p168 = pneg %p114
        $region18: #{_lambda_.9} parent=11 // pred_check_branch
          %170 = sbr.rel (%p168) target = $region20
        $region19: #{_lambda_.9} parent=11 // pred_region
          %s172 = ssub.s32 16, 16
          %173 = vsyncadd [#allocation9], %s172
          %s175 = sshll.u32 [#allocation8], 4
          %s176 = int_to_ptr.vmem [resolvable:$true] %s175
          %178 = dma.hbm_to_vmem [thread:$0]  %s3, 16, %s176, [#allocation9]
        $region20: #{_lambda_.9} parent=11 // pred_fallthru
          _
      $region12: #{_lambda_.9} parent=5 // pred_fallthru
        _
      %p179 = scmp.lt.s32.totalorder %s20, 2
      // Predicated region
      $region21: #{_lambda_.9} parent=5 // pred_check
        %p180 = pneg %p179
      $region22: #{_lambda_.9} parent=5 // pred_check_branch
        %182 = sbr.rel (%p180) target = $region24
      $region23: #{_lambda_.9} parent=5 // pred_region
        // Predicated region
        $region25: #{_lambda_.9} parent=23 // pred_check
          %p183 = pneg %p40
        $region26: #{_lambda_.9} parent=23 // pred_check_branch
          %185 = sbr.rel (%p183) target = $region28
        $region27: #{_lambda_.9} parent=23 // pred_region
          %s186 = sand.u32 %s30, 1
          %s187 = scalar_lea.sflag [#allocation3], %s186
          %s188 = sand.u32 %s30, 1
          %s189 = smul.addr %s188, 16
          %s190 = scalar_lea.vmem [#allocation2], %s189
          %s192 = ssub.s32 256, 256
          %193 = vsyncadd %s187, %s192
          %s194 = smul.addr %s20, 2
          %s195 = smul.addr %s194, 128
          %s196 = scalar_lea.hbm %s0, %s195
          %s197 = sshll.u32 %s190, 4
          %s198 = int_to_ptr.vmem [resolvable:$true] %s197
          %203 = dma.hbm_to_vmem [thread:$0]  %s196, 256, %s198, %s187, 128, 128, 8
        $region28: #{_lambda_.9} parent=23 // pred_fallthru
          _
        // Predicated region
        $region29: #{_lambda_.9} parent=23 // pred_check
          %p204 = pneg %p66
        $region30: #{_lambda_.9} parent=23 // pred_check_branch
          %206 = sbr.rel (%p204) target = $region32
        $region31: #{_lambda_.9} parent=23 // pred_region
          %s207 = sand.u32 %s20, 1
          %s208 = scalar_lea.sflag [#allocation6], %s207
          %s209 = sand.u32 %s56, 1
          %s210 = smul.addr %s209, 2
          %s211 = scalar_lea.vmem [#allocation5], %s210
          %s213 = ssub.s32 32, 32
          %214 = vsyncadd %s208, %s213
          %s215 = smul.addr %s20, 32
          %s216 = scalar_lea.hbm %s1, %s215
          %s218 = sshll.u32 %s211, 4
          %s219 = int_to_ptr.vmem [resolvable:$true] %s218
          %221 = dma.hbm_to_vmem [thread:$0]  %s216, 32, %s219, %s208
        $region32: #{_lambda_.9} parent=23 // pred_fallthru
          _
      $region24: #{_lambda_.9} parent=5 // pred_fallthru
        _
      %p222 = scmp.le.s32.totalorder 1, %s20
      %p223 = scmp.lt.s32.totalorder %s20, 3
      %p224 = pnand %p222, %p223
      %p225 = pneg %p224
      // Predicated region
      $region33: #{_lambda_.9} parent=5 // pred_check
        _
      $region34: #{_lambda_.9} parent=5 // pred_check_branch
        %227 = sbr.rel (%p224) target = $region36
      $region35: #{_lambda_.9} parent=5 // pred_region
        %s228 = ssub.s32 %s20, 1
        %s229 = sand.u32 %s33, 1
        %s230 = scalar_lea.sflag [#allocation3], %s229
        %s231 = sand.u32 %s33, 1
        %s232 = smul.addr %s231, 16
        %s233 = scalar_lea.vmem [#allocation2], %s232
        // Predicated region
        $region37: #{_lambda_.9} parent=35 // pred_check
          %p234 = pneg %p46
        $region38: #{_lambda_.9} parent=35 // pred_check_branch
          %236 = sbr.rel (%p234) target = $region40
        $region39: #{_lambda_.9} parent=35 // pred_region
          %237 = dma.done %s230, 256
        $region40: #{_lambda_.9} parent=35 // pred_fallthru
          _
        %s238 = sand.u32 %s25, 1
        %s239 = scalar_lea.sflag [#allocation6], %s238
        %s240 = sand.u32 %s59, 1
        %s241 = smul.addr %s240, 2
        %s242 = scalar_lea.vmem [#allocation5], %s241
        // Predicated region
        $region41: #{_lambda_.9} parent=35 // pred_check
          %p243 = pneg %p72
        $region42: #{_lambda_.9} parent=35 // pred_check_branch
          %245 = sbr.rel (%p243) target = $region44
        $region43: #{_lambda_.9} parent=35 // pred_region
          %246 = dma.done %s239, 32
        $region44: #{_lambda_.9} parent=35 // pred_fallthru
          _
        // Predicated region
        $region45: #{_lambda_.9} parent=35 // pred_check
          %p247 = pneg %p93
        $region46: #{_lambda_.9} parent=35 // pred_check_branch
          %249 = sbr.rel (%p247) target = $region48
        $region47: #{_lambda_.9} parent=35 // pred_region
          %250 = dma.done [#allocation6], 1024
        $region48: #{_lambda_.9} parent=35 // pred_fallthru
          _
        // Predicated region
        $region49: #{_lambda_.9} parent=35 // pred_check
          %p251 = pneg %p114
        $region50: #{_lambda_.9} parent=35 // pred_check_branch
          %253 = sbr.rel (%p251) target = $region52
        $region51: #{_lambda_.9} parent=35 // pred_region
          %254 = dma.done [#allocation9], 16
        $region52: #{_lambda_.9} parent=35 // pred_fallthru
          _
        %s255 = sand.u32 %s33, 1
        %s256 = scalar_lea.sflag [#allocation3], %s255
        %s257 = sand.u32 %s33, 1
        %s258 = smul.addr %s257, 16
        %s259 = scalar_lea.vmem [#allocation2], %s258
        %p260 = pneg %p46
        %p261 = pneg %p43
        %s262 = sand.u32 %s25, 1
        %s263 = scalar_lea.sflag [#allocation6], %s262
        %s264 = sand.u32 %s59, 1
        %s265 = smul.addr %s264, 2
        %s266 = scalar_lea.vmem [#allocation5], %s265
        %p267 = pneg %p72
        %p268 = pneg %p69
        %p269 = pneg %p93
        %p270 = pneg %p90
        %p271 = pneg %p114
        %p272 = pneg %p111
        %p273 = pneg %p140
        %p274 = pneg %p137
        %s275 = sand.u32 %s127, 1
        %s276 = scalar_lea.sflag [#allocation4], %s275
        %s277 = sand.u32 %s127, 1
        %s278 = smul.addr %s277, 16
        %s279 = scalar_lea.vmem [#allocation10], %s278
        %v281 = vld [vmem:[%s233] sm:$0xff]
        %v282 = vld [vmem:[%s233 + $0x8] sm:$0xff]
        %v283 = vld [vmem:[%s242] sm:$0x3]
        %284 = vadd.xlane.f32.xlu0 %v281
        %v285 = vpop.xlane.xlu0 %284
        %286 = vadd.xlane.f32.xlu0 %v282
        %v287 = vpop.xlane.xlu0 %286
        %v288 = vrcp.pop 128.0
        %v289 = vmul.f32 %v285, %v288
        %v290 = vmul.f32 %v287, %v288
        %v291 = vsub.f32 %v281, %v289
        %v292 = vsub.f32 %v282, %v290
        %v293 = vmul.f32 %v291, %v291
        %v294 = vmul.f32 %v292, %v292
        %295 = vadd.xlane.f32.xlu0 %v293
        %v296 = vpop.xlane.xlu0 %295
        %297 = vadd.xlane.f32.xlu0 %v294
        %v298 = vpop.xlane.xlu0 %297
        %v299 = vmul.f32 %v296, %v288
        %v300 = vmul.f32 %v298, %v288
        %v301 = vadd.f32 %v299, 1e-06
        %v302 = vadd.f32 %v300, 1e-06
        %v303 = vrsqrt.pop %v301
        %v304 = vrsqrt.pop %v302
        %v305 = vmul.f32 %v291, %v303
        %v306 = vmul.f32 %v292, %v304
        %v307 = vadd.f32 %v283, 1.0
        %v308 = vlaneseq
        %v309 = vshrl.u32 %v308, 7
        %v310 = vsub.s32 1, %v309
        %v311 = vrot.slane %v307, %v310
        %v312 = vmul.f32 %v305, %v311
        %v313 = vmul.f32 %v306, %v311
        %v314 = vlaneseq
        %v315 = vshrl.u32 %v314, 7
        %v316 = vsub.s32 0, %v315
        %v317 = vrot.slane %v283, %v316
        %v318 = vadd.f32 %v312, %v317
        %v319 = vadd.f32 %v313, %v317
        %v320 = vpack.c.bf16 %v319, %v318
        %v321 = vld [vmem:[#allocation7] sm:$0xf]
        %v322 = vld [vmem:[#allocation7 + $0x4] sm:$0xf]
        %v323 = vld [vmem:[#allocation7 + $0x8] sm:$0xf]
        %v324 = vld [vmem:[#allocation7 + $0xc] sm:$0xf]
        %v325 = vld [vmem:[#allocation7 + $0x10] sm:$0xf]
        %v326 = vld [vmem:[#allocation7 + $0x14] sm:$0xf]
        %v327 = vld [vmem:[#allocation7 + $0x18] sm:$0xf]
        %v328 = vld [vmem:[#allocation7 + $0x1c] sm:$0xf]
        %v329 = vld [vmem:[#allocation7 + $0x20] sm:$0xf]
        %v330 = vld [vmem:[#allocation7 + $0x24] sm:$0xf]
        %v331 = vld [vmem:[#allocation7 + $0x28] sm:$0xf]
        %v332 = vld [vmem:[#allocation7 + $0x2c] sm:$0xf]
        %v333 = vld [vmem:[#allocation7 + $0x30] sm:$0xf]
        %v334 = vld [vmem:[#allocation7 + $0x34] sm:$0xf]
        %v335 = vld [vmem:[#allocation7 + $0x38] sm:$0xf]
        %v336 = vld [vmem:[#allocation7 + $0x3c] sm:$0xf]
        %v337 = vld [vmem:[#allocation8] sm:$0x1]
        %v339 = vlaneseq
        %v340 = vshrl.u32 %v339, 7
        %v341 = vsub.s32 0, %v340
        %v342 = vrot.slane %v337, %v341
        %v360 = vunpack.c.l.b16 %v321
        %v361 = vunpack.c.l.b16 %v322
        %v362 = vunpack.c.l.b16 %v323
        %v363 = vunpack.c.l.b16 %v324
        %v364 = vunpack.c.l.b16 %v325
        %v365 = vunpack.c.l.b16 %v326
        %v366 = vunpack.c.l.b16 %v327
        %v367 = vunpack.c.l.b16 %v328
        %v368 = vunpack.c.l.b16 %v329
        %v369 = vunpack.c.l.b16 %v330
        %v370 = vunpack.c.l.b16 %v331
        %v371 = vunpack.c.l.b16 %v332
        %v372 = vunpack.c.l.b16 %v333
        %v373 = vunpack.c.l.b16 %v334
        %v374 = vunpack.c.l.b16 %v335
        %v375 = vunpack.c.l.b16 %v336
        %v376 = vpack.c.b16 %v361, %v360
        %v377 = vpack.c.b16 %v363, %v362
        %v378 = vpack.c.b16 %v365, %v364
        %v379 = vpack.c.b16 %v367, %v366
        %v380 = vpack.c.b16 %v369, %v368
        %v381 = vpack.c.b16 %v371, %v370
        %v382 = vpack.c.b16 %v373, %v372
        %v383 = vpack.c.b16 %v375, %v374
        %392 = vmatprep.subr.bf16.mxu0 0
        %393 = vmatpush1.bf16.msra.mxu0 %v376
        %394 = vmatprep.subr.bf16.mxu0 0
        %395 = vmatpush1.bf16.msra.mxu0 %v377
        %396 = vmatprep.subr.bf16.mxu0 0
        %397 = vmatpush1.bf16.msra.mxu0 %v378
        %398 = vmatprep.subr.bf16.mxu0 0
        %399 = vmatpush1.bf16.msra.mxu0 %v379
        %400 = vmatprep.subr.bf16.mxu0 0
        %401 = vmatpush1.bf16.msra.mxu0 %v380
        %402 = vmatprep.subr.bf16.mxu0 0
        %403 = vmatpush1.bf16.msra.mxu0 %v381
        %404 = vmatprep.subr.bf16.mxu0 0
        %405 = vmatpush1.bf16.msra.mxu0 %v382
        %406 = vmatprep.subr.bf16.mxu0 0
        %407 = vmatpush1.bf16.msra.mxu0 %v383
        %408 = vmatprep.subr.bf16.mxu0 0
        %409 = vmatpush1.bf16.msra.mxu0 0
        %410 = vmatprep.subr.bf16.mxu0 0
        %411 = vmatpush1.bf16.msra.mxu0 0
        %412 = vmatprep.subr.bf16.mxu0 0
        %413 = vmatpush1.bf16.msra.mxu0 0
        %414 = vmatprep.subr.bf16.mxu0 0
        %415 = vmatpush1.bf16.msra.mxu0 0
        %416 = vmatprep.subr.bf16.mxu0 0
        %417 = vmatpush1.bf16.msra.mxu0 0
        %418 = vmatprep.subr.bf16.mxu0 0
        %419 = vmatpush1.bf16.msra.mxu0 0
        %420 = vmatprep.subr.bf16.mxu0 0
        %421 = vmatpush1.bf16.msra.mxu0 0
        %422 = vmatprep.subr.bf16.mxu0 0
        %423 = vmatpush1.bf16.msra.mxu0 0
        %424 = vmatprep.mubr.bf16.mxu0 0
        %425 = vmatmul.mubr.bf16.gmra.mrb[0].mxu0 %v320
        %v426 = vpop.f32.mrb[0].mxu0
        %v427 = vadd.f32 %v342, %v426
        %v428 = vpop.f32.mrb[0].mxu0
        %v429 = vpop.f32.mrb[0].mxu0
        %v430 = vadd.f32 %v342, %v429
        %v431 = vpop.f32.mrb[0].mxu0
        %432 = vdwg.mxu0
        %433 = vst [vmem:[%s279] sm:$0xff] %v427
        %434 = vst [vmem:[%s279 + $0x8] sm:$0xff] %v430
        %s435 = sand.u32 %s127, 1
        %s436 = scalar_lea.sflag [#allocation4], %s435
        %s437 = sand.u32 %s127, 1
        %s438 = smul.addr %s437, 16
        %s439 = scalar_lea.vmem [#allocation10], %s438
        // Predicated region
        $region53: #{_lambda_.9} parent=35 // pred_check
          %p440 = pneg %p137
        $region54: #{_lambda_.9} parent=35 // pred_check_branch
          %442 = sbr.rel (%p440) target = $region56
        $region55: #{_lambda_.9} parent=35 // pred_region
          %s444 = ssub.s32 256, 256
          %445 = vsyncadd %s436, %s444
          %s446 = smul.addr %s25, 2
          %s447 = smul.addr %s446, 128
          %s448 = scalar_lea.hbm %s4, %s447
          %s449 = sshll.u32 %s439, 4
          %s450 = int_to_ptr.vmem [resolvable:$true] %s449
          %455 = dma.vmem_to_hbm [thread:$0]  %s450, 256, %s448, %s436, 128, 128, 8
        $region56: #{_lambda_.9} parent=35 // pred_fallthru
          _
      $region36: #{_lambda_.9} parent=5 // pred_fallthru
        _
      %p456 = scmp.le.s32.totalorder 2, %s20
      // Predicated region
      $region57: #{_lambda_.9} parent=5 // pred_check
        %p457 = pneg %p456
      $region58: #{_lambda_.9} parent=5 // pred_check_branch
        %459 = sbr.rel (%p457) target = $region60
      $region59: #{_lambda_.9} parent=5 // pred_region
        %s460 = ssub.s32 %s20, 2
        // Predicated region
        $region61: #{_lambda_.9} parent=59 // pred_check
          %p461 = pneg %p143
        $region62: #{_lambda_.9} parent=59 // pred_check_branch
          %463 = sbr.rel (%p461) target = $region64
        $region63: #{_lambda_.9} parent=59 // pred_region
          %s464 = sand.u32 %s128, 1
          %s465 = scalar_lea.sflag [#allocation4], %s464
          %s466 = sand.u32 %s128, 1
          %s467 = smul.addr %s466, 16
          %s468 = scalar_lea.vmem [#allocation10], %s467
          %469 = dma.done %s465, 256
        $region64: #{_lambda_.9} parent=59 // pred_fallthru
          _
      $region60: #{_lambda_.9} parent=5 // pred_fallthru
        _
    $region6: #{_lambda_.9} parent=1 // loop_footer
      %s24 = sadd.s32 1, %s20
    $region7: #{_lambda_.9} parent=1 // loop_footer_branch
      %19 = sbr.rel target = $region3
    $region8: #{_lambda_.9} parent=1 // loop_exit
      _
    %470 = vsyncpa [#allocation3], 1
    %s471 = scalar_lea.sflag [#allocation3], 1
    %472 = vsyncpa %s471, 1
    %473 = vsyncpa [#allocation6], 1
    %s474 = scalar_lea.sflag [#allocation6], 1
    %475 = vsyncpa %s474, 1
    %476 = vsyncpa [#allocation9], 1
    %477 = vsyncpa [#allocation4], 1
    %s478 = scalar_lea.sflag [#allocation4], 1
    %479 = vsyncpa %s478, 1

// kernel: _lambda_.8
$region0: #{_lambda_.8}
  #allocation0 [shape = 'u32[]', space=smem, size = 0x4, offset = 0x4, fixed_abs, tag = 'smem constant byte address 0x4 - core index']
  #allocation1 [shape = 'u32[144,128]{1,0:T(1,128)}', space=vmem, size = 0x12000, scoped, tag = 'internal scratch']
  #allocation2 [shape = 'f32[2,24,128]{2,1,0:T(8,128)}', space=vmem, size = 0x6000, scoped, tag = 'scratch operand']
  %s0 = inlined_call_operand.hbm [shape: f32[2,24,128], index: 0, kind: input, shape index: {}]
  %s1 = inlined_call_operand.hbm [shape: f32[2,2,6,128], index: 1, kind: input, shape index: {}]
  %s2 = inlined_call_operand.hbm [shape: bf16[2,128,384], index: 2, kind: input, shape index: {}]
  %s3 = inlined_call_operand.hbm [shape: f32[2,1,384], index: 3, kind: input, shape index: {}]
  %s4 = inlined_call_operand.hbm [shape: bf16[2,128,128], index: 4, kind: input, shape index: {}]
  %s5 = inlined_call_operand.hbm [shape: f32[2,1,128], index: 5, kind: input, shape index: {}]
  %s6 = inlined_call_operand.hbm [shape: bf16[2,128,512], index: 6, kind: input, shape index: {}]
  %s7 = inlined_call_operand.hbm [shape: f32[2,1,512], index: 7, kind: input, shape index: {}]
  %s8 = inlined_call_operand.hbm [shape: bf16[2,512,128], index: 8, kind: input, shape index: {}]
  %s9 = inlined_call_operand.hbm [shape: f32[2,1,128], index: 9, kind: input, shape index: {}]
  %s10 = inlined_call_operand.hbm [shape: f32[2,24,128], index: 10, kind: output, shape index: {}]
  %s11 = sld [smem:[#allocation0]]
  $region121: #{_lambda_.8} parent=0
    _
  %s13 = ssub.s32 1, %s11
  %s14 = scalar_select 0, %s13, %s11
  $region1: #{_lambda_.8} parent=0
    #allocation3 [shape = 'u8[24576]{0}', space=vmem, size = 0x6000, scoped, tag = 'input window, operand 0, single buffered']
    #allocation4 [shape = 's32[2]{0}', space=sflag, size = 0x8, scoped, tag = 'scoped memory for _lambda_.8']
    #allocation5 [shape = 's32[2]{0}', space=sflag, size = 0x8, scoped, tag = 'scoped memory for _lambda_.8']
    #allocation6 [shape = 'u8[16384]{0}', space=vmem, size = 0x4000, scoped, tag = 'input window, operand 1']
    #allocation7 [shape = 's32[2]{0}', space=sflag, size = 0x8, scoped, tag = 'scoped memory for _lambda_.8']
    #allocation8 [shape = 'u8[196608]{0}', space=vmem, size = 0x30000, scoped, tag = 'input window, operand 2']
    #allocation9 [shape = 'u8[3072]{0}', space=vmem, size = 0xc00, scoped, tag = 'input window, operand 3']
    #allocation10 [shape = 's32[2]{0}', space=sflag, size = 0x8, scoped, tag = 'scoped memory for _lambda_.8']
    #allocation11 [shape = 'u8[65536]{0}', space=vmem, size = 0x10000, scoped, tag = 'input window, operand 4']
    #allocation12 [shape = 'u8[1024]{0}', space=vmem, size = 0x400, scoped, tag = 'input window, operand 5']
    #allocation13 [shape = 's32[2]{0}', space=sflag, size = 0x8, scoped, tag = 'scoped memory for _lambda_.8']
    #allocation14 [shape = 'u8[262144]{0}', space=vmem, size = 0x40000, scoped, tag = 'input window, operand 6']
    #allocation15 [shape = 'u8[4096]{0}', space=vmem, size = 0x1000, scoped, tag = 'input window, operand 7']
    #allocation16 [shape = 's32[2]{0}', space=sflag, size = 0x8, scoped, tag = 'scoped memory for _lambda_.8']
    #allocation17 [shape = 'u8[262144]{0}', space=vmem, size = 0x40000, scoped, tag = 'input window, operand 8']
    #allocation18 [shape = 'u8[1024]{0}', space=vmem, size = 0x400, scoped, tag = 'input window, operand 9']
    #allocation19 [shape = 's32[2]{0}', space=sflag, size = 0x8, scoped, tag = 'scoped memory for _lambda_.8']
    #allocation20 [shape = 'u8[24576]{0}', space=vmem, size = 0x6000, scoped, tag = 'output window, operand 0, single buffered']
    %15 = vsyncpa [#allocation4], 0
    %16 = vsyncpa [#allocation7], 0
    %s17 = scalar_lea.sflag [#allocation7], 1
    %18 = vsyncpa %s17, 0
    %19 = vsyncpa [#allocation10], 0
    %s20 = scalar_lea.sflag [#allocation10], 1
    %21 = vsyncpa %s20, 0
    %22 = vsyncpa [#allocation13], 0
    %s23 = scalar_lea.sflag [#allocation13], 1
    %24 = vsyncpa %s23, 0
    %25 = vsyncpa [#allocation16], 0
    %s26 = scalar_lea.sflag [#allocation16], 1
    %27 = vsyncpa %s26, 0
    %28 = vsyncpa [#allocation19], 0
    %s29 = scalar_lea.sflag [#allocation19], 1
    %30 = vsyncpa %s29, 0
    %31 = vsyncpa [#allocation5], 0
    loop: start=0, step=1, limit=4
    $region2: #{_lambda_.8} parent=1 // loop_pre_header
      _
    $region3: #{_lambda_.8} parent=1 // loop_header
      %s33 = sphi 0, %s37
      %p34 = scmp.ge.s32.totalorder %s33, 4
      %s40 = sphi 0, %s52
      %s41 = sphi 0, %s48
      %s42 = sphi 0, %s40
      %s43 = sphi 0, %s41
      %s44 = sphi 0, %s42
      %s45 = sphi 0, %s43
      %s55 = sphi 0, %s57
      %s58 = sphi 0, %s55
      %s59 = sphi 0, %s58
      %s75 = sphi 0, %s59
      %s83 = sphi 0, %s85
      %s86 = sphi 0, %s83
      %s87 = sphi 0, %s86
      %s103 = sphi 0, %s87
      %s109 = sphi 0, %s111
      %s112 = sphi 0, %s109
      %s113 = sphi 0, %s112
      %s129 = sphi 0, %s113
      %s135 = sphi 0, %s137
      %s138 = sphi 0, %s135
      %s139 = sphi 0, %s138
      %s155 = sphi 0, %s139
      %s161 = sphi 0, %s163
      %s164 = sphi 0, %s161
      %s165 = sphi 0, %s164
      %s181 = sphi 0, %s165
      %s187 = sphi 0, %s189
      %s190 = sphi 0, %s187
      %s191 = sphi 0, %s190
      %s207 = sphi 0, %s191
      %s213 = sphi 0, %s215
      %s216 = sphi 0, %s213
      %s217 = sphi 0, %s216
      %s233 = sphi 0, %s217
      %s239 = sphi 0, %s241
      %s242 = sphi 0, %s239
      %s243 = sphi 0, %s242
      %s259 = sphi 0, %s243
      %s265 = sphi 0, %s267
      %s268 = sphi 0, %s265
      %s269 = sphi 0, %s268
      %s285 = sphi 0, %s269
      %s291 = sphi 0, %s293
      %s294 = sphi 0, %s291
      %s295 = sphi 0, %s294
      %s311 = sphi 0, %s295
      %s317 = sphi 0, %s319
      %s320 = sphi 0, %s317
      %s321 = sphi 0, %s320
      %s337 = sphi 0, %s321
    $region4: #{_lambda_.8} parent=1 // loop_header_branch
      %36 = sbr.rel (%p34) target = $region8
    $region5: #{_lambda_.8} parent=1 // loop_body
      %s38 = ssub.s32 %s33, 1
      %s39 = ssub.s32 %s33, 2
      %s46 = sadd.s32 1, %s41
      %p47 = scmp.ge.s32.totalorder %s46, 2
      %s48 = scalar_select %p47, 0, %s46
      %s49 = sadd.s32 1, %s40
      %s50 = scalar_select %p47, %s49, %s40
      %p51 = scmp.ge.s32.totalorder %s50, 1
      %s52 = scalar_select %p51, 0, %s50
      %s53 = ssub.s32 %s40, %s52
      %p54 = scmp.eq.s32.totalorder %s53, 0
      %s56 = sadd.s32 %s55, 1
      %s57 = scalar_select %p54, %s55, %s56
      %p60 = pneg %p54
      %p61 = scmp.eq.s32.totalorder %s33, 1
      %p62 = por %p60, %p61
      %p63 = scmp.ne.s32.totalorder %s55, %s58
      %p64 = scmp.eq.s32.totalorder %s33, 0
      %p65 = por %p63, %p64
      %p66 = scmp.ne.s32.totalorder %s55, %s58
      %p67 = scmp.eq.s32.totalorder %s38, 1
      %p68 = por %p66, %p67
      %p69 = scmp.ne.s32.totalorder %s58, %s59
      %p70 = scmp.eq.s32.totalorder %s38, 0
      %p71 = por %p69, %p70
      %p72 = scmp.ne.s32.totalorder %s58, %s59
      %p73 = scmp.eq.s32.totalorder %s39, 1
      %p74 = por %p72, %p73
      %p76 = scmp.ne.s32.totalorder %s59, %s75
      %p77 = scmp.eq.s32.totalorder %s39, 0
      %p78 = por %p76, %p77
      %s79 = ssub.s32 %s41, %s48
      %s80 = ssub.s32 %s40, %s52
      %s81 = sor.u32 %s79, %s80
      %p82 = scmp.eq.s32.totalorder %s81, 0
      %s84 = sadd.s32 %s83, 1
      %s85 = scalar_select %p82, %s83, %s84
      %p88 = pneg %p82
      %p89 = scmp.eq.s32.totalorder %s33, 1
      %p90 = por %p88, %p89
      %p91 = scmp.ne.s32.totalorder %s83, %s86
      %p92 = scmp.eq.s32.totalorder %s33, 0
      %p93 = por %p91, %p92
      %p94 = scmp.ne.s32.totalorder %s83, %s86
      %p95 = scmp.eq.s32.totalorder %s38, 1
      %p96 = por %p94, %p95
      %p97 = scmp.ne.s32.totalorder %s86, %s87
      %p98 = scmp.eq.s32.totalorder %s38, 0
      %p99 = por %p97, %p98
      %p100 = scmp.ne.s32.totalorder %s86, %s87
      %p101 = scmp.eq.s32.totalorder %s39, 1
      %p102 = por %p100, %p101
      %p104 = scmp.ne.s32.totalorder %s87, %s103
      %p105 = scmp.eq.s32.totalorder %s39, 0
      %p106 = por %p104, %p105
      %s107 = ssub.s32 %s41, %s48
      %p108 = scmp.eq.s32.totalorder %s107, 0
      %s110 = sadd.s32 %s109, 1
      %s111 = scalar_select %p108, %s109, %s110
      %p114 = pneg %p108
      %p115 = scmp.eq.s32.totalorder %s33, 1
      %p116 = por %p114, %p115
      %p117 = scmp.ne.s32.totalorder %s109, %s112
      %p118 = scmp.eq.s32.totalorder %s33, 0
      %p119 = por %p117, %p118
      %p120 = scmp.ne.s32.totalorder %s109, %s112
      %p121 = scmp.eq.s32.totalorder %s38, 1
      %p122 = por %p120, %p121
      %p123 = scmp.ne.s32.totalorder %s112, %s113
      %p124 = scmp.eq.s32.totalorder %s38, 0
      %p125 = por %p123, %p124
      %p126 = scmp.ne.s32.totalorder %s112, %s113
      %p127 = scmp.eq.s32.totalorder %s39, 1
      %p128 = por %p126, %p127
      %p130 = scmp.ne.s32.totalorder %s113, %s129
      %p131 = scmp.eq.s32.totalorder %s39, 0
      %p132 = por %p130, %p131
      %s133 = ssub.s32 %s41, %s48
      %p134 = scmp.eq.s32.totalorder %s133, 0
      %s136 = sadd.s32 %s135, 1
      %s137 = scalar_select %p134, %s135, %s136
      %p140 = pneg %p134
      %p141 = scmp.eq.s32.totalorder %s33, 1
      %p142 = por %p140, %p141
      %p143 = scmp.ne.s32.totalorder %s135, %s138
      %p144 = scmp.eq.s32.totalorder %s33, 0
      %p145 = por %p143, %p144
      %p146 = scmp.ne.s32.totalorder %s135, %s138
      %p147 = scmp.eq.s32.totalorder %s38, 1
      %p148 = por %p146, %p147
      %p149 = scmp.ne.s32.totalorder %s138, %s139
      %p150 = scmp.eq.s32.totalorder %s38, 0
      %p151 = por %p149, %p150
      %p152 = scmp.ne.s32.totalorder %s138, %s139
      %p153 = scmp.eq.s32.totalorder %s39, 1
      %p154 = por %p152, %p153
      %p156 = scmp.ne.s32.totalorder %s139, %s155
      %p157 = scmp.eq.s32.totalorder %s39, 0
      %p158 = por %p156, %p157
      %s159 = ssub.s32 %s41, %s48
      %p160 = scmp.eq.s32.totalorder %s159, 0
      %s162 = sadd.s32 %s161, 1
      %s163 = scalar_select %p160, %s161, %s162
      %p166 = pneg %p160
      %p167 = scmp.eq.s32.totalorder %s33, 1
      %p168 = por %p166, %p167
      %p169 = scmp.ne.s32.totalorder %s161, %s164
      %p170 = scmp.eq.s32.totalorder %s33, 0
      %p171 = por %p169, %p170
      %p172 = scmp.ne.s32.totalorder %s161, %s164
      %p173 = scmp.eq.s32.totalorder %s38, 1
      %p174 = por %p172, %p173
      %p175 = scmp.ne.s32.totalorder %s164, %s165
      %p176 = scmp.eq.s32.totalorder %s38, 0
      %p177 = por %p175, %p176
      %p178 = scmp.ne.s32.totalorder %s164, %s165
      %p179 = scmp.eq.s32.totalorder %s39, 1
      %p180 = por %p178, %p179
      %p182 = scmp.ne.s32.totalorder %s165, %s181
      %p183 = scmp.eq.s32.totalorder %s39, 0
      %p184 = por %p182, %p183
      %s185 = ssub.s32 %s41, %s48
      %p186 = scmp.eq.s32.totalorder %s185, 0
      %s188 = sadd.s32 %s187, 1
      %s189 = scalar_select %p186, %s187, %s188
      %p192 = pneg %p186
      %p193 = scmp.eq.s32.totalorder %s33, 1
      %p194 = por %p192, %p193
      %p195 = scmp.ne.s32.totalorder %s187, %s190
      %p196 = scmp.eq.s32.totalorder %s33, 0
      %p197 = por %p195, %p196
      %p198 = scmp.ne.s32.totalorder %s187, %s190
      %p199 = scmp.eq.s32.totalorder %s38, 1
      %p200 = por %p198, %p199
      %p201 = scmp.ne.s32.totalorder %s190, %s191
      %p202 = scmp.eq.s32.totalorder %s38, 0
      %p203 = por %p201, %p202
      %p204 = scmp.ne.s32.totalorder %s190, %s191
      %p205 = scmp.eq.s32.totalorder %s39, 1
      %p206 = por %p204, %p205
      %p208 = scmp.ne.s32.totalorder %s191, %s207
      %p209 = scmp.eq.s32.totalorder %s39, 0
      %p210 = por %p208, %p209
      %s211 = ssub.s32 %s41, %s48
      %p212 = scmp.eq.s32.totalorder %s211, 0
      %s214 = sadd.s32 %s213, 1
      %s215 = scalar_select %p212, %s213, %s214
      %p218 = pneg %p212
      %p219 = scmp.eq.s32.totalorder %s33, 1
      %p220 = por %p218, %p219
      %p221 = scmp.ne.s32.totalorder %s213, %s216
      %p222 = scmp.eq.s32.totalorder %s33, 0
      %p223 = por %p221, %p222
      %p224 = scmp.ne.s32.totalorder %s213, %s216
      %p225 = scmp.eq.s32.totalorder %s38, 1
      %p226 = por %p224, %p225
      %p227 = scmp.ne.s32.totalorder %s216, %s217
      %p228 = scmp.eq.s32.totalorder %s38, 0
      %p229 = por %p227, %p228
      %p230 = scmp.ne.s32.totalorder %s216, %s217
      %p231 = scmp.eq.s32.totalorder %s39, 1
      %p232 = por %p230, %p231
      %p234 = scmp.ne.s32.totalorder %s217, %s233
      %p235 = scmp.eq.s32.totalorder %s39, 0
      %p236 = por %p234, %p235
      %s237 = ssub.s32 %s41, %s48
      %p238 = scmp.eq.s32.totalorder %s237, 0
      %s240 = sadd.s32 %s239, 1
      %s241 = scalar_select %p238, %s239, %s240
      %p244 = pneg %p238
      %p245 = scmp.eq.s32.totalorder %s33, 1
      %p246 = por %p244, %p245
      %p247 = scmp.ne.s32.totalorder %s239, %s242
      %p248 = scmp.eq.s32.totalorder %s33, 0
      %p249 = por %p247, %p248
      %p250 = scmp.ne.s32.totalorder %s239, %s242
      %p251 = scmp.eq.s32.totalorder %s38, 1
      %p252 = por %p250, %p251
      %p253 = scmp.ne.s32.totalorder %s242, %s243
      %p254 = scmp.eq.s32.totalorder %s38, 0
      %p255 = por %p253, %p254
      %p256 = scmp.ne.s32.totalorder %s242, %s243
      %p257 = scmp.eq.s32.totalorder %s39, 1
      %p258 = por %p256, %p257
      %p260 = scmp.ne.s32.totalorder %s243, %s259
      %p261 = scmp.eq.s32.totalorder %s39, 0
      %p262 = por %p260, %p261
      %s263 = ssub.s32 %s41, %s48
      %p264 = scmp.eq.s32.totalorder %s263, 0
      %s266 = sadd.s32 %s265, 1
      %s267 = scalar_select %p264, %s265, %s266
      %p270 = pneg %p264
      %p271 = scmp.eq.s32.totalorder %s33, 1
      %p272 = por %p270, %p271
      %p273 = scmp.ne.s32.totalorder %s265, %s268
      %p274 = scmp.eq.s32.totalorder %s33, 0
      %p275 = por %p273, %p274
      %p276 = scmp.ne.s32.totalorder %s265, %s268
      %p277 = scmp.eq.s32.totalorder %s38, 1
      %p278 = por %p276, %p277
      %p279 = scmp.ne.s32.totalorder %s268, %s269
      %p280 = scmp.eq.s32.totalorder %s38, 0
      %p281 = por %p279, %p280
      %p282 = scmp.ne.s32.totalorder %s268, %s269
      %p283 = scmp.eq.s32.totalorder %s39, 1
      %p284 = por %p282, %p283
      %p286 = scmp.ne.s32.totalorder %s269, %s285
      %p287 = scmp.eq.s32.totalorder %s39, 0
      %p288 = por %p286, %p287
      %s289 = ssub.s32 %s41, %s48
      %p290 = scmp.eq.s32.totalorder %s289, 0
      %s292 = sadd.s32 %s291, 1
      %s293 = scalar_select %p290, %s291, %s292
      %p296 = pneg %p290
      %p297 = scmp.eq.s32.totalorder %s33, 1
      %p298 = por %p296, %p297
      %p299 = scmp.ne.s32.totalorder %s291, %s294
      %p300 = scmp.eq.s32.totalorder %s33, 0
      %p301 = por %p299, %p300
      %p302 = scmp.ne.s32.totalorder %s291, %s294
      %p303 = scmp.eq.s32.totalorder %s38, 1
      %p304 = por %p302, %p303
      %p305 = scmp.ne.s32.totalorder %s294, %s295
      %p306 = scmp.eq.s32.totalorder %s38, 0
      %p307 = por %p305, %p306
      %p308 = scmp.ne.s32.totalorder %s294, %s295
      %p309 = scmp.eq.s32.totalorder %s39, 1
      %p310 = por %p308, %p309
      %p312 = scmp.ne.s32.totalorder %s295, %s311
      %p313 = scmp.eq.s32.totalorder %s39, 0
      %p314 = por %p312, %p313
      %s315 = ssub.s32 %s40, %s52
      %p316 = scmp.eq.s32.totalorder %s315, 0
      %s318 = sadd.s32 %s317, 1
      %s319 = scalar_select %p316, %s317, %s318
      %p322 = pneg %p316
      %p323 = scmp.eq.s32.totalorder %s33, 1
      %p324 = por %p322, %p323
      %p325 = scmp.ne.s32.totalorder %s317, %s320
      %p326 = scmp.eq.s32.totalorder %s33, 0
      %p327 = por %p325, %p326
      %p328 = scmp.ne.s32.totalorder %s317, %s320
      %p329 = scmp.eq.s32.totalorder %s38, 1
      %p330 = por %p328, %p329
      %p331 = scmp.ne.s32.totalorder %s320, %s321
      %p332 = scmp.eq.s32.totalorder %s38, 0
      %p333 = por %p331, %p332
      %p334 = scmp.ne.s32.totalorder %s320, %s321
      %p335 = scmp.eq.s32.totalorder %s39, 1
      %p336 = por %p334, %p335
      %p338 = scmp.ne.s32.totalorder %s321, %s337
      %p339 = scmp.eq.s32.totalorder %s39, 0
      %p340 = por %p338, %p339
      %p341 = scmp.le.s32.totalorder 1, %s33
      %p342 = scmp.lt.s32.totalorder %s33, 3
      %p343 = pnand %p341, %p342
      %p344 = pneg %p343
      // Predicated region
      $region9: #{_lambda_.8} parent=5 // pred_check
        _
      $region10: #{_lambda_.8} parent=5 // pred_check_branch
        %346 = sbr.rel (%p343) target = $region12
      $region11: #{_lambda_.8} parent=5 // pred_region
        %s347 = ssub.s32 %s33, 1
        // Predicated region
        $region13: #{_lambda_.8} parent=11 // pred_check
          %p348 = pneg %p71
        $region14: #{_lambda_.8} parent=11 // pred_check_branch
          %350 = sbr.rel (%p348) target = $region16
        $region15: #{_lambda_.8} parent=11 // pred_region
          %s351 = smul.u32 2, %s42
          %s353 = ssub.s32 768, 768
          %354 = vsyncadd [#allocation4], %s353
          %s355 = smul.addr %s351, 3
          %s356 = smul.addr %s355, 128
          %s357 = scalar_lea.hbm %s0, %s356
          %s358 = sshll.u32 [#allocation3], 4
          %s359 = int_to_ptr.vmem [resolvable:$true] %s358
          %364 = dma.hbm_to_vmem [thread:$0]  %s357, 768, %s359, [#allocation4], 128, 128, 8
        $region16: #{_lambda_.8} parent=11 // pred_fallthru
          _
      $region12: #{_lambda_.8} parent=5 // pred_fallthru
        _
      %p365 = scmp.lt.s32.totalorder %s33, 2
      // Predicated region
      $region17: #{_lambda_.8} parent=5 // pred_check
        %p366 = pneg %p365
      $region18: #{_lambda_.8} parent=5 // pred_check_branch
        %368 = sbr.rel (%p366) target = $region20
      $region19: #{_lambda_.8} parent=5 // pred_region
        // Predicated region
        $region21: #{_lambda_.8} parent=19 // pred_check
          %p369 = pneg %p93
        $region22: #{_lambda_.8} parent=19 // pred_check_branch
          %371 = sbr.rel (%p369) target = $region24
        $region23: #{_lambda_.8} parent=19 // pred_region
          %s372 = sand.u32 %s33, 1
          %s373 = scalar_lea.sflag [#allocation7], %s372
          %s374 = sand.u32 %s83, 1
          %s375 = smul.addr %s374, 16
          %s376 = scalar_lea.vmem [#allocation6], %s375
          %s377 = smul.u32 2, %s40
          %s379 = ssub.s32 256, 256
          %380 = vsyncadd %s373, %s379
          %s381 = smul.addr %s41, 2
          %s382 = sadd.s32 %s377, %s381
          %s383 = smul.addr %s382, 128
          %s384 = scalar_lea.hbm %s1, %s383
          %s385 = sshll.u32 %s376, 4
          %s386 = int_to_ptr.vmem [resolvable:$true] %s385
          %391 = dma.hbm_to_vmem [thread:$0]  %s384, 256, %s386, %s373, 128, 128, 8
        $region24: #{_lambda_.8} parent=19 // pred_fallthru
          _
        // Predicated region
        $region25: #{_lambda_.8} parent=19 // pred_check
          %p392 = pneg %p119
        $region26: #{_lambda_.8} parent=19 // pred_check_branch
          %394 = sbr.rel (%p392) target = $region28
        $region27: #{_lambda_.8} parent=19 // pred_region
          %s395 = sand.u32 %s33, 1
          %s396 = scalar_lea.sflag [#allocation7], %s395
          %s397 = sand.u32 %s109, 1
          %s398 = smul.addr %s397, 192
          %s399 = scalar_lea.vmem [#allocation8], %s398
          %s401 = ssub.s32 3072, 3072
          %402 = vsyncadd %s396, %s401
          %s403 = smul.addr %s41, 48
          %s404 = smul.addr %s403, 64
          %s405 = scalar_lea.hbm %s2, %s404
          %s406 = sshll.u32 %s399, 4
          %s407 = int_to_ptr.vmem [resolvable:$true] %s406
          %412 = dma.hbm_to_vmem [thread:$0]  %s405, 3072, %s407, %s396, 192, 192, 12
        $region28: #{_lambda_.8} parent=19 // pred_fallthru
          _
        // Predicated region
        $region29: #{_lambda_.8} parent=19 // pred_check
          %p413 = pneg %p145
        $region30: #{_lambda_.8} parent=19 // pred_check_branch
          %415 = sbr.rel (%p413) target = $region32
        $region31: #{_lambda_.8} parent=19 // pred_region
          %s416 = sand.u32 %s33, 1
          %s417 = scalar_lea.sflag [#allocation10], %s416
          %s418 = sand.u32 %s135, 1
          %s419 = smul.addr %s418, 3
          %s420 = scalar_lea.vmem [#allocation9], %s419
          %s422 = ssub.s32 48, 48
          %423 = vsyncadd %s417, %s422
          %s424 = smul.addr %s41, 3
          %s425 = smul.addr %s424, 16
          %s426 = scalar_lea.hbm %s3, %s425
          %s428 = sshll.u32 %s420, 4
          %s429 = int_to_ptr.vmem [resolvable:$true] %s428
          %431 = dma.hbm_to_vmem [thread:$0]  %s426, 48, %s429, %s417
        $region32: #{_lambda_.8} parent=19 // pred_fallthru
          _
        // Predicated region
        $region33: #{_lambda_.8} parent=19 // pred_check
          %p432 = pneg %p171
        $region34: #{_lambda_.8} parent=19 // pred_check_branch
          %434 = sbr.rel (%p432) target = $region36
        $region35: #{_lambda_.8} parent=19 // pred_region
          %s435 = sand.u32 %s33, 1
          %s436 = scalar_lea.sflag [#allocation10], %s435
          %s437 = sand.u32 %s161, 1
          %s438 = smul.addr %s437, 64
          %s439 = scalar_lea.vmem [#allocation11], %s438
          %s441 = ssub.s32 1024, 1024
          %442 = vsyncadd %s436, %s441
          %s443 = smul.addr %s41, 16
          %s444 = smul.addr %s443, 64
          %s445 = scalar_lea.hbm %s4, %s444
          %s446 = sshll.u32 %s439, 4
          %s447 = int_to_ptr.vmem [resolvable:$true] %s446
          %452 = dma.hbm_to_vmem [thread:$0]  %s445, 1024, %s447, %s436, 64, 64, 4
        $region36: #{_lambda_.8} parent=19 // pred_fallthru
          _
        // Predicated region
        $region37: #{_lambda_.8} parent=19 // pred_check
          %p453 = pneg %p197
        $region38: #{_lambda_.8} parent=19 // pred_check_branch
          %455 = sbr.rel (%p453) target = $region40
        $region39: #{_lambda_.8} parent=19 // pred_region
          %s456 = sand.u32 %s33, 1
          %s457 = scalar_lea.sflag [#allocation13], %s456
          %s458 = sand.u32 %s187, 1
          %s459 = scalar_lea.vmem [#allocation12], %s458
          %s461 = ssub.s32 16, 16
          %462 = vsyncadd %s457, %s461
          %s463 = smul.addr %s41, 16
          %s464 = scalar_lea.hbm %s5, %s463
          %s466 = sshll.u32 %s459, 4
          %s467 = int_to_ptr.vmem [resolvable:$true] %s466
          %469 = dma.hbm_to_vmem [thread:$0]  %s464, 16, %s467, %s457
        $region40: #{_lambda_.8} parent=19 // pred_fallthru
          _
        // Predicated region
        $region41: #{_lambda_.8} parent=19 // pred_check
          %p470 = pneg %p223
        $region42: #{_lambda_.8} parent=19 // pred_check_branch
          %472 = sbr.rel (%p470) target = $region44
        $region43: #{_lambda_.8} parent=19 // pred_region
          %s473 = sand.u32 %s33, 1
          %s474 = scalar_lea.sflag [#allocation13], %s473
          %s475 = sand.u32 %s213, 1
          %s476 = smul.addr %s475, 256
          %s477 = scalar_lea.vmem [#allocation14], %s476
          %s479 = ssub.s32 4096, 4096
          %480 = vsyncadd %s474, %s479
          %s481 = smul.addr %s41, 64
          %s482 = smul.addr %s481, 64
          %s483 = scalar_lea.hbm %s6, %s482
          %s484 = sshll.u32 %s477, 4
          %s485 = int_to_ptr.vmem [resolvable:$true] %s484
          %490 = dma.hbm_to_vmem [thread:$0]  %s483, 4096, %s485, %s474, 256, 256, 16
        $region44: #{_lambda_.8} parent=19 // pred_fallthru
          _
        // Predicated region
        $region45: #{_lambda_.8} parent=19 // pred_check
          %p491 = pneg %p249
        $region46: #{_lambda_.8} parent=19 // pred_check_branch
          %493 = sbr.rel (%p491) target = $region48
        $region47: #{_lambda_.8} parent=19 // pred_region
          %s494 = sand.u32 %s33, 1
          %s495 = scalar_lea.sflag [#allocation16], %s494
          %s496 = sand.u32 %s239, 1
          %s497 = smul.addr %s496, 4
          %s498 = scalar_lea.vmem [#allocation15], %s497
          %s500 = ssub.s32 64, 64
          %501 = vsyncadd %s495, %s500
          %s502 = smul.addr %s41, 4
          %s503 = smul.addr %s502, 16
          %s504 = scalar_lea.hbm %s7, %s503
          %s506 = sshll.u32 %s498, 4
          %s507 = int_to_ptr.vmem [resolvable:$true] %s506
          %509 = dma.hbm_to_vmem [thread:$0]  %s504, 64, %s507, %s495
        $region48: #{_lambda_.8} parent=19 // pred_fallthru
          _
        // Predicated region
        $region49: #{_lambda_.8} parent=19 // pred_check
          %p510 = pneg %p275
        $region50: #{_lambda_.8} parent=19 // pred_check_branch
          %512 = sbr.rel (%p510) target = $region52
        $region51: #{_lambda_.8} parent=19 // pred_region
          %s513 = sand.u32 %s33, 1
          %s514 = scalar_lea.sflag [#allocation16], %s513
          %s515 = sand.u32 %s265, 1
          %s516 = smul.addr %s515, 256
          %s517 = scalar_lea.vmem [#allocation17], %s516
          %s519 = ssub.s32 4096, 4096
          %520 = vsyncadd %s514, %s519
          %s521 = smul.addr %s41, 64
          %s522 = smul.addr %s521, 64
          %s523 = scalar_lea.hbm %s8, %s522
          %s524 = sshll.u32 %s517, 4
          %s525 = int_to_ptr.vmem [resolvable:$true] %s524
          %530 = dma.hbm_to_vmem [thread:$0]  %s523, 4096, %s525, %s514, 64, 64, 4
        $region52: #{_lambda_.8} parent=19 // pred_fallthru
          _
        // Predicated region
        $region53: #{_lambda_.8} parent=19 // pred_check
          %p531 = pneg %p301
        $region54: #{_lambda_.8} parent=19 // pred_check_branch
          %533 = sbr.rel (%p531) target = $region56
        $region55: #{_lambda_.8} parent=19 // pred_region
          %s534 = sand.u32 %s291, 1
          %s535 = scalar_lea.sflag [#allocation19], %s534
          %s536 = sand.u32 %s291, 1
          %s537 = scalar_lea.vmem [#allocation18], %s536
          %s539 = ssub.s32 16, 16
          %540 = vsyncadd %s535, %s539
          %s541 = smul.addr %s41, 16
          %s542 = scalar_lea.hbm %s9, %s541
          %s544 = sshll.u32 %s537, 4
          %s545 = int_to_ptr.vmem [resolvable:$true] %s544
          %547 = dma.hbm_to_vmem [thread:$0]  %s542, 16, %s545, %s535
        $region56: #{_lambda_.8} parent=19 // pred_fallthru
          _
      $region20: #{_lambda_.8} parent=5 // pred_fallthru
        _
      %p548 = scmp.le.s32.totalorder 1, %s33
      %p549 = scmp.lt.s32.totalorder %s33, 3
      %p550 = pnand %p548, %p549
      %p551 = pneg %p550
      // Predicated region
      $region57: #{_lambda_.8} parent=5 // pred_check
        _
      $region58: #{_lambda_.8} parent=5 // pred_check_branch
        %553 = sbr.rel (%p550) target = $region60
      $region59: #{_lambda_.8} parent=5 // pred_region
        %s554 = ssub.s32 %s33, 1
        // Predicated region
        $region61: #{_lambda_.8} parent=59 // pred_check
          %p555 = pneg %p71
        $region62: #{_lambda_.8} parent=59 // pred_check_branch
          %557 = sbr.rel (%p555) target = $region64
        $region63: #{_lambda_.8} parent=59 // pred_region
          %558 = dma.done [#allocation4], 768
        $region64: #{_lambda_.8} parent=59 // pred_fallthru
          _
        %s559 = sand.u32 %s38, 1
        %s560 = scalar_lea.sflag [#allocation7], %s559
        %s561 = sand.u32 %s86, 1
        %s562 = smul.addr %s561, 16
        %s563 = scalar_lea.vmem [#allocation6], %s562
        // Predicated region
        $region65: #{_lambda_.8} parent=59 // pred_check
          %p564 = pneg %p99
        $region66: #{_lambda_.8} parent=59 // pred_check_branch
          %566 = sbr.rel (%p564) target = $region68
        $region67: #{_lambda_.8} parent=59 // pred_region
          %567 = dma.done %s560, 256
        $region68: #{_lambda_.8} parent=59 // pred_fallthru
          _
        %s568 = sand.u32 %s38, 1
        %s569 = scalar_lea.sflag [#allocation7], %s568
        %s570 = sand.u32 %s112, 1
        %s571 = smul.addr %s570, 192
        %s572 = scalar_lea.vmem [#allocation8], %s571
        // Predicated region
        $region69: #{_lambda_.8} parent=59 // pred_check
          %p573 = pneg %p125
        $region70: #{_lambda_.8} parent=59 // pred_check_branch
          %575 = sbr.rel (%p573) target = $region72
        $region71: #{_lambda_.8} parent=59 // pred_region
          %576 = dma.done %s569, 3072
        $region72: #{_lambda_.8} parent=59 // pred_fallthru
          _
        %s577 = sand.u32 %s38, 1
        %s578 = scalar_lea.sflag [#allocation10], %s577
        %s579 = sand.u32 %s138, 1
        %s580 = smul.addr %s579, 3
        %s581 = scalar_lea.vmem [#allocation9], %s580
        // Predicated region
        $region73: #{_lambda_.8} parent=59 // pred_check
          %p582 = pneg %p151
        $region74: #{_lambda_.8} parent=59 // pred_check_branch
          %584 = sbr.rel (%p582) target = $region76
        $region75: #{_lambda_.8} parent=59 // pred_region
          %585 = dma.done %s578, 48
        $region76: #{_lambda_.8} parent=59 // pred_fallthru
          _
        %s586 = sand.u32 %s38, 1
        %s587 = scalar_lea.sflag [#allocation10], %s586
        %s588 = sand.u32 %s164, 1
        %s589 = smul.addr %s588, 64
        %s590 = scalar_lea.vmem [#allocation11], %s589
        // Predicated region
        $region77: #{_lambda_.8} parent=59 // pred_check
          %p591 = pneg %p177
        $region78: #{_lambda_.8} parent=59 // pred_check_branch
          %593 = sbr.rel (%p591) target = $region80
        $region79: #{_lambda_.8} parent=59 // pred_region
          %594 = dma.done %s587, 1024
        $region80: #{_lambda_.8} parent=59 // pred_fallthru
          _
        %s595 = sand.u32 %s38, 1
        %s596 = scalar_lea.sflag [#allocation13], %s595
        %s597 = sand.u32 %s190, 1
        %s598 = scalar_lea.vmem [#allocation12], %s597
        // Predicated region
        $region81: #{_lambda_.8} parent=59 // pred_check
          %p599 = pneg %p203
        $region82: #{_lambda_.8} parent=59 // pred_check_branch
          %601 = sbr.rel (%p599) target = $region84
        $region83: #{_lambda_.8} parent=59 // pred_region
          %602 = dma.done %s596, 16
        $region84: #{_lambda_.8} parent=59 // pred_fallthru
          _
        %s603 = sand.u32 %s38, 1
        %s604 = scalar_lea.sflag [#allocation13], %s603
        %s605 = sand.u32 %s216, 1
        %s606 = smul.addr %s605, 256
        %s607 = scalar_lea.vmem [#allocation14], %s606
        // Predicated region
        $region85: #{_lambda_.8} parent=59 // pred_check
          %p608 = pneg %p229
        $region86: #{_lambda_.8} parent=59 // pred_check_branch
          %610 = sbr.rel (%p608) target = $region88
        $region87: #{_lambda_.8} parent=59 // pred_region
          %611 = dma.done %s604, 4096
        $region88: #{_lambda_.8} parent=59 // pred_fallthru
          _
        %s612 = sand.u32 %s38, 1
        %s613 = scalar_lea.sflag [#allocation16], %s612
        %s614 = sand.u32 %s242, 1
        %s615 = smul.addr %s614, 4
        %s616 = scalar_lea.vmem [#allocation15], %s615
        // Predicated region
        $region89: #{_lambda_.8} parent=59 // pred_check
          %p617 = pneg %p255
        $region90: #{_lambda_.8} parent=59 // pred_check_branch
          %619 = sbr.rel (%p617) target = $region92
        $region91: #{_lambda_.8} parent=59 // pred_region
          %620 = dma.done %s613, 64
        $region92: #{_lambda_.8} parent=59 // pred_fallthru
          _
        %s621 = sand.u32 %s38, 1
        %s622 = scalar_lea.sflag [#allocation16], %s621
        %s623 = sand.u32 %s268, 1
        %s624 = smul.addr %s623, 256
        %s625 = scalar_lea.vmem [#allocation17], %s624
        // Predicated region
        $region93: #{_lambda_.8} parent=59 // pred_check
          %p626 = pneg %p281
        $region94: #{_lambda_.8} parent=59 // pred_check_branch
          %628 = sbr.rel (%p626) target = $region96
        $region95: #{_lambda_.8} parent=59 // pred_region
          %629 = dma.done %s622, 4096
        $region96: #{_lambda_.8} parent=59 // pred_fallthru
          _
        %s630 = sand.u32 %s294, 1
        %s631 = scalar_lea.sflag [#allocation19], %s630
        %s632 = sand.u32 %s294, 1
        %s633 = scalar_lea.vmem [#allocation18], %s632
        // Predicated region
        $region97: #{_lambda_.8} parent=59 // pred_check
          %p634 = pneg %p307
        $region98: #{_lambda_.8} parent=59 // pred_check_branch
          %636 = sbr.rel (%p634) target = $region100
        $region99: #{_lambda_.8} parent=59 // pred_region
          %637 = dma.done %s631, 16
        $region100: #{_lambda_.8} parent=59 // pred_fallthru
          _
        %p638 = pneg %p71
        %p639 = pneg %p68
        %s640 = sand.u32 %s38, 1
        %s641 = scalar_lea.sflag [#allocation7], %s640
        %s642 = sand.u32 %s86, 1
        %s643 = smul.addr %s642, 16
        %s644 = scalar_lea.vmem [#allocation6], %s643
        %p645 = pneg %p99
        %p646 = pneg %p96
        %s647 = sand.u32 %s38, 1
        %s648 = scalar_lea.sflag [#allocation7], %s647
        %s649 = sand.u32 %s112, 1
        %s650 = smul.addr %s649, 192
        %s651 = scalar_lea.vmem [#allocation8], %s650
        %p652 = pneg %p125
        %p653 = pneg %p122
        %s654 = sand.u32 %s38, 1
        %s655 = scalar_lea.sflag [#allocation10], %s654
        %s656 = sand.u32 %s138, 1
        %s657 = smul.addr %s656, 3
        %s658 = scalar_lea.vmem [#allocation9], %s657
        %p659 = pneg %p151
        %p660 = pneg %p148
        %s661 = sand.u32 %s38, 1
        %s662 = scalar_lea.sflag [#allocation10], %s661
        %s663 = sand.u32 %s164, 1
        %s664 = smul.addr %s663, 64
        %s665 = scalar_lea.vmem [#allocation11], %s664
        %p666 = pneg %p177
        %p667 = pneg %p174
        %s668 = sand.u32 %s38, 1
        %s669 = scalar_lea.sflag [#allocation13], %s668
        %s670 = sand.u32 %s190, 1
        %s671 = scalar_lea.vmem [#allocation12], %s670
        %p672 = pneg %p203
        %p673 = pneg %p200
        %s674 = sand.u32 %s38, 1
        %s675 = scalar_lea.sflag [#allocation13], %s674
        %s676 = sand.u32 %s216, 1
        %s677 = smul.addr %s676, 256
        %s678 = scalar_lea.vmem [#allocation14], %s677
        %p679 = pneg %p229
        %p680 = pneg %p226
        %s681 = sand.u32 %s38, 1
        %s682 = scalar_lea.sflag [#allocation16], %s681
        %s683 = sand.u32 %s242, 1
        %s684 = smul.addr %s683, 4
        %s685 = scalar_lea.vmem [#allocation15], %s684
        %p686 = pneg %p255
        %p687 = pneg %p252
        %s688 = sand.u32 %s38, 1
        %s689 = scalar_lea.sflag [#allocation16], %s688
        %s690 = sand.u32 %s268, 1
        %s691 = smul.addr %s690, 256
        %s692 = scalar_lea.vmem [#allocation17], %s691
        %p693 = pneg %p281
        %p694 = pneg %p278
        %s695 = sand.u32 %s294, 1
        %s696 = scalar_lea.sflag [#allocation19], %s695
        %s697 = sand.u32 %s294, 1
        %s698 = scalar_lea.vmem [#allocation18], %s697
        %p699 = pneg %p307
        %p700 = pneg %p304
        %p701 = pneg %p333
        %p702 = pneg %p330
        %s703 = smul.u32 2, %s42
        %s704 = smul.u32 2, %s42
        %s705 = smul.u32 2, %s42
        %p707 = scmp.eq.s32.totalorder %s43, 0
        // Predicated region
        $region101: #{_lambda_.8} parent=59 // pred_check
          %p708 = pneg %p707
        $region102: #{_lambda_.8} parent=59 // pred_check_branch
          %710 = sbr.rel (%p708) target = $region104
        $region103: #{_lambda_.8} parent=59 // pred_region
          %v711 = vld [vmem:[#allocation3] sm:$0xff]
          %v712 = vld [vmem:[#allocation3 + $0x8] sm:$0xff]
          %v713 = vld [vmem:[#allocation3 + $0x10] sm:$0xff]
          %v714 = vld [vmem:[#allocation3 + $0x18] sm:$0xff]
          %v715 = vld [vmem:[#allocation3 + $0x20] sm:$0xff]
          %v716 = vld [vmem:[#allocation3 + $0x28] sm:$0xff]
          %717 = vst [vmem:[#allocation2] sm:$0xff] %v711
          %718 = vst [vmem:[#allocation2 + $0x8] sm:$0xff] %v712
          %719 = vst [vmem:[#allocation2 + $0x10] sm:$0xff] %v713
          %720 = vst [vmem:[#allocation2 + $0x18] sm:$0xff] %v714
          %721 = vst [vmem:[#allocation2 + $0x20] sm:$0xff] %v715
          %722 = vst [vmem:[#allocation2 + $0x28] sm:$0xff] %v716
        $region104: #{_lambda_.8} parent=59 // pred_fallthru
          _
        %v723 = vld [vmem:[#allocation2] sm:$0xff]
        %v724 = vld [vmem:[#allocation2 + $0x8] sm:$0xff]
        %v725 = vld [vmem:[#allocation2 + $0x10] sm:$0xff]
        %v726 = vld [vmem:[#allocation2 + $0x18] sm:$0xff]
        %v727 = vld [vmem:[#allocation2 + $0x20] sm:$0xff]
        %v728 = vld [vmem:[#allocation2 + $0x28] sm:$0xff]
        %v729 = vld [vmem:[%s563] sm:$0x3f]
        %v730 = vld [vmem:[%s563 + $0x8] sm:$0x3f]
        %731 = vadd.xlane.f32.xlu0 %v723
        %v732 = vpop.xlane.xlu0 %731
        %733 = vadd.xlane.f32.xlu0 %v724
        %v734 = vpop.xlane.xlu0 %733
        %735 = vadd.xlane.f32.xlu0 %v725
        %v736 = vpop.xlane.xlu0 %735
        %737 = vadd.xlane.f32.xlu0 %v726
        %v738 = vpop.xlane.xlu0 %737
        %739 = vadd.xlane.f32.xlu0 %v727
        %v740 = vpop.xlane.xlu0 %739
        %741 = vadd.xlane.f32.xlu0 %v728
        %v742 = vpop.xlane.xlu0 %741
        %v743 = vrcp.pop 128.0
        %v744 = vmul.f32 %v732, %v743
        %v745 = vmul.f32 %v734, %v743
        %v746 = vmul.f32 %v736, %v743
        %v747 = vmul.f32 %v738, %v743
        %v748 = vmul.f32 %v740, %v743
        %v749 = vmul.f32 %v742, %v743
        %v750 = vsub.f32 %v723, %v744
        %v751 = vsub.f32 %v724, %v745
        %v752 = vsub.f32 %v725, %v746
        %v753 = vsub.f32 %v726, %v747
        %v754 = vsub.f32 %v727, %v748
        %v755 = vsub.f32 %v728, %v749
        %v756 = vmul.f32 %v750, %v750
        %v757 = vmul.f32 %v751, %v751
        %v758 = vmul.f32 %v752, %v752
        %v759 = vmul.f32 %v753, %v753
        %v760 = vmul.f32 %v754, %v754
        %v761 = vmul.f32 %v755, %v755
        %762 = vadd.xlane.f32.xlu0 %v756
        %v763 = vpop.xlane.xlu0 %762
        %764 = vadd.xlane.f32.xlu0 %v757
        %v765 = vpop.xlane.xlu0 %764
        %766 = vadd.xlane.f32.xlu0 %v758
        %v767 = vpop.xlane.xlu0 %766
        %768 = vadd.xlane.f32.xlu0 %v759
        %v769 = vpop.xlane.xlu0 %768
        %770 = vadd.xlane.f32.xlu0 %v760
        %v771 = vpop.xlane.xlu0 %770
        %772 = vadd.xlane.f32.xlu0 %v761
        %v773 = vpop.xlane.xlu0 %772
        %v774 = vmul.f32 %v763, %v743
        %v775 = vmul.f32 %v765, %v743
        %v776 = vmul.f32 %v767, %v743
        %v777 = vmul.f32 %v769, %v743
        %v778 = vmul.f32 %v771, %v743
        %v779 = vmul.f32 %v773, %v743
        %v780 = vadd.f32 %v774, 1e-06
        %v781 = vadd.f32 %v775, 1e-06
        %v782 = vadd.f32 %v776, 1e-06
        %v783 = vadd.f32 %v777, 1e-06
        %v784 = vadd.f32 %v778, 1e-06
        %v785 = vadd.f32 %v779, 1e-06
        %v786 = vrsqrt.pop %v780
        %v787 = vrsqrt.pop %v781
        %v788 = vrsqrt.pop %v782
        %v789 = vrsqrt.pop %v783
        %v790 = vrsqrt.pop %v784
        %v791 = vrsqrt.pop %v785
        %v792 = vmul.f32 %v750, %v786
        %v793 = vmul.f32 %v751, %v787
        %v794 = vmul.f32 %v752, %v788
        %v795 = vmul.f32 %v753, %v789
        %v796 = vmul.f32 %v754, %v790
        %v797 = vmul.f32 %v755, %v791
        %v798 = vadd.f32 %v729, 1.0
        %v799 = vadd.f32 %v730, 1.0
        %v800 = vlaneseq
        %v801 = vshrl.u32 %v800, 7
        %v802 = vsub.s32 1, %v801
        %v803 = vrot.slane %v798, %v802
        %v804 = vlaneseq
        %v805 = vshrl.u32 %v804, 7
        %v806 = vsub.s32 1, %v805
        %v807 = vrot.slane %v799, %v806
        %v808 = vmul.f32 %v792, %v803
        %v809 = vmul.f32 %v793, %v803
        %v810 = vmul.f32 %v794, %v803
        %v811 = vmul.f32 %v795, %v807
        %v812 = vmul.f32 %v796, %v807
        %v813 = vmul.f32 %v797, %v807
        %v814 = vlaneseq
        %v815 = vshrl.u32 %v814, 7
        %v816 = vsub.s32 0, %v815
        %v817 = vrot.slane %v729, %v816
        %v818 = vlaneseq
        %v819 = vshrl.u32 %v818, 7
        %v820 = vsub.s32 0, %v819
        %v821 = vrot.slane %v730, %v820
        %v822 = vadd.f32 %v808, %v817
        %v823 = vadd.f32 %v809, %v817
        %v824 = vadd.f32 %v810, %v817
        %v825 = vadd.f32 %v811, %v821
        %v826 = vadd.f32 %v812, %v821
        %v827 = vadd.f32 %v813, %v821
        %v828 = vpack.c.bf16 %v823, %v822
        %v829 = vpack.c.bf16 %v825, %v824
        %v830 = vpack.c.bf16 %v827, %v826
        %v831 = vld [vmem:[%s572] sm:$0xff]
        %v832 = vld [vmem:[%s572 + $0x8] sm:$0xf]
        %v833 = vld [vmem:[%s572 + $0xc] sm:$0xff]
        %v834 = vld [vmem:[%s572 + $0x14] sm:$0xf]
        %v835 = vld [vmem:[%s572 + $0x18] sm:$0xff]
        %v836 = vld [vmem:[%s572 + $0x20] sm:$0xf]
        %v837 = vld [vmem:[%s572 + $0x24] sm:$0xff]
        %v838 = vld [vmem:[%s572 + $0x2c] sm:$0xf]
        %v839 = vld [vmem:[%s572 + $0x30] sm:$0xff]
        %v840 = vld [vmem:[%s572 + $0x38] sm:$0xf]
        %v841 = vld [vmem:[%s572 + $0x3c] sm:$0xff]
        %v842 = vld [vmem:[%s572 + $0x44] sm:$0xf]
        %v843 = vld [vmem:[%s572 + $0x48] sm:$0xff]
        %v844 = vld [vmem:[%s572 + $0x50] sm:$0xf]
        %v845 = vld [vmem:[%s572 + $0x54] sm:$0xff]
        %v846 = vld [vmem:[%s572 + $0x5c] sm:$0xf]
        %v847 = vld [vmem:[%s572 + $0x60] sm:$0xff]
        %v848 = vld [vmem:[%s572 + $0x68] sm:$0xf]
        %v849 = vld [vmem:[%s572 + $0x6c] sm:$0xff]
        %v850 = vld [vmem:[%s572 + $0x74] sm:$0xf]
        %v851 = vld [vmem:[%s572 + $0x78] sm:$0xff]
        %v852 = vld [vmem:[%s572 + $0x80] sm:$0xf]
        %v853 = vld [vmem:[%s572 + $0x84] sm:$0xff]
        %v854 = vld [vmem:[%s572 + $0x8c] sm:$0xf]
        %v855 = vld [vmem:[%s572 + $0x90] sm:$0xff]
        %v856 = vld [vmem:[%s572 + $0x98] sm:$0xf]
        %v857 = vld [vmem:[%s572 + $0x9c] sm:$0xff]
        %v858 = vld [vmem:[%s572 + $0xa4] sm:$0xf]
        %v859 = vld [vmem:[%s572 + $0xa8] sm:$0xff]
        %v860 = vld [vmem:[%s572 + $0xb0] sm:$0xf]
        %v861 = vld [vmem:[%s572 + $0xb4] sm:$0xff]
        %v862 = vld [vmem:[%s572 + $0xbc] sm:$0xf]
        %v863 = vld [vmem:[%s581] sm:$0x7]
        %v865 = vlaneseq
        %v866 = vshrl.u32 %v865, 7
        %v867 = vsub.s32 0, %v866
        %v868 = vrot.slane %v863, %v867
        %v869 = vlaneseq
        %v870 = vshrl.u32 %v869, 7
        %v871 = vsub.s32 1, %v870
        %v872 = vrot.slane %v863, %v871
        %v873 = vlaneseq
        %v874 = vshrl.u32 %v873, 7
        %v875 = vsub.s32 2, %v874
        %v876 = vrot.slane %v863, %v875
        %v912 = vunpack.c.l.b16 %v831
        %v913 = vunpack.c.h.b16 %v831
        %v914 = vunpack.c.l.b16 %v832
        %v915 = vunpack.c.l.b16 %v833
        %v916 = vunpack.c.h.b16 %v833
        %v917 = vunpack.c.l.b16 %v834
        %v918 = vunpack.c.l.b16 %v835
        %v919 = vunpack.c.h.b16 %v835
        %v920 = vunpack.c.l.b16 %v836
        %v921 = vunpack.c.l.b16 %v837
        %v922 = vunpack.c.h.b16 %v837
        %v923 = vunpack.c.l.b16 %v838
        %v924 = vunpack.c.l.b16 %v839
        %v925 = vunpack.c.h.b16 %v839
        %v926 = vunpack.c.l.b16 %v840
        %v927 = vunpack.c.l.b16 %v841
        %v928 = vunpack.c.h.b16 %v841
        %v929 = vunpack.c.l.b16 %v842
        %v930 = vunpack.c.l.b16 %v843
        %v931 = vunpack.c.h.b16 %v843
        %v932 = vunpack.c.l.b16 %v844
        %v933 = vunpack.c.l.b16 %v845
        %v934 = vunpack.c.h.b16 %v845
        %v935 = vunpack.c.l.b16 %v846
        %v936 = vunpack.c.l.b16 %v847
        %v937 = vunpack.c.h.b16 %v847
        %v938 = vunpack.c.l.b16 %v848
        %v939 = vunpack.c.l.b16 %v849
        %v940 = vunpack.c.h.b16 %v849
        %v941 = vunpack.c.l.b16 %v850
        %v942 = vunpack.c.l.b16 %v851
        %v943 = vunpack.c.h.b16 %v851
        %v944 = vunpack.c.l.b16 %v852
        %v945 = vunpack.c.l.b16 %v853
        %v946 = vunpack.c.h.b16 %v853
        %v947 = vunpack.c.l.b16 %v854
        %v948 = vunpack.c.l.b16 %v855
        %v949 = vunpack.c.h.b16 %v855
        %v950 = vunpack.c.l.b16 %v856
        %v951 = vunpack.c.l.b16 %v857
        %v952 = vunpack.c.h.b16 %v857
        %v953 = vunpack.c.l.b16 %v858
        %v954 = vunpack.c.l.b16 %v859
        %v955 = vunpack.c.h.b16 %v859
        %v956 = vunpack.c.l.b16 %v860
        %v957 = vunpack.c.l.b16 %v861
        %v958 = vunpack.c.h.b16 %v861
        %v959 = vunpack.c.l.b16 %v862
        %v960 = vpack.c.b16 %v915, %v912
        %v961 = vpack.c.b16 %v916, %v913
        %v962 = vpack.c.b16 %v917, %v914
        %v963 = vpack.c.b16 %v921, %v918
        %v964 = vpack.c.b16 %v922, %v919
        %v965 = vpack.c.b16 %v923, %v920
        %v966 = vpack.c.b16 %v927, %v924
        %v967 = vpack.c.b16 %v928, %v925
        %v968 = vpack.c.b16 %v929, %v926
        %v969 = vpack.c.b16 %v933, %v930
        %v970 = vpack.c.b16 %v934, %v931
        %v971 = vpack.c.b16 %v935, %v932
        %v972 = vpack.c.b16 %v939, %v936
        %v973 = vpack.c.b16 %v940, %v937
        %v974 = vpack.c.b16 %v941, %v938
        %v975 = vpack.c.b16 %v945, %v942
        %v976 = vpack.c.b16 %v946, %v943
        %v977 = vpack.c.b16 %v947, %v944
        %v978 = vpack.c.b16 %v951, %v948
        %v979 = vpack.c.b16 %v952, %v949
        %v980 = vpack.c.b16 %v953, %v950
        %v981 = vpack.c.b16 %v957, %v954
        %v982 = vpack.c.b16 %v958, %v955
        %v983 = vpack.c.b16 %v959, %v956
        %1008 = vmatprep.subr.bf16.mxu0 %v961
        %1009 = vmatpush1.bf16.msra.mxu0 %v960
        %1010 = vmatprep.subr.bf16.mxu0 %v964
        %1011 = vmatpush1.bf16.msra.mxu0 %v963
        %1012 = vmatprep.subr.bf16.mxu0 %v967
        %1013 = vmatpush1.bf16.msra.mxu0 %v966
        %1014 = vmatprep.subr.bf16.mxu0 %v970
        %1015 = vmatpush1.bf16.msra.mxu0 %v969
        %1016 = vmatprep.subr.bf16.mxu0 %v973
        %1017 = vmatpush1.bf16.msra.mxu0 %v972
        %1018 = vmatprep.subr.bf16.mxu0 %v976
        %1019 = vmatpush1.bf16.msra.mxu0 %v975
        %1020 = vmatprep.subr.bf16.mxu0 %v979
        %1021 = vmatpush1.bf16.msra.mxu0 %v978
        %1022 = vmatprep.subr.bf16.mxu0 %v982
        %1023 = vmatpush1.bf16.msra.mxu0 %v981
        %1024 = vmatprep.subr.bf16.mxu0 0
        %1025 = vmatpush1.bf16.msra.mxu0 0
        %1026 = vmatprep.subr.bf16.mxu0 0
        %1027 = vmatpush1.bf16.msra.mxu0 0
        %1028 = vmatprep.subr.bf16.mxu0 0
        %1029 = vmatpush1.bf16.msra.mxu0 0
        %1030 = vmatprep.subr.bf16.mxu0 0
        %1031 = vmatpush1.bf16.msra.mxu0 0
        %1032 = vmatprep.subr.bf16.mxu0 0
        %1033 = vmatpush1.bf16.msra.mxu0 0
        %1034 = vmatprep.subr.bf16.mxu0 0
        %1035 = vmatpush1.bf16.msra.mxu0 0
        %1036 = vmatprep.subr.bf16.mxu0 0
        %1037 = vmatpush1.bf16.msra.mxu0 0
        %1038 = vmatprep.subr.bf16.mxu0 0
        %1039 = vmatpush1.bf16.msra.mxu0 0
        %1040 = vmatprep.mubr.bf16.mxu0 0
        %1041 = vmatmul.mubr.bf16.gmra.mrb[0].mxu0 %v828
        %v1042 = vpop.f32.mrb[0].mxu0
        %v1043 = vadd.f32 %v868, %v1042
        %v1044 = vpop.f32.mrb[0].mxu0
        %v1045 = vadd.f32 %v872, %v1044
        %v1046 = vpop.f32.mrb[0].mxu0
        %v1047 = vadd.f32 %v868, %v1046
        %v1048 = vpop.f32.mrb[0].mxu0
        %v1049 = vadd.f32 %v872, %v1048
        %1050 = vmatprep.mubr.bf16.mxu0 0
        %1051 = vmatmul.mubr.bf16.gmra.mrb[0].mxu0 %v829
        %v1052 = vpop.f32.mrb[0].mxu0
        %v1053 = vadd.f32 %v868, %v1052
        %v1054 = vpop.f32.mrb[0].mxu0
        %v1055 = vadd.f32 %v872, %v1054
        %v1056 = vpop.f32.mrb[0].mxu0
        %v1057 = vadd.f32 %v868, %v1056
        %v1058 = vpop.f32.mrb[0].mxu0
        %v1059 = vadd.f32 %v872, %v1058
        %1060 = vmatprep.mubr.bf16.mxu0 0
        %1061 = vmatmul.mubr.bf16.gmra.mrb[0].mxu0 %v830
        %v1062 = vpop.f32.mrb[0].mxu0
        %v1063 = vadd.f32 %v868, %v1062
        %v1064 = vpop.f32.mrb[0].mxu0
        %v1065 = vadd.f32 %v872, %v1064
        %v1066 = vpop.f32.mrb[0].mxu0
        %v1067 = vadd.f32 %v868, %v1066
        %v1068 = vpop.f32.mrb[0].mxu0
        %v1069 = vadd.f32 %v872, %v1068
        %1070 = vdwg.mxu0
        %1071 = vmatprep.subr.bf16.mxu0 0
        %1072 = vmatpush1.bf16.msra.mxu0 %v962
        %1073 = vmatprep.subr.bf16.mxu0 0
        %1074 = vmatpush1.bf16.msra.mxu0 %v965
        %1075 = vmatprep.subr.bf16.mxu0 0
        %1076 = vmatpush1.bf16.msra.mxu0 %v968
        %1077 = vmatprep.subr.bf16.mxu0 0
        %1078 = vmatpush1.bf16.msra.mxu0 %v971
        %1079 = vmatprep.subr.bf16.mxu0 0
        %1080 = vmatpush1.bf16.msra.mxu0 %v974
        %1081 = vmatprep.subr.bf16.mxu0 0
        %1082 = vmatpush1.bf16.msra.mxu0 %v977
        %1083 = vmatprep.subr.bf16.mxu0 0
        %1084 = vmatpush1.bf16.msra.mxu0 %v980
        %1085 = vmatprep.subr.bf16.mxu0 0
        %1086 = vmatpush1.bf16.msra.mxu0 %v983
        %1087 = vmatprep.subr.bf16.mxu0 0
        %1088 = vmatpush1.bf16.msra.mxu0 0
        %1089 = vmatprep.subr.bf16.mxu0 0
        %1090 = vmatpush1.bf16.msra.mxu0 0
        %1091 = vmatprep.subr.bf16.mxu0 0
        %1092 = vmatpush1.bf16.msra.mxu0 0
        %1093 = vmatprep.subr.bf16.mxu0 0
        %1094 = vmatpush1.bf16.msra.mxu0 0
        %1095 = vmatprep.subr.bf16.mxu0 0
        %1096 = vmatpush1.bf16.msra.mxu0 0
        %1097 = vmatprep.subr.bf16.mxu0 0
        %1098 = vmatpush1.bf16.msra.mxu0 0
        %1099 = vmatprep.subr.bf16.mxu0 0
        %1100 = vmatpush1.bf16.msra.mxu0 0
        %1101 = vmatprep.subr.bf16.mxu0 0
        %1102 = vmatpush1.bf16.msra.mxu0 0
        %1103 = vmatprep.mubr.bf16.mxu0 0
        %1104 = vmatmul.mubr.bf16.gmra.mrb[0].mxu0 %v828
        %v1105 = vpop.f32.mrb[0].mxu0
        %v1106 = vadd.f32 %v876, %v1105
        %v1107 = vpop.f32.mrb[0].mxu0
        %v1108 = vpop.f32.mrb[0].mxu0
        %v1109 = vadd.f32 %v876, %v1108
        %v1110 = vpop.f32.mrb[0].mxu0
        %1111 = vmatprep.mubr.bf16.mxu0 0
        %1112 = vmatmul.mubr.bf16.gmra.mrb[0].mxu0 %v829
        %v1113 = vpop.f32.mrb[0].mxu0
        %v1114 = vadd.f32 %v876, %v1113
        %v1115 = vpop.f32.mrb[0].mxu0
        %v1116 = vpop.f32.mrb[0].mxu0
        %v1117 = vadd.f32 %v876, %v1116
        %v1118 = vpop.f32.mrb[0].mxu0
        %1119 = vmatprep.mubr.bf16.mxu0 0
        %1120 = vmatmul.mubr.bf16.gmra.mrb[0].mxu0 %v830
        %v1121 = vpop.f32.mrb[0].mxu0
        %v1122 = vadd.f32 %v876, %v1121
        %v1123 = vpop.f32.mrb[0].mxu0
        %v1124 = vpop.f32.mrb[0].mxu0
        %v1125 = vadd.f32 %v876, %v1124
        %v1126 = vpop.f32.mrb[0].mxu0
        %1127 = vdwg.mxu0
        %v1128 = vmul.f32 %v1043, 0.17677669
        %v1129 = vmul.f32 %v1047, 0.17677669
        %v1130 = vmul.f32 %v1053, 0.17677669
        %v1131 = vmul.f32 %v1057, 0.17677669
        %v1132 = vmul.f32 %v1063, 0.17677669
        %v1133 = vmul.f32 %v1067, 0.17677669
        %1137 = vrot.lane.b32.xlu0 %v1128, 96
        %v1138 = vpop.permute.xlu0 %1137
        %1139 = vrot.lane.b32.xlu0 %v1129, 96
        %v1140 = vpop.permute.xlu0 %1139
        %1141 = vrot.lane.b32.xlu0 %v1130, 96
        %v1142 = vpop.permute.xlu0 %1141
        %1146 = vrot.lane.b32.xlu0 %v1128, 64
        %v1147 = vpop.permute.xlu0 %1146
        %1148 = vrot.lane.b32.xlu0 %v1129, 64
        %v1149 = vpop.permute.xlu0 %1148
        %1150 = vrot.lane.b32.xlu0 %v1130, 64
        %v1151 = vpop.permute.xlu0 %1150
        %1155 = vrot.lane.b32.xlu0 %v1128, 32
        %v1156 = vpop.permute.xlu0 %1155
        %1157 = vrot.lane.b32.xlu0 %v1129, 32
        %v1158 = vpop.permute.xlu0 %1157
        %1159 = vrot.lane.b32.xlu0 %v1130, 32
        %v1160 = vpop.permute.xlu0 %1159
        %v1164 = vcombine.low %v1128, %v1147
        %v1165 = vcombine.high %v1128, %v1147
        %v1167 = vunpack.c.l.s4 1983009808
        %v1168 = vunpack.c.0.s8 %v1167
        %v1169 = vlaneseq
        %v1170 = vshrl.u32 %v1169, 7
        %v1171 = vsub.s32 %v1168, %v1170
        %v1172 = vrot.slane %v1164, %v1171
        %v1174 = vunpack.c.l.s4 1983009808
        %v1175 = vunpack.c.0.s8 %v1174
        %v1176 = vlaneseq
        %v1177 = vshrl.u32 %v1176, 7
        %v1178 = vsub.s32 %v1175, %v1177
        %v1179 = vrot.slane %v1165, %v1178
        %v1180 = vcombine.low %v1138, %v1156
        %v1181 = vcombine.high %v1138, %v1156
        %v1183 = vunpack.c.l.s4 1983009808
        %v1184 = vunpack.c.0.s8 %v1183
        %v1185 = vlaneseq
        %v1186 = vshrl.u32 %v1185, 7
        %v1187 = vsub.s32 %v1184, %v1186
        %v1188 = vrot.slane %v1180, %v1187
        %v1190 = vunpack.c.l.s4 1983009808
        %v1191 = vunpack.c.0.s8 %v1190
        %v1192 = vlaneseq
        %v1193 = vshrl.u32 %v1192, 7
        %v1194 = vsub.s32 %v1191, %v1193
        %v1195 = vrot.slane %v1181, %v1194
        %v1196 = vcombine.low %v1172, %v1188
        %v1197 = vcombine.high %v1172, %v1188
        %v1199 = vunpack.c.l.s4 1934713408
        %v1200 = vunpack.c.0.s8 %v1199
        %v1201 = vlaneseq
        %v1202 = vshrl.u32 %v1201, 7
        %v1203 = vsub.s32 %v1200, %v1202
        %v1204 = vrot.slane %v1196, %v1203
        %v1206 = vunpack.c.l.s4 1934713408
        %v1207 = vunpack.c.0.s8 %v1206
        %v1208 = vlaneseq
        %v1209 = vshrl.u32 %v1208, 7
        %v1210 = vsub.s32 %v1207, %v1209
        %v1211 = vrot.slane %v1197, %v1210
        %v1212 = vcombine.low %v1179, %v1195
        %v1213 = vcombine.high %v1179, %v1195
        %v1215 = vunpack.c.l.s4 1934713408
        %v1216 = vunpack.c.0.s8 %v1215
        %v1217 = vlaneseq
        %v1218 = vshrl.u32 %v1217, 7
        %v1219 = vsub.s32 %v1216, %v1218
        %v1220 = vrot.slane %v1212, %v1219
        %v1222 = vunpack.c.l.s4 1934713408
        %v1223 = vunpack.c.0.s8 %v1222
        %v1224 = vlaneseq
        %v1225 = vshrl.u32 %v1224, 7
        %v1226 = vsub.s32 %v1223, %v1225
        %v1227 = vrot.slane %v1213, %v1226
        %v1228 = vcombine.high %v1204, 0.0
        %v1229 = vcombine.high %v1211, 0.0
        %v1230 = vcombine.high %v1220, 0.0
        %v1231 = vcombine.high %v1227, 0.0
        %v1232 = vcombine.low %v1129, %v1149
        %v1233 = vcombine.high %v1129, %v1149
        %v1235 = vunpack.c.l.s4 1983009808
        %v1236 = vunpack.c.0.s8 %v1235
        %v1237 = vlaneseq
        %v1238 = vshrl.u32 %v1237, 7
        %v1239 = vsub.s32 %v1236, %v1238
        %v1240 = vrot.slane %v1232, %v1239
        %v1242 = vunpack.c.l.s4 1983009808
        %v1243 = vunpack.c.0.s8 %v1242
        %v1244 = vlaneseq
        %v1245 = vshrl.u32 %v1244, 7
        %v1246 = vsub.s32 %v1243, %v1245
        %v1247 = vrot.slane %v1233, %v1246
        %v1248 = vcombine.low %v1140, %v1158
        %v1249 = vcombine.high %v1140, %v1158
        %v1251 = vunpack.c.l.s4 1983009808
        %v1252 = vunpack.c.0.s8 %v1251
        %v1253 = vlaneseq
        %v1254 = vshrl.u32 %v1253, 7
        %v1255 = vsub.s32 %v1252, %v1254
        %v1256 = vrot.slane %v1248, %v1255
        %v1258 = vunpack.c.l.s4 1983009808
        %v1259 = vunpack.c.0.s8 %v1258
        %v1260 = vlaneseq
        %v1261 = vshrl.u32 %v1260, 7
        %v1262 = vsub.s32 %v1259, %v1261
        %v1263 = vrot.slane %v1249, %v1262
        %v1264 = vcombine.low %v1240, %v1256
        %v1265 = vcombine.high %v1240, %v1256
        %v1267 = vunpack.c.l.s4 1934713408
        %v1268 = vunpack.c.0.s8 %v1267
        %v1269 = vlaneseq
        %v1270 = vshrl.u32 %v1269, 7
        %v1271 = vsub.s32 %v1268, %v1270
        %v1272 = vrot.slane %v1264, %v1271
        %v1274 = vunpack.c.l.s4 1934713408
        %v1275 = vunpack.c.0.s8 %v1274
        %v1276 = vlaneseq
        %v1277 = vshrl.u32 %v1276, 7
        %v1278 = vsub.s32 %v1275, %v1277
        %v1279 = vrot.slane %v1265, %v1278
        %v1280 = vcombine.low %v1247, %v1263
        %v1281 = vcombine.high %v1247, %v1263
        %v1283 = vunpack.c.l.s4 1934713408
        %v1284 = vunpack.c.0.s8 %v1283
        %v1285 = vlaneseq
        %v1286 = vshrl.u32 %v1285, 7
        %v1287 = vsub.s32 %v1284, %v1286
        %v1288 = vrot.slane %v1280, %v1287
        %v1290 = vunpack.c.l.s4 1934713408
        %v1291 = vunpack.c.0.s8 %v1290
        %v1292 = vlaneseq
        %v1293 = vshrl.u32 %v1292, 7
        %v1294 = vsub.s32 %v1291, %v1293
        %v1295 = vrot.slane %v1281, %v1294
        %v1296 = vcombine.high %v1272, 0.0
        %v1297 = vcombine.high %v1279, 0.0
        %v1298 = vcombine.high %v1288, 0.0
        %v1299 = vcombine.high %v1295, 0.0
        %v1300 = vcombine.low %v1130, %v1151
        %v1301 = vcombine.high %v1130, %v1151
        %v1303 = vunpack.c.l.s4 1983009808
        %v1304 = vunpack.c.0.s8 %v1303
        %v1305 = vlaneseq
        %v1306 = vshrl.u32 %v1305, 7
        %v1307 = vsub.s32 %v1304, %v1306
        %v1308 = vrot.slane %v1300, %v1307
        %v1310 = vunpack.c.l.s4 1983009808
        %v1311 = vunpack.c.0.s8 %v1310
        %v1312 = vlaneseq
        %v1313 = vshrl.u32 %v1312, 7
        %v1314 = vsub.s32 %v1311, %v1313
        %v1315 = vrot.slane %v1301, %v1314
        %v1316 = vcombine.low %v1142, %v1160
        %v1317 = vcombine.high %v1142, %v1160
        %v1319 = vunpack.c.l.s4 1983009808
        %v1320 = vunpack.c.0.s8 %v1319
        %v1321 = vlaneseq
        %v1322 = vshrl.u32 %v1321, 7
        %v1323 = vsub.s32 %v1320, %v1322
        %v1324 = vrot.slane %v1316, %v1323
        %v1326 = vunpack.c.l.s4 1983009808
        %v1327 = vunpack.c.0.s8 %v1326
        %v1328 = vlaneseq
        %v1329 = vshrl.u32 %v1328, 7
        %v1330 = vsub.s32 %v1327, %v1329
        %v1331 = vrot.slane %v1317, %v1330
        %v1332 = vcombine.low %v1308, %v1324
        %v1333 = vcombine.high %v1308, %v1324
        %v1335 = vunpack.c.l.s4 1934713408
        %v1336 = vunpack.c.0.s8 %v1335
        %v1337 = vlaneseq
        %v1338 = vshrl.u32 %v1337, 7
        %v1339 = vsub.s32 %v1336, %v1338
        %v1340 = vrot.slane %v1332, %v1339
        %v1342 = vunpack.c.l.s4 1934713408
        %v1343 = vunpack.c.0.s8 %v1342
        %v1344 = vlaneseq
        %v1345 = vshrl.u32 %v1344, 7
        %v1346 = vsub.s32 %v1343, %v1345
        %v1347 = vrot.slane %v1333, %v1346
        %v1348 = vcombine.low %v1315, %v1331
        %v1349 = vcombine.high %v1315, %v1331
        %v1351 = vunpack.c.l.s4 1934713408
        %v1352 = vunpack.c.0.s8 %v1351
        %v1353 = vlaneseq
        %v1354 = vshrl.u32 %v1353, 7
        %v1355 = vsub.s32 %v1352, %v1354
        %v1356 = vrot.slane %v1348, %v1355
        %v1358 = vunpack.c.l.s4 1934713408
        %v1359 = vunpack.c.0.s8 %v1358
        %v1360 = vlaneseq
        %v1361 = vshrl.u32 %v1360, 7
        %v1362 = vsub.s32 %v1359, %v1361
        %v1363 = vrot.slane %v1349, %v1362
        %v1364 = vcombine.high %v1340, 0.0
        %v1365 = vcombine.high %v1347, 0.0
        %v1366 = vcombine.high %v1356, 0.0
        %v1367 = vcombine.high %v1363, 0.0
        %v1368 = vcombine.low %v1204, %v1211
        %v1370 = vunpack.c.l.s4 1983009808
        %v1371 = vunpack.c.0.s8 %v1370
        %v1372 = vlaneseq
        %v1373 = vshrl.u32 %v1372, 7
        %v1374 = vsub.s32 %v1371, %v1373
        %v1375 = vrot.slane %v1368, %v1374
        %v1376 = vcombine.low %v1228, %v1229
        %v1378 = vunpack.c.l.s4 1983009808
        %v1379 = vunpack.c.0.s8 %v1378
        %v1380 = vlaneseq
        %v1381 = vshrl.u32 %v1380, 7
        %v1382 = vsub.s32 %v1379, %v1381
        %v1383 = vrot.slane %v1376, %v1382
        %v1384 = vcombine.low %v1220, %v1227
        %v1386 = vunpack.c.l.s4 1983009808
        %v1387 = vunpack.c.0.s8 %v1386
        %v1388 = vlaneseq
        %v1389 = vshrl.u32 %v1388, 7
        %v1390 = vsub.s32 %v1387, %v1389
        %v1391 = vrot.slane %v1384, %v1390
        %v1392 = vcombine.low %v1230, %v1231
        %v1394 = vunpack.c.l.s4 1983009808
        %v1395 = vunpack.c.0.s8 %v1394
        %v1396 = vlaneseq
        %v1397 = vshrl.u32 %v1396, 7
        %v1398 = vsub.s32 %v1395, %v1397
        %v1399 = vrot.slane %v1392, %v1398
        %v1400 = vcombine.low %v1375, %v1383
        %v1401 = vcombine.high %v1375, %v1383
        %v1403 = vunpack.c.l.s4 1934713408
        %v1404 = vunpack.c.0.s8 %v1403
        %v1405 = vlaneseq
        %v1406 = vshrl.u32 %v1405, 7
        %v1407 = vsub.s32 %v1404, %v1406
        %v1408 = vrot.slane %v1400, %v1407
        %v1410 = vunpack.c.l.s4 1934713408
        %v1411 = vunpack.c.0.s8 %v1410
        %v1412 = vlaneseq
        %v1413 = vshrl.u32 %v1412, 7
        %v1414 = vsub.s32 %v1411, %v1413
        %v1415 = vrot.slane %v1401, %v1414
        %v1416 = vcombine.low %v1391, %v1399
        %v1417 = vcombine.high %v1391, %v1399
        %v1419 = vunpack.c.l.s4 1934713408
        %v1420 = vunpack.c.0.s8 %v1419
        %v1421 = vlaneseq
        %v1422 = vshrl.u32 %v1421, 7
        %v1423 = vsub.s32 %v1420, %v1422
        %v1424 = vrot.slane %v1416, %v1423
        %v1426 = vunpack.c.l.s4 1934713408
        %v1427 = vunpack.c.0.s8 %v1426
        %v1428 = vlaneseq
        %v1429 = vshrl.u32 %v1428, 7
        %v1430 = vsub.s32 %v1427, %v1429
        %v1431 = vrot.slane %v1417, %v1430
        %v1432 = vcombine.low %v1408, %v1424
        %v1433 = vcombine.high %v1408, %v1424
        %v1434 = vcombine.low %v1415, %v1431
        %v1435 = vcombine.high %v1415, %v1431
        %v1436 = vcombine.low %v1272, %v1279
        %v1438 = vunpack.c.l.s4 1983009808
        %v1439 = vunpack.c.0.s8 %v1438
        %v1440 = vlaneseq
        %v1441 = vshrl.u32 %v1440, 7
        %v1442 = vsub.s32 %v1439, %v1441
        %v1443 = vrot.slane %v1436, %v1442
        %v1444 = vcombine.low %v1296, %v1297
        %v1446 = vunpack.c.l.s4 1983009808
        %v1447 = vunpack.c.0.s8 %v1446
        %v1448 = vlaneseq
        %v1449 = vshrl.u32 %v1448, 7
        %v1450 = vsub.s32 %v1447, %v1449
        %v1451 = vrot.slane %v1444, %v1450
        %v1452 = vcombine.low %v1288, %v1295
        %v1454 = vunpack.c.l.s4 1983009808
        %v1455 = vunpack.c.0.s8 %v1454
        %v1456 = vlaneseq
        %v1457 = vshrl.u32 %v1456, 7
        %v1458 = vsub.s32 %v1455, %v1457
        %v1459 = vrot.slane %v1452, %v1458
        %v1460 = vcombine.low %v1298, %v1299
        %v1462 = vunpack.c.l.s4 1983009808
        %v1463 = vunpack.c.0.s8 %v1462
        %v1464 = vlaneseq
        %v1465 = vshrl.u32 %v1464, 7
        %v1466 = vsub.s32 %v1463, %v1465
        %v1467 = vrot.slane %v1460, %v1466
        %v1468 = vcombine.low %v1443, %v1451
        %v1469 = vcombine.high %v1443, %v1451
        %v1471 = vunpack.c.l.s4 1934713408
        %v1472 = vunpack.c.0.s8 %v1471
        %v1473 = vlaneseq
        %v1474 = vshrl.u32 %v1473, 7
        %v1475 = vsub.s32 %v1472, %v1474
        %v1476 = vrot.slane %v1468, %v1475
        %v1478 = vunpack.c.l.s4 1934713408
        %v1479 = vunpack.c.0.s8 %v1478
        %v1480 = vlaneseq
        %v1481 = vshrl.u32 %v1480, 7
        %v1482 = vsub.s32 %v1479, %v1481
        %v1483 = vrot.slane %v1469, %v1482
        %v1484 = vcombine.low %v1459, %v1467
        %v1485 = vcombine.high %v1459, %v1467
        %v1487 = vunpack.c.l.s4 1934713408
        %v1488 = vunpack.c.0.s8 %v1487
        %v1489 = vlaneseq
        %v1490 = vshrl.u32 %v1489, 7
        %v1491 = vsub.s32 %v1488, %v1490
        %v1492 = vrot.slane %v1484, %v1491
        %v1494 = vunpack.c.l.s4 1934713408
        %v1495 = vunpack.c.0.s8 %v1494
        %v1496 = vlaneseq
        %v1497 = vshrl.u32 %v1496, 7
        %v1498 = vsub.s32 %v1495, %v1497
        %v1499 = vrot.slane %v1485, %v1498
        %v1500 = vcombine.low %v1476, %v1492
        %v1501 = vcombine.high %v1476, %v1492
        %v1502 = vcombine.low %v1483, %v1499
        %v1503 = vcombine.high %v1483, %v1499
        %v1504 = vcombine.low %v1340, %v1347
        %v1506 = vunpack.c.l.s4 1983009808
        %v1507 = vunpack.c.0.s8 %v1506
        %v1508 = vlaneseq
        %v1509 = vshrl.u32 %v1508, 7
        %v1510 = vsub.s32 %v1507, %v1509
        %v1511 = vrot.slane %v1504, %v1510
        %v1512 = vcombine.low %v1364, %v1365
        %v1514 = vunpack.c.l.s4 1983009808
        %v1515 = vunpack.c.0.s8 %v1514
        %v1516 = vlaneseq
        %v1517 = vshrl.u32 %v1516, 7
        %v1518 = vsub.s32 %v1515, %v1517
        %v1519 = vrot.slane %v1512, %v1518
        %v1520 = vcombine.low %v1356, %v1363
        %v1522 = vunpack.c.l.s4 1983009808
        %v1523 = vunpack.c.0.s8 %v1522
        %v1524 = vlaneseq
        %v1525 = vshrl.u32 %v1524, 7
        %v1526 = vsub.s32 %v1523, %v1525
        %v1527 = vrot.slane %v1520, %v1526
        %v1528 = vcombine.low %v1366, %v1367
        %v1530 = vunpack.c.l.s4 1983009808
        %v1531 = vunpack.c.0.s8 %v1530
        %v1532 = vlaneseq
        %v1533 = vshrl.u32 %v1532, 7
        %v1534 = vsub.s32 %v1531, %v1533
        %v1535 = vrot.slane %v1528, %v1534
        %v1536 = vcombine.low %v1511, %v1519
        %v1537 = vcombine.high %v1511, %v1519
        %v1539 = vunpack.c.l.s4 1934713408
        %v1540 = vunpack.c.0.s8 %v1539
        %v1541 = vlaneseq
        %v1542 = vshrl.u32 %v1541, 7
        %v1543 = vsub.s32 %v1540, %v1542
        %v1544 = vrot.slane %v1536, %v1543
        %v1546 = vunpack.c.l.s4 1934713408
        %v1547 = vunpack.c.0.s8 %v1546
        %v1548 = vlaneseq
        %v1549 = vshrl.u32 %v1548, 7
        %v1550 = vsub.s32 %v1547, %v1549
        %v1551 = vrot.slane %v1537, %v1550
        %v1552 = vcombine.low %v1527, %v1535
        %v1553 = vcombine.high %v1527, %v1535
        %v1555 = vunpack.c.l.s4 1934713408
        %v1556 = vunpack.c.0.s8 %v1555
        %v1557 = vlaneseq
        %v1558 = vshrl.u32 %v1557, 7
        %v1559 = vsub.s32 %v1556, %v1558
        %v1560 = vrot.slane %v1552, %v1559
        %v1562 = vunpack.c.l.s4 1934713408
        %v1563 = vunpack.c.0.s8 %v1562
        %v1564 = vlaneseq
        %v1565 = vshrl.u32 %v1564, 7
        %v1566 = vsub.s32 %v1563, %v1565
        %v1567 = vrot.slane %v1553, %v1566
        %v1568 = vcombine.low %v1544, %v1560
        %v1569 = vcombine.high %v1544, %v1560
        %v1570 = vcombine.low %v1551, %v1567
        %v1571 = vcombine.high %v1551, %v1567
        %v1572 = vpack.c.bf16 %v1500, %v1432
        %v1573 = vpack.c.bf16 %v1568, %v1568
        %v1574 = vpack.c.bf16 %v1501, %v1433
        %v1575 = vpack.c.bf16 %v1569, %v1569
        %v1576 = vpack.c.bf16 %v1502, %v1434
        %v1577 = vpack.c.bf16 %v1570, %v1570
        %v1578 = vpack.c.bf16 %v1503, %v1435
        %v1579 = vpack.c.bf16 %v1571, %v1571
        %1583 = vrot.lane.b32.xlu0 %v1045, 96
        %v1584 = vpop.permute.xlu0 %1583
        %1585 = vrot.lane.b32.xlu0 %v1049, 96
        %v1586 = vpop.permute.xlu0 %1585
        %1587 = vrot.lane.b32.xlu0 %v1055, 96
        %v1588 = vpop.permute.xlu0 %1587
        %1592 = vrot.lane.b32.xlu0 %v1045, 64
        %v1593 = vpop.permute.xlu0 %1592
        %1594 = vrot.lane.b32.xlu0 %v1049, 64
        %v1595 = vpop.permute.xlu0 %1594
        %1596 = vrot.lane.b32.xlu0 %v1055, 64
        %v1597 = vpop.permute.xlu0 %1596
        %1601 = vrot.lane.b32.xlu0 %v1045, 32
        %v1602 = vpop.permute.xlu0 %1601
        %1603 = vrot.lane.b32.xlu0 %v1049, 32
        %v1604 = vpop.permute.xlu0 %1603
        %1605 = vrot.lane.b32.xlu0 %v1055, 32
        %v1606 = vpop.permute.xlu0 %1605
        %v1610 = vcombine.low %v1045, %v1593
        %v1611 = vcombine.high %v1045, %v1593
        %v1613 = vunpack.c.l.s4 1983009808
        %v1614 = vunpack.c.0.s8 %v1613
        %v1615 = vlaneseq
        %v1616 = vshrl.u32 %v1615, 7
        %v1617 = vsub.s32 %v1614, %v1616
        %v1618 = vrot.slane %v1610, %v1617
        %v1620 = vunpack.c.l.s4 1983009808
        %v1621 = vunpack.c.0.s8 %v1620
        %v1622 = vlaneseq
        %v1623 = vshrl.u32 %v1622, 7
        %v1624 = vsub.s32 %v1621, %v1623
        %v1625 = vrot.slane %v1611, %v1624
        %v1626 = vcombine.low %v1584, %v1602
        %v1627 = vcombine.high %v1584, %v1602
        %v1629 = vunpack.c.l.s4 1983009808
        %v1630 = vunpack.c.0.s8 %v1629
        %v1631 = vlaneseq
        %v1632 = vshrl.u32 %v1631, 7
        %v1633 = vsub.s32 %v1630, %v1632
        %v1634 = vrot.slane %v1626, %v1633
        %v1636 = vunpack.c.l.s4 1983009808
        %v1637 = vunpack.c.0.s8 %v1636
        %v1638 = vlaneseq
        %v1639 = vshrl.u32 %v1638, 7
        %v1640 = vsub.s32 %v1637, %v1639
        %v1641 = vrot.slane %v1627, %v1640
        %v1642 = vcombine.low %v1618, %v1634
        %v1643 = vcombine.high %v1618, %v1634
        %v1645 = vunpack.c.l.s4 1934713408
        %v1646 = vunpack.c.0.s8 %v1645
        %v1647 = vlaneseq
        %v1648 = vshrl.u32 %v1647, 7
        %v1649 = vsub.s32 %v1646, %v1648
        %v1650 = vrot.slane %v1642, %v1649
        %v1652 = vunpack.c.l.s4 1934713408
        %v1653 = vunpack.c.0.s8 %v1652
        %v1654 = vlaneseq
        %v1655 = vshrl.u32 %v1654, 7
        %v1656 = vsub.s32 %v1653, %v1655
        %v1657 = vrot.slane %v1643, %v1656
        %v1658 = vcombine.low %v1625, %v1641
        %v1659 = vcombine.high %v1625, %v1641
        %v1661 = vunpack.c.l.s4 1934713408
        %v1662 = vunpack.c.0.s8 %v1661
        %v1663 = vlaneseq
        %v1664 = vshrl.u32 %v1663, 7
        %v1665 = vsub.s32 %v1662, %v1664
        %v1666 = vrot.slane %v1658, %v1665
        %v1668 = vunpack.c.l.s4 1934713408
        %v1669 = vunpack.c.0.s8 %v1668
        %v1670 = vlaneseq
        %v1671 = vshrl.u32 %v1670, 7
        %v1672 = vsub.s32 %v1669, %v1671
        %v1673 = vrot.slane %v1659, %v1672
        %v1674 = vcombine.high %v1650, 0.0
        %v1675 = vcombine.high %v1657, 0.0
        %v1676 = vcombine.high %v1666, 0.0
        %v1677 = vcombine.high %v1673, 0.0
        %v1678 = vcombine.low %v1049, %v1595
        %v1679 = vcombine.high %v1049, %v1595
        %v1681 = vunpack.c.l.s4 1983009808
        %v1682 = vunpack.c.0.s8 %v1681
        %v1683 = vlaneseq
        %v1684 = vshrl.u32 %v1683, 7
        %v1685 = vsub.s32 %v1682, %v1684
        %v1686 = vrot.slane %v1678, %v1685
        %v1688 = vunpack.c.l.s4 1983009808
        %v1689 = vunpack.c.0.s8 %v1688
        %v1690 = vlaneseq
        %v1691 = vshrl.u32 %v1690, 7
        %v1692 = vsub.s32 %v1689, %v1691
        %v1693 = vrot.slane %v1679, %v1692
        %v1694 = vcombine.low %v1586, %v1604
        %v1695 = vcombine.high %v1586, %v1604
        %v1697 = vunpack.c.l.s4 1983009808
        %v1698 = vunpack.c.0.s8 %v1697
        %v1699 = vlaneseq
        %v1700 = vshrl.u32 %v1699, 7
        %v1701 = vsub.s32 %v1698, %v1700
        %v1702 = vrot.slane %v1694, %v1701
        %v1704 = vunpack.c.l.s4 1983009808
        %v1705 = vunpack.c.0.s8 %v1704
        %v1706 = vlaneseq
        %v1707 = vshrl.u32 %v1706, 7
        %v1708 = vsub.s32 %v1705, %v1707
        %v1709 = vrot.slane %v1695, %v1708
        %v1710 = vcombine.low %v1686, %v1702
        %v1711 = vcombine.high %v1686, %v1702
        %v1713 = vunpack.c.l.s4 1934713408
        %v1714 = vunpack.c.0.s8 %v1713
        %v1715 = vlaneseq
        %v1716 = vshrl.u32 %v1715, 7
        %v1717 = vsub.s32 %v1714, %v1716
        %v1718 = vrot.slane %v1710, %v1717
        %v1720 = vunpack.c.l.s4 1934713408
        %v1721 = vunpack.c.0.s8 %v1720
        %v1722 = vlaneseq
        %v1723 = vshrl.u32 %v1722, 7
        %v1724 = vsub.s32 %v1721, %v1723
        %v1725 = vrot.slane %v1711, %v1724
        %v1726 = vcombine.low %v1693, %v1709
        %v1727 = vcombine.high %v1693, %v1709
        %v1729 = vunpack.c.l.s4 1934713408
        %v1730 = vunpack.c.0.s8 %v1729
        %v1731 = vlaneseq
        %v1732 = vshrl.u32 %v1731, 7
        %v1733 = vsub.s32 %v1730, %v1732
        %v1734 = vrot.slane %v1726, %v1733
        %v1736 = vunpack.c.l.s4 1934713408
        %v1737 = vunpack.c.0.s8 %v1736
        %v1738 = vlaneseq
        %v1739 = vshrl.u32 %v1738, 7
        %v1740 = vsub.s32 %v1737, %v1739
        %v1741 = vrot.slane %v1727, %v1740
        %v1742 = vcombine.high %v1718, 0.0
        %v1743 = vcombine.high %v1725, 0.0
        %v1744 = vcombine.high %v1734, 0.0
        %v1745 = vcombine.high %v1741, 0.0
        %v1746 = vcombine.low %v1055, %v1597
        %v1747 = vcombine.high %v1055, %v1597
        %v1749 = vunpack.c.l.s4 1983009808
        %v1750 = vunpack.c.0.s8 %v1749
        %v1751 = vlaneseq
        %v1752 = vshrl.u32 %v1751, 7
        %v1753 = vsub.s32 %v1750, %v1752
        %v1754 = vrot.slane %v1746, %v1753
        %v1756 = vunpack.c.l.s4 1983009808
        %v1757 = vunpack.c.0.s8 %v1756
        %v1758 = vlaneseq
        %v1759 = vshrl.u32 %v1758, 7
        %v1760 = vsub.s32 %v1757, %v1759
        %v1761 = vrot.slane %v1747, %v1760
        %v1762 = vcombine.low %v1588, %v1606
        %v1763 = vcombine.high %v1588, %v1606
        %v1765 = vunpack.c.l.s4 1983009808
        %v1766 = vunpack.c.0.s8 %v1765
        %v1767 = vlaneseq
        %v1768 = vshrl.u32 %v1767, 7
        %v1769 = vsub.s32 %v1766, %v1768
        %v1770 = vrot.slane %v1762, %v1769
        %v1772 = vunpack.c.l.s4 1983009808
        %v1773 = vunpack.c.0.s8 %v1772
        %v1774 = vlaneseq
        %v1775 = vshrl.u32 %v1774, 7
        %v1776 = vsub.s32 %v1773, %v1775
        %v1777 = vrot.slane %v1763, %v1776
        %v1778 = vcombine.low %v1754, %v1770
        %v1779 = vcombine.high %v1754, %v1770
        %v1781 = vunpack.c.l.s4 1934713408
        %v1782 = vunpack.c.0.s8 %v1781
        %v1783 = vlaneseq
        %v1784 = vshrl.u32 %v1783, 7
        %v1785 = vsub.s32 %v1782, %v1784
        %v1786 = vrot.slane %v1778, %v1785
        %v1788 = vunpack.c.l.s4 1934713408
        %v1789 = vunpack.c.0.s8 %v1788
        %v1790 = vlaneseq
        %v1791 = vshrl.u32 %v1790, 7
        %v1792 = vsub.s32 %v1789, %v1791
        %v1793 = vrot.slane %v1779, %v1792
        %v1794 = vcombine.low %v1761, %v1777
        %v1795 = vcombine.high %v1761, %v1777
        %v1797 = vunpack.c.l.s4 1934713408
        %v1798 = vunpack.c.0.s8 %v1797
        %v1799 = vlaneseq
        %v1800 = vshrl.u32 %v1799, 7
        %v1801 = vsub.s32 %v1798, %v1800
        %v1802 = vrot.slane %v1794, %v1801
        %v1804 = vunpack.c.l.s4 1934713408
        %v1805 = vunpack.c.0.s8 %v1804
        %v1806 = vlaneseq
        %v1807 = vshrl.u32 %v1806, 7
        %v1808 = vsub.s32 %v1805, %v1807
        %v1809 = vrot.slane %v1795, %v1808
        %v1810 = vcombine.high %v1786, 0.0
        %v1811 = vcombine.high %v1793, 0.0
        %v1812 = vcombine.high %v1802, 0.0
        %v1813 = vcombine.high %v1809, 0.0
        %v1814 = vcombine.low %v1650, %v1657
        %v1816 = vunpack.c.l.s4 1983009808
        %v1817 = vunpack.c.0.s8 %v1816
        %v1818 = vlaneseq
        %v1819 = vshrl.u32 %v1818, 7
        %v1820 = vsub.s32 %v1817, %v1819
        %v1821 = vrot.slane %v1814, %v1820
        %v1822 = vcombine.low %v1674, %v1675
        %v1824 = vunpack.c.l.s4 1983009808
        %v1825 = vunpack.c.0.s8 %v1824
        %v1826 = vlaneseq
        %v1827 = vshrl.u32 %v1826, 7
        %v1828 = vsub.s32 %v1825, %v1827
        %v1829 = vrot.slane %v1822, %v1828
        %v1830 = vcombine.low %v1666, %v1673
        %v1832 = vunpack.c.l.s4 1983009808
        %v1833 = vunpack.c.0.s8 %v1832
        %v1834 = vlaneseq
        %v1835 = vshrl.u32 %v1834, 7
        %v1836 = vsub.s32 %v1833, %v1835
        %v1837 = vrot.slane %v1830, %v1836
        %v1838 = vcombine.low %v1676, %v1677
        %v1840 = vunpack.c.l.s4 1983009808
        %v1841 = vunpack.c.0.s8 %v1840
        %v1842 = vlaneseq
        %v1843 = vshrl.u32 %v1842, 7
        %v1844 = vsub.s32 %v1841, %v1843
        %v1845 = vrot.slane %v1838, %v1844
        %v1846 = vcombine.low %v1821, %v1829
        %v1847 = vcombine.high %v1821, %v1829
        %v1849 = vunpack.c.l.s4 1934713408
        %v1850 = vunpack.c.0.s8 %v1849
        %v1851 = vlaneseq
        %v1852 = vshrl.u32 %v1851, 7
        %v1853 = vsub.s32 %v1850, %v1852
        %v1854 = vrot.slane %v1846, %v1853
        %v1856 = vunpack.c.l.s4 1934713408
        %v1857 = vunpack.c.0.s8 %v1856
        %v1858 = vlaneseq
        %v1859 = vshrl.u32 %v1858, 7
        %v1860 = vsub.s32 %v1857, %v1859
        %v1861 = vrot.slane %v1847, %v1860
        %v1862 = vcombine.low %v1837, %v1845
        %v1863 = vcombine.high %v1837, %v1845
        %v1865 = vunpack.c.l.s4 1934713408
        %v1866 = vunpack.c.0.s8 %v1865
        %v1867 = vlaneseq
        %v1868 = vshrl.u32 %v1867, 7
        %v1869 = vsub.s32 %v1866, %v1868
        %v1870 = vrot.slane %v1862, %v1869
        %v1872 = vunpack.c.l.s4 1934713408
        %v1873 = vunpack.c.0.s8 %v1872
        %v1874 = vlaneseq
        %v1875 = vshrl.u32 %v1874, 7
        %v1876 = vsub.s32 %v1873, %v1875
        %v1877 = vrot.slane %v1863, %v1876
        %v1878 = vcombine.low %v1854, %v1870
        %v1879 = vcombine.high %v1854, %v1870
        %v1880 = vcombine.low %v1861, %v1877
        %v1881 = vcombine.high %v1861, %v1877
        %v1882 = vcombine.low %v1718, %v1725
        %v1884 = vunpack.c.l.s4 1983009808
        %v1885 = vunpack.c.0.s8 %v1884
        %v1886 = vlaneseq
        %v1887 = vshrl.u32 %v1886, 7
        %v1888 = vsub.s32 %v1885, %v1887
        %v1889 = vrot.slane %v1882, %v1888
        %v1890 = vcombine.low %v1742, %v1743
        %v1892 = vunpack.c.l.s4 1983009808
        %v1893 = vunpack.c.0.s8 %v1892
        %v1894 = vlaneseq
        %v1895 = vshrl.u32 %v1894, 7
        %v1896 = vsub.s32 %v1893, %v1895
        %v1897 = vrot.slane %v1890, %v1896
        %v1898 = vcombine.low %v1734, %v1741
        %v1900 = vunpack.c.l.s4 1983009808
        %v1901 = vunpack.c.0.s8 %v1900
        %v1902 = vlaneseq
        %v1903 = vshrl.u32 %v1902, 7
        %v1904 = vsub.s32 %v1901, %v1903
        %v1905 = vrot.slane %v1898, %v1904
        %v1906 = vcombine.low %v1744, %v1745
        %v1908 = vunpack.c.l.s4 1983009808
        %v1909 = vunpack.c.0.s8 %v1908
        %v1910 = vlaneseq
        %v1911 = vshrl.u32 %v1910, 7
        %v1912 = vsub.s32 %v1909, %v1911
        %v1913 = vrot.slane %v1906, %v1912
        %v1914 = vcombine.low %v1889, %v1897
        %v1915 = vcombine.high %v1889, %v1897
        %v1917 = vunpack.c.l.s4 1934713408
        %v1918 = vunpack.c.0.s8 %v1917
        %v1919 = vlaneseq
        %v1920 = vshrl.u32 %v1919, 7
        %v1921 = vsub.s32 %v1918, %v1920
        %v1922 = vrot.slane %v1914, %v1921
        %v1924 = vunpack.c.l.s4 1934713408
        %v1925 = vunpack.c.0.s8 %v1924
        %v1926 = vlaneseq
        %v1927 = vshrl.u32 %v1926, 7
        %v1928 = vsub.s32 %v1925, %v1927
        %v1929 = vrot.slane %v1915, %v1928
        %v1930 = vcombine.low %v1905, %v1913
        %v1931 = vcombine.high %v1905, %v1913
        %v1933 = vunpack.c.l.s4 1934713408
        %v1934 = vunpack.c.0.s8 %v1933
        %v1935 = vlaneseq
        %v1936 = vshrl.u32 %v1935, 7
        %v1937 = vsub.s32 %v1934, %v1936
        %v1938 = vrot.slane %v1930, %v1937
        %v1940 = vunpack.c.l.s4 1934713408
        %v1941 = vunpack.c.0.s8 %v1940
        %v1942 = vlaneseq
        %v1943 = vshrl.u32 %v1942, 7
        %v1944 = vsub.s32 %v1941, %v1943
        %v1945 = vrot.slane %v1931, %v1944
        %v1946 = vcombine.low %v1922, %v1938
        %v1947 = vcombine.high %v1922, %v1938
        %v1948 = vcombine.low %v1929, %v1945
        %v1949 = vcombine.high %v1929, %v1945
        %v1950 = vcombine.low %v1786, %v1793
        %v1952 = vunpack.c.l.s4 1983009808
        %v1953 = vunpack.c.0.s8 %v1952
        %v1954 = vlaneseq
        %v1955 = vshrl.u32 %v1954, 7
        %v1956 = vsub.s32 %v1953, %v1955
        %v1957 = vrot.slane %v1950, %v1956
        %v1958 = vcombine.low %v1810, %v1811
        %v1960 = vunpack.c.l.s4 1983009808
        %v1961 = vunpack.c.0.s8 %v1960
        %v1962 = vlaneseq
        %v1963 = vshrl.u32 %v1962, 7
        %v1964 = vsub.s32 %v1961, %v1963
        %v1965 = vrot.slane %v1958, %v1964
        %v1966 = vcombine.low %v1802, %v1809
        %v1968 = vunpack.c.l.s4 1983009808
        %v1969 = vunpack.c.0.s8 %v1968
        %v1970 = vlaneseq
        %v1971 = vshrl.u32 %v1970, 7
        %v1972 = vsub.s32 %v1969, %v1971
        %v1973 = vrot.slane %v1966, %v1972
        %v1974 = vcombine.low %v1812, %v1813
        %v1976 = vunpack.c.l.s4 1983009808
        %v1977 = vunpack.c.0.s8 %v1976
        %v1978 = vlaneseq
        %v1979 = vshrl.u32 %v1978, 7
        %v1980 = vsub.s32 %v1977, %v1979
        %v1981 = vrot.slane %v1974, %v1980
        %v1982 = vcombine.low %v1957, %v1965
        %v1983 = vcombine.high %v1957, %v1965
        %v1985 = vunpack.c.l.s4 1934713408
        %v1986 = vunpack.c.0.s8 %v1985
        %v1987 = vlaneseq
        %v1988 = vshrl.u32 %v1987, 7
        %v1989 = vsub.s32 %v1986, %v1988
        %v1990 = vrot.slane %v1982, %v1989
        %v1992 = vunpack.c.l.s4 1934713408
        %v1993 = vunpack.c.0.s8 %v1992
        %v1994 = vlaneseq
        %v1995 = vshrl.u32 %v1994, 7
        %v1996 = vsub.s32 %v1993, %v1995
        %v1997 = vrot.slane %v1983, %v1996
        %v1998 = vcombine.low %v1973, %v1981
        %v1999 = vcombine.high %v1973, %v1981
        %v2001 = vunpack.c.l.s4 1934713408
        %v2002 = vunpack.c.0.s8 %v2001
        %v2003 = vlaneseq
        %v2004 = vshrl.u32 %v2003, 7
        %v2005 = vsub.s32 %v2002, %v2004
        %v2006 = vrot.slane %v1998, %v2005
        %v2008 = vunpack.c.l.s4 1934713408
        %v2009 = vunpack.c.0.s8 %v2008
        %v2010 = vlaneseq
        %v2011 = vshrl.u32 %v2010, 7
        %v2012 = vsub.s32 %v2009, %v2011
        %v2013 = vrot.slane %v1999, %v2012
        %v2014 = vcombine.low %v1990, %v2006
        %v2015 = vcombine.high %v1990, %v2006
        %v2016 = vcombine.low %v1997, %v2013
        %v2017 = vcombine.high %v1997, %v2013
        %v2018 = vpack.c.bf16 %v1946, %v1878
        %v2019 = vpack.c.bf16 %v2014, %v2014
        %v2020 = vpack.c.bf16 %v1947, %v1879
        %v2021 = vpack.c.bf16 %v2015, %v2015
        %v2022 = vpack.c.bf16 %v1948, %v1880
        %v2023 = vpack.c.bf16 %v2016, %v2016
        %v2024 = vpack.c.bf16 %v1949, %v1881
        %v2025 = vpack.c.bf16 %v2017, %v2017
        %2029 = vrot.lane.b32.xlu0 %v1106, 96
        %v2030 = vpop.permute.xlu0 %2029
        %2031 = vrot.lane.b32.xlu0 %v1109, 96
        %v2032 = vpop.permute.xlu0 %2031
        %2033 = vrot.lane.b32.xlu0 %v1114, 96
        %v2034 = vpop.permute.xlu0 %2033
        %2038 = vrot.lane.b32.xlu0 %v1106, 64
        %v2039 = vpop.permute.xlu0 %2038
        %2040 = vrot.lane.b32.xlu0 %v1109, 64
        %v2041 = vpop.permute.xlu0 %2040
        %2042 = vrot.lane.b32.xlu0 %v1114, 64
        %v2043 = vpop.permute.xlu0 %2042
        %2047 = vrot.lane.b32.xlu0 %v1106, 32
        %v2048 = vpop.permute.xlu0 %2047
        %2049 = vrot.lane.b32.xlu0 %v1109, 32
        %v2050 = vpop.permute.xlu0 %2049
        %2051 = vrot.lane.b32.xlu0 %v1114, 32
        %v2052 = vpop.permute.xlu0 %2051
        %v2056 = vcombine.low %v1106, %v2039
        %v2057 = vcombine.high %v1106, %v2039
        %v2059 = vunpack.c.l.s4 1983009808
        %v2060 = vunpack.c.0.s8 %v2059
        %v2061 = vlaneseq
        %v2062 = vshrl.u32 %v2061, 7
        %v2063 = vsub.s32 %v2060, %v2062
        %v2064 = vrot.slane %v2056, %v2063
        %v2066 = vunpack.c.l.s4 1983009808
        %v2067 = vunpack.c.0.s8 %v2066
        %v2068 = vlaneseq
        %v2069 = vshrl.u32 %v2068, 7
        %v2070 = vsub.s32 %v2067, %v2069
        %v2071 = vrot.slane %v2057, %v2070
        %v2072 = vcombine.low %v2030, %v2048
        %v2073 = vcombine.high %v2030, %v2048
        %v2075 = vunpack.c.l.s4 1983009808
        %v2076 = vunpack.c.0.s8 %v2075
        %v2077 = vlaneseq
        %v2078 = vshrl.u32 %v2077, 7
        %v2079 = vsub.s32 %v2076, %v2078
        %v2080 = vrot.slane %v2072, %v2079
        %v2082 = vunpack.c.l.s4 1983009808
        %v2083 = vunpack.c.0.s8 %v2082
        %v2084 = vlaneseq
        %v2085 = vshrl.u32 %v2084, 7
        %v2086 = vsub.s32 %v2083, %v2085
        %v2087 = vrot.slane %v2073, %v2086
        %v2088 = vcombine.low %v2064, %v2080
        %v2089 = vcombine.high %v2064, %v2080
        %v2091 = vunpack.c.l.s4 1934713408
        %v2092 = vunpack.c.0.s8 %v2091
        %v2093 = vlaneseq
        %v2094 = vshrl.u32 %v2093, 7
        %v2095 = vsub.s32 %v2092, %v2094
        %v2096 = vrot.slane %v2088, %v2095
        %v2098 = vunpack.c.l.s4 1934713408
        %v2099 = vunpack.c.0.s8 %v2098
        %v2100 = vlaneseq
        %v2101 = vshrl.u32 %v2100, 7
        %v2102 = vsub.s32 %v2099, %v2101
        %v2103 = vrot.slane %v2089, %v2102
        %v2104 = vcombine.low %v2071, %v2087
        %v2105 = vcombine.high %v2071, %v2087
        %v2107 = vunpack.c.l.s4 1934713408
        %v2108 = vunpack.c.0.s8 %v2107
        %v2109 = vlaneseq
        %v2110 = vshrl.u32 %v2109, 7
        %v2111 = vsub.s32 %v2108, %v2110
        %v2112 = vrot.slane %v2104, %v2111
        %v2114 = vunpack.c.l.s4 1934713408
        %v2115 = vunpack.c.0.s8 %v2114
        %v2116 = vlaneseq
        %v2117 = vshrl.u32 %v2116, 7
        %v2118 = vsub.s32 %v2115, %v2117
        %v2119 = vrot.slane %v2105, %v2118
        %v2120 = vcombine.high %v2096, 0.0
        %v2121 = vcombine.high %v2103, 0.0
        %v2122 = vcombine.high %v2112, 0.0
        %v2123 = vcombine.high %v2119, 0.0
        %v2124 = vcombine.low %v1109, %v2041
        %v2125 = vcombine.high %v1109, %v2041
        %v2127 = vunpack.c.l.s4 1983009808
        %v2128 = vunpack.c.0.s8 %v2127
        %v2129 = vlaneseq
        %v2130 = vshrl.u32 %v2129, 7
        %v2131 = vsub.s32 %v2128, %v2130
        %v2132 = vrot.slane %v2124, %v2131
        %v2134 = vunpack.c.l.s4 1983009808
        %v2135 = vunpack.c.0.s8 %v2134
        %v2136 = vlaneseq
        %v2137 = vshrl.u32 %v2136, 7
        %v2138 = vsub.s32 %v2135, %v2137
        %v2139 = vrot.slane %v2125, %v2138
        %v2140 = vcombine.low %v2032, %v2050
        %v2141 = vcombine.high %v2032, %v2050
        %v2143 = vunpack.c.l.s4 1983009808
        %v2144 = vunpack.c.0.s8 %v2143
        %v2145 = vlaneseq
        %v2146 = vshrl.u32 %v2145, 7
        %v2147 = vsub.s32 %v2144, %v2146
        %v2148 = vrot.slane %v2140, %v2147
        %v2150 = vunpack.c.l.s4 1983009808
        %v2151 = vunpack.c.0.s8 %v2150
        %v2152 = vlaneseq
        %v2153 = vshrl.u32 %v2152, 7
        %v2154 = vsub.s32 %v2151, %v2153
        %v2155 = vrot.slane %v2141, %v2154
        %v2156 = vcombine.low %v2132, %v2148
        %v2157 = vcombine.high %v2132, %v2148
        %v2159 = vunpack.c.l.s4 1934713408
        %v2160 = vunpack.c.0.s8 %v2159
        %v2161 = vlaneseq
        %v2162 = vshrl.u32 %v2161, 7
        %v2163 = vsub.s32 %v2160, %v2162
        %v2164 = vrot.slane %v2156, %v2163
        %v2166 = vunpack.c.l.s4 1934713408
        %v2167 = vunpack.c.0.s8 %v2166
        %v2168 = vlaneseq
        %v2169 = vshrl.u32 %v2168, 7
        %v2170 = vsub.s32 %v2167, %v2169
        %v2171 = vrot.slane %v2157, %v2170
        %v2172 = vcombine.low %v2139, %v2155
        %v2173 = vcombine.high %v2139, %v2155
        %v2175 = vunpack.c.l.s4 1934713408
        %v2176 = vunpack.c.0.s8 %v2175
        %v2177 = vlaneseq
        %v2178 = vshrl.u32 %v2177, 7
        %v2179 = vsub.s32 %v2176, %v2178
        %v2180 = vrot.slane %v2172, %v2179
        %v2182 = vunpack.c.l.s4 1934713408
        %v2183 = vunpack.c.0.s8 %v2182
        %v2184 = vlaneseq
        %v2185 = vshrl.u32 %v2184, 7
        %v2186 = vsub.s32 %v2183, %v2185
        %v2187 = vrot.slane %v2173, %v2186
        %v2188 = vcombine.high %v2164, 0.0
        %v2189 = vcombine.high %v2171, 0.0
        %v2190 = vcombine.high %v2180, 0.0
        %v2191 = vcombine.high %v2187, 0.0
        %v2192 = vcombine.low %v1114, %v2043
        %v2193 = vcombine.high %v1114, %v2043
        %v2195 = vunpack.c.l.s4 1983009808
        %v2196 = vunpack.c.0.s8 %v2195
        %v2197 = vlaneseq
        %v2198 = vshrl.u32 %v2197, 7
        %v2199 = vsub.s32 %v2196, %v2198
        %v2200 = vrot.slane %v2192, %v2199
        %v2202 = vunpack.c.l.s4 1983009808
        %v2203 = vunpack.c.0.s8 %v2202
        %v2204 = vlaneseq
        %v2205 = vshrl.u32 %v2204, 7
        %v2206 = vsub.s32 %v2203, %v2205
        %v2207 = vrot.slane %v2193, %v2206
        %v2208 = vcombine.low %v2034, %v2052
        %v2209 = vcombine.high %v2034, %v2052
        %v2211 = vunpack.c.l.s4 1983009808
        %v2212 = vunpack.c.0.s8 %v2211
        %v2213 = vlaneseq
        %v2214 = vshrl.u32 %v2213, 7
        %v2215 = vsub.s32 %v2212, %v2214
        %v2216 = vrot.slane %v2208, %v2215
        %v2218 = vunpack.c.l.s4 1983009808
        %v2219 = vunpack.c.0.s8 %v2218
        %v2220 = vlaneseq
        %v2221 = vshrl.u32 %v2220, 7
        %v2222 = vsub.s32 %v2219, %v2221
        %v2223 = vrot.slane %v2209, %v2222
        %v2224 = vcombine.low %v2200, %v2216
        %v2225 = vcombine.high %v2200, %v2216
        %v2227 = vunpack.c.l.s4 1934713408
        %v2228 = vunpack.c.0.s8 %v2227
        %v2229 = vlaneseq
        %v2230 = vshrl.u32 %v2229, 7
        %v2231 = vsub.s32 %v2228, %v2230
        %v2232 = vrot.slane %v2224, %v2231
        %v2234 = vunpack.c.l.s4 1934713408
        %v2235 = vunpack.c.0.s8 %v2234
        %v2236 = vlaneseq
        %v2237 = vshrl.u32 %v2236, 7
        %v2238 = vsub.s32 %v2235, %v2237
        %v2239 = vrot.slane %v2225, %v2238
        %v2240 = vcombine.low %v2207, %v2223
        %v2241 = vcombine.high %v2207, %v2223
        %v2243 = vunpack.c.l.s4 1934713408
        %v2244 = vunpack.c.0.s8 %v2243
        %v2245 = vlaneseq
        %v2246 = vshrl.u32 %v2245, 7
        %v2247 = vsub.s32 %v2244, %v2246
        %v2248 = vrot.slane %v2240, %v2247
        %v2250 = vunpack.c.l.s4 1934713408
        %v2251 = vunpack.c.0.s8 %v2250
        %v2252 = vlaneseq
        %v2253 = vshrl.u32 %v2252, 7
        %v2254 = vsub.s32 %v2251, %v2253
        %v2255 = vrot.slane %v2241, %v2254
        %v2256 = vcombine.high %v2232, 0.0
        %v2257 = vcombine.high %v2239, 0.0
        %v2258 = vcombine.high %v2248, 0.0
        %v2259 = vcombine.high %v2255, 0.0
        %v2260 = vcombine.low %v2096, %v2103
        %v2262 = vunpack.c.l.s4 1983009808
        %v2263 = vunpack.c.0.s8 %v2262
        %v2264 = vlaneseq
        %v2265 = vshrl.u32 %v2264, 7
        %v2266 = vsub.s32 %v2263, %v2265
        %v2267 = vrot.slane %v2260, %v2266
        %v2268 = vcombine.low %v2120, %v2121
        %v2270 = vunpack.c.l.s4 1983009808
        %v2271 = vunpack.c.0.s8 %v2270
        %v2272 = vlaneseq
        %v2273 = vshrl.u32 %v2272, 7
        %v2274 = vsub.s32 %v2271, %v2273
        %v2275 = vrot.slane %v2268, %v2274
        %v2276 = vcombine.low %v2112, %v2119
        %v2278 = vunpack.c.l.s4 1983009808
        %v2279 = vunpack.c.0.s8 %v2278
        %v2280 = vlaneseq
        %v2281 = vshrl.u32 %v2280, 7
        %v2282 = vsub.s32 %v2279, %v2281
        %v2283 = vrot.slane %v2276, %v2282
        %v2284 = vcombine.low %v2122, %v2123
        %v2286 = vunpack.c.l.s4 1983009808
        %v2287 = vunpack.c.0.s8 %v2286
        %v2288 = vlaneseq
        %v2289 = vshrl.u32 %v2288, 7
        %v2290 = vsub.s32 %v2287, %v2289
        %v2291 = vrot.slane %v2284, %v2290
        %v2292 = vcombine.low %v2267, %v2275
        %v2293 = vcombine.high %v2267, %v2275
        %v2295 = vunpack.c.l.s4 1934713408
        %v2296 = vunpack.c.0.s8 %v2295
        %v2297 = vlaneseq
        %v2298 = vshrl.u32 %v2297, 7
        %v2299 = vsub.s32 %v2296, %v2298
        %v2300 = vrot.slane %v2292, %v2299
        %v2302 = vunpack.c.l.s4 1934713408
        %v2303 = vunpack.c.0.s8 %v2302
        %v2304 = vlaneseq
        %v2305 = vshrl.u32 %v2304, 7
        %v2306 = vsub.s32 %v2303, %v2305
        %v2307 = vrot.slane %v2293, %v2306
        %v2308 = vcombine.low %v2283, %v2291
        %v2309 = vcombine.high %v2283, %v2291
        %v2311 = vunpack.c.l.s4 1934713408
        %v2312 = vunpack.c.0.s8 %v2311
        %v2313 = vlaneseq
        %v2314 = vshrl.u32 %v2313, 7
        %v2315 = vsub.s32 %v2312, %v2314
        %v2316 = vrot.slane %v2308, %v2315
        %v2318 = vunpack.c.l.s4 1934713408
        %v2319 = vunpack.c.0.s8 %v2318
        %v2320 = vlaneseq
        %v2321 = vshrl.u32 %v2320, 7
        %v2322 = vsub.s32 %v2319, %v2321
        %v2323 = vrot.slane %v2309, %v2322
        %v2324 = vcombine.low %v2300, %v2316
        %v2325 = vcombine.high %v2300, %v2316
        %v2326 = vcombine.low %v2307, %v2323
        %v2327 = vcombine.high %v2307, %v2323
        %v2328 = vcombine.low %v2164, %v2171
        %v2330 = vunpack.c.l.s4 1983009808
        %v2331 = vunpack.c.0.s8 %v2330
        %v2332 = vlaneseq
        %v2333 = vshrl.u32 %v2332, 7
        %v2334 = vsub.s32 %v2331, %v2333
        %v2335 = vrot.slane %v2328, %v2334
        %v2336 = vcombine.low %v2188, %v2189
        %v2338 = vunpack.c.l.s4 1983009808
        %v2339 = vunpack.c.0.s8 %v2338
        %v2340 = vlaneseq
        %v2341 = vshrl.u32 %v2340, 7
        %v2342 = vsub.s32 %v2339, %v2341
        %v2343 = vrot.slane %v2336, %v2342
        %v2344 = vcombine.low %v2180, %v2187
        %v2346 = vunpack.c.l.s4 1983009808
        %v2347 = vunpack.c.0.s8 %v2346
        %v2348 = vlaneseq
        %v2349 = vshrl.u32 %v2348, 7
        %v2350 = vsub.s32 %v2347, %v2349
        %v2351 = vrot.slane %v2344, %v2350
        %v2352 = vcombine.low %v2190, %v2191
        %v2354 = vunpack.c.l.s4 1983009808
        %v2355 = vunpack.c.0.s8 %v2354
        %v2356 = vlaneseq
        %v2357 = vshrl.u32 %v2356, 7
        %v2358 = vsub.s32 %v2355, %v2357
        %v2359 = vrot.slane %v2352, %v2358
        %v2360 = vcombine.low %v2335, %v2343
        %v2361 = vcombine.high %v2335, %v2343
        %v2363 = vunpack.c.l.s4 1934713408
        %v2364 = vunpack.c.0.s8 %v2363
        %v2365 = vlaneseq
        %v2366 = vshrl.u32 %v2365, 7
        %v2367 = vsub.s32 %v2364, %v2366
        %v2368 = vrot.slane %v2360, %v2367
        %v2370 = vunpack.c.l.s4 1934713408
        %v2371 = vunpack.c.0.s8 %v2370
        %v2372 = vlaneseq
        %v2373 = vshrl.u32 %v2372, 7
        %v2374 = vsub.s32 %v2371, %v2373
        %v2375 = vrot.slane %v2361, %v2374
        %v2376 = vcombine.low %v2351, %v2359
        %v2377 = vcombine.high %v2351, %v2359
        %v2379 = vunpack.c.l.s4 1934713408
        %v2380 = vunpack.c.0.s8 %v2379
        %v2381 = vlaneseq
        %v2382 = vshrl.u32 %v2381, 7
        %v2383 = vsub.s32 %v2380, %v2382
        %v2384 = vrot.slane %v2376, %v2383
        %v2386 = vunpack.c.l.s4 1934713408
        %v2387 = vunpack.c.0.s8 %v2386
        %v2388 = vlaneseq
        %v2389 = vshrl.u32 %v2388, 7
        %v2390 = vsub.s32 %v2387, %v2389
        %v2391 = vrot.slane %v2377, %v2390
        %v2392 = vcombine.low %v2368, %v2384
        %v2393 = vcombine.high %v2368, %v2384
        %v2394 = vcombine.low %v2375, %v2391
        %v2395 = vcombine.high %v2375, %v2391
        %v2396 = vcombine.low %v2232, %v2239
        %v2398 = vunpack.c.l.s4 1983009808
        %v2399 = vunpack.c.0.s8 %v2398
        %v2400 = vlaneseq
        %v2401 = vshrl.u32 %v2400, 7
        %v2402 = vsub.s32 %v2399, %v2401
        %v2403 = vrot.slane %v2396, %v2402
        %v2404 = vcombine.low %v2256, %v2257
        %v2406 = vunpack.c.l.s4 1983009808
        %v2407 = vunpack.c.0.s8 %v2406
        %v2408 = vlaneseq
        %v2409 = vshrl.u32 %v2408, 7
        %v2410 = vsub.s32 %v2407, %v2409
        %v2411 = vrot.slane %v2404, %v2410
        %v2412 = vcombine.low %v2248, %v2255
        %v2414 = vunpack.c.l.s4 1983009808
        %v2415 = vunpack.c.0.s8 %v2414
        %v2416 = vlaneseq
        %v2417 = vshrl.u32 %v2416, 7
        %v2418 = vsub.s32 %v2415, %v2417
        %v2419 = vrot.slane %v2412, %v2418
        %v2420 = vcombine.low %v2258, %v2259
        %v2422 = vunpack.c.l.s4 1983009808
        %v2423 = vunpack.c.0.s8 %v2422
        %v2424 = vlaneseq
        %v2425 = vshrl.u32 %v2424, 7
        %v2426 = vsub.s32 %v2423, %v2425
        %v2427 = vrot.slane %v2420, %v2426
        %v2428 = vcombine.low %v2403, %v2411
        %v2429 = vcombine.high %v2403, %v2411
        %v2431 = vunpack.c.l.s4 1934713408
        %v2432 = vunpack.c.0.s8 %v2431
        %v2433 = vlaneseq
        %v2434 = vshrl.u32 %v2433, 7
        %v2435 = vsub.s32 %v2432, %v2434
        %v2436 = vrot.slane %v2428, %v2435
        %v2438 = vunpack.c.l.s4 1934713408
        %v2439 = vunpack.c.0.s8 %v2438
        %v2440 = vlaneseq
        %v2441 = vshrl.u32 %v2440, 7
        %v2442 = vsub.s32 %v2439, %v2441
        %v2443 = vrot.slane %v2429, %v2442
        %v2444 = vcombine.low %v2419, %v2427
        %v2445 = vcombine.high %v2419, %v2427
        %v2447 = vunpack.c.l.s4 1934713408
        %v2448 = vunpack.c.0.s8 %v2447
        %v2449 = vlaneseq
        %v2450 = vshrl.u32 %v2449, 7
        %v2451 = vsub.s32 %v2448, %v2450
        %v2452 = vrot.slane %v2444, %v2451
        %v2454 = vunpack.c.l.s4 1934713408
        %v2455 = vunpack.c.0.s8 %v2454
        %v2456 = vlaneseq
        %v2457 = vshrl.u32 %v2456, 7
        %v2458 = vsub.s32 %v2455, %v2457
        %v2459 = vrot.slane %v2445, %v2458
        %v2460 = vcombine.low %v2436, %v2452
        %v2461 = vcombine.high %v2436, %v2452
        %v2462 = vcombine.low %v2443, %v2459
        %v2463 = vcombine.high %v2443, %v2459
        %v2464 = vpack.c.bf16 %v2392, %v2324
        %v2465 = vpack.c.bf16 %v2460, %v2460
        %v2466 = vpack.c.bf16 %v2393, %v2325
        %v2467 = vpack.c.bf16 %v2461, %v2461
        %v2468 = vpack.c.bf16 %v2394, %v2326
        %v2469 = vpack.c.bf16 %v2462, %v2462
        %v2470 = vpack.c.bf16 %v2395, %v2327
        %v2471 = vpack.c.bf16 %v2463, %v2463
        %vm2472 = vcmask 261120
        %v2474 = vsel %vm2472, %v1572, 0
        %v2477 = vsel %vm2472, %v1573, 0
        %v2480 = vsel %vm2472, %v2018, 0
        %v2483 = vsel %vm2472, %v2019, 0
        %2485 = vmatprep.subr.bf16.mxu0 0
        %2486 = vmatpush1.bf16.xpose.msra.mxu0 %v2480
        %2487 = vmatprep.subr.bf16.mxu0 0
        %2488 = vmatpush1.bf16.xpose.msra.mxu0 %v2483
        %2489 = vmatprep.subr.bf16.mxu0 0
        %2490 = vmatpush1.bf16.xpose.msra.mxu0 0
        %2491 = vmatprep.subr.bf16.mxu0 0
        %2492 = vmatpush1.bf16.xpose.msra.mxu0 0
        %2493 = vmatprep.subr.bf16.mxu0 0
        %2494 = vmatpush1.bf16.xpose.msra.mxu0 0
        %2495 = vmatprep.subr.bf16.mxu0 0
        %2496 = vmatpush1.bf16.xpose.msra.mxu0 0
        %2497 = vmatprep.subr.bf16.mxu0 0
        %2498 = vmatpush1.bf16.xpose.msra.mxu0 0
        %2499 = vmatprep.subr.bf16.mxu0 0
        %2500 = vmatpush1.bf16.xpose.msra.mxu0 0
        %2501 = vmatprep.subr.bf16.mxu0 0
        %2502 = vmatpush1.bf16.xpose.msra.mxu0 0
        %2503 = vmatprep.subr.bf16.mxu0 0
        %2504 = vmatpush1.bf16.xpose.msra.mxu0 0
        %2505 = vmatprep.subr.bf16.mxu0 0
        %2506 = vmatpush1.bf16.xpose.msra.mxu0 0
        %2507 = vmatprep.subr.bf16.mxu0 0
        %2508 = vmatpush1.bf16.xpose.msra.mxu0 0
        %2509 = vmatprep.subr.bf16.mxu0 0
        %2510 = vmatpush1.bf16.xpose.msra.mxu0 0
        %2511 = vmatprep.subr.bf16.mxu0 0
        %2512 = vmatpush1.bf16.xpose.msra.mxu0 0
        %2513 = vmatprep.subr.bf16.mxu0 0
        %2514 = vmatpush1.bf16.xpose.msra.mxu0 0
        %2515 = vmatprep.subr.bf16.mxu0 0
        %2516 = vmatpush1.bf16.xpose.msra.mxu0 0
        %2517 = vmatprep.mubr.bf16.mxu0 0
        %2518 = vmatmul.mubr.bf16.gmra.mrb[0].mxu0 %v2474
        %v2519 = vpop.f32.mrb[0].mxu0
        %v2520 = vadd.f32 0.0, %v2519
        %v2521 = vpop.f32.mrb[0].mxu0
        %v2522 = vpop.f32.mrb[0].mxu0
        %v2523 = vadd.f32 0.0, %v2522
        %v2524 = vpop.f32.mrb[0].mxu0
        %2525 = vmatprep.mubr.bf16.mxu0 0
        %2526 = vmatmul.mubr.bf16.gmra.mrb[0].mxu0 %v2477
        %v2527 = vpop.f32.mrb[0].mxu0
        %v2528 = vadd.f32 0.0, %v2527
        %v2529 = vpop.f32.mrb[0].mxu0
        %v2530 = vpop.f32.mrb[0].mxu0
        %v2531 = vpop.f32.mrb[0].mxu0
        %2532 = vdwg.mxu0
        %v2534 = vsel %vm2472, %v1574, 0
        %v2537 = vsel %vm2472, %v1575, 0
        %v2540 = vsel %vm2472, %v2020, 0
        %v2543 = vsel %vm2472, %v2021, 0
        %2545 = vmatprep.subr.bf16.mxu0 0
        %2546 = vmatpush1.bf16.xpose.msra.mxu0 %v2540
        %2547 = vmatprep.subr.bf16.mxu0 0
        %2548 = vmatpush1.bf16.xpose.msra.mxu0 %v2543
        %2549 = vmatprep.subr.bf16.mxu0 0
        %2550 = vmatpush1.bf16.xpose.msra.mxu0 0
        %2551 = vmatprep.subr.bf16.mxu0 0
        %2552 = vmatpush1.bf16.xpose.msra.mxu0 0
        %2553 = vmatprep.subr.bf16.mxu0 0
        %2554 = vmatpush1.bf16.xpose.msra.mxu0 0
        %2555 = vmatprep.subr.bf16.mxu0 0
        %2556 = vmatpush1.bf16.xpose.msra.mxu0 0
        %2557 = vmatprep.subr.bf16.mxu0 0
        %2558 = vmatpush1.bf16.xpose.msra.mxu0 0
        %2559 = vmatprep.subr.bf16.mxu0 0
        %2560 = vmatpush1.bf16.xpose.msra.mxu0 0
        %2561 = vmatprep.subr.bf16.mxu0 0
        %2562 = vmatpush1.bf16.xpose.msra.mxu0 0
        %2563 = vmatprep.subr.bf16.mxu0 0
        %2564 = vmatpush1.bf16.xpose.msra.mxu0 0
        %2565 = vmatprep.subr.bf16.mxu0 0
        %2566 = vmatpush1.bf16.xpose.msra.mxu0 0
        %2567 = vmatprep.subr.bf16.mxu0 0
        %2568 = vmatpush1.bf16.xpose.msra.mxu0 0
        %2569 = vmatprep.subr.bf16.mxu0 0
        %2570 = vmatpush1.bf16.xpose.msra.mxu0 0
        %2571 = vmatprep.subr.bf16.mxu0 0
        %2572 = vmatpush1.bf16.xpose.msra.mxu0 0
        %2573 = vmatprep.subr.bf16.mxu0 0
        %2574 = vmatpush1.bf16.xpose.msra.mxu0 0
        %2575 = vmatprep.subr.bf16.mxu0 0
        %2576 = vmatpush1.bf16.xpose.msra.mxu0 0
        %2577 = vmatprep.mubr.bf16.mxu0 0
        %2578 = vmatmul.mubr.bf16.gmra.mrb[0].mxu0 %v2534
        %v2579 = vpop.f32.mrb[0].mxu0
        %v2580 = vadd.f32 0.0, %v2579
        %v2581 = vpop.f32.mrb[0].mxu0
        %v2582 = vpop.f32.mrb[0].mxu0
        %v2583 = vadd.f32 0.0, %v2582
        %v2584 = vpop.f32.mrb[0].mxu0
        %2585 = vmatprep.mubr.bf16.mxu0 0
        %2586 = vmatmul.mubr.bf16.gmra.mrb[0].mxu0 %v2537
        %v2587 = vpop.f32.mrb[0].mxu0
        %v2588 = vadd.f32 0.0, %v2587
        %v2589 = vpop.f32.mrb[0].mxu0
        %v2590 = vpop.f32.mrb[0].mxu0
        %v2591 = vpop.f32.mrb[0].mxu0
        %2592 = vdwg.mxu0
        %v2594 = vsel %vm2472, %v1576, 0
        %v2597 = vsel %vm2472, %v1577, 0
        %v2600 = vsel %vm2472, %v2022, 0
        %v2603 = vsel %vm2472, %v2023, 0
        %2605 = vmatprep.subr.bf16.mxu0 0
        %2606 = vmatpush1.bf16.xpose.msra.mxu0 %v2600
        %2607 = vmatprep.subr.bf16.mxu0 0
        %2608 = vmatpush1.bf16.xpose.msra.mxu0 %v2603
        %2609 = vmatprep.subr.bf16.mxu0 0
        %2610 = vmatpush1.bf16.xpose.msra.mxu0 0
        %2611 = vmatprep.subr.bf16.mxu0 0
        %2612 = vmatpush1.bf16.xpose.msra.mxu0 0
        %2613 = vmatprep.subr.bf16.mxu0 0
        %2614 = vmatpush1.bf16.xpose.msra.mxu0 0
        %2615 = vmatprep.subr.bf16.mxu0 0
        %2616 = vmatpush1.bf16.xpose.msra.mxu0 0
        %2617 = vmatprep.subr.bf16.mxu0 0
        %2618 = vmatpush1.bf16.xpose.msra.mxu0 0
        %2619 = vmatprep.subr.bf16.mxu0 0
        %2620 = vmatpush1.bf16.xpose.msra.mxu0 0
        %2621 = vmatprep.subr.bf16.mxu0 0
        %2622 = vmatpush1.bf16.xpose.msra.mxu0 0
        %2623 = vmatprep.subr.bf16.mxu0 0
        %2624 = vmatpush1.bf16.xpose.msra.mxu0 0
        %2625 = vmatprep.subr.bf16.mxu0 0
        %2626 = vmatpush1.bf16.xpose.msra.mxu0 0
        %2627 = vmatprep.subr.bf16.mxu0 0
        %2628 = vmatpush1.bf16.xpose.msra.mxu0 0
        %2629 = vmatprep.subr.bf16.mxu0 0
        %2630 = vmatpush1.bf16.xpose.msra.mxu0 0
        %2631 = vmatprep.subr.bf16.mxu0 0
        %2632 = vmatpush1.bf16.xpose.msra.mxu0 0
        %2633 = vmatprep.subr.bf16.mxu0 0
        %2634 = vmatpush1.bf16.xpose.msra.mxu0 0
        %2635 = vmatprep.subr.bf16.mxu0 0
        %2636 = vmatpush1.bf16.xpose.msra.mxu0 0
        %2637 = vmatprep.mubr.bf16.mxu0 0
        %2638 = vmatmul.mubr.bf16.gmra.mrb[0].mxu0 %v2594
        %v2639 = vpop.f32.mrb[0].mxu0
        %v2640 = vadd.f32 0.0, %v2639
        %v2641 = vpop.f32.mrb[0].mxu0
        %v2642 = vpop.f32.mrb[0].mxu0
        %v2643 = vadd.f32 0.0, %v2642
        %v2644 = vpop.f32.mrb[0].mxu0
        %2645 = vmatprep.mubr.bf16.mxu0 0
        %2646 = vmatmul.mubr.bf16.gmra.mrb[0].mxu0 %v2597
        %v2647 = vpop.f32.mrb[0].mxu0
        %v2648 = vadd.f32 0.0, %v2647
        %v2649 = vpop.f32.mrb[0].mxu0
        %v2650 = vpop.f32.mrb[0].mxu0
        %v2651 = vpop.f32.mrb[0].mxu0
        %2652 = vdwg.mxu0
        %v2654 = vsel %vm2472, %v1578, 0
        %v2657 = vsel %vm2472, %v1579, 0
        %v2660 = vsel %vm2472, %v2024, 0
        %v2663 = vsel %vm2472, %v2025, 0
        %2665 = vmatprep.subr.bf16.mxu0 0
        %2666 = vmatpush1.bf16.xpose.msra.mxu0 %v2660
        %2667 = vmatprep.subr.bf16.mxu0 0
        %2668 = vmatpush1.bf16.xpose.msra.mxu0 %v2663
        %2669 = vmatprep.subr.bf16.mxu0 0
        %2670 = vmatpush1.bf16.xpose.msra.mxu0 0
        %2671 = vmatprep.subr.bf16.mxu0 0
        %2672 = vmatpush1.bf16.xpose.msra.mxu0 0
        %2673 = vmatprep.subr.bf16.mxu0 0
        %2674 = vmatpush1.bf16.xpose.msra.mxu0 0
        %2675 = vmatprep.subr.bf16.mxu0 0
        %2676 = vmatpush1.bf16.xpose.msra.mxu0 0
        %2677 = vmatprep.subr.bf16.mxu0 0
        %2678 = vmatpush1.bf16.xpose.msra.mxu0 0
        %2679 = vmatprep.subr.bf16.mxu0 0
        %2680 = vmatpush1.bf16.xpose.msra.mxu0 0
        %2681 = vmatprep.subr.bf16.mxu0 0
        %2682 = vmatpush1.bf16.xpose.msra.mxu0 0
        %2683 = vmatprep.subr.bf16.mxu0 0
        %2684 = vmatpush1.bf16.xpose.msra.mxu0 0
        %2685 = vmatprep.subr.bf16.mxu0 0
        %2686 = vmatpush1.bf16.xpose.msra.mxu0 0
        %2687 = vmatprep.subr.bf16.mxu0 0
        %2688 = vmatpush1.bf16.xpose.msra.mxu0 0
        %2689 = vmatprep.subr.bf16.mxu0 0
        %2690 = vmatpush1.bf16.xpose.msra.mxu0 0
        %2691 = vmatprep.subr.bf16.mxu0 0
        %2692 = vmatpush1.bf16.xpose.msra.mxu0 0
        %2693 = vmatprep.subr.bf16.mxu0 0
        %2694 = vmatpush1.bf16.xpose.msra.mxu0 0
        %2695 = vmatprep.subr.bf16.mxu0 0
        %2696 = vmatpush1.bf16.xpose.msra.mxu0 0
        %2697 = vmatprep.mubr.bf16.mxu0 0
        %2698 = vmatmul.mubr.bf16.gmra.mrb[0].mxu0 %v2654
        %v2699 = vpop.f32.mrb[0].mxu0
        %v2700 = vadd.f32 0.0, %v2699
        %v2701 = vpop.f32.mrb[0].mxu0
        %v2702 = vpop.f32.mrb[0].mxu0
        %v2703 = vadd.f32 0.0, %v2702
        %v2704 = vpop.f32.mrb[0].mxu0
        %2705 = vmatprep.mubr.bf16.mxu0 0
        %2706 = vmatmul.mubr.bf16.gmra.mrb[0].mxu0 %v2657
        %v2707 = vpop.f32.mrb[0].mxu0
        %v2708 = vadd.f32 0.0, %v2707
        %v2709 = vpop.f32.mrb[0].mxu0
        %v2710 = vpop.f32.mrb[0].mxu0
        %v2711 = vpop.f32.mrb[0].mxu0
        %2712 = vdwg.mxu0
        %vm2713 = vcmask 195584
        %v2714 = vsel %vm2713, %v2520, -inf
        %2715 = vmax.xlane.f32.xlu0 %v2714
        %v2716 = vpop.xlane.xlu0 %2715
        %v2717 = vsel %vm2713, %v2523, -inf
        %2718 = vmax.xlane.f32.xlu0 %v2717
        %v2719 = vpop.xlane.xlu0 %2718
        %v2720 = vsel %vm2713, %v2528, -inf
        %2721 = vmax.xlane.f32.xlu0 %v2720
        %v2722 = vpop.xlane.xlu0 %2721
        %v2723 = vsel %vm2713, %v2580, -inf
        %2724 = vmax.xlane.f32.xlu0 %v2723
        %v2725 = vpop.xlane.xlu0 %2724
        %v2726 = vsel %vm2713, %v2583, -inf
        %2727 = vmax.xlane.f32.xlu0 %v2726
        %v2728 = vpop.xlane.xlu0 %2727
        %v2729 = vsel %vm2713, %v2588, -inf
        %2730 = vmax.xlane.f32.xlu0 %v2729
        %v2731 = vpop.xlane.xlu0 %2730
        %v2732 = vsel %vm2713, %v2640, -inf
        %2733 = vmax.xlane.f32.xlu0 %v2732
        %v2734 = vpop.xlane.xlu0 %2733
        %v2735 = vsel %vm2713, %v2643, -inf
        %2736 = vmax.xlane.f32.xlu0 %v2735
        %v2737 = vpop.xlane.xlu0 %2736
        %v2738 = vsel %vm2713, %v2648, -inf
        %2739 = vmax.xlane.f32.xlu0 %v2738
        %v2740 = vpop.xlane.xlu0 %2739
        %v2741 = vsel %vm2713, %v2700, -inf
        %2742 = vmax.xlane.f32.xlu0 %v2741
        %v2743 = vpop.xlane.xlu0 %2742
        %v2744 = vsel %vm2713, %v2703, -inf
        %2745 = vmax.xlane.f32.xlu0 %v2744
        %v2746 = vpop.xlane.xlu0 %2745
        %v2747 = vsel %vm2713, %v2708, -inf
        %2748 = vmax.xlane.f32.xlu0 %v2747
        %v2749 = vpop.xlane.xlu0 %2748
        %v2750 = vsub.f32 %v2520, %v2716
        %v2751 = vsub.f32 %v2523, %v2719
        %v2752 = vsub.f32 %v2528, %v2722
        %v2753 = vsub.f32 %v2580, %v2725
        %v2754 = vsub.f32 %v2583, %v2728
        %v2755 = vsub.f32 %v2588, %v2731
        %v2756 = vsub.f32 %v2640, %v2734
        %v2757 = vsub.f32 %v2643, %v2737
        %v2758 = vsub.f32 %v2648, %v2740
        %v2759 = vsub.f32 %v2700, %v2743
        %v2760 = vsub.f32 %v2703, %v2746
        %v2761 = vsub.f32 %v2708, %v2749
        %v2762 = vmul.f32 %v2750, 1.442695
        %v2763 = vpow.pop %v2762
        %v2764 = vmul.f32 %v2751, 1.442695
        %v2765 = vpow.pop %v2764
        %v2766 = vmul.f32 %v2752, 1.442695
        %v2767 = vpow.pop %v2766
        %v2768 = vmul.f32 %v2753, 1.442695
        %v2769 = vpow.pop %v2768
        %v2770 = vmul.f32 %v2754, 1.442695
        %v2771 = vpow.pop %v2770
        %v2772 = vmul.f32 %v2755, 1.442695
        %v2773 = vpow.pop %v2772
        %v2774 = vmul.f32 %v2756, 1.442695
        %v2775 = vpow.pop %v2774
        %v2776 = vmul.f32 %v2757, 1.442695
        %v2777 = vpow.pop %v2776
        %v2778 = vmul.f32 %v2758, 1.442695
        %v2779 = vpow.pop %v2778
        %v2780 = vmul.f32 %v2759, 1.442695
        %v2781 = vpow.pop %v2780
        %v2782 = vmul.f32 %v2760, 1.442695
        %v2783 = vpow.pop %v2782
        %v2784 = vmul.f32 %v2761, 1.442695
        %v2785 = vpow.pop %v2784
        %v2786 = vsel %vm2713, %v2763, 0.0
        %2787 = vadd.xlane.f32.xlu0 %v2786
        %v2788 = vpop.xlane.xlu0 %2787
        %v2789 = vsel %vm2713, %v2765, 0.0
        %2790 = vadd.xlane.f32.xlu0 %v2789
        %v2791 = vpop.xlane.xlu0 %2790
        %v2792 = vsel %vm2713, %v2767, 0.0
        %2793 = vadd.xlane.f32.xlu0 %v2792
        %v2794 = vpop.xlane.xlu0 %2793
        %v2795 = vsel %vm2713, %v2769, 0.0
        %2796 = vadd.xlane.f32.xlu0 %v2795
        %v2797 = vpop.xlane.xlu0 %2796
        %v2798 = vsel %vm2713, %v2771, 0.0
        %2799 = vadd.xlane.f32.xlu0 %v2798
        %v2800 = vpop.xlane.xlu0 %2799
        %v2801 = vsel %vm2713, %v2773, 0.0
        %2802 = vadd.xlane.f32.xlu0 %v2801
        %v2803 = vpop.xlane.xlu0 %2802
        %v2804 = vsel %vm2713, %v2775, 0.0
        %2805 = vadd.xlane.f32.xlu0 %v2804
        %v2806 = vpop.xlane.xlu0 %2805
        %v2807 = vsel %vm2713, %v2777, 0.0
        %2808 = vadd.xlane.f32.xlu0 %v2807
        %v2809 = vpop.xlane.xlu0 %2808
        %v2810 = vsel %vm2713, %v2779, 0.0
        %2811 = vadd.xlane.f32.xlu0 %v2810
        %v2812 = vpop.xlane.xlu0 %2811
        %v2813 = vsel %vm2713, %v2781, 0.0
        %2814 = vadd.xlane.f32.xlu0 %v2813
        %v2815 = vpop.xlane.xlu0 %2814
        %v2816 = vsel %vm2713, %v2783, 0.0
        %2817 = vadd.xlane.f32.xlu0 %v2816
        %v2818 = vpop.xlane.xlu0 %2817
        %v2819 = vsel %vm2713, %v2785, 0.0
        %2820 = vadd.xlane.f32.xlu0 %v2819
        %v2821 = vpop.xlane.xlu0 %2820
        %v2822 = vrcp.pop %v2788
        %v2823 = vrcp.pop %v2791
        %v2824 = vrcp.pop %v2794
        %v2825 = vrcp.pop %v2797
        %v2826 = vrcp.pop %v2800
        %v2827 = vrcp.pop %v2803
        %v2828 = vrcp.pop %v2806
        %v2829 = vrcp.pop %v2809
        %v2830 = vrcp.pop %v2812
        %v2831 = vrcp.pop %v2815
        %v2832 = vrcp.pop %v2818
        %v2833 = vrcp.pop %v2821
        %v2834 = vmul.f32 %v2763, %v2822
        %v2835 = vmul.f32 %v2765, %v2823
        %v2836 = vmul.f32 %v2767, %v2824
        %v2837 = vmul.f32 %v2769, %v2825
        %v2838 = vmul.f32 %v2771, %v2826
        %v2839 = vmul.f32 %v2773, %v2827
        %v2840 = vmul.f32 %v2775, %v2828
        %v2841 = vmul.f32 %v2777, %v2829
        %v2842 = vmul.f32 %v2779, %v2830
        %v2843 = vmul.f32 %v2781, %v2831
        %v2844 = vmul.f32 %v2783, %v2832
        %v2845 = vmul.f32 %v2785, %v2833
        %v2846 = vpack.c.bf16 %v2835, %v2834
        %v2847 = vpack.c.bf16 %v2836, %v2836
        %v2848 = vpack.c.bf16 %v2838, %v2837
        %v2849 = vpack.c.bf16 %v2839, %v2839
        %v2850 = vpack.c.bf16 %v2841, %v2840
        %v2851 = vpack.c.bf16 %v2842, %v2842
        %v2852 = vpack.c.bf16 %v2844, %v2843
        %v2853 = vpack.c.bf16 %v2845, %v2845
        %v2855 = vsel %vm2713, %v2846, 0
        %v2858 = vsel %vm2713, %v2847, 0
        %vm2860 = vcmask 1043456
        %v2862 = vsel %vm2860, %v2465, 0
        %2864 = vmatprep.subr.bf16.mxu0 0
        %2865 = vmatpush1.bf16.msra.mxu0 %v2464
        %2866 = vmatprep.subr.bf16.mxu0 0
        %2867 = vmatpush1.bf16.msra.mxu0 %v2862
        %2868 = vmatprep.subr.bf16.mxu0 0
        %2869 = vmatpush1.bf16.msra.mxu0 0
        %2870 = vmatprep.subr.bf16.mxu0 0
        %2871 = vmatpush1.bf16.msra.mxu0 0
        %2872 = vmatprep.subr.bf16.mxu0 0
        %2873 = vmatpush1.bf16.msra.mxu0 0
        %2874 = vmatprep.subr.bf16.mxu0 0
        %2875 = vmatpush1.bf16.msra.mxu0 0
        %2876 = vmatprep.subr.bf16.mxu0 0
        %2877 = vmatpush1.bf16.msra.mxu0 0
        %2878 = vmatprep.subr.bf16.mxu0 0
        %2879 = vmatpush1.bf16.msra.mxu0 0
        %2880 = vmatprep.subr.bf16.mxu0 0
        %2881 = vmatpush1.bf16.msra.mxu0 0
        %2882 = vmatprep.subr.bf16.mxu0 0
        %2883 = vmatpush1.bf16.msra.mxu0 0
        %2884 = vmatprep.subr.bf16.mxu0 0
        %2885 = vmatpush1.bf16.msra.mxu0 0
        %2886 = vmatprep.subr.bf16.mxu0 0
        %2887 = vmatpush1.bf16.msra.mxu0 0
        %2888 = vmatprep.subr.bf16.mxu0 0
        %2889 = vmatpush1.bf16.msra.mxu0 0
        %2890 = vmatprep.subr.bf16.mxu0 0
        %2891 = vmatpush1.bf16.msra.mxu0 0
        %2892 = vmatprep.subr.bf16.mxu0 0
        %2893 = vmatpush1.bf16.msra.mxu0 0
        %2894 = vmatprep.subr.bf16.mxu0 0
        %2895 = vmatpush1.bf16.msra.mxu0 0
        %2896 = vmatprep.mubr.bf16.mxu0 0
        %2897 = vmatmul.mubr.bf16.gmra.mrb[0].mxu0 %v2855
        %v2898 = vpop.f32.mrb[0].mxu0
        %v2899 = vadd.f32 0.0, %v2898
        %v2900 = vpop.f32.mrb[0].mxu0
        %v2901 = vpop.f32.mrb[0].mxu0
        %v2902 = vadd.f32 0.0, %v2901
        %v2903 = vpop.f32.mrb[0].mxu0
        %2904 = vmatprep.mubr.bf16.mxu0 0
        %2905 = vmatmul.mubr.bf16.gmra.mrb[0].mxu0 %v2858
        %v2906 = vpop.f32.mrb[0].mxu0
        %v2907 = vadd.f32 0.0, %v2906
        %v2908 = vpop.f32.mrb[0].mxu0
        %v2909 = vpop.f32.mrb[0].mxu0
        %v2910 = vpop.f32.mrb[0].mxu0
        %2911 = vdwg.mxu0
        %v2913 = vsel %vm2713, %v2848, 0
        %v2916 = vsel %vm2713, %v2849, 0
        %v2919 = vsel %vm2860, %v2467, 0
        %2921 = vmatprep.subr.bf16.mxu0 0
        %2922 = vmatpush1.bf16.msra.mxu0 %v2466
        %2923 = vmatprep.subr.bf16.mxu0 0
        %2924 = vmatpush1.bf16.msra.mxu0 %v2919
        %2925 = vmatprep.subr.bf16.mxu0 0
        %2926 = vmatpush1.bf16.msra.mxu0 0
        %2927 = vmatprep.subr.bf16.mxu0 0
        %2928 = vmatpush1.bf16.msra.mxu0 0
        %2929 = vmatprep.subr.bf16.mxu0 0
        %2930 = vmatpush1.bf16.msra.mxu0 0
        %2931 = vmatprep.subr.bf16.mxu0 0
        %2932 = vmatpush1.bf16.msra.mxu0 0
        %2933 = vmatprep.subr.bf16.mxu0 0
        %2934 = vmatpush1.bf16.msra.mxu0 0
        %2935 = vmatprep.subr.bf16.mxu0 0
        %2936 = vmatpush1.bf16.msra.mxu0 0
        %2937 = vmatprep.subr.bf16.mxu0 0
        %2938 = vmatpush1.bf16.msra.mxu0 0
        %2939 = vmatprep.subr.bf16.mxu0 0
        %2940 = vmatpush1.bf16.msra.mxu0 0
        %2941 = vmatprep.subr.bf16.mxu0 0
        %2942 = vmatpush1.bf16.msra.mxu0 0
        %2943 = vmatprep.subr.bf16.mxu0 0
        %2944 = vmatpush1.bf16.msra.mxu0 0
        %2945 = vmatprep.subr.bf16.mxu0 0
        %2946 = vmatpush1.bf16.msra.mxu0 0
        %2947 = vmatprep.subr.bf16.mxu0 0
        %2948 = vmatpush1.bf16.msra.mxu0 0
        %2949 = vmatprep.subr.bf16.mxu0 0
        %2950 = vmatpush1.bf16.msra.mxu0 0
        %2951 = vmatprep.subr.bf16.mxu0 0
        %2952 = vmatpush1.bf16.msra.mxu0 0
        %2953 = vmatprep.mubr.bf16.mxu0 0
        %2954 = vmatmul.mubr.bf16.gmra.mrb[0].mxu0 %v2913
        %v2955 = vpop.f32.mrb[0].mxu0
        %v2956 = vadd.f32 0.0, %v2955
        %v2957 = vpop.f32.mrb[0].mxu0
        %v2958 = vpop.f32.mrb[0].mxu0
        %v2959 = vadd.f32 0.0, %v2958
        %v2960 = vpop.f32.mrb[0].mxu0
        %2961 = vmatprep.mubr.bf16.mxu0 0
        %2962 = vmatmul.mubr.bf16.gmra.mrb[0].mxu0 %v2916
        %v2963 = vpop.f32.mrb[0].mxu0
        %v2964 = vadd.f32 0.0, %v2963
        %v2965 = vpop.f32.mrb[0].mxu0
        %v2966 = vpop.f32.mrb[0].mxu0
        %v2967 = vpop.f32.mrb[0].mxu0
        %2968 = vdwg.mxu0
        %v2970 = vsel %vm2713, %v2850, 0
        %v2973 = vsel %vm2713, %v2851, 0
        %v2976 = vsel %vm2860, %v2469, 0
        %2978 = vmatprep.subr.bf16.mxu0 0
        %2979 = vmatpush1.bf16.msra.mxu0 %v2468
        %2980 = vmatprep.subr.bf16.mxu0 0
        %2981 = vmatpush1.bf16.msra.mxu0 %v2976
        %2982 = vmatprep.subr.bf16.mxu0 0
        %2983 = vmatpush1.bf16.msra.mxu0 0
        %2984 = vmatprep.subr.bf16.mxu0 0
        %2985 = vmatpush1.bf16.msra.mxu0 0
        %2986 = vmatprep.subr.bf16.mxu0 0
        %2987 = vmatpush1.bf16.msra.mxu0 0
        %2988 = vmatprep.subr.bf16.mxu0 0
        %2989 = vmatpush1.bf16.msra.mxu0 0
        %2990 = vmatprep.subr.bf16.mxu0 0
        %2991 = vmatpush1.bf16.msra.mxu0 0
        %2992 = vmatprep.subr.bf16.mxu0 0
        %2993 = vmatpush1.bf16.msra.mxu0 0
        %2994 = vmatprep.subr.bf16.mxu0 0
        %2995 = vmatpush1.bf16.msra.mxu0 0
        %2996 = vmatprep.subr.bf16.mxu0 0
        %2997 = vmatpush1.bf16.msra.mxu0 0
        %2998 = vmatprep.subr.bf16.mxu0 0
        %2999 = vmatpush1.bf16.msra.mxu0 0
        %3000 = vmatprep.subr.bf16.mxu0 0
        %3001 = vmatpush1.bf16.msra.mxu0 0
        %3002 = vmatprep.subr.bf16.mxu0 0
        %3003 = vmatpush1.bf16.msra.mxu0 0
        %3004 = vmatprep.subr.bf16.mxu0 0
        %3005 = vmatpush1.bf16.msra.mxu0 0
        %3006 = vmatprep.subr.bf16.mxu0 0
        %3007 = vmatpush1.bf16.msra.mxu0 0
        %3008 = vmatprep.subr.bf16.mxu0 0
        %3009 = vmatpush1.bf16.msra.mxu0 0
        %3010 = vmatprep.mubr.bf16.mxu0 0
        %3011 = vmatmul.mubr.bf16.gmra.mrb[0].mxu0 %v2970
        %v3012 = vpop.f32.mrb[0].mxu0
        %v3013 = vadd.f32 0.0, %v3012
        %v3014 = vpop.f32.mrb[0].mxu0
        %v3015 = vpop.f32.mrb[0].mxu0
        %v3016 = vadd.f32 0.0, %v3015
        %v3017 = vpop.f32.mrb[0].mxu0
        %3018 = vmatprep.mubr.bf16.mxu0 0
        %3019 = vmatmul.mubr.bf16.gmra.mrb[0].mxu0 %v2973
        %v3020 = vpop.f32.mrb[0].mxu0
        %v3021 = vadd.f32 0.0, %v3020
        %v3022 = vpop.f32.mrb[0].mxu0
        %v3023 = vpop.f32.mrb[0].mxu0
        %v3024 = vpop.f32.mrb[0].mxu0
        %3025 = vdwg.mxu0
        %v3027 = vsel %vm2713, %v2852, 0
        %v3030 = vsel %vm2713, %v2853, 0
        %v3033 = vsel %vm2860, %v2471, 0
        %3035 = vmatprep.subr.bf16.mxu0 0
        %3036 = vmatpush1.bf16.msra.mxu0 %v2470
        %3037 = vmatprep.subr.bf16.mxu0 0
        %3038 = vmatpush1.bf16.msra.mxu0 %v3033
        %3039 = vmatprep.subr.bf16.mxu0 0
        %3040 = vmatpush1.bf16.msra.mxu0 0
        %3041 = vmatprep.subr.bf16.mxu0 0
        %3042 = vmatpush1.bf16.msra.mxu0 0
        %3043 = vmatprep.subr.bf16.mxu0 0
        %3044 = vmatpush1.bf16.msra.mxu0 0
        %3045 = vmatprep.subr.bf16.mxu0 0
        %3046 = vmatpush1.bf16.msra.mxu0 0
        %3047 = vmatprep.subr.bf16.mxu0 0
        %3048 = vmatpush1.bf16.msra.mxu0 0
        %3049 = vmatprep.subr.bf16.mxu0 0
        %3050 = vmatpush1.bf16.msra.mxu0 0
        %3051 = vmatprep.subr.bf16.mxu0 0
        %3052 = vmatpush1.bf16.msra.mxu0 0
        %3053 = vmatprep.subr.bf16.mxu0 0
        %3054 = vmatpush1.bf16.msra.mxu0 0
        %3055 = vmatprep.subr.bf16.mxu0 0
        %3056 = vmatpush1.bf16.msra.mxu0 0
        %3057 = vmatprep.subr.bf16.mxu0 0
        %3058 = vmatpush1.bf16.msra.mxu0 0
        %3059 = vmatprep.subr.bf16.mxu0 0
        %3060 = vmatpush1.bf16.msra.mxu0 0
        %3061 = vmatprep.subr.bf16.mxu0 0
        %3062 = vmatpush1.bf16.msra.mxu0 0
        %3063 = vmatprep.subr.bf16.mxu0 0
        %3064 = vmatpush1.bf16.msra.mxu0 0
        %3065 = vmatprep.subr.bf16.mxu0 0
        %3066 = vmatpush1.bf16.msra.mxu0 0
        %3067 = vmatprep.mubr.bf16.mxu0 0
        %3068 = vmatmul.mubr.bf16.gmra.mrb[0].mxu0 %v3027
        %v3069 = vpop.f32.mrb[0].mxu0
        %v3070 = vadd.f32 0.0, %v3069
        %v3071 = vpop.f32.mrb[0].mxu0
        %v3072 = vpop.f32.mrb[0].mxu0
        %v3073 = vadd.f32 0.0, %v3072
        %v3074 = vpop.f32.mrb[0].mxu0
        %3075 = vmatprep.mubr.bf16.mxu0 0
        %3076 = vmatmul.mubr.bf16.gmra.mrb[0].mxu0 %v3030
        %v3077 = vpop.f32.mrb[0].mxu0
        %v3078 = vadd.f32 0.0, %v3077
        %v3079 = vpop.f32.mrb[0].mxu0
        %v3080 = vpop.f32.mrb[0].mxu0
        %v3081 = vpop.f32.mrb[0].mxu0
        %3082 = vdwg.mxu0
        %v3083 = vcombine.low %v2899, %v3013
        %v3084 = vcombine.high %v2899, %v3013
        %v3086 = vunpack.c.l.s4 1983009808
        %v3087 = vunpack.c.0.s8 %v3086
        %v3088 = vlaneseq
        %v3089 = vshrl.u32 %v3088, 7
        %v3090 = vsub.s32 %v3087, %v3089
        %v3091 = vrot.slane %v3083, %v3090
        %v3093 = vunpack.c.l.s4 1983009808
        %v3094 = vunpack.c.0.s8 %v3093
        %v3095 = vlaneseq
        %v3096 = vshrl.u32 %v3095, 7
        %v3097 = vsub.s32 %v3094, %v3096
        %v3098 = vrot.slane %v3084, %v3097
        %v3099 = vcombine.low %v2956, %v3070
        %v3100 = vcombine.high %v2956, %v3070
        %v3102 = vunpack.c.l.s4 1983009808
        %v3103 = vunpack.c.0.s8 %v3102
        %v3104 = vlaneseq
        %v3105 = vshrl.u32 %v3104, 7
        %v3106 = vsub.s32 %v3103, %v3105
        %v3107 = vrot.slane %v3099, %v3106
        %v3109 = vunpack.c.l.s4 1983009808
        %v3110 = vunpack.c.0.s8 %v3109
        %v3111 = vlaneseq
        %v3112 = vshrl.u32 %v3111, 7
        %v3113 = vsub.s32 %v3110, %v3112
        %v3114 = vrot.slane %v3100, %v3113
        %v3115 = vcombine.low %v3091, %v3107
        %v3116 = vcombine.high %v3091, %v3107
        %v3118 = vunpack.c.l.s4 1934713408
        %v3119 = vunpack.c.0.s8 %v3118
        %v3120 = vlaneseq
        %v3121 = vshrl.u32 %v3120, 7
        %v3122 = vsub.s32 %v3119, %v3121
        %v3123 = vrot.slane %v3115, %v3122
        %v3125 = vunpack.c.l.s4 1934713408
        %v3126 = vunpack.c.0.s8 %v3125
        %v3127 = vlaneseq
        %v3128 = vshrl.u32 %v3127, 7
        %v3129 = vsub.s32 %v3126, %v3128
        %v3130 = vrot.slane %v3116, %v3129
        %v3131 = vcombine.low %v3098, %v3114
        %v3132 = vcombine.high %v3098, %v3114
        %v3134 = vunpack.c.l.s4 1934713408
        %v3135 = vunpack.c.0.s8 %v3134
        %v3136 = vlaneseq
        %v3137 = vshrl.u32 %v3136, 7
        %v3138 = vsub.s32 %v3135, %v3137
        %v3139 = vrot.slane %v3131, %v3138
        %v3141 = vunpack.c.l.s4 1934713408
        %v3142 = vunpack.c.0.s8 %v3141
        %v3143 = vlaneseq
        %v3144 = vshrl.u32 %v3143, 7
        %v3145 = vsub.s32 %v3142, %v3144
        %v3146 = vrot.slane %v3132, %v3145
        %v3147 = vcombine.high %v3123, 0.0
        %v3148 = vcombine.high %v3130, 0.0
        %v3149 = vcombine.high %v3139, 0.0
        %v3150 = vcombine.high %v3146, 0.0
        %v3151 = vcombine.low %v2902, %v3016
        %v3152 = vcombine.high %v2902, %v3016
        %v3154 = vunpack.c.l.s4 1983009808
        %v3155 = vunpack.c.0.s8 %v3154
        %v3156 = vlaneseq
        %v3157 = vshrl.u32 %v3156, 7
        %v3158 = vsub.s32 %v3155, %v3157
        %v3159 = vrot.slane %v3151, %v3158
        %v3161 = vunpack.c.l.s4 1983009808
        %v3162 = vunpack.c.0.s8 %v3161
        %v3163 = vlaneseq
        %v3164 = vshrl.u32 %v3163, 7
        %v3165 = vsub.s32 %v3162, %v3164
        %v3166 = vrot.slane %v3152, %v3165
        %v3167 = vcombine.low %v2959, %v3073
        %v3168 = vcombine.high %v2959, %v3073
        %v3170 = vunpack.c.l.s4 1983009808
        %v3171 = vunpack.c.0.s8 %v3170
        %v3172 = vlaneseq
        %v3173 = vshrl.u32 %v3172, 7
        %v3174 = vsub.s32 %v3171, %v3173
        %v3175 = vrot.slane %v3167, %v3174
        %v3177 = vunpack.c.l.s4 1983009808
        %v3178 = vunpack.c.0.s8 %v3177
        %v3179 = vlaneseq
        %v3180 = vshrl.u32 %v3179, 7
        %v3181 = vsub.s32 %v3178, %v3180
        %v3182 = vrot.slane %v3168, %v3181
        %v3183 = vcombine.low %v3159, %v3175
        %v3184 = vcombine.high %v3159, %v3175
        %v3186 = vunpack.c.l.s4 1934713408
        %v3187 = vunpack.c.0.s8 %v3186
        %v3188 = vlaneseq
        %v3189 = vshrl.u32 %v3188, 7
        %v3190 = vsub.s32 %v3187, %v3189
        %v3191 = vrot.slane %v3183, %v3190
        %v3193 = vunpack.c.l.s4 1934713408
        %v3194 = vunpack.c.0.s8 %v3193
        %v3195 = vlaneseq
        %v3196 = vshrl.u32 %v3195, 7
        %v3197 = vsub.s32 %v3194, %v3196
        %v3198 = vrot.slane %v3184, %v3197
        %v3199 = vcombine.low %v3166, %v3182
        %v3200 = vcombine.high %v3166, %v3182
        %v3202 = vunpack.c.l.s4 1934713408
        %v3203 = vunpack.c.0.s8 %v3202
        %v3204 = vlaneseq
        %v3205 = vshrl.u32 %v3204, 7
        %v3206 = vsub.s32 %v3203, %v3205
        %v3207 = vrot.slane %v3199, %v3206
        %v3209 = vunpack.c.l.s4 1934713408
        %v3210 = vunpack.c.0.s8 %v3209
        %v3211 = vlaneseq
        %v3212 = vshrl.u32 %v3211, 7
        %v3213 = vsub.s32 %v3210, %v3212
        %v3214 = vrot.slane %v3200, %v3213
        %v3215 = vcombine.high %v3191, 0.0
        %v3216 = vcombine.high %v3198, 0.0
        %v3217 = vcombine.high %v3207, 0.0
        %v3218 = vcombine.high %v3214, 0.0
        %v3219 = vcombine.low %v2907, %v3021
        %v3220 = vcombine.high %v2907, %v3021
        %v3222 = vunpack.c.l.s4 1983009808
        %v3223 = vunpack.c.0.s8 %v3222
        %v3224 = vlaneseq
        %v3225 = vshrl.u32 %v3224, 7
        %v3226 = vsub.s32 %v3223, %v3225
        %v3227 = vrot.slane %v3219, %v3226
        %v3229 = vunpack.c.l.s4 1983009808
        %v3230 = vunpack.c.0.s8 %v3229
        %v3231 = vlaneseq
        %v3232 = vshrl.u32 %v3231, 7
        %v3233 = vsub.s32 %v3230, %v3232
        %v3234 = vrot.slane %v3220, %v3233
        %v3235 = vcombine.low %v2964, %v3078
        %v3236 = vcombine.high %v2964, %v3078
        %v3238 = vunpack.c.l.s4 1983009808
        %v3239 = vunpack.c.0.s8 %v3238
        %v3240 = vlaneseq
        %v3241 = vshrl.u32 %v3240, 7
        %v3242 = vsub.s32 %v3239, %v3241
        %v3243 = vrot.slane %v3235, %v3242
        %v3245 = vunpack.c.l.s4 1983009808
        %v3246 = vunpack.c.0.s8 %v3245
        %v3247 = vlaneseq
        %v3248 = vshrl.u32 %v3247, 7
        %v3249 = vsub.s32 %v3246, %v3248
        %v3250 = vrot.slane %v3236, %v3249
        %v3251 = vcombine.low %v3227, %v3243
        %v3252 = vcombine.high %v3227, %v3243
        %v3254 = vunpack.c.l.s4 1934713408
        %v3255 = vunpack.c.0.s8 %v3254
        %v3256 = vlaneseq
        %v3257 = vshrl.u32 %v3256, 7
        %v3258 = vsub.s32 %v3255, %v3257
        %v3259 = vrot.slane %v3251, %v3258
        %v3261 = vunpack.c.l.s4 1934713408
        %v3262 = vunpack.c.0.s8 %v3261
        %v3263 = vlaneseq
        %v3264 = vshrl.u32 %v3263, 7
        %v3265 = vsub.s32 %v3262, %v3264
        %v3266 = vrot.slane %v3252, %v3265
        %v3267 = vcombine.low %v3234, %v3250
        %v3268 = vcombine.high %v3234, %v3250
        %v3270 = vunpack.c.l.s4 1934713408
        %v3271 = vunpack.c.0.s8 %v3270
        %v3272 = vlaneseq
        %v3273 = vshrl.u32 %v3272, 7
        %v3274 = vsub.s32 %v3271, %v3273
        %v3275 = vrot.slane %v3267, %v3274
        %v3277 = vunpack.c.l.s4 1934713408
        %v3278 = vunpack.c.0.s8 %v3277
        %v3279 = vlaneseq
        %v3280 = vshrl.u32 %v3279, 7
        %v3281 = vsub.s32 %v3278, %v3280
        %v3282 = vrot.slane %v3268, %v3281
        %v3283 = vcombine.high %v3259, 0.0
        %v3284 = vcombine.high %v3266, 0.0
        %v3285 = vcombine.high %v3275, 0.0
        %v3286 = vcombine.high %v3282, 0.0
        %v3287 = vcombine.low %v3123, %v3130
        %v3289 = vunpack.c.l.s4 1983009808
        %v3290 = vunpack.c.0.s8 %v3289
        %v3291 = vlaneseq
        %v3292 = vshrl.u32 %v3291, 7
        %v3293 = vsub.s32 %v3290, %v3292
        %v3294 = vrot.slane %v3287, %v3293
        %v3295 = vcombine.low %v3147, %v3148
        %v3297 = vunpack.c.l.s4 1983009808
        %v3298 = vunpack.c.0.s8 %v3297
        %v3299 = vlaneseq
        %v3300 = vshrl.u32 %v3299, 7
        %v3301 = vsub.s32 %v3298, %v3300
        %v3302 = vrot.slane %v3295, %v3301
        %v3303 = vcombine.low %v3139, %v3146
        %v3305 = vunpack.c.l.s4 1983009808
        %v3306 = vunpack.c.0.s8 %v3305
        %v3307 = vlaneseq
        %v3308 = vshrl.u32 %v3307, 7
        %v3309 = vsub.s32 %v3306, %v3308
        %v3310 = vrot.slane %v3303, %v3309
        %v3311 = vcombine.low %v3149, %v3150
        %v3313 = vunpack.c.l.s4 1983009808
        %v3314 = vunpack.c.0.s8 %v3313
        %v3315 = vlaneseq
        %v3316 = vshrl.u32 %v3315, 7
        %v3317 = vsub.s32 %v3314, %v3316
        %v3318 = vrot.slane %v3311, %v3317
        %v3319 = vcombine.low %v3294, %v3302
        %v3320 = vcombine.high %v3294, %v3302
        %v3322 = vunpack.c.l.s4 1934713408
        %v3323 = vunpack.c.0.s8 %v3322
        %v3324 = vlaneseq
        %v3325 = vshrl.u32 %v3324, 7
        %v3326 = vsub.s32 %v3323, %v3325
        %v3327 = vrot.slane %v3319, %v3326
        %v3329 = vunpack.c.l.s4 1934713408
        %v3330 = vunpack.c.0.s8 %v3329
        %v3331 = vlaneseq
        %v3332 = vshrl.u32 %v3331, 7
        %v3333 = vsub.s32 %v3330, %v3332
        %v3334 = vrot.slane %v3320, %v3333
        %v3335 = vcombine.low %v3310, %v3318
        %v3336 = vcombine.high %v3310, %v3318
        %v3338 = vunpack.c.l.s4 1934713408
        %v3339 = vunpack.c.0.s8 %v3338
        %v3340 = vlaneseq
        %v3341 = vshrl.u32 %v3340, 7
        %v3342 = vsub.s32 %v3339, %v3341
        %v3343 = vrot.slane %v3335, %v3342
        %v3345 = vunpack.c.l.s4 1934713408
        %v3346 = vunpack.c.0.s8 %v3345
        %v3347 = vlaneseq
        %v3348 = vshrl.u32 %v3347, 7
        %v3349 = vsub.s32 %v3346, %v3348
        %v3350 = vrot.slane %v3336, %v3349
        %v3351 = vcombine.low %v3327, %v3343
        %v3352 = vcombine.high %v3327, %v3343
        %v3353 = vcombine.low %v3334, %v3350
        %v3354 = vcombine.high %v3334, %v3350
        %v3355 = vcombine.low %v3191, %v3198
        %v3357 = vunpack.c.l.s4 1983009808
        %v3358 = vunpack.c.0.s8 %v3357
        %v3359 = vlaneseq
        %v3360 = vshrl.u32 %v3359, 7
        %v3361 = vsub.s32 %v3358, %v3360
        %v3362 = vrot.slane %v3355, %v3361
        %v3363 = vcombine.low %v3215, %v3216
        %v3365 = vunpack.c.l.s4 1983009808
        %v3366 = vunpack.c.0.s8 %v3365
        %v3367 = vlaneseq
        %v3368 = vshrl.u32 %v3367, 7
        %v3369 = vsub.s32 %v3366, %v3368
        %v3370 = vrot.slane %v3363, %v3369
        %v3371 = vcombine.low %v3207, %v3214
        %v3373 = vunpack.c.l.s4 1983009808
        %v3374 = vunpack.c.0.s8 %v3373
        %v3375 = vlaneseq
        %v3376 = vshrl.u32 %v3375, 7
        %v3377 = vsub.s32 %v3374, %v3376
        %v3378 = vrot.slane %v3371, %v3377
        %v3379 = vcombine.low %v3217, %v3218
        %v3381 = vunpack.c.l.s4 1983009808
        %v3382 = vunpack.c.0.s8 %v3381
        %v3383 = vlaneseq
        %v3384 = vshrl.u32 %v3383, 7
        %v3385 = vsub.s32 %v3382, %v3384
        %v3386 = vrot.slane %v3379, %v3385
        %v3387 = vcombine.low %v3362, %v3370
        %v3388 = vcombine.high %v3362, %v3370
        %v3390 = vunpack.c.l.s4 1934713408
        %v3391 = vunpack.c.0.s8 %v3390
        %v3392 = vlaneseq
        %v3393 = vshrl.u32 %v3392, 7
        %v3394 = vsub.s32 %v3391, %v3393
        %v3395 = vrot.slane %v3387, %v3394
        %v3397 = vunpack.c.l.s4 1934713408
        %v3398 = vunpack.c.0.s8 %v3397
        %v3399 = vlaneseq
        %v3400 = vshrl.u32 %v3399, 7
        %v3401 = vsub.s32 %v3398, %v3400
        %v3402 = vrot.slane %v3388, %v3401
        %v3403 = vcombine.low %v3378, %v3386
        %v3404 = vcombine.high %v3378, %v3386
        %v3406 = vunpack.c.l.s4 1934713408
        %v3407 = vunpack.c.0.s8 %v3406
        %v3408 = vlaneseq
        %v3409 = vshrl.u32 %v3408, 7
        %v3410 = vsub.s32 %v3407, %v3409
        %v3411 = vrot.slane %v3403, %v3410
        %v3413 = vunpack.c.l.s4 1934713408
        %v3414 = vunpack.c.0.s8 %v3413
        %v3415 = vlaneseq
        %v3416 = vshrl.u32 %v3415, 7
        %v3417 = vsub.s32 %v3414, %v3416
        %v3418 = vrot.slane %v3404, %v3417
        %v3419 = vcombine.low %v3395, %v3411
        %v3420 = vcombine.high %v3395, %v3411
        %v3421 = vcombine.low %v3402, %v3418
        %v3422 = vcombine.high %v3402, %v3418
        %v3423 = vcombine.low %v3259, %v3266
        %v3425 = vunpack.c.l.s4 1983009808
        %v3426 = vunpack.c.0.s8 %v3425
        %v3427 = vlaneseq
        %v3428 = vshrl.u32 %v3427, 7
        %v3429 = vsub.s32 %v3426, %v3428
        %v3430 = vrot.slane %v3423, %v3429
        %v3431 = vcombine.low %v3283, %v3284
        %v3433 = vunpack.c.l.s4 1983009808
        %v3434 = vunpack.c.0.s8 %v3433
        %v3435 = vlaneseq
        %v3436 = vshrl.u32 %v3435, 7
        %v3437 = vsub.s32 %v3434, %v3436
        %v3438 = vrot.slane %v3431, %v3437
        %v3439 = vcombine.low %v3275, %v3282
        %v3441 = vunpack.c.l.s4 1983009808
        %v3442 = vunpack.c.0.s8 %v3441
        %v3443 = vlaneseq
        %v3444 = vshrl.u32 %v3443, 7
        %v3445 = vsub.s32 %v3442, %v3444
        %v3446 = vrot.slane %v3439, %v3445
        %v3447 = vcombine.low %v3285, %v3286
        %v3449 = vunpack.c.l.s4 1983009808
        %v3450 = vunpack.c.0.s8 %v3449
        %v3451 = vlaneseq
        %v3452 = vshrl.u32 %v3451, 7
        %v3453 = vsub.s32 %v3450, %v3452
        %v3454 = vrot.slane %v3447, %v3453
        %v3455 = vcombine.low %v3430, %v3438
        %v3456 = vcombine.high %v3430, %v3438
        %v3458 = vunpack.c.l.s4 1934713408
        %v3459 = vunpack.c.0.s8 %v3458
        %v3460 = vlaneseq
        %v3461 = vshrl.u32 %v3460, 7
        %v3462 = vsub.s32 %v3459, %v3461
        %v3463 = vrot.slane %v3455, %v3462
        %v3465 = vunpack.c.l.s4 1934713408
        %v3466 = vunpack.c.0.s8 %v3465
        %v3467 = vlaneseq
        %v3468 = vshrl.u32 %v3467, 7
        %v3469 = vsub.s32 %v3466, %v3468
        %v3470 = vrot.slane %v3456, %v3469
        %v3471 = vcombine.low %v3446, %v3454
        %v3472 = vcombine.high %v3446, %v3454
        %v3474 = vunpack.c.l.s4 1934713408
        %v3475 = vunpack.c.0.s8 %v3474
        %v3476 = vlaneseq
        %v3477 = vshrl.u32 %v3476, 7
        %v3478 = vsub.s32 %v3475, %v3477
        %v3479 = vrot.slane %v3471, %v3478
        %v3481 = vunpack.c.l.s4 1934713408
        %v3482 = vunpack.c.0.s8 %v3481
        %v3483 = vlaneseq
        %v3484 = vshrl.u32 %v3483, 7
        %v3485 = vsub.s32 %v3482, %v3484
        %v3486 = vrot.slane %v3472, %v3485
        %v3487 = vcombine.low %v3463, %v3479
        %v3488 = vcombine.high %v3463, %v3479
        %v3489 = vcombine.low %v3470, %v3486
        %v3490 = vcombine.high %v3470, %v3486
        %3494 = vrot.lane.b32.xlu0 %v3352, 32
        %v3495 = vpop.permute.xlu0 %3494
        %3496 = vrot.lane.b32.xlu0 %v3420, 32
        %v3497 = vpop.permute.xlu0 %3496
        %3498 = vrot.lane.b32.xlu0 %v3488, 32
        %v3499 = vpop.permute.xlu0 %3498
        %3506 = vrot.lane.b32.xlu0 %v3353, 64
        %v3507 = vpop.permute.xlu0 %3506
        %3508 = vrot.lane.b32.xlu0 %v3421, 64
        %v3509 = vpop.permute.xlu0 %3508
        %3510 = vrot.lane.b32.xlu0 %v3489, 64
        %v3511 = vpop.permute.xlu0 %3510
        %3518 = vrot.lane.b32.xlu0 %v3354, 96
        %v3519 = vpop.permute.xlu0 %3518
        %3520 = vrot.lane.b32.xlu0 %v3422, 96
        %v3521 = vpop.permute.xlu0 %3520
        %3522 = vrot.lane.b32.xlu0 %v3490, 96
        %v3523 = vpop.permute.xlu0 %3522
        %v3527 = vsel %vm2472, %v3351, %v3495
        %v3528 = vsel %vm2472, %v3419, %v3497
        %v3529 = vsel %vm2472, %v3487, %v3499
        %vm3530 = vcmask 523264
        %v3531 = vsel %vm3530, %v3527, %v3507
        %v3532 = vsel %vm3530, %v3528, %v3509
        %v3533 = vsel %vm3530, %v3529, %v3511
        %vm3534 = vcmask 785408
        %v3535 = vsel %vm3534, %v3531, %v3519
        %v3536 = vsel %vm3534, %v3532, %v3521
        %v3537 = vsel %vm3534, %v3533, %v3523
        %3541 = vrot.lane.b32.xlu0 %v1131, 96
        %v3542 = vpop.permute.xlu0 %3541
        %3543 = vrot.lane.b32.xlu0 %v1132, 96
        %v3544 = vpop.permute.xlu0 %3543
        %3545 = vrot.lane.b32.xlu0 %v1133, 96
        %v3546 = vpop.permute.xlu0 %3545
        %3550 = vrot.lane.b32.xlu0 %v1131, 64
        %v3551 = vpop.permute.xlu0 %3550
        %3552 = vrot.lane.b32.xlu0 %v1132, 64
        %v3553 = vpop.permute.xlu0 %3552
        %3554 = vrot.lane.b32.xlu0 %v1133, 64
        %v3555 = vpop.permute.xlu0 %3554
        %3559 = vrot.lane.b32.xlu0 %v1131, 32
        %v3560 = vpop.permute.xlu0 %3559
        %3561 = vrot.lane.b32.xlu0 %v1132, 32
        %v3562 = vpop.permute.xlu0 %3561
        %3563 = vrot.lane.b32.xlu0 %v1133, 32
        %v3564 = vpop.permute.xlu0 %3563
        %v3568 = vcombine.low %v1131, %v3551
        %v3569 = vcombine.high %v1131, %v3551
        %v3571 = vunpack.c.l.s4 1983009808
        %v3572 = vunpack.c.0.s8 %v3571
        %v3573 = vlaneseq
        %v3574 = vshrl.u32 %v3573, 7
        %v3575 = vsub.s32 %v3572, %v3574
        %v3576 = vrot.slane %v3568, %v3575
        %v3578 = vunpack.c.l.s4 1983009808
        %v3579 = vunpack.c.0.s8 %v3578
        %v3580 = vlaneseq
        %v3581 = vshrl.u32 %v3580, 7
        %v3582 = vsub.s32 %v3579, %v3581
        %v3583 = vrot.slane %v3569, %v3582
        %v3584 = vcombine.low %v3542, %v3560
        %v3585 = vcombine.high %v3542, %v3560
        %v3587 = vunpack.c.l.s4 1983009808
        %v3588 = vunpack.c.0.s8 %v3587
        %v3589 = vlaneseq
        %v3590 = vshrl.u32 %v3589, 7
        %v3591 = vsub.s32 %v3588, %v3590
        %v3592 = vrot.slane %v3584, %v3591
        %v3594 = vunpack.c.l.s4 1983009808
        %v3595 = vunpack.c.0.s8 %v3594
        %v3596 = vlaneseq
        %v3597 = vshrl.u32 %v3596, 7
        %v3598 = vsub.s32 %v3595, %v3597
        %v3599 = vrot.slane %v3585, %v3598
        %v3600 = vcombine.low %v3576, %v3592
        %v3601 = vcombine.high %v3576, %v3592
        %v3603 = vunpack.c.l.s4 1934713408
        %v3604 = vunpack.c.0.s8 %v3603
        %v3605 = vlaneseq
        %v3606 = vshrl.u32 %v3605, 7
        %v3607 = vsub.s32 %v3604, %v3606
        %v3608 = vrot.slane %v3600, %v3607
        %v3610 = vunpack.c.l.s4 1934713408
        %v3611 = vunpack.c.0.s8 %v3610
        %v3612 = vlaneseq
        %v3613 = vshrl.u32 %v3612, 7
        %v3614 = vsub.s32 %v3611, %v3613
        %v3615 = vrot.slane %v3601, %v3614
        %v3616 = vcombine.low %v3583, %v3599
        %v3617 = vcombine.high %v3583, %v3599
        %v3619 = vunpack.c.l.s4 1934713408
        %v3620 = vunpack.c.0.s8 %v3619
        %v3621 = vlaneseq
        %v3622 = vshrl.u32 %v3621, 7
        %v3623 = vsub.s32 %v3620, %v3622
        %v3624 = vrot.slane %v3616, %v3623
        %v3626 = vunpack.c.l.s4 1934713408
        %v3627 = vunpack.c.0.s8 %v3626
        %v3628 = vlaneseq
        %v3629 = vshrl.u32 %v3628, 7
        %v3630 = vsub.s32 %v3627, %v3629
        %v3631 = vrot.slane %v3617, %v3630
        %v3632 = vcombine.high %v3608, 0.0
        %v3633 = vcombine.high %v3615, 0.0
        %v3634 = vcombine.high %v3624, 0.0
        %v3635 = vcombine.high %v3631, 0.0
        %v3636 = vcombine.low %v1132, %v3553
        %v3637 = vcombine.high %v1132, %v3553
        %v3639 = vunpack.c.l.s4 1983009808
        %v3640 = vunpack.c.0.s8 %v3639
        %v3641 = vlaneseq
        %v3642 = vshrl.u32 %v3641, 7
        %v3643 = vsub.s32 %v3640, %v3642
        %v3644 = vrot.slane %v3636, %v3643
        %v3646 = vunpack.c.l.s4 1983009808
        %v3647 = vunpack.c.0.s8 %v3646
        %v3648 = vlaneseq
        %v3649 = vshrl.u32 %v3648, 7
        %v3650 = vsub.s32 %v3647, %v3649
        %v3651 = vrot.slane %v3637, %v3650
        %v3652 = vcombine.low %v3544, %v3562
        %v3653 = vcombine.high %v3544, %v3562
        %v3655 = vunpack.c.l.s4 1983009808
        %v3656 = vunpack.c.0.s8 %v3655
        %v3657 = vlaneseq
        %v3658 = vshrl.u32 %v3657, 7
        %v3659 = vsub.s32 %v3656, %v3658
        %v3660 = vrot.slane %v3652, %v3659
        %v3662 = vunpack.c.l.s4 1983009808
        %v3663 = vunpack.c.0.s8 %v3662
        %v3664 = vlaneseq
        %v3665 = vshrl.u32 %v3664, 7
        %v3666 = vsub.s32 %v3663, %v3665
        %v3667 = vrot.slane %v3653, %v3666
        %v3668 = vcombine.low %v3644, %v3660
        %v3669 = vcombine.high %v3644, %v3660
        %v3671 = vunpack.c.l.s4 1934713408
        %v3672 = vunpack.c.0.s8 %v3671
        %v3673 = vlaneseq
        %v3674 = vshrl.u32 %v3673, 7
        %v3675 = vsub.s32 %v3672, %v3674
        %v3676 = vrot.slane %v3668, %v3675
        %v3678 = vunpack.c.l.s4 1934713408
        %v3679 = vunpack.c.0.s8 %v3678
        %v3680 = vlaneseq
        %v3681 = vshrl.u32 %v3680, 7
        %v3682 = vsub.s32 %v3679, %v3681
        %v3683 = vrot.slane %v3669, %v3682
        %v3684 = vcombine.low %v3651, %v3667
        %v3685 = vcombine.high %v3651, %v3667
        %v3687 = vunpack.c.l.s4 1934713408
        %v3688 = vunpack.c.0.s8 %v3687
        %v3689 = vlaneseq
        %v3690 = vshrl.u32 %v3689, 7
        %v3691 = vsub.s32 %v3688, %v3690
        %v3692 = vrot.slane %v3684, %v3691
        %v3694 = vunpack.c.l.s4 1934713408
        %v3695 = vunpack.c.0.s8 %v3694
        %v3696 = vlaneseq
        %v3697 = vshrl.u32 %v3696, 7
        %v3698 = vsub.s32 %v3695, %v3697
        %v3699 = vrot.slane %v3685, %v3698
        %v3700 = vcombine.high %v3676, 0.0
        %v3701 = vcombine.high %v3683, 0.0
        %v3702 = vcombine.high %v3692, 0.0
        %v3703 = vcombine.high %v3699, 0.0
        %v3704 = vcombine.low %v1133, %v3555
        %v3705 = vcombine.high %v1133, %v3555
        %v3707 = vunpack.c.l.s4 1983009808
        %v3708 = vunpack.c.0.s8 %v3707
        %v3709 = vlaneseq
        %v3710 = vshrl.u32 %v3709, 7
        %v3711 = vsub.s32 %v3708, %v3710
        %v3712 = vrot.slane %v3704, %v3711
        %v3714 = vunpack.c.l.s4 1983009808
        %v3715 = vunpack.c.0.s8 %v3714
        %v3716 = vlaneseq
        %v3717 = vshrl.u32 %v3716, 7
        %v3718 = vsub.s32 %v3715, %v3717
        %v3719 = vrot.slane %v3705, %v3718
        %v3720 = vcombine.low %v3546, %v3564
        %v3721 = vcombine.high %v3546, %v3564
        %v3723 = vunpack.c.l.s4 1983009808
        %v3724 = vunpack.c.0.s8 %v3723
        %v3725 = vlaneseq
        %v3726 = vshrl.u32 %v3725, 7
        %v3727 = vsub.s32 %v3724, %v3726
        %v3728 = vrot.slane %v3720, %v3727
        %v3730 = vunpack.c.l.s4 1983009808
        %v3731 = vunpack.c.0.s8 %v3730
        %v3732 = vlaneseq
        %v3733 = vshrl.u32 %v3732, 7
        %v3734 = vsub.s32 %v3731, %v3733
        %v3735 = vrot.slane %v3721, %v3734
        %v3736 = vcombine.low %v3712, %v3728
        %v3737 = vcombine.high %v3712, %v3728
        %v3739 = vunpack.c.l.s4 1934713408
        %v3740 = vunpack.c.0.s8 %v3739
        %v3741 = vlaneseq
        %v3742 = vshrl.u32 %v3741, 7
        %v3743 = vsub.s32 %v3740, %v3742
        %v3744 = vrot.slane %v3736, %v3743
        %v3746 = vunpack.c.l.s4 1934713408
        %v3747 = vunpack.c.0.s8 %v3746
        %v3748 = vlaneseq
        %v3749 = vshrl.u32 %v3748, 7
        %v3750 = vsub.s32 %v3747, %v3749
        %v3751 = vrot.slane %v3737, %v3750
        %v3752 = vcombine.low %v3719, %v3735
        %v3753 = vcombine.high %v3719, %v3735
        %v3755 = vunpack.c.l.s4 1934713408
        %v3756 = vunpack.c.0.s8 %v3755
        %v3757 = vlaneseq
        %v3758 = vshrl.u32 %v3757, 7
        %v3759 = vsub.s32 %v3756, %v3758
        %v3760 = vrot.slane %v3752, %v3759
        %v3762 = vunpack.c.l.s4 1934713408
        %v3763 = vunpack.c.0.s8 %v3762
        %v3764 = vlaneseq
        %v3765 = vshrl.u32 %v3764, 7
        %v3766 = vsub.s32 %v3763, %v3765
        %v3767 = vrot.slane %v3753, %v3766
        %v3768 = vcombine.high %v3744, 0.0
        %v3769 = vcombine.high %v3751, 0.0
        %v3770 = vcombine.high %v3760, 0.0
        %v3771 = vcombine.high %v3767, 0.0
        %v3772 = vcombine.low %v3608, %v3615
        %v3774 = vunpack.c.l.s4 1983009808
        %v3775 = vunpack.c.0.s8 %v3774
        %v3776 = vlaneseq
        %v3777 = vshrl.u32 %v3776, 7
        %v3778 = vsub.s32 %v3775, %v3777
        %v3779 = vrot.slane %v3772, %v3778
        %v3780 = vcombine.low %v3632, %v3633
        %v3782 = vunpack.c.l.s4 1983009808
        %v3783 = vunpack.c.0.s8 %v3782
        %v3784 = vlaneseq
        %v3785 = vshrl.u32 %v3784, 7
        %v3786 = vsub.s32 %v3783, %v3785
        %v3787 = vrot.slane %v3780, %v3786
        %v3788 = vcombine.low %v3624, %v3631
        %v3790 = vunpack.c.l.s4 1983009808
        %v3791 = vunpack.c.0.s8 %v3790
        %v3792 = vlaneseq
        %v3793 = vshrl.u32 %v3792, 7
        %v3794 = vsub.s32 %v3791, %v3793
        %v3795 = vrot.slane %v3788, %v3794
        %v3796 = vcombine.low %v3634, %v3635
        %v3798 = vunpack.c.l.s4 1983009808
        %v3799 = vunpack.c.0.s8 %v3798
        %v3800 = vlaneseq
        %v3801 = vshrl.u32 %v3800, 7
        %v3802 = vsub.s32 %v3799, %v3801
        %v3803 = vrot.slane %v3796, %v3802
        %v3804 = vcombine.low %v3779, %v3787
        %v3805 = vcombine.high %v3779, %v3787
        %v3807 = vunpack.c.l.s4 1934713408
        %v3808 = vunpack.c.0.s8 %v3807
        %v3809 = vlaneseq
        %v3810 = vshrl.u32 %v3809, 7
        %v3811 = vsub.s32 %v3808, %v3810
        %v3812 = vrot.slane %v3804, %v3811
        %v3814 = vunpack.c.l.s4 1934713408
        %v3815 = vunpack.c.0.s8 %v3814
        %v3816 = vlaneseq
        %v3817 = vshrl.u32 %v3816, 7
        %v3818 = vsub.s32 %v3815, %v3817
        %v3819 = vrot.slane %v3805, %v3818
        %v3820 = vcombine.low %v3795, %v3803
        %v3821 = vcombine.high %v3795, %v3803
        %v3823 = vunpack.c.l.s4 1934713408
        %v3824 = vunpack.c.0.s8 %v3823
        %v3825 = vlaneseq
        %v3826 = vshrl.u32 %v3825, 7
        %v3827 = vsub.s32 %v3824, %v3826
        %v3828 = vrot.slane %v3820, %v3827
        %v3830 = vunpack.c.l.s4 1934713408
        %v3831 = vunpack.c.0.s8 %v3830
        %v3832 = vlaneseq
        %v3833 = vshrl.u32 %v3832, 7
        %v3834 = vsub.s32 %v3831, %v3833
        %v3835 = vrot.slane %v3821, %v3834
        %v3836 = vcombine.low %v3812, %v3828
        %v3837 = vcombine.high %v3812, %v3828
        %v3838 = vcombine.low %v3819, %v3835
        %v3839 = vcombine.high %v3819, %v3835
        %v3840 = vcombine.low %v3676, %v3683
        %v3842 = vunpack.c.l.s4 1983009808
        %v3843 = vunpack.c.0.s8 %v3842
        %v3844 = vlaneseq
        %v3845 = vshrl.u32 %v3844, 7
        %v3846 = vsub.s32 %v3843, %v3845
        %v3847 = vrot.slane %v3840, %v3846
        %v3848 = vcombine.low %v3700, %v3701
        %v3850 = vunpack.c.l.s4 1983009808
        %v3851 = vunpack.c.0.s8 %v3850
        %v3852 = vlaneseq
        %v3853 = vshrl.u32 %v3852, 7
        %v3854 = vsub.s32 %v3851, %v3853
        %v3855 = vrot.slane %v3848, %v3854
        %v3856 = vcombine.low %v3692, %v3699
        %v3858 = vunpack.c.l.s4 1983009808
        %v3859 = vunpack.c.0.s8 %v3858
        %v3860 = vlaneseq
        %v3861 = vshrl.u32 %v3860, 7
        %v3862 = vsub.s32 %v3859, %v3861
        %v3863 = vrot.slane %v3856, %v3862
        %v3864 = vcombine.low %v3702, %v3703
        %v3866 = vunpack.c.l.s4 1983009808
        %v3867 = vunpack.c.0.s8 %v3866
        %v3868 = vlaneseq
        %v3869 = vshrl.u32 %v3868, 7
        %v3870 = vsub.s32 %v3867, %v3869
        %v3871 = vrot.slane %v3864, %v3870
        %v3872 = vcombine.low %v3847, %v3855
        %v3873 = vcombine.high %v3847, %v3855
        %v3875 = vunpack.c.l.s4 1934713408
        %v3876 = vunpack.c.0.s8 %v3875
        %v3877 = vlaneseq
        %v3878 = vshrl.u32 %v3877, 7
        %v3879 = vsub.s32 %v3876, %v3878
        %v3880 = vrot.slane %v3872, %v3879
        %v3882 = vunpack.c.l.s4 1934713408
        %v3883 = vunpack.c.0.s8 %v3882
        %v3884 = vlaneseq
        %v3885 = vshrl.u32 %v3884, 7
        %v3886 = vsub.s32 %v3883, %v3885
        %v3887 = vrot.slane %v3873, %v3886
        %v3888 = vcombine.low %v3863, %v3871
        %v3889 = vcombine.high %v3863, %v3871
        %v3891 = vunpack.c.l.s4 1934713408
        %v3892 = vunpack.c.0.s8 %v3891
        %v3893 = vlaneseq
        %v3894 = vshrl.u32 %v3893, 7
        %v3895 = vsub.s32 %v3892, %v3894
        %v3896 = vrot.slane %v3888, %v3895
        %v3898 = vunpack.c.l.s4 1934713408
        %v3899 = vunpack.c.0.s8 %v3898
        %v3900 = vlaneseq
        %v3901 = vshrl.u32 %v3900, 7
        %v3902 = vsub.s32 %v3899, %v3901
        %v3903 = vrot.slane %v3889, %v3902
        %v3904 = vcombine.low %v3880, %v3896
        %v3905 = vcombine.high %v3880, %v3896
        %v3906 = vcombine.low %v3887, %v3903
        %v3907 = vcombine.high %v3887, %v3903
        %v3908 = vcombine.low %v3744, %v3751
        %v3910 = vunpack.c.l.s4 1983009808
        %v3911 = vunpack.c.0.s8 %v3910
        %v3912 = vlaneseq
        %v3913 = vshrl.u32 %v3912, 7
        %v3914 = vsub.s32 %v3911, %v3913
        %v3915 = vrot.slane %v3908, %v3914
        %v3916 = vcombine.low %v3768, %v3769
        %v3918 = vunpack.c.l.s4 1983009808
        %v3919 = vunpack.c.0.s8 %v3918
        %v3920 = vlaneseq
        %v3921 = vshrl.u32 %v3920, 7
        %v3922 = vsub.s32 %v3919, %v3921
        %v3923 = vrot.slane %v3916, %v3922
        %v3924 = vcombine.low %v3760, %v3767
        %v3926 = vunpack.c.l.s4 1983009808
        %v3927 = vunpack.c.0.s8 %v3926
        %v3928 = vlaneseq
        %v3929 = vshrl.u32 %v3928, 7
        %v3930 = vsub.s32 %v3927, %v3929
        %v3931 = vrot.slane %v3924, %v3930
        %v3932 = vcombine.low %v3770, %v3771
        %v3934 = vunpack.c.l.s4 1983009808
        %v3935 = vunpack.c.0.s8 %v3934
        %v3936 = vlaneseq
        %v3937 = vshrl.u32 %v3936, 7
        %v3938 = vsub.s32 %v3935, %v3937
        %v3939 = vrot.slane %v3932, %v3938
        %v3940 = vcombine.low %v3915, %v3923
        %v3941 = vcombine.high %v3915, %v3923
        %v3943 = vunpack.c.l.s4 1934713408
        %v3944 = vunpack.c.0.s8 %v3943
        %v3945 = vlaneseq
        %v3946 = vshrl.u32 %v3945, 7
        %v3947 = vsub.s32 %v3944, %v3946
        %v3948 = vrot.slane %v3940, %v3947
        %v3950 = vunpack.c.l.s4 1934713408
        %v3951 = vunpack.c.0.s8 %v3950
        %v3952 = vlaneseq
        %v3953 = vshrl.u32 %v3952, 7
        %v3954 = vsub.s32 %v3951, %v3953
        %v3955 = vrot.slane %v3941, %v3954
        %v3956 = vcombine.low %v3931, %v3939
        %v3957 = vcombine.high %v3931, %v3939
        %v3959 = vunpack.c.l.s4 1934713408
        %v3960 = vunpack.c.0.s8 %v3959
        %v3961 = vlaneseq
        %v3962 = vshrl.u32 %v3961, 7
        %v3963 = vsub.s32 %v3960, %v3962
        %v3964 = vrot.slane %v3956, %v3963
        %v3966 = vunpack.c.l.s4 1934713408
        %v3967 = vunpack.c.0.s8 %v3966
        %v3968 = vlaneseq
        %v3969 = vshrl.u32 %v3968, 7
        %v3970 = vsub.s32 %v3967, %v3969
        %v3971 = vrot.slane %v3957, %v3970
        %v3972 = vcombine.low %v3948, %v3964
        %v3973 = vcombine.high %v3948, %v3964
        %v3974 = vcombine.low %v3955, %v3971
        %v3975 = vcombine.high %v3955, %v3971
        %v3976 = vpack.c.bf16 %v3904, %v3836
        %v3977 = vpack.c.bf16 %v3972, %v3972
        %v3978 = vpack.c.bf16 %v3905, %v3837
        %v3979 = vpack.c.bf16 %v3973, %v3973
        %v3980 = vpack.c.bf16 %v3906, %v3838
        %v3981 = vpack.c.bf16 %v3974, %v3974
        %v3982 = vpack.c.bf16 %v3907, %v3839
        %v3983 = vpack.c.bf16 %v3975, %v3975
        %3987 = vrot.lane.b32.xlu0 %v1059, 96
        %v3988 = vpop.permute.xlu0 %3987
        %3989 = vrot.lane.b32.xlu0 %v1065, 96
        %v3990 = vpop.permute.xlu0 %3989
        %3991 = vrot.lane.b32.xlu0 %v1069, 96
        %v3992 = vpop.permute.xlu0 %3991
        %3996 = vrot.lane.b32.xlu0 %v1059, 64
        %v3997 = vpop.permute.xlu0 %3996
        %3998 = vrot.lane.b32.xlu0 %v1065, 64
        %v3999 = vpop.permute.xlu0 %3998
        %4000 = vrot.lane.b32.xlu0 %v1069, 64
        %v4001 = vpop.permute.xlu0 %4000
        %4005 = vrot.lane.b32.xlu0 %v1059, 32
        %v4006 = vpop.permute.xlu0 %4005
        %4007 = vrot.lane.b32.xlu0 %v1065, 32
        %v4008 = vpop.permute.xlu0 %4007
        %4009 = vrot.lane.b32.xlu0 %v1069, 32
        %v4010 = vpop.permute.xlu0 %4009
        %v4014 = vcombine.low %v1059, %v3997
        %v4015 = vcombine.high %v1059, %v3997
        %v4017 = vunpack.c.l.s4 1983009808
        %v4018 = vunpack.c.0.s8 %v4017
        %v4019 = vlaneseq
        %v4020 = vshrl.u32 %v4019, 7
        %v4021 = vsub.s32 %v4018, %v4020
        %v4022 = vrot.slane %v4014, %v4021
        %v4024 = vunpack.c.l.s4 1983009808
        %v4025 = vunpack.c.0.s8 %v4024
        %v4026 = vlaneseq
        %v4027 = vshrl.u32 %v4026, 7
        %v4028 = vsub.s32 %v4025, %v4027
        %v4029 = vrot.slane %v4015, %v4028
        %v4030 = vcombine.low %v3988, %v4006
        %v4031 = vcombine.high %v3988, %v4006
        %v4033 = vunpack.c.l.s4 1983009808
        %v4034 = vunpack.c.0.s8 %v4033
        %v4035 = vlaneseq
        %v4036 = vshrl.u32 %v4035, 7
        %v4037 = vsub.s32 %v4034, %v4036
        %v4038 = vrot.slane %v4030, %v4037
        %v4040 = vunpack.c.l.s4 1983009808
        %v4041 = vunpack.c.0.s8 %v4040
        %v4042 = vlaneseq
        %v4043 = vshrl.u32 %v4042, 7
        %v4044 = vsub.s32 %v4041, %v4043
        %v4045 = vrot.slane %v4031, %v4044
        %v4046 = vcombine.low %v4022, %v4038
        %v4047 = vcombine.high %v4022, %v4038
        %v4049 = vunpack.c.l.s4 1934713408
        %v4050 = vunpack.c.0.s8 %v4049
        %v4051 = vlaneseq
        %v4052 = vshrl.u32 %v4051, 7
        %v4053 = vsub.s32 %v4050, %v4052
        %v4054 = vrot.slane %v4046, %v4053
        %v4056 = vunpack.c.l.s4 1934713408
        %v4057 = vunpack.c.0.s8 %v4056
        %v4058 = vlaneseq
        %v4059 = vshrl.u32 %v4058, 7
        %v4060 = vsub.s32 %v4057, %v4059
        %v4061 = vrot.slane %v4047, %v4060
        %v4062 = vcombine.low %v4029, %v4045
        %v4063 = vcombine.high %v4029, %v4045
        %v4065 = vunpack.c.l.s4 1934713408
        %v4066 = vunpack.c.0.s8 %v4065
        %v4067 = vlaneseq
        %v4068 = vshrl.u32 %v4067, 7
        %v4069 = vsub.s32 %v4066, %v4068
        %v4070 = vrot.slane %v4062, %v4069
        %v4072 = vunpack.c.l.s4 1934713408
        %v4073 = vunpack.c.0.s8 %v4072
        %v4074 = vlaneseq
        %v4075 = vshrl.u32 %v4074, 7
        %v4076 = vsub.s32 %v4073, %v4075
        %v4077 = vrot.slane %v4063, %v4076
        %v4078 = vcombine.high %v4054, 0.0
        %v4079 = vcombine.high %v4061, 0.0
        %v4080 = vcombine.high %v4070, 0.0
        %v4081 = vcombine.high %v4077, 0.0
        %v4082 = vcombine.low %v1065, %v3999
        %v4083 = vcombine.high %v1065, %v3999
        %v4085 = vunpack.c.l.s4 1983009808
        %v4086 = vunpack.c.0.s8 %v4085
        %v4087 = vlaneseq
        %v4088 = vshrl.u32 %v4087, 7
        %v4089 = vsub.s32 %v4086, %v4088
        %v4090 = vrot.slane %v4082, %v4089
        %v4092 = vunpack.c.l.s4 1983009808
        %v4093 = vunpack.c.0.s8 %v4092
        %v4094 = vlaneseq
        %v4095 = vshrl.u32 %v4094, 7
        %v4096 = vsub.s32 %v4093, %v4095
        %v4097 = vrot.slane %v4083, %v4096
        %v4098 = vcombine.low %v3990, %v4008
        %v4099 = vcombine.high %v3990, %v4008
        %v4101 = vunpack.c.l.s4 1983009808
        %v4102 = vunpack.c.0.s8 %v4101
        %v4103 = vlaneseq
        %v4104 = vshrl.u32 %v4103, 7
        %v4105 = vsub.s32 %v4102, %v4104
        %v4106 = vrot.slane %v4098, %v4105
        %v4108 = vunpack.c.l.s4 1983009808
        %v4109 = vunpack.c.0.s8 %v4108
        %v4110 = vlaneseq
        %v4111 = vshrl.u32 %v4110, 7
        %v4112 = vsub.s32 %v4109, %v4111
        %v4113 = vrot.slane %v4099, %v4112
        %v4114 = vcombine.low %v4090, %v4106
        %v4115 = vcombine.high %v4090, %v4106
        %v4117 = vunpack.c.l.s4 1934713408
        %v4118 = vunpack.c.0.s8 %v4117
        %v4119 = vlaneseq
        %v4120 = vshrl.u32 %v4119, 7
        %v4121 = vsub.s32 %v4118, %v4120
        %v4122 = vrot.slane %v4114, %v4121
        %v4124 = vunpack.c.l.s4 1934713408
        %v4125 = vunpack.c.0.s8 %v4124
        %v4126 = vlaneseq
        %v4127 = vshrl.u32 %v4126, 7
        %v4128 = vsub.s32 %v4125, %v4127
        %v4129 = vrot.slane %v4115, %v4128
        %v4130 = vcombine.low %v4097, %v4113
        %v4131 = vcombine.high %v4097, %v4113
        %v4133 = vunpack.c.l.s4 1934713408
        %v4134 = vunpack.c.0.s8 %v4133
        %v4135 = vlaneseq
        %v4136 = vshrl.u32 %v4135, 7
        %v4137 = vsub.s32 %v4134, %v4136
        %v4138 = vrot.slane %v4130, %v4137
        %v4140 = vunpack.c.l.s4 1934713408
        %v4141 = vunpack.c.0.s8 %v4140
        %v4142 = vlaneseq
        %v4143 = vshrl.u32 %v4142, 7
        %v4144 = vsub.s32 %v4141, %v4143
        %v4145 = vrot.slane %v4131, %v4144
        %v4146 = vcombine.high %v4122, 0.0
        %v4147 = vcombine.high %v4129, 0.0
        %v4148 = vcombine.high %v4138, 0.0
        %v4149 = vcombine.high %v4145, 0.0
        %v4150 = vcombine.low %v1069, %v4001
        %v4151 = vcombine.high %v1069, %v4001
        %v4153 = vunpack.c.l.s4 1983009808
        %v4154 = vunpack.c.0.s8 %v4153
        %v4155 = vlaneseq
        %v4156 = vshrl.u32 %v4155, 7
        %v4157 = vsub.s32 %v4154, %v4156
        %v4158 = vrot.slane %v4150, %v4157
        %v4160 = vunpack.c.l.s4 1983009808
        %v4161 = vunpack.c.0.s8 %v4160
        %v4162 = vlaneseq
        %v4163 = vshrl.u32 %v4162, 7
        %v4164 = vsub.s32 %v4161, %v4163
        %v4165 = vrot.slane %v4151, %v4164
        %v4166 = vcombine.low %v3992, %v4010
        %v4167 = vcombine.high %v3992, %v4010
        %v4169 = vunpack.c.l.s4 1983009808
        %v4170 = vunpack.c.0.s8 %v4169
        %v4171 = vlaneseq
        %v4172 = vshrl.u32 %v4171, 7
        %v4173 = vsub.s32 %v4170, %v4172
        %v4174 = vrot.slane %v4166, %v4173
        %v4176 = vunpack.c.l.s4 1983009808
        %v4177 = vunpack.c.0.s8 %v4176
        %v4178 = vlaneseq
        %v4179 = vshrl.u32 %v4178, 7
        %v4180 = vsub.s32 %v4177, %v4179
        %v4181 = vrot.slane %v4167, %v4180
        %v4182 = vcombine.low %v4158, %v4174
        %v4183 = vcombine.high %v4158, %v4174
        %v4185 = vunpack.c.l.s4 1934713408
        %v4186 = vunpack.c.0.s8 %v4185
        %v4187 = vlaneseq
        %v4188 = vshrl.u32 %v4187, 7
        %v4189 = vsub.s32 %v4186, %v4188
        %v4190 = vrot.slane %v4182, %v4189
        %v4192 = vunpack.c.l.s4 1934713408
        %v4193 = vunpack.c.0.s8 %v4192
        %v4194 = vlaneseq
        %v4195 = vshrl.u32 %v4194, 7
        %v4196 = vsub.s32 %v4193, %v4195
        %v4197 = vrot.slane %v4183, %v4196
        %v4198 = vcombine.low %v4165, %v4181
        %v4199 = vcombine.high %v4165, %v4181
        %v4201 = vunpack.c.l.s4 1934713408
        %v4202 = vunpack.c.0.s8 %v4201
        %v4203 = vlaneseq
        %v4204 = vshrl.u32 %v4203, 7
        %v4205 = vsub.s32 %v4202, %v4204
        %v4206 = vrot.slane %v4198, %v4205
        %v4208 = vunpack.c.l.s4 1934713408
        %v4209 = vunpack.c.0.s8 %v4208
        %v4210 = vlaneseq
        %v4211 = vshrl.u32 %v4210, 7
        %v4212 = vsub.s32 %v4209, %v4211
        %v4213 = vrot.slane %v4199, %v4212
        %v4214 = vcombine.high %v4190, 0.0
        %v4215 = vcombine.high %v4197, 0.0
        %v4216 = vcombine.high %v4206, 0.0
        %v4217 = vcombine.high %v4213, 0.0
        %v4218 = vcombine.low %v4054, %v4061
        %v4220 = vunpack.c.l.s4 1983009808
        %v4221 = vunpack.c.0.s8 %v4220
        %v4222 = vlaneseq
        %v4223 = vshrl.u32 %v4222, 7
        %v4224 = vsub.s32 %v4221, %v4223
        %v4225 = vrot.slane %v4218, %v4224
        %v4226 = vcombine.low %v4078, %v4079
        %v4228 = vunpack.c.l.s4 1983009808
        %v4229 = vunpack.c.0.s8 %v4228
        %v4230 = vlaneseq
        %v4231 = vshrl.u32 %v4230, 7
        %v4232 = vsub.s32 %v4229, %v4231
        %v4233 = vrot.slane %v4226, %v4232
        %v4234 = vcombine.low %v4070, %v4077
        %v4236 = vunpack.c.l.s4 1983009808
        %v4237 = vunpack.c.0.s8 %v4236
        %v4238 = vlaneseq
        %v4239 = vshrl.u32 %v4238, 7
        %v4240 = vsub.s32 %v4237, %v4239
        %v4241 = vrot.slane %v4234, %v4240
        %v4242 = vcombine.low %v4080, %v4081
        %v4244 = vunpack.c.l.s4 1983009808
        %v4245 = vunpack.c.0.s8 %v4244
        %v4246 = vlaneseq
        %v4247 = vshrl.u32 %v4246, 7
        %v4248 = vsub.s32 %v4245, %v4247
        %v4249 = vrot.slane %v4242, %v4248
        %v4250 = vcombine.low %v4225, %v4233
        %v4251 = vcombine.high %v4225, %v4233
        %v4253 = vunpack.c.l.s4 1934713408
        %v4254 = vunpack.c.0.s8 %v4253
        %v4255 = vlaneseq
        %v4256 = vshrl.u32 %v4255, 7
        %v4257 = vsub.s32 %v4254, %v4256
        %v4258 = vrot.slane %v4250, %v4257
        %v4260 = vunpack.c.l.s4 1934713408
        %v4261 = vunpack.c.0.s8 %v4260
        %v4262 = vlaneseq
        %v4263 = vshrl.u32 %v4262, 7
        %v4264 = vsub.s32 %v4261, %v4263
        %v4265 = vrot.slane %v4251, %v4264
        %v4266 = vcombine.low %v4241, %v4249
        %v4267 = vcombine.high %v4241, %v4249
        %v4269 = vunpack.c.l.s4 1934713408
        %v4270 = vunpack.c.0.s8 %v4269
        %v4271 = vlaneseq
        %v4272 = vshrl.u32 %v4271, 7
        %v4273 = vsub.s32 %v4270, %v4272
        %v4274 = vrot.slane %v4266, %v4273
        %v4276 = vunpack.c.l.s4 1934713408
        %v4277 = vunpack.c.0.s8 %v4276
        %v4278 = vlaneseq
        %v4279 = vshrl.u32 %v4278, 7
        %v4280 = vsub.s32 %v4277, %v4279
        %v4281 = vrot.slane %v4267, %v4280
        %v4282 = vcombine.low %v4258, %v4274
        %v4283 = vcombine.high %v4258, %v4274
        %v4284 = vcombine.low %v4265, %v4281
        %v4285 = vcombine.high %v4265, %v4281
        %v4286 = vcombine.low %v4122, %v4129
        %v4288 = vunpack.c.l.s4 1983009808
        %v4289 = vunpack.c.0.s8 %v4288
        %v4290 = vlaneseq
        %v4291 = vshrl.u32 %v4290, 7
        %v4292 = vsub.s32 %v4289, %v4291
        %v4293 = vrot.slane %v4286, %v4292
        %v4294 = vcombine.low %v4146, %v4147
        %v4296 = vunpack.c.l.s4 1983009808
        %v4297 = vunpack.c.0.s8 %v4296
        %v4298 = vlaneseq
        %v4299 = vshrl.u32 %v4298, 7
        %v4300 = vsub.s32 %v4297, %v4299
        %v4301 = vrot.slane %v4294, %v4300
        %v4302 = vcombine.low %v4138, %v4145
        %v4304 = vunpack.c.l.s4 1983009808
        %v4305 = vunpack.c.0.s8 %v4304
        %v4306 = vlaneseq
        %v4307 = vshrl.u32 %v4306, 7
        %v4308 = vsub.s32 %v4305, %v4307
        %v4309 = vrot.slane %v4302, %v4308
        %v4310 = vcombine.low %v4148, %v4149
        %v4312 = vunpack.c.l.s4 1983009808
        %v4313 = vunpack.c.0.s8 %v4312
        %v4314 = vlaneseq
        %v4315 = vshrl.u32 %v4314, 7
        %v4316 = vsub.s32 %v4313, %v4315
        %v4317 = vrot.slane %v4310, %v4316
        %v4318 = vcombine.low %v4293, %v4301
        %v4319 = vcombine.high %v4293, %v4301
        %v4321 = vunpack.c.l.s4 1934713408
        %v4322 = vunpack.c.0.s8 %v4321
        %v4323 = vlaneseq
        %v4324 = vshrl.u32 %v4323, 7
        %v4325 = vsub.s32 %v4322, %v4324
        %v4326 = vrot.slane %v4318, %v4325
        %v4328 = vunpack.c.l.s4 1934713408
        %v4329 = vunpack.c.0.s8 %v4328
        %v4330 = vlaneseq
        %v4331 = vshrl.u32 %v4330, 7
        %v4332 = vsub.s32 %v4329, %v4331
        %v4333 = vrot.slane %v4319, %v4332
        %v4334 = vcombine.low %v4309, %v4317
        %v4335 = vcombine.high %v4309, %v4317
        %v4337 = vunpack.c.l.s4 1934713408
        %v4338 = vunpack.c.0.s8 %v4337
        %v4339 = vlaneseq
        %v4340 = vshrl.u32 %v4339, 7
        %v4341 = vsub.s32 %v4338, %v4340
        %v4342 = vrot.slane %v4334, %v4341
        %v4344 = vunpack.c.l.s4 1934713408
        %v4345 = vunpack.c.0.s8 %v4344
        %v4346 = vlaneseq
        %v4347 = vshrl.u32 %v4346, 7
        %v4348 = vsub.s32 %v4345, %v4347
        %v4349 = vrot.slane %v4335, %v4348
        %v4350 = vcombine.low %v4326, %v4342
        %v4351 = vcombine.high %v4326, %v4342
        %v4352 = vcombine.low %v4333, %v4349
        %v4353 = vcombine.high %v4333, %v4349
        %v4354 = vcombine.low %v4190, %v4197
        %v4356 = vunpack.c.l.s4 1983009808
        %v4357 = vunpack.c.0.s8 %v4356
        %v4358 = vlaneseq
        %v4359 = vshrl.u32 %v4358, 7
        %v4360 = vsub.s32 %v4357, %v4359
        %v4361 = vrot.slane %v4354, %v4360
        %v4362 = vcombine.low %v4214, %v4215
        %v4364 = vunpack.c.l.s4 1983009808
        %v4365 = vunpack.c.0.s8 %v4364
        %v4366 = vlaneseq
        %v4367 = vshrl.u32 %v4366, 7
        %v4368 = vsub.s32 %v4365, %v4367
        %v4369 = vrot.slane %v4362, %v4368
        %v4370 = vcombine.low %v4206, %v4213
        %v4372 = vunpack.c.l.s4 1983009808
        %v4373 = vunpack.c.0.s8 %v4372
        %v4374 = vlaneseq
        %v4375 = vshrl.u32 %v4374, 7
        %v4376 = vsub.s32 %v4373, %v4375
        %v4377 = vrot.slane %v4370, %v4376
        %v4378 = vcombine.low %v4216, %v4217
        %v4380 = vunpack.c.l.s4 1983009808
        %v4381 = vunpack.c.0.s8 %v4380
        %v4382 = vlaneseq
        %v4383 = vshrl.u32 %v4382, 7
        %v4384 = vsub.s32 %v4381, %v4383
        %v4385 = vrot.slane %v4378, %v4384
        %v4386 = vcombine.low %v4361, %v4369
        %v4387 = vcombine.high %v4361, %v4369
        %v4389 = vunpack.c.l.s4 1934713408
        %v4390 = vunpack.c.0.s8 %v4389
        %v4391 = vlaneseq
        %v4392 = vshrl.u32 %v4391, 7
        %v4393 = vsub.s32 %v4390, %v4392
        %v4394 = vrot.slane %v4386, %v4393
        %v4396 = vunpack.c.l.s4 1934713408
        %v4397 = vunpack.c.0.s8 %v4396
        %v4398 = vlaneseq
        %v4399 = vshrl.u32 %v4398, 7
        %v4400 = vsub.s32 %v4397, %v4399
        %v4401 = vrot.slane %v4387, %v4400
        %v4402 = vcombine.low %v4377, %v4385
        %v4403 = vcombine.high %v4377, %v4385
        %v4405 = vunpack.c.l.s4 1934713408
        %v4406 = vunpack.c.0.s8 %v4405
        %v4407 = vlaneseq
        %v4408 = vshrl.u32 %v4407, 7
        %v4409 = vsub.s32 %v4406, %v4408
        %v4410 = vrot.slane %v4402, %v4409
        %v4412 = vunpack.c.l.s4 1934713408
        %v4413 = vunpack.c.0.s8 %v4412
        %v4414 = vlaneseq
        %v4415 = vshrl.u32 %v4414, 7
        %v4416 = vsub.s32 %v4413, %v4415
        %v4417 = vrot.slane %v4403, %v4416
        %v4418 = vcombine.low %v4394, %v4410
        %v4419 = vcombine.high %v4394, %v4410
        %v4420 = vcombine.low %v4401, %v4417
        %v4421 = vcombine.high %v4401, %v4417
        %v4422 = vpack.c.bf16 %v4350, %v4282
        %v4423 = vpack.c.bf16 %v4418, %v4418
        %v4424 = vpack.c.bf16 %v4351, %v4283
        %v4425 = vpack.c.bf16 %v4419, %v4419
        %v4426 = vpack.c.bf16 %v4352, %v4284
        %v4427 = vpack.c.bf16 %v4420, %v4420
        %v4428 = vpack.c.bf16 %v4353, %v4285
        %v4429 = vpack.c.bf16 %v4421, %v4421
        %4433 = vrot.lane.b32.xlu0 %v1117, 96
        %v4434 = vpop.permute.xlu0 %4433
        %4435 = vrot.lane.b32.xlu0 %v1122, 96
        %v4436 = vpop.permute.xlu0 %4435
        %4437 = vrot.lane.b32.xlu0 %v1125, 96
        %v4438 = vpop.permute.xlu0 %4437
        %4442 = vrot.lane.b32.xlu0 %v1117, 64
        %v4443 = vpop.permute.xlu0 %4442
        %4444 = vrot.lane.b32.xlu0 %v1122, 64
        %v4445 = vpop.permute.xlu0 %4444
        %4446 = vrot.lane.b32.xlu0 %v1125, 64
        %v4447 = vpop.permute.xlu0 %4446
        %4451 = vrot.lane.b32.xlu0 %v1117, 32
        %v4452 = vpop.permute.xlu0 %4451
        %4453 = vrot.lane.b32.xlu0 %v1122, 32
        %v4454 = vpop.permute.xlu0 %4453
        %4455 = vrot.lane.b32.xlu0 %v1125, 32
        %v4456 = vpop.permute.xlu0 %4455
        %v4460 = vcombine.low %v1117, %v4443
        %v4461 = vcombine.high %v1117, %v4443
        %v4463 = vunpack.c.l.s4 1983009808
        %v4464 = vunpack.c.0.s8 %v4463
        %v4465 = vlaneseq
        %v4466 = vshrl.u32 %v4465, 7
        %v4467 = vsub.s32 %v4464, %v4466
        %v4468 = vrot.slane %v4460, %v4467
        %v4470 = vunpack.c.l.s4 1983009808
        %v4471 = vunpack.c.0.s8 %v4470
        %v4472 = vlaneseq
        %v4473 = vshrl.u32 %v4472, 7
        %v4474 = vsub.s32 %v4471, %v4473
        %v4475 = vrot.slane %v4461, %v4474
        %v4476 = vcombine.low %v4434, %v4452
        %v4477 = vcombine.high %v4434, %v4452
        %v4479 = vunpack.c.l.s4 1983009808
        %v4480 = vunpack.c.0.s8 %v4479
        %v4481 = vlaneseq
        %v4482 = vshrl.u32 %v4481, 7
        %v4483 = vsub.s32 %v4480, %v4482
        %v4484 = vrot.slane %v4476, %v4483
        %v4486 = vunpack.c.l.s4 1983009808
        %v4487 = vunpack.c.0.s8 %v4486
        %v4488 = vlaneseq
        %v4489 = vshrl.u32 %v4488, 7
        %v4490 = vsub.s32 %v4487, %v4489
        %v4491 = vrot.slane %v4477, %v4490
        %v4492 = vcombine.low %v4468, %v4484
        %v4493 = vcombine.high %v4468, %v4484
        %v4495 = vunpack.c.l.s4 1934713408
        %v4496 = vunpack.c.0.s8 %v4495
        %v4497 = vlaneseq
        %v4498 = vshrl.u32 %v4497, 7
        %v4499 = vsub.s32 %v4496, %v4498
        %v4500 = vrot.slane %v4492, %v4499
        %v4502 = vunpack.c.l.s4 1934713408
        %v4503 = vunpack.c.0.s8 %v4502
        %v4504 = vlaneseq
        %v4505 = vshrl.u32 %v4504, 7
        %v4506 = vsub.s32 %v4503, %v4505
        %v4507 = vrot.slane %v4493, %v4506
        %v4508 = vcombine.low %v4475, %v4491
        %v4509 = vcombine.high %v4475, %v4491
        %v4511 = vunpack.c.l.s4 1934713408
        %v4512 = vunpack.c.0.s8 %v4511
        %v4513 = vlaneseq
        %v4514 = vshrl.u32 %v4513, 7
        %v4515 = vsub.s32 %v4512, %v4514
        %v4516 = vrot.slane %v4508, %v4515
        %v4518 = vunpack.c.l.s4 1934713408
        %v4519 = vunpack.c.0.s8 %v4518
        %v4520 = vlaneseq
        %v4521 = vshrl.u32 %v4520, 7
        %v4522 = vsub.s32 %v4519, %v4521
        %v4523 = vrot.slane %v4509, %v4522
        %v4524 = vcombine.high %v4500, 0.0
        %v4525 = vcombine.high %v4507, 0.0
        %v4526 = vcombine.high %v4516, 0.0
        %v4527 = vcombine.high %v4523, 0.0
        %v4528 = vcombine.low %v1122, %v4445
        %v4529 = vcombine.high %v1122, %v4445
        %v4531 = vunpack.c.l.s4 1983009808
        %v4532 = vunpack.c.0.s8 %v4531
        %v4533 = vlaneseq
        %v4534 = vshrl.u32 %v4533, 7
        %v4535 = vsub.s32 %v4532, %v4534
        %v4536 = vrot.slane %v4528, %v4535
        %v4538 = vunpack.c.l.s4 1983009808
        %v4539 = vunpack.c.0.s8 %v4538
        %v4540 = vlaneseq
        %v4541 = vshrl.u32 %v4540, 7
        %v4542 = vsub.s32 %v4539, %v4541
        %v4543 = vrot.slane %v4529, %v4542
        %v4544 = vcombine.low %v4436, %v4454
        %v4545 = vcombine.high %v4436, %v4454
        %v4547 = vunpack.c.l.s4 1983009808
        %v4548 = vunpack.c.0.s8 %v4547
        %v4549 = vlaneseq
        %v4550 = vshrl.u32 %v4549, 7
        %v4551 = vsub.s32 %v4548, %v4550
        %v4552 = vrot.slane %v4544, %v4551
        %v4554 = vunpack.c.l.s4 1983009808
        %v4555 = vunpack.c.0.s8 %v4554
        %v4556 = vlaneseq
        %v4557 = vshrl.u32 %v4556, 7
        %v4558 = vsub.s32 %v4555, %v4557
        %v4559 = vrot.slane %v4545, %v4558
        %v4560 = vcombine.low %v4536, %v4552
        %v4561 = vcombine.high %v4536, %v4552
        %v4563 = vunpack.c.l.s4 1934713408
        %v4564 = vunpack.c.0.s8 %v4563
        %v4565 = vlaneseq
        %v4566 = vshrl.u32 %v4565, 7
        %v4567 = vsub.s32 %v4564, %v4566
        %v4568 = vrot.slane %v4560, %v4567
        %v4570 = vunpack.c.l.s4 1934713408
        %v4571 = vunpack.c.0.s8 %v4570
        %v4572 = vlaneseq
        %v4573 = vshrl.u32 %v4572, 7
        %v4574 = vsub.s32 %v4571, %v4573
        %v4575 = vrot.slane %v4561, %v4574
        %v4576 = vcombine.low %v4543, %v4559
        %v4577 = vcombine.high %v4543, %v4559
        %v4579 = vunpack.c.l.s4 1934713408
        %v4580 = vunpack.c.0.s8 %v4579
        %v4581 = vlaneseq
        %v4582 = vshrl.u32 %v4581, 7
        %v4583 = vsub.s32 %v4580, %v4582
        %v4584 = vrot.slane %v4576, %v4583
        %v4586 = vunpack.c.l.s4 1934713408
        %v4587 = vunpack.c.0.s8 %v4586
        %v4588 = vlaneseq
        %v4589 = vshrl.u32 %v4588, 7
        %v4590 = vsub.s32 %v4587, %v4589
        %v4591 = vrot.slane %v4577, %v4590
        %v4592 = vcombine.high %v4568, 0.0
        %v4593 = vcombine.high %v4575, 0.0
        %v4594 = vcombine.high %v4584, 0.0
        %v4595 = vcombine.high %v4591, 0.0
        %v4596 = vcombine.low %v1125, %v4447
        %v4597 = vcombine.high %v1125, %v4447
        %v4599 = vunpack.c.l.s4 1983009808
        %v4600 = vunpack.c.0.s8 %v4599
        %v4601 = vlaneseq
        %v4602 = vshrl.u32 %v4601, 7
        %v4603 = vsub.s32 %v4600, %v4602
        %v4604 = vrot.slane %v4596, %v4603
        %v4606 = vunpack.c.l.s4 1983009808
        %v4607 = vunpack.c.0.s8 %v4606
        %v4608 = vlaneseq
        %v4609 = vshrl.u32 %v4608, 7
        %v4610 = vsub.s32 %v4607, %v4609
        %v4611 = vrot.slane %v4597, %v4610
        %v4612 = vcombine.low %v4438, %v4456
        %v4613 = vcombine.high %v4438, %v4456
        %v4615 = vunpack.c.l.s4 1983009808
        %v4616 = vunpack.c.0.s8 %v4615
        %v4617 = vlaneseq
        %v4618 = vshrl.u32 %v4617, 7
        %v4619 = vsub.s32 %v4616, %v4618
        %v4620 = vrot.slane %v4612, %v4619
        %v4622 = vunpack.c.l.s4 1983009808
        %v4623 = vunpack.c.0.s8 %v4622
        %v4624 = vlaneseq
        %v4625 = vshrl.u32 %v4624, 7
        %v4626 = vsub.s32 %v4623, %v4625
        %v4627 = vrot.slane %v4613, %v4626
        %v4628 = vcombine.low %v4604, %v4620
        %v4629 = vcombine.high %v4604, %v4620
        %v4631 = vunpack.c.l.s4 1934713408
        %v4632 = vunpack.c.0.s8 %v4631
        %v4633 = vlaneseq
        %v4634 = vshrl.u32 %v4633, 7
        %v4635 = vsub.s32 %v4632, %v4634
        %v4636 = vrot.slane %v4628, %v4635
        %v4638 = vunpack.c.l.s4 1934713408
        %v4639 = vunpack.c.0.s8 %v4638
        %v4640 = vlaneseq
        %v4641 = vshrl.u32 %v4640, 7
        %v4642 = vsub.s32 %v4639, %v4641
        %v4643 = vrot.slane %v4629, %v4642
        %v4644 = vcombine.low %v4611, %v4627
        %v4645 = vcombine.high %v4611, %v4627
        %v4647 = vunpack.c.l.s4 1934713408
        %v4648 = vunpack.c.0.s8 %v4647
        %v4649 = vlaneseq
        %v4650 = vshrl.u32 %v4649, 7
        %v4651 = vsub.s32 %v4648, %v4650
        %v4652 = vrot.slane %v4644, %v4651
        %v4654 = vunpack.c.l.s4 1934713408
        %v4655 = vunpack.c.0.s8 %v4654
        %v4656 = vlaneseq
        %v4657 = vshrl.u32 %v4656, 7
        %v4658 = vsub.s32 %v4655, %v4657
        %v4659 = vrot.slane %v4645, %v4658
        %v4660 = vcombine.high %v4636, 0.0
        %v4661 = vcombine.high %v4643, 0.0
        %v4662 = vcombine.high %v4652, 0.0
        %v4663 = vcombine.high %v4659, 0.0
        %v4664 = vcombine.low %v4500, %v4507
        %v4666 = vunpack.c.l.s4 1983009808
        %v4667 = vunpack.c.0.s8 %v4666
        %v4668 = vlaneseq
        %v4669 = vshrl.u32 %v4668, 7
        %v4670 = vsub.s32 %v4667, %v4669
        %v4671 = vrot.slane %v4664, %v4670
        %v4672 = vcombine.low %v4524, %v4525
        %v4674 = vunpack.c.l.s4 1983009808
        %v4675 = vunpack.c.0.s8 %v4674
        %v4676 = vlaneseq
        %v4677 = vshrl.u32 %v4676, 7
        %v4678 = vsub.s32 %v4675, %v4677
        %v4679 = vrot.slane %v4672, %v4678
        %v4680 = vcombine.low %v4516, %v4523
        %v4682 = vunpack.c.l.s4 1983009808
        %v4683 = vunpack.c.0.s8 %v4682
        %v4684 = vlaneseq
        %v4685 = vshrl.u32 %v4684, 7
        %v4686 = vsub.s32 %v4683, %v4685
        %v4687 = vrot.slane %v4680, %v4686
        %v4688 = vcombine.low %v4526, %v4527
        %v4690 = vunpack.c.l.s4 1983009808
        %v4691 = vunpack.c.0.s8 %v4690
        %v4692 = vlaneseq
        %v4693 = vshrl.u32 %v4692, 7
        %v4694 = vsub.s32 %v4691, %v4693
        %v4695 = vrot.slane %v4688, %v4694
        %v4696 = vcombine.low %v4671, %v4679
        %v4697 = vcombine.high %v4671, %v4679
        %v4699 = vunpack.c.l.s4 1934713408
        %v4700 = vunpack.c.0.s8 %v4699
        %v4701 = vlaneseq
        %v4702 = vshrl.u32 %v4701, 7
        %v4703 = vsub.s32 %v4700, %v4702
        %v4704 = vrot.slane %v4696, %v4703
        %v4706 = vunpack.c.l.s4 1934713408
        %v4707 = vunpack.c.0.s8 %v4706
        %v4708 = vlaneseq
        %v4709 = vshrl.u32 %v4708, 7
        %v4710 = vsub.s32 %v4707, %v4709
        %v4711 = vrot.slane %v4697, %v4710
        %v4712 = vcombine.low %v4687, %v4695
        %v4713 = vcombine.high %v4687, %v4695
        %v4715 = vunpack.c.l.s4 1934713408
        %v4716 = vunpack.c.0.s8 %v4715
        %v4717 = vlaneseq
        %v4718 = vshrl.u32 %v4717, 7
        %v4719 = vsub.s32 %v4716, %v4718
        %v4720 = vrot.slane %v4712, %v4719
        %v4722 = vunpack.c.l.s4 1934713408
        %v4723 = vunpack.c.0.s8 %v4722
        %v4724 = vlaneseq
        %v4725 = vshrl.u32 %v4724, 7
        %v4726 = vsub.s32 %v4723, %v4725
        %v4727 = vrot.slane %v4713, %v4726
        %v4728 = vcombine.low %v4704, %v4720
        %v4729 = vcombine.high %v4704, %v4720
        %v4730 = vcombine.low %v4711, %v4727
        %v4731 = vcombine.high %v4711, %v4727
        %v4732 = vcombine.low %v4568, %v4575
        %v4734 = vunpack.c.l.s4 1983009808
        %v4735 = vunpack.c.0.s8 %v4734
        %v4736 = vlaneseq
        %v4737 = vshrl.u32 %v4736, 7
        %v4738 = vsub.s32 %v4735, %v4737
        %v4739 = vrot.slane %v4732, %v4738
        %v4740 = vcombine.low %v4592, %v4593
        %v4742 = vunpack.c.l.s4 1983009808
        %v4743 = vunpack.c.0.s8 %v4742
        %v4744 = vlaneseq
        %v4745 = vshrl.u32 %v4744, 7
        %v4746 = vsub.s32 %v4743, %v4745
        %v4747 = vrot.slane %v4740, %v4746
        %v4748 = vcombine.low %v4584, %v4591
        %v4750 = vunpack.c.l.s4 1983009808
        %v4751 = vunpack.c.0.s8 %v4750
        %v4752 = vlaneseq
        %v4753 = vshrl.u32 %v4752, 7
        %v4754 = vsub.s32 %v4751, %v4753
        %v4755 = vrot.slane %v4748, %v4754
        %v4756 = vcombine.low %v4594, %v4595
        %v4758 = vunpack.c.l.s4 1983009808
        %v4759 = vunpack.c.0.s8 %v4758
        %v4760 = vlaneseq
        %v4761 = vshrl.u32 %v4760, 7
        %v4762 = vsub.s32 %v4759, %v4761
        %v4763 = vrot.slane %v4756, %v4762
        %v4764 = vcombine.low %v4739, %v4747
        %v4765 = vcombine.high %v4739, %v4747
        %v4767 = vunpack.c.l.s4 1934713408
        %v4768 = vunpack.c.0.s8 %v4767
        %v4769 = vlaneseq
        %v4770 = vshrl.u32 %v4769, 7
        %v4771 = vsub.s32 %v4768, %v4770
        %v4772 = vrot.slane %v4764, %v4771
        %v4774 = vunpack.c.l.s4 1934713408
        %v4775 = vunpack.c.0.s8 %v4774
        %v4776 = vlaneseq
        %v4777 = vshrl.u32 %v4776, 7
        %v4778 = vsub.s32 %v4775, %v4777
        %v4779 = vrot.slane %v4765, %v4778
        %v4780 = vcombine.low %v4755, %v4763
        %v4781 = vcombine.high %v4755, %v4763
        %v4783 = vunpack.c.l.s4 1934713408
        %v4784 = vunpack.c.0.s8 %v4783
        %v4785 = vlaneseq
        %v4786 = vshrl.u32 %v4785, 7
        %v4787 = vsub.s32 %v4784, %v4786
        %v4788 = vrot.slane %v4780, %v4787
        %v4790 = vunpack.c.l.s4 1934713408
        %v4791 = vunpack.c.0.s8 %v4790
        %v4792 = vlaneseq
        %v4793 = vshrl.u32 %v4792, 7
        %v4794 = vsub.s32 %v4791, %v4793
        %v4795 = vrot.slane %v4781, %v4794
        %v4796 = vcombine.low %v4772, %v4788
        %v4797 = vcombine.high %v4772, %v4788
        %v4798 = vcombine.low %v4779, %v4795
        %v4799 = vcombine.high %v4779, %v4795
        %v4800 = vcombine.low %v4636, %v4643
        %v4802 = vunpack.c.l.s4 1983009808
        %v4803 = vunpack.c.0.s8 %v4802
        %v4804 = vlaneseq
        %v4805 = vshrl.u32 %v4804, 7
        %v4806 = vsub.s32 %v4803, %v4805
        %v4807 = vrot.slane %v4800, %v4806
        %v4808 = vcombine.low %v4660, %v4661
        %v4810 = vunpack.c.l.s4 1983009808
        %v4811 = vunpack.c.0.s8 %v4810
        %v4812 = vlaneseq
        %v4813 = vshrl.u32 %v4812, 7
        %v4814 = vsub.s32 %v4811, %v4813
        %v4815 = vrot.slane %v4808, %v4814
        %v4816 = vcombine.low %v4652, %v4659
        %v4818 = vunpack.c.l.s4 1983009808
        %v4819 = vunpack.c.0.s8 %v4818
        %v4820 = vlaneseq
        %v4821 = vshrl.u32 %v4820, 7
        %v4822 = vsub.s32 %v4819, %v4821
        %v4823 = vrot.slane %v4816, %v4822
        %v4824 = vcombine.low %v4662, %v4663
        %v4826 = vunpack.c.l.s4 1983009808
        %v4827 = vunpack.c.0.s8 %v4826
        %v4828 = vlaneseq
        %v4829 = vshrl.u32 %v4828, 7
        %v4830 = vsub.s32 %v4827, %v4829
        %v4831 = vrot.slane %v4824, %v4830
        %v4832 = vcombine.low %v4807, %v4815
        %v4833 = vcombine.high %v4807, %v4815
        %v4835 = vunpack.c.l.s4 1934713408
        %v4836 = vunpack.c.0.s8 %v4835
        %v4837 = vlaneseq
        %v4838 = vshrl.u32 %v4837, 7
        %v4839 = vsub.s32 %v4836, %v4838
        %v4840 = vrot.slane %v4832, %v4839
        %v4842 = vunpack.c.l.s4 1934713408
        %v4843 = vunpack.c.0.s8 %v4842
        %v4844 = vlaneseq
        %v4845 = vshrl.u32 %v4844, 7
        %v4846 = vsub.s32 %v4843, %v4845
        %v4847 = vrot.slane %v4833, %v4846
        %v4848 = vcombine.low %v4823, %v4831
        %v4849 = vcombine.high %v4823, %v4831
        %v4851 = vunpack.c.l.s4 1934713408
        %v4852 = vunpack.c.0.s8 %v4851
        %v4853 = vlaneseq
        %v4854 = vshrl.u32 %v4853, 7
        %v4855 = vsub.s32 %v4852, %v4854
        %v4856 = vrot.slane %v4848, %v4855
        %v4858 = vunpack.c.l.s4 1934713408
        %v4859 = vunpack.c.0.s8 %v4858
        %v4860 = vlaneseq
        %v4861 = vshrl.u32 %v4860, 7
        %v4862 = vsub.s32 %v4859, %v4861
        %v4863 = vrot.slane %v4849, %v4862
        %v4864 = vcombine.low %v4840, %v4856
        %v4865 = vcombine.high %v4840, %v4856
        %v4866 = vcombine.low %v4847, %v4863
        %v4867 = vcombine.high %v4847, %v4863
        %v4868 = vpack.c.bf16 %v4796, %v4728
        %v4869 = vpack.c.bf16 %v4864, %v4864
        %v4870 = vpack.c.bf16 %v4797, %v4729
        %v4871 = vpack.c.bf16 %v4865, %v4865
        %v4872 = vpack.c.bf16 %v4798, %v4730
        %v4873 = vpack.c.bf16 %v4866, %v4866
        %v4874 = vpack.c.bf16 %v4799, %v4731
        %v4875 = vpack.c.bf16 %v4867, %v4867
        %v4877 = vsel %vm2472, %v3976, 0
        %v4880 = vsel %vm2472, %v3977, 0
        %v4883 = vsel %vm2472, %v4422, 0
        %v4886 = vsel %vm2472, %v4423, 0
        %4888 = vmatprep.subr.bf16.mxu0 0
        %4889 = vmatpush1.bf16.xpose.msra.mxu0 %v4883
        %4890 = vmatprep.subr.bf16.mxu0 0
        %4891 = vmatpush1.bf16.xpose.msra.mxu0 %v4886
        %4892 = vmatprep.subr.bf16.mxu0 0
        %4893 = vmatpush1.bf16.xpose.msra.mxu0 0
        %4894 = vmatprep.subr.bf16.mxu0 0
        %4895 = vmatpush1.bf16.xpose.msra.mxu0 0
        %4896 = vmatprep.subr.bf16.mxu0 0
        %4897 = vmatpush1.bf16.xpose.msra.mxu0 0
        %4898 = vmatprep.subr.bf16.mxu0 0
        %4899 = vmatpush1.bf16.xpose.msra.mxu0 0
        %4900 = vmatprep.subr.bf16.mxu0 0
        %4901 = vmatpush1.bf16.xpose.msra.mxu0 0
        %4902 = vmatprep.subr.bf16.mxu0 0
        %4903 = vmatpush1.bf16.xpose.msra.mxu0 0
        %4904 = vmatprep.subr.bf16.mxu0 0
        %4905 = vmatpush1.bf16.xpose.msra.mxu0 0
        %4906 = vmatprep.subr.bf16.mxu0 0
        %4907 = vmatpush1.bf16.xpose.msra.mxu0 0
        %4908 = vmatprep.subr.bf16.mxu0 0
        %4909 = vmatpush1.bf16.xpose.msra.mxu0 0
        %4910 = vmatprep.subr.bf16.mxu0 0
        %4911 = vmatpush1.bf16.xpose.msra.mxu0 0
        %4912 = vmatprep.subr.bf16.mxu0 0
        %4913 = vmatpush1.bf16.xpose.msra.mxu0 0
        %4914 = vmatprep.subr.bf16.mxu0 0
        %4915 = vmatpush1.bf16.xpose.msra.mxu0 0
        %4916 = vmatprep.subr.bf16.mxu0 0
        %4917 = vmatpush1.bf16.xpose.msra.mxu0 0
        %4918 = vmatprep.subr.bf16.mxu0 0
        %4919 = vmatpush1.bf16.xpose.msra.mxu0 0
        %4920 = vmatprep.mubr.bf16.mxu0 0
        %4921 = vmatmul.mubr.bf16.gmra.mrb[0].mxu0 %v4877
        %v4922 = vpop.f32.mrb[0].mxu0
        %v4923 = vadd.f32 0.0, %v4922
        %v4924 = vpop.f32.mrb[0].mxu0
        %v4925 = vpop.f32.mrb[0].mxu0
        %v4926 = vadd.f32 0.0, %v4925
        %v4927 = vpop.f32.mrb[0].mxu0
        %4928 = vmatprep.mubr.bf16.mxu0 0
        %4929 = vmatmul.mubr.bf16.gmra.mrb[0].mxu0 %v4880
        %v4930 = vpop.f32.mrb[0].mxu0
        %v4931 = vadd.f32 0.0, %v4930
        %v4932 = vpop.f32.mrb[0].mxu0
        %v4933 = vpop.f32.mrb[0].mxu0
        %v4934 = vpop.f32.mrb[0].mxu0
        %4935 = vdwg.mxu0
        %v4937 = vsel %vm2472, %v3978, 0
        %v4940 = vsel %vm2472, %v3979, 0
        %v4943 = vsel %vm2472, %v4424, 0
        %v4946 = vsel %vm2472, %v4425, 0
        %4948 = vmatprep.subr.bf16.mxu0 0
        %4949 = vmatpush1.bf16.xpose.msra.mxu0 %v4943
        %4950 = vmatprep.subr.bf16.mxu0 0
        %4951 = vmatpush1.bf16.xpose.msra.mxu0 %v4946
        %4952 = vmatprep.subr.bf16.mxu0 0
        %4953 = vmatpush1.bf16.xpose.msra.mxu0 0
        %4954 = vmatprep.subr.bf16.mxu0 0
        %4955 = vmatpush1.bf16.xpose.msra.mxu0 0
        %4956 = vmatprep.subr.bf16.mxu0 0
        %4957 = vmatpush1.bf16.xpose.msra.mxu0 0
        %4958 = vmatprep.subr.bf16.mxu0 0
        %4959 = vmatpush1.bf16.xpose.msra.mxu0 0
        %4960 = vmatprep.subr.bf16.mxu0 0
        %4961 = vmatpush1.bf16.xpose.msra.mxu0 0
        %4962 = vmatprep.subr.bf16.mxu0 0
        %4963 = vmatpush1.bf16.xpose.msra.mxu0 0
        %4964 = vmatprep.subr.bf16.mxu0 0
        %4965 = vmatpush1.bf16.xpose.msra.mxu0 0
        %4966 = vmatprep.subr.bf16.mxu0 0
        %4967 = vmatpush1.bf16.xpose.msra.mxu0 0
        %4968 = vmatprep.subr.bf16.mxu0 0
        %4969 = vmatpush1.bf16.xpose.msra.mxu0 0
        %4970 = vmatprep.subr.bf16.mxu0 0
        %4971 = vmatpush1.bf16.xpose.msra.mxu0 0
        %4972 = vmatprep.subr.bf16.mxu0 0
        %4973 = vmatpush1.bf16.xpose.msra.mxu0 0
        %4974 = vmatprep.subr.bf16.mxu0 0
        %4975 = vmatpush1.bf16.xpose.msra.mxu0 0
        %4976 = vmatprep.subr.bf16.mxu0 0
        %4977 = vmatpush1.bf16.xpose.msra.mxu0 0
        %4978 = vmatprep.subr.bf16.mxu0 0
        %4979 = vmatpush1.bf16.xpose.msra.mxu0 0
        %4980 = vmatprep.mubr.bf16.mxu0 0
        %4981 = vmatmul.mubr.bf16.gmra.mrb[0].mxu0 %v4937
        %v4982 = vpop.f32.mrb[0].mxu0
        %v4983 = vadd.f32 0.0, %v4982
        %v4984 = vpop.f32.mrb[0].mxu0
        %v4985 = vpop.f32.mrb[0].mxu0
        %v4986 = vadd.f32 0.0, %v4985
        %v4987 = vpop.f32.mrb[0].mxu0
        %4988 = vmatprep.mubr.bf16.mxu0 0
        %4989 = vmatmul.mubr.bf16.gmra.mrb[0].mxu0 %v4940
        %v4990 = vpop.f32.mrb[0].mxu0
        %v4991 = vadd.f32 0.0, %v4990
        %v4992 = vpop.f32.mrb[0].mxu0
        %v4993 = vpop.f32.mrb[0].mxu0
        %v4994 = vpop.f32.mrb[0].mxu0
        %4995 = vdwg.mxu0
        %v4997 = vsel %vm2472, %v3980, 0
        %v5000 = vsel %vm2472, %v3981, 0
        %v5003 = vsel %vm2472, %v4426, 0
        %v5006 = vsel %vm2472, %v4427, 0
        %5008 = vmatprep.subr.bf16.mxu0 0
        %5009 = vmatpush1.bf16.xpose.msra.mxu0 %v5003
        %5010 = vmatprep.subr.bf16.mxu0 0
        %5011 = vmatpush1.bf16.xpose.msra.mxu0 %v5006
        %5012 = vmatprep.subr.bf16.mxu0 0
        %5013 = vmatpush1.bf16.xpose.msra.mxu0 0
        %5014 = vmatprep.subr.bf16.mxu0 0
        %5015 = vmatpush1.bf16.xpose.msra.mxu0 0
        %5016 = vmatprep.subr.bf16.mxu0 0
        %5017 = vmatpush1.bf16.xpose.msra.mxu0 0
        %5018 = vmatprep.subr.bf16.mxu0 0
        %5019 = vmatpush1.bf16.xpose.msra.mxu0 0
        %5020 = vmatprep.subr.bf16.mxu0 0
        %5021 = vmatpush1.bf16.xpose.msra.mxu0 0
        %5022 = vmatprep.subr.bf16.mxu0 0
        %5023 = vmatpush1.bf16.xpose.msra.mxu0 0
        %5024 = vmatprep.subr.bf16.mxu0 0
        %5025 = vmatpush1.bf16.xpose.msra.mxu0 0
        %5026 = vmatprep.subr.bf16.mxu0 0
        %5027 = vmatpush1.bf16.xpose.msra.mxu0 0
        %5028 = vmatprep.subr.bf16.mxu0 0
        %5029 = vmatpush1.bf16.xpose.msra.mxu0 0
        %5030 = vmatprep.subr.bf16.mxu0 0
        %5031 = vmatpush1.bf16.xpose.msra.mxu0 0
        %5032 = vmatprep.subr.bf16.mxu0 0
        %5033 = vmatpush1.bf16.xpose.msra.mxu0 0
        %5034 = vmatprep.subr.bf16.mxu0 0
        %5035 = vmatpush1.bf16.xpose.msra.mxu0 0
        %5036 = vmatprep.subr.bf16.mxu0 0
        %5037 = vmatpush1.bf16.xpose.msra.mxu0 0
        %5038 = vmatprep.subr.bf16.mxu0 0
        %5039 = vmatpush1.bf16.xpose.msra.mxu0 0
        %5040 = vmatprep.mubr.bf16.mxu0 0
        %5041 = vmatmul.mubr.bf16.gmra.mrb[0].mxu0 %v4997
        %v5042 = vpop.f32.mrb[0].mxu0
        %v5043 = vadd.f32 0.0, %v5042
        %v5044 = vpop.f32.mrb[0].mxu0
        %v5045 = vpop.f32.mrb[0].mxu0
        %v5046 = vadd.f32 0.0, %v5045
        %v5047 = vpop.f32.mrb[0].mxu0
        %5048 = vmatprep.mubr.bf16.mxu0 0
        %5049 = vmatmul.mubr.bf16.gmra.mrb[0].mxu0 %v5000
        %v5050 = vpop.f32.mrb[0].mxu0
        %v5051 = vadd.f32 0.0, %v5050
        %v5052 = vpop.f32.mrb[0].mxu0
        %v5053 = vpop.f32.mrb[0].mxu0
        %v5054 = vpop.f32.mrb[0].mxu0
        %5055 = vdwg.mxu0
        %v5057 = vsel %vm2472, %v3982, 0
        %v5060 = vsel %vm2472, %v3983, 0
        %v5063 = vsel %vm2472, %v4428, 0
        %v5066 = vsel %vm2472, %v4429, 0
        %5068 = vmatprep.subr.bf16.mxu0 0
        %5069 = vmatpush1.bf16.xpose.msra.mxu0 %v5063
        %5070 = vmatprep.subr.bf16.mxu0 0
        %5071 = vmatpush1.bf16.xpose.msra.mxu0 %v5066
        %5072 = vmatprep.subr.bf16.mxu0 0
        %5073 = vmatpush1.bf16.xpose.msra.mxu0 0
        %5074 = vmatprep.subr.bf16.mxu0 0
        %5075 = vmatpush1.bf16.xpose.msra.mxu0 0
        %5076 = vmatprep.subr.bf16.mxu0 0
        %5077 = vmatpush1.bf16.xpose.msra.mxu0 0
        %5078 = vmatprep.subr.bf16.mxu0 0
        %5079 = vmatpush1.bf16.xpose.msra.mxu0 0
        %5080 = vmatprep.subr.bf16.mxu0 0
        %5081 = vmatpush1.bf16.xpose.msra.mxu0 0
        %5082 = vmatprep.subr.bf16.mxu0 0
        %5083 = vmatpush1.bf16.xpose.msra.mxu0 0
        %5084 = vmatprep.subr.bf16.mxu0 0
        %5085 = vmatpush1.bf16.xpose.msra.mxu0 0
        %5086 = vmatprep.subr.bf16.mxu0 0
        %5087 = vmatpush1.bf16.xpose.msra.mxu0 0
        %5088 = vmatprep.subr.bf16.mxu0 0
        %5089 = vmatpush1.bf16.xpose.msra.mxu0 0
        %5090 = vmatprep.subr.bf16.mxu0 0
        %5091 = vmatpush1.bf16.xpose.msra.mxu0 0
        %5092 = vmatprep.subr.bf16.mxu0 0
        %5093 = vmatpush1.bf16.xpose.msra.mxu0 0
        %5094 = vmatprep.subr.bf16.mxu0 0
        %5095 = vmatpush1.bf16.xpose.msra.mxu0 0
        %5096 = vmatprep.subr.bf16.mxu0 0
        %5097 = vmatpush1.bf16.xpose.msra.mxu0 0
        %5098 = vmatprep.subr.bf16.mxu0 0
        %5099 = vmatpush1.bf16.xpose.msra.mxu0 0
        %5100 = vmatprep.mubr.bf16.mxu0 0
        %5101 = vmatmul.mubr.bf16.gmra.mrb[0].mxu0 %v5057
        %v5102 = vpop.f32.mrb[0].mxu0
        %v5103 = vadd.f32 0.0, %v5102
        %v5104 = vpop.f32.mrb[0].mxu0
        %v5105 = vpop.f32.mrb[0].mxu0
        %v5106 = vadd.f32 0.0, %v5105
        %v5107 = vpop.f32.mrb[0].mxu0
        %5108 = vmatprep.mubr.bf16.mxu0 0
        %5109 = vmatmul.mubr.bf16.gmra.mrb[0].mxu0 %v5060
        %v5110 = vpop.f32.mrb[0].mxu0
        %v5111 = vadd.f32 0.0, %v5110
        %v5112 = vpop.f32.mrb[0].mxu0
        %v5113 = vpop.f32.mrb[0].mxu0
        %v5114 = vpop.f32.mrb[0].mxu0
        %5115 = vdwg.mxu0
        %v5116 = vsel %vm2713, %v4923, -inf
        %5117 = vmax.xlane.f32.xlu0 %v5116
        %v5118 = vpop.xlane.xlu0 %5117
        %v5119 = vsel %vm2713, %v4926, -inf
        %5120 = vmax.xlane.f32.xlu0 %v5119
        %v5121 = vpop.xlane.xlu0 %5120
        %v5122 = vsel %vm2713, %v4931, -inf
        %5123 = vmax.xlane.f32.xlu0 %v5122
        %v5124 = vpop.xlane.xlu0 %5123
        %v5125 = vsel %vm2713, %v4983, -inf
        %5126 = vmax.xlane.f32.xlu0 %v5125
        %v5127 = vpop.xlane.xlu0 %5126
        %v5128 = vsel %vm2713, %v4986, -inf
        %5129 = vmax.xlane.f32.xlu0 %v5128
        %v5130 = vpop.xlane.xlu0 %5129
        %v5131 = vsel %vm2713, %v4991, -inf
        %5132 = vmax.xlane.f32.xlu0 %v5131
        %v5133 = vpop.xlane.xlu0 %5132
        %v5134 = vsel %vm2713, %v5043, -inf
        %5135 = vmax.xlane.f32.xlu0 %v5134
        %v5136 = vpop.xlane.xlu0 %5135
        %v5137 = vsel %vm2713, %v5046, -inf
        %5138 = vmax.xlane.f32.xlu0 %v5137
        %v5139 = vpop.xlane.xlu0 %5138
        %v5140 = vsel %vm2713, %v5051, -inf
        %5141 = vmax.xlane.f32.xlu0 %v5140
        %v5142 = vpop.xlane.xlu0 %5141
        %v5143 = vsel %vm2713, %v5103, -inf
        %5144 = vmax.xlane.f32.xlu0 %v5143
        %v5145 = vpop.xlane.xlu0 %5144
        %v5146 = vsel %vm2713, %v5106, -inf
        %5147 = vmax.xlane.f32.xlu0 %v5146
        %v5148 = vpop.xlane.xlu0 %5147
        %v5149 = vsel %vm2713, %v5111, -inf
        %5150 = vmax.xlane.f32.xlu0 %v5149
        %v5151 = vpop.xlane.xlu0 %5150
        %v5152 = vsub.f32 %v4923, %v5118
        %v5153 = vsub.f32 %v4926, %v5121
        %v5154 = vsub.f32 %v4931, %v5124
        %v5155 = vsub.f32 %v4983, %v5127
        %v5156 = vsub.f32 %v4986, %v5130
        %v5157 = vsub.f32 %v4991, %v5133
        %v5158 = vsub.f32 %v5043, %v5136
        %v5159 = vsub.f32 %v5046, %v5139
        %v5160 = vsub.f32 %v5051, %v5142
        %v5161 = vsub.f32 %v5103, %v5145
        %v5162 = vsub.f32 %v5106, %v5148
        %v5163 = vsub.f32 %v5111, %v5151
        %v5164 = vmul.f32 %v5152, 1.442695
        %v5165 = vpow.pop %v5164
        %v5166 = vmul.f32 %v5153, 1.442695
        %v5167 = vpow.pop %v5166
        %v5168 = vmul.f32 %v5154, 1.442695
        %v5169 = vpow.pop %v5168
        %v5170 = vmul.f32 %v5155, 1.442695
        %v5171 = vpow.pop %v5170
        %v5172 = vmul.f32 %v5156, 1.442695
        %v5173 = vpow.pop %v5172
        %v5174 = vmul.f32 %v5157, 1.442695
        %v5175 = vpow.pop %v5174
        %v5176 = vmul.f32 %v5158, 1.442695
        %v5177 = vpow.pop %v5176
        %v5178 = vmul.f32 %v5159, 1.442695
        %v5179 = vpow.pop %v5178
        %v5180 = vmul.f32 %v5160, 1.442695
        %v5181 = vpow.pop %v5180
        %v5182 = vmul.f32 %v5161, 1.442695
        %v5183 = vpow.pop %v5182
        %v5184 = vmul.f32 %v5162, 1.442695
        %v5185 = vpow.pop %v5184
        %v5186 = vmul.f32 %v5163, 1.442695
        %v5187 = vpow.pop %v5186
        %v5188 = vsel %vm2713, %v5165, 0.0
        %5189 = vadd.xlane.f32.xlu0 %v5188
        %v5190 = vpop.xlane.xlu0 %5189
        %v5191 = vsel %vm2713, %v5167, 0.0
        %5192 = vadd.xlane.f32.xlu0 %v5191
        %v5193 = vpop.xlane.xlu0 %5192
        %v5194 = vsel %vm2713, %v5169, 0.0
        %5195 = vadd.xlane.f32.xlu0 %v5194
        %v5196 = vpop.xlane.xlu0 %5195
        %v5197 = vsel %vm2713, %v5171, 0.0
        %5198 = vadd.xlane.f32.xlu0 %v5197
        %v5199 = vpop.xlane.xlu0 %5198
        %v5200 = vsel %vm2713, %v5173, 0.0
        %5201 = vadd.xlane.f32.xlu0 %v5200
        %v5202 = vpop.xlane.xlu0 %5201
        %v5203 = vsel %vm2713, %v5175, 0.0
        %5204 = vadd.xlane.f32.xlu0 %v5203
        %v5205 = vpop.xlane.xlu0 %5204
        %v5206 = vsel %vm2713, %v5177, 0.0
        %5207 = vadd.xlane.f32.xlu0 %v5206
        %v5208 = vpop.xlane.xlu0 %5207
        %v5209 = vsel %vm2713, %v5179, 0.0
        %5210 = vadd.xlane.f32.xlu0 %v5209
        %v5211 = vpop.xlane.xlu0 %5210
        %v5212 = vsel %vm2713, %v5181, 0.0
        %5213 = vadd.xlane.f32.xlu0 %v5212
        %v5214 = vpop.xlane.xlu0 %5213
        %v5215 = vsel %vm2713, %v5183, 0.0
        %5216 = vadd.xlane.f32.xlu0 %v5215
        %v5217 = vpop.xlane.xlu0 %5216
        %v5218 = vsel %vm2713, %v5185, 0.0
        %5219 = vadd.xlane.f32.xlu0 %v5218
        %v5220 = vpop.xlane.xlu0 %5219
        %v5221 = vsel %vm2713, %v5187, 0.0
        %5222 = vadd.xlane.f32.xlu0 %v5221
        %v5223 = vpop.xlane.xlu0 %5222
        %v5224 = vrcp.pop %v5190
        %v5225 = vrcp.pop %v5193
        %v5226 = vrcp.pop %v5196
        %v5227 = vrcp.pop %v5199
        %v5228 = vrcp.pop %v5202
        %v5229 = vrcp.pop %v5205
        %v5230 = vrcp.pop %v5208
        %v5231 = vrcp.pop %v5211
        %v5232 = vrcp.pop %v5214
        %v5233 = vrcp.pop %v5217
        %v5234 = vrcp.pop %v5220
        %v5235 = vrcp.pop %v5223
        %v5236 = vmul.f32 %v5165, %v5224
        %v5237 = vmul.f32 %v5167, %v5225
        %v5238 = vmul.f32 %v5169, %v5226
        %v5239 = vmul.f32 %v5171, %v5227
        %v5240 = vmul.f32 %v5173, %v5228
        %v5241 = vmul.f32 %v5175, %v5229
        %v5242 = vmul.f32 %v5177, %v5230
        %v5243 = vmul.f32 %v5179, %v5231
        %v5244 = vmul.f32 %v5181, %v5232
        %v5245 = vmul.f32 %v5183, %v5233
        %v5246 = vmul.f32 %v5185, %v5234
        %v5247 = vmul.f32 %v5187, %v5235
        %v5248 = vpack.c.bf16 %v5237, %v5236
        %v5249 = vpack.c.bf16 %v5238, %v5238
        %v5250 = vpack.c.bf16 %v5240, %v5239
        %v5251 = vpack.c.bf16 %v5241, %v5241
        %v5252 = vpack.c.bf16 %v5243, %v5242
        %v5253 = vpack.c.bf16 %v5244, %v5244
        %v5254 = vpack.c.bf16 %v5246, %v5245
        %v5255 = vpack.c.bf16 %v5247, %v5247
        %v5257 = vsel %vm2713, %v5248, 0
        %v5260 = vsel %vm2713, %v5249, 0
        %v5263 = vsel %vm2860, %v4869, 0
        %5265 = vmatprep.subr.bf16.mxu0 0
        %5266 = vmatpush1.bf16.msra.mxu0 %v4868
        %5267 = vmatprep.subr.bf16.mxu0 0
        %5268 = vmatpush1.bf16.msra.mxu0 %v5263
        %5269 = vmatprep.subr.bf16.mxu0 0
        %5270 = vmatpush1.bf16.msra.mxu0 0
        %5271 = vmatprep.subr.bf16.mxu0 0
        %5272 = vmatpush1.bf16.msra.mxu0 0
        %5273 = vmatprep.subr.bf16.mxu0 0
        %5274 = vmatpush1.bf16.msra.mxu0 0
        %5275 = vmatprep.subr.bf16.mxu0 0
        %5276 = vmatpush1.bf16.msra.mxu0 0
        %5277 = vmatprep.subr.bf16.mxu0 0
        %5278 = vmatpush1.bf16.msra.mxu0 0
        %5279 = vmatprep.subr.bf16.mxu0 0
        %5280 = vmatpush1.bf16.msra.mxu0 0
        %5281 = vmatprep.subr.bf16.mxu0 0
        %5282 = vmatpush1.bf16.msra.mxu0 0
        %5283 = vmatprep.subr.bf16.mxu0 0
        %5284 = vmatpush1.bf16.msra.mxu0 0
        %5285 = vmatprep.subr.bf16.mxu0 0
        %5286 = vmatpush1.bf16.msra.mxu0 0
        %5287 = vmatprep.subr.bf16.mxu0 0
        %5288 = vmatpush1.bf16.msra.mxu0 0
        %5289 = vmatprep.subr.bf16.mxu0 0
        %5290 = vmatpush1.bf16.msra.mxu0 0
        %5291 = vmatprep.subr.bf16.mxu0 0
        %5292 = vmatpush1.bf16.msra.mxu0 0
        %5293 = vmatprep.subr.bf16.mxu0 0
        %5294 = vmatpush1.bf16.msra.mxu0 0
        %5295 = vmatprep.subr.bf16.mxu0 0
        %5296 = vmatpush1.bf16.msra.mxu0 0
        %5297 = vmatprep.mubr.bf16.mxu0 0
        %5298 = vmatmul.mubr.bf16.gmra.mrb[0].mxu0 %v5257
        %v5299 = vpop.f32.mrb[0].mxu0
        %v5300 = vadd.f32 0.0, %v5299
        %v5301 = vpop.f32.mrb[0].mxu0
        %v5302 = vpop.f32.mrb[0].mxu0
        %v5303 = vadd.f32 0.0, %v5302
        %v5304 = vpop.f32.mrb[0].mxu0
        %5305 = vmatprep.mubr.bf16.mxu0 0
        %5306 = vmatmul.mubr.bf16.gmra.mrb[0].mxu0 %v5260
        %v5307 = vpop.f32.mrb[0].mxu0
        %v5308 = vadd.f32 0.0, %v5307
        %v5309 = vpop.f32.mrb[0].mxu0
        %v5310 = vpop.f32.mrb[0].mxu0
        %v5311 = vpop.f32.mrb[0].mxu0
        %5312 = vdwg.mxu0
        %v5314 = vsel %vm2713, %v5250, 0
        %v5317 = vsel %vm2713, %v5251, 0
        %v5320 = vsel %vm2860, %v4871, 0
        %5322 = vmatprep.subr.bf16.mxu0 0
        %5323 = vmatpush1.bf16.msra.mxu0 %v4870
        %5324 = vmatprep.subr.bf16.mxu0 0
        %5325 = vmatpush1.bf16.msra.mxu0 %v5320
        %5326 = vmatprep.subr.bf16.mxu0 0
        %5327 = vmatpush1.bf16.msra.mxu0 0
        %5328 = vmatprep.subr.bf16.mxu0 0
        %5329 = vmatpush1.bf16.msra.mxu0 0
        %5330 = vmatprep.subr.bf16.mxu0 0
        %5331 = vmatpush1.bf16.msra.mxu0 0
        %5332 = vmatprep.subr.bf16.mxu0 0
        %5333 = vmatpush1.bf16.msra.mxu0 0
        %5334 = vmatprep.subr.bf16.mxu0 0
        %5335 = vmatpush1.bf16.msra.mxu0 0
        %5336 = vmatprep.subr.bf16.mxu0 0
        %5337 = vmatpush1.bf16.msra.mxu0 0
        %5338 = vmatprep.subr.bf16.mxu0 0
        %5339 = vmatpush1.bf16.msra.mxu0 0
        %5340 = vmatprep.subr.bf16.mxu0 0
        %5341 = vmatpush1.bf16.msra.mxu0 0
        %5342 = vmatprep.subr.bf16.mxu0 0
        %5343 = vmatpush1.bf16.msra.mxu0 0
        %5344 = vmatprep.subr.bf16.mxu0 0
        %5345 = vmatpush1.bf16.msra.mxu0 0
        %5346 = vmatprep.subr.bf16.mxu0 0
        %5347 = vmatpush1.bf16.msra.mxu0 0
        %5348 = vmatprep.subr.bf16.mxu0 0
        %5349 = vmatpush1.bf16.msra.mxu0 0
        %5350 = vmatprep.subr.bf16.mxu0 0
        %5351 = vmatpush1.bf16.msra.mxu0 0
        %5352 = vmatprep.subr.bf16.mxu0 0
        %5353 = vmatpush1.bf16.msra.mxu0 0
        %5354 = vmatprep.mubr.bf16.mxu0 0
        %5355 = vmatmul.mubr.bf16.gmra.mrb[0].mxu0 %v5314
        %v5356 = vpop.f32.mrb[0].mxu0
        %v5357 = vadd.f32 0.0, %v5356
        %v5358 = vpop.f32.mrb[0].mxu0
        %v5359 = vpop.f32.mrb[0].mxu0
        %v5360 = vadd.f32 0.0, %v5359
        %v5361 = vpop.f32.mrb[0].mxu0
        %5362 = vmatprep.mubr.bf16.mxu0 0
        %5363 = vmatmul.mubr.bf16.gmra.mrb[0].mxu0 %v5317
        %v5364 = vpop.f32.mrb[0].mxu0
        %v5365 = vadd.f32 0.0, %v5364
        %v5366 = vpop.f32.mrb[0].mxu0
        %v5367 = vpop.f32.mrb[0].mxu0
        %v5368 = vpop.f32.mrb[0].mxu0
        %5369 = vdwg.mxu0
        %v5371 = vsel %vm2713, %v5252, 0
        %v5374 = vsel %vm2713, %v5253, 0
        %v5377 = vsel %vm2860, %v4873, 0
        %5379 = vmatprep.subr.bf16.mxu0 0
        %5380 = vmatpush1.bf16.msra.mxu0 %v4872
        %5381 = vmatprep.subr.bf16.mxu0 0
        %5382 = vmatpush1.bf16.msra.mxu0 %v5377
        %5383 = vmatprep.subr.bf16.mxu0 0
        %5384 = vmatpush1.bf16.msra.mxu0 0
        %5385 = vmatprep.subr.bf16.mxu0 0
        %5386 = vmatpush1.bf16.msra.mxu0 0
        %5387 = vmatprep.subr.bf16.mxu0 0
        %5388 = vmatpush1.bf16.msra.mxu0 0
        %5389 = vmatprep.subr.bf16.mxu0 0
        %5390 = vmatpush1.bf16.msra.mxu0 0
        %5391 = vmatprep.subr.bf16.mxu0 0
        %5392 = vmatpush1.bf16.msra.mxu0 0
        %5393 = vmatprep.subr.bf16.mxu0 0
        %5394 = vmatpush1.bf16.msra.mxu0 0
        %5395 = vmatprep.subr.bf16.mxu0 0
        %5396 = vmatpush1.bf16.msra.mxu0 0
        %5397 = vmatprep.subr.bf16.mxu0 0
        %5398 = vmatpush1.bf16.msra.mxu0 0
        %5399 = vmatprep.subr.bf16.mxu0 0
        %5400 = vmatpush1.bf16.msra.mxu0 0
        %5401 = vmatprep.subr.bf16.mxu0 0
        %5402 = vmatpush1.bf16.msra.mxu0 0
        %5403 = vmatprep.subr.bf16.mxu0 0
        %5404 = vmatpush1.bf16.msra.mxu0 0
        %5405 = vmatprep.subr.bf16.mxu0 0
        %5406 = vmatpush1.bf16.msra.mxu0 0
        %5407 = vmatprep.subr.bf16.mxu0 0
        %5408 = vmatpush1.bf16.msra.mxu0 0
        %5409 = vmatprep.subr.bf16.mxu0 0
        %5410 = vmatpush1.bf16.msra.mxu0 0
        %5411 = vmatprep.mubr.bf16.mxu0 0
        %5412 = vmatmul.mubr.bf16.gmra.mrb[0].mxu0 %v5371
        %v5413 = vpop.f32.mrb[0].mxu0
        %v5414 = vadd.f32 0.0, %v5413
        %v5415 = vpop.f32.mrb[0].mxu0
        %v5416 = vpop.f32.mrb[0].mxu0
        %v5417 = vadd.f32 0.0, %v5416
        %v5418 = vpop.f32.mrb[0].mxu0
        %5419 = vmatprep.mubr.bf16.mxu0 0
        %5420 = vmatmul.mubr.bf16.gmra.mrb[0].mxu0 %v5374
        %v5421 = vpop.f32.mrb[0].mxu0
        %v5422 = vadd.f32 0.0, %v5421
        %v5423 = vpop.f32.mrb[0].mxu0
        %v5424 = vpop.f32.mrb[0].mxu0
        %v5425 = vpop.f32.mrb[0].mxu0
        %5426 = vdwg.mxu0
        %v5428 = vsel %vm2713, %v5254, 0
        %v5431 = vsel %vm2713, %v5255, 0
        %v5434 = vsel %vm2860, %v4875, 0
        %5436 = vmatprep.subr.bf16.mxu0 0
        %5437 = vmatpush1.bf16.msra.mxu0 %v4874
        %5438 = vmatprep.subr.bf16.mxu0 0
        %5439 = vmatpush1.bf16.msra.mxu0 %v5434
        %5440 = vmatprep.subr.bf16.mxu0 0
        %5441 = vmatpush1.bf16.msra.mxu0 0
        %5442 = vmatprep.subr.bf16.mxu0 0
        %5443 = vmatpush1.bf16.msra.mxu0 0
        %5444 = vmatprep.subr.bf16.mxu0 0
        %5445 = vmatpush1.bf16.msra.mxu0 0
        %5446 = vmatprep.subr.bf16.mxu0 0
        %5447 = vmatpush1.bf16.msra.mxu0 0
        %5448 = vmatprep.subr.bf16.mxu0 0
        %5449 = vmatpush1.bf16.msra.mxu0 0
        %5450 = vmatprep.subr.bf16.mxu0 0
        %5451 = vmatpush1.bf16.msra.mxu0 0
        %5452 = vmatprep.subr.bf16.mxu0 0
        %5453 = vmatpush1.bf16.msra.mxu0 0
        %5454 = vmatprep.subr.bf16.mxu0 0
        %5455 = vmatpush1.bf16.msra.mxu0 0
        %5456 = vmatprep.subr.bf16.mxu0 0
        %5457 = vmatpush1.bf16.msra.mxu0 0
        %5458 = vmatprep.subr.bf16.mxu0 0
        %5459 = vmatpush1.bf16.msra.mxu0 0
        %5460 = vmatprep.subr.bf16.mxu0 0
        %5461 = vmatpush1.bf16.msra.mxu0 0
        %5462 = vmatprep.subr.bf16.mxu0 0
        %5463 = vmatpush1.bf16.msra.mxu0 0
        %5464 = vmatprep.subr.bf16.mxu0 0
        %5465 = vmatpush1.bf16.msra.mxu0 0
        %5466 = vmatprep.subr.bf16.mxu0 0
        %5467 = vmatpush1.bf16.msra.mxu0 0
        %5468 = vmatprep.mubr.bf16.mxu0 0
        %5469 = vmatmul.mubr.bf16.gmra.mrb[0].mxu0 %v5428
        %v5470 = vpop.f32.mrb[0].mxu0
        %v5471 = vadd.f32 0.0, %v5470
        %v5472 = vpop.f32.mrb[0].mxu0
        %v5473 = vpop.f32.mrb[0].mxu0
        %v5474 = vadd.f32 0.0, %v5473
        %v5475 = vpop.f32.mrb[0].mxu0
        %5476 = vmatprep.mubr.bf16.mxu0 0
        %5477 = vmatmul.mubr.bf16.gmra.mrb[0].mxu0 %v5431
        %v5478 = vpop.f32.mrb[0].mxu0
        %v5479 = vadd.f32 0.0, %v5478
        %v5480 = vpop.f32.mrb[0].mxu0
        %v5481 = vpop.f32.mrb[0].mxu0
        %v5482 = vpop.f32.mrb[0].mxu0
        %5483 = vdwg.mxu0
        %v5484 = vcombine.low %v5300, %v5414
        %v5485 = vcombine.high %v5300, %v5414
        %v5487 = vunpack.c.l.s4 1983009808
        %v5488 = vunpack.c.0.s8 %v5487
        %v5489 = vlaneseq
        %v5490 = vshrl.u32 %v5489, 7
        %v5491 = vsub.s32 %v5488, %v5490
        %v5492 = vrot.slane %v5484, %v5491
        %v5494 = vunpack.c.l.s4 1983009808
        %v5495 = vunpack.c.0.s8 %v5494
        %v5496 = vlaneseq
        %v5497 = vshrl.u32 %v5496, 7
        %v5498 = vsub.s32 %v5495, %v5497
        %v5499 = vrot.slane %v5485, %v5498
        %v5500 = vcombine.low %v5357, %v5471
        %v5501 = vcombine.high %v5357, %v5471
        %v5503 = vunpack.c.l.s4 1983009808
        %v5504 = vunpack.c.0.s8 %v5503
        %v5505 = vlaneseq
        %v5506 = vshrl.u32 %v5505, 7
        %v5507 = vsub.s32 %v5504, %v5506
        %v5508 = vrot.slane %v5500, %v5507
        %v5510 = vunpack.c.l.s4 1983009808
        %v5511 = vunpack.c.0.s8 %v5510
        %v5512 = vlaneseq
        %v5513 = vshrl.u32 %v5512, 7
        %v5514 = vsub.s32 %v5511, %v5513
        %v5515 = vrot.slane %v5501, %v5514
        %v5516 = vcombine.low %v5492, %v5508
        %v5517 = vcombine.high %v5492, %v5508
        %v5519 = vunpack.c.l.s4 1934713408
        %v5520 = vunpack.c.0.s8 %v5519
        %v5521 = vlaneseq
        %v5522 = vshrl.u32 %v5521, 7
        %v5523 = vsub.s32 %v5520, %v5522
        %v5524 = vrot.slane %v5516, %v5523
        %v5526 = vunpack.c.l.s4 1934713408
        %v5527 = vunpack.c.0.s8 %v5526
        %v5528 = vlaneseq
        %v5529 = vshrl.u32 %v5528, 7
        %v5530 = vsub.s32 %v5527, %v5529
        %v5531 = vrot.slane %v5517, %v5530
        %v5532 = vcombine.low %v5499, %v5515
        %v5533 = vcombine.high %v5499, %v5515
        %v5535 = vunpack.c.l.s4 1934713408
        %v5536 = vunpack.c.0.s8 %v5535
        %v5537 = vlaneseq
        %v5538 = vshrl.u32 %v5537, 7
        %v5539 = vsub.s32 %v5536, %v5538
        %v5540 = vrot.slane %v5532, %v5539
        %v5542 = vunpack.c.l.s4 1934713408
        %v5543 = vunpack.c.0.s8 %v5542
        %v5544 = vlaneseq
        %v5545 = vshrl.u32 %v5544, 7
        %v5546 = vsub.s32 %v5543, %v5545
        %v5547 = vrot.slane %v5533, %v5546
        %v5548 = vcombine.high %v5524, 0.0
        %v5549 = vcombine.high %v5531, 0.0
        %v5550 = vcombine.high %v5540, 0.0
        %v5551 = vcombine.high %v5547, 0.0
        %v5552 = vcombine.low %v5303, %v5417
        %v5553 = vcombine.high %v5303, %v5417
        %v5555 = vunpack.c.l.s4 1983009808
        %v5556 = vunpack.c.0.s8 %v5555
        %v5557 = vlaneseq
        %v5558 = vshrl.u32 %v5557, 7
        %v5559 = vsub.s32 %v5556, %v5558
        %v5560 = vrot.slane %v5552, %v5559
        %v5562 = vunpack.c.l.s4 1983009808
        %v5563 = vunpack.c.0.s8 %v5562
        %v5564 = vlaneseq
        %v5565 = vshrl.u32 %v5564, 7
        %v5566 = vsub.s32 %v5563, %v5565
        %v5567 = vrot.slane %v5553, %v5566
        %v5568 = vcombine.low %v5360, %v5474
        %v5569 = vcombine.high %v5360, %v5474
        %v5571 = vunpack.c.l.s4 1983009808
        %v5572 = vunpack.c.0.s8 %v5571
        %v5573 = vlaneseq
        %v5574 = vshrl.u32 %v5573, 7
        %v5575 = vsub.s32 %v5572, %v5574
        %v5576 = vrot.slane %v5568, %v5575
        %v5578 = vunpack.c.l.s4 1983009808
        %v5579 = vunpack.c.0.s8 %v5578
        %v5580 = vlaneseq
        %v5581 = vshrl.u32 %v5580, 7
        %v5582 = vsub.s32 %v5579, %v5581
        %v5583 = vrot.slane %v5569, %v5582
        %v5584 = vcombine.low %v5560, %v5576
        %v5585 = vcombine.high %v5560, %v5576
        %v5587 = vunpack.c.l.s4 1934713408
        %v5588 = vunpack.c.0.s8 %v5587
        %v5589 = vlaneseq
        %v5590 = vshrl.u32 %v5589, 7
        %v5591 = vsub.s32 %v5588, %v5590
        %v5592 = vrot.slane %v5584, %v5591
        %v5594 = vunpack.c.l.s4 1934713408
        %v5595 = vunpack.c.0.s8 %v5594
        %v5596 = vlaneseq
        %v5597 = vshrl.u32 %v5596, 7
        %v5598 = vsub.s32 %v5595, %v5597
        %v5599 = vrot.slane %v5585, %v5598
        %v5600 = vcombine.low %v5567, %v5583
        %v5601 = vcombine.high %v5567, %v5583
        %v5603 = vunpack.c.l.s4 1934713408
        %v5604 = vunpack.c.0.s8 %v5603
        %v5605 = vlaneseq
        %v5606 = vshrl.u32 %v5605, 7
        %v5607 = vsub.s32 %v5604, %v5606
        %v5608 = vrot.slane %v5600, %v5607
        %v5610 = vunpack.c.l.s4 1934713408
        %v5611 = vunpack.c.0.s8 %v5610
        %v5612 = vlaneseq
        %v5613 = vshrl.u32 %v5612, 7
        %v5614 = vsub.s32 %v5611, %v5613
        %v5615 = vrot.slane %v5601, %v5614
        %v5616 = vcombine.high %v5592, 0.0
        %v5617 = vcombine.high %v5599, 0.0
        %v5618 = vcombine.high %v5608, 0.0
        %v5619 = vcombine.high %v5615, 0.0
        %v5620 = vcombine.low %v5308, %v5422
        %v5621 = vcombine.high %v5308, %v5422
        %v5623 = vunpack.c.l.s4 1983009808
        %v5624 = vunpack.c.0.s8 %v5623
        %v5625 = vlaneseq
        %v5626 = vshrl.u32 %v5625, 7
        %v5627 = vsub.s32 %v5624, %v5626
        %v5628 = vrot.slane %v5620, %v5627
        %v5630 = vunpack.c.l.s4 1983009808
        %v5631 = vunpack.c.0.s8 %v5630
        %v5632 = vlaneseq
        %v5633 = vshrl.u32 %v5632, 7
        %v5634 = vsub.s32 %v5631, %v5633
        %v5635 = vrot.slane %v5621, %v5634
        %v5636 = vcombine.low %v5365, %v5479
        %v5637 = vcombine.high %v5365, %v5479
        %v5639 = vunpack.c.l.s4 1983009808
        %v5640 = vunpack.c.0.s8 %v5639
        %v5641 = vlaneseq
        %v5642 = vshrl.u32 %v5641, 7
        %v5643 = vsub.s32 %v5640, %v5642
        %v5644 = vrot.slane %v5636, %v5643
        %v5646 = vunpack.c.l.s4 1983009808
        %v5647 = vunpack.c.0.s8 %v5646
        %v5648 = vlaneseq
        %v5649 = vshrl.u32 %v5648, 7
        %v5650 = vsub.s32 %v5647, %v5649
        %v5651 = vrot.slane %v5637, %v5650
        %v5652 = vcombine.low %v5628, %v5644
        %v5653 = vcombine.high %v5628, %v5644
        %v5655 = vunpack.c.l.s4 1934713408
        %v5656 = vunpack.c.0.s8 %v5655
        %v5657 = vlaneseq
        %v5658 = vshrl.u32 %v5657, 7
        %v5659 = vsub.s32 %v5656, %v5658
        %v5660 = vrot.slane %v5652, %v5659
        %v5662 = vunpack.c.l.s4 1934713408
        %v5663 = vunpack.c.0.s8 %v5662
        %v5664 = vlaneseq
        %v5665 = vshrl.u32 %v5664, 7
        %v5666 = vsub.s32 %v5663, %v5665
        %v5667 = vrot.slane %v5653, %v5666
        %v5668 = vcombine.low %v5635, %v5651
        %v5669 = vcombine.high %v5635, %v5651
        %v5671 = vunpack.c.l.s4 1934713408
        %v5672 = vunpack.c.0.s8 %v5671
        %v5673 = vlaneseq
        %v5674 = vshrl.u32 %v5673, 7
        %v5675 = vsub.s32 %v5672, %v5674
        %v5676 = vrot.slane %v5668, %v5675
        %v5678 = vunpack.c.l.s4 1934713408
        %v5679 = vunpack.c.0.s8 %v5678
        %v5680 = vlaneseq
        %v5681 = vshrl.u32 %v5680, 7
        %v5682 = vsub.s32 %v5679, %v5681
        %v5683 = vrot.slane %v5669, %v5682
        %v5684 = vcombine.high %v5660, 0.0
        %v5685 = vcombine.high %v5667, 0.0
        %v5686 = vcombine.high %v5676, 0.0
        %v5687 = vcombine.high %v5683, 0.0
        %v5688 = vcombine.low %v5524, %v5531
        %v5690 = vunpack.c.l.s4 1983009808
        %v5691 = vunpack.c.0.s8 %v5690
        %v5692 = vlaneseq
        %v5693 = vshrl.u32 %v5692, 7
        %v5694 = vsub.s32 %v5691, %v5693
        %v5695 = vrot.slane %v5688, %v5694
        %v5696 = vcombine.low %v5548, %v5549
        %v5698 = vunpack.c.l.s4 1983009808
        %v5699 = vunpack.c.0.s8 %v5698
        %v5700 = vlaneseq
        %v5701 = vshrl.u32 %v5700, 7
        %v5702 = vsub.s32 %v5699, %v5701
        %v5703 = vrot.slane %v5696, %v5702
        %v5704 = vcombine.low %v5540, %v5547
        %v5706 = vunpack.c.l.s4 1983009808
        %v5707 = vunpack.c.0.s8 %v5706
        %v5708 = vlaneseq
        %v5709 = vshrl.u32 %v5708, 7
        %v5710 = vsub.s32 %v5707, %v5709
        %v5711 = vrot.slane %v5704, %v5710
        %v5712 = vcombine.low %v5550, %v5551
        %v5714 = vunpack.c.l.s4 1983009808
        %v5715 = vunpack.c.0.s8 %v5714
        %v5716 = vlaneseq
        %v5717 = vshrl.u32 %v5716, 7
        %v5718 = vsub.s32 %v5715, %v5717
        %v5719 = vrot.slane %v5712, %v5718
        %v5720 = vcombine.low %v5695, %v5703
        %v5721 = vcombine.high %v5695, %v5703
        %v5723 = vunpack.c.l.s4 1934713408
        %v5724 = vunpack.c.0.s8 %v5723
        %v5725 = vlaneseq
        %v5726 = vshrl.u32 %v5725, 7
        %v5727 = vsub.s32 %v5724, %v5726
        %v5728 = vrot.slane %v5720, %v5727
        %v5730 = vunpack.c.l.s4 1934713408
        %v5731 = vunpack.c.0.s8 %v5730
        %v5732 = vlaneseq
        %v5733 = vshrl.u32 %v5732, 7
        %v5734 = vsub.s32 %v5731, %v5733
        %v5735 = vrot.slane %v5721, %v5734
        %v5736 = vcombine.low %v5711, %v5719
        %v5737 = vcombine.high %v5711, %v5719
        %v5739 = vunpack.c.l.s4 1934713408
        %v5740 = vunpack.c.0.s8 %v5739
        %v5741 = vlaneseq
        %v5742 = vshrl.u32 %v5741, 7
        %v5743 = vsub.s32 %v5740, %v5742
        %v5744 = vrot.slane %v5736, %v5743
        %v5746 = vunpack.c.l.s4 1934713408
        %v5747 = vunpack.c.0.s8 %v5746
        %v5748 = vlaneseq
        %v5749 = vshrl.u32 %v5748, 7
        %v5750 = vsub.s32 %v5747, %v5749
        %v5751 = vrot.slane %v5737, %v5750
        %v5752 = vcombine.low %v5728, %v5744
        %v5753 = vcombine.high %v5728, %v5744
        %v5754 = vcombine.low %v5735, %v5751
        %v5755 = vcombine.high %v5735, %v5751
        %v5756 = vcombine.low %v5592, %v5599
        %v5758 = vunpack.c.l.s4 1983009808
        %v5759 = vunpack.c.0.s8 %v5758
        %v5760 = vlaneseq
        %v5761 = vshrl.u32 %v5760, 7
        %v5762 = vsub.s32 %v5759, %v5761
        %v5763 = vrot.slane %v5756, %v5762
        %v5764 = vcombine.low %v5616, %v5617
        %v5766 = vunpack.c.l.s4 1983009808
        %v5767 = vunpack.c.0.s8 %v5766
        %v5768 = vlaneseq
        %v5769 = vshrl.u32 %v5768, 7
        %v5770 = vsub.s32 %v5767, %v5769
        %v5771 = vrot.slane %v5764, %v5770
        %v5772 = vcombine.low %v5608, %v5615
        %v5774 = vunpack.c.l.s4 1983009808
        %v5775 = vunpack.c.0.s8 %v5774
        %v5776 = vlaneseq
        %v5777 = vshrl.u32 %v5776, 7
        %v5778 = vsub.s32 %v5775, %v5777
        %v5779 = vrot.slane %v5772, %v5778
        %v5780 = vcombine.low %v5618, %v5619
        %v5782 = vunpack.c.l.s4 1983009808
        %v5783 = vunpack.c.0.s8 %v5782
        %v5784 = vlaneseq
        %v5785 = vshrl.u32 %v5784, 7
        %v5786 = vsub.s32 %v5783, %v5785
        %v5787 = vrot.slane %v5780, %v5786
        %v5788 = vcombine.low %v5763, %v5771
        %v5789 = vcombine.high %v5763, %v5771
        %v5791 = vunpack.c.l.s4 1934713408
        %v5792 = vunpack.c.0.s8 %v5791
        %v5793 = vlaneseq
        %v5794 = vshrl.u32 %v5793, 7
        %v5795 = vsub.s32 %v5792, %v5794
        %v5796 = vrot.slane %v5788, %v5795
        %v5798 = vunpack.c.l.s4 1934713408
        %v5799 = vunpack.c.0.s8 %v5798
        %v5800 = vlaneseq
        %v5801 = vshrl.u32 %v5800, 7
        %v5802 = vsub.s32 %v5799, %v5801
        %v5803 = vrot.slane %v5789, %v5802
        %v5804 = vcombine.low %v5779, %v5787
        %v5805 = vcombine.high %v5779, %v5787
        %v5807 = vunpack.c.l.s4 1934713408
        %v5808 = vunpack.c.0.s8 %v5807
        %v5809 = vlaneseq
        %v5810 = vshrl.u32 %v5809, 7
        %v5811 = vsub.s32 %v5808, %v5810
        %v5812 = vrot.slane %v5804, %v5811
        %v5814 = vunpack.c.l.s4 1934713408
        %v5815 = vunpack.c.0.s8 %v5814
        %v5816 = vlaneseq
        %v5817 = vshrl.u32 %v5816, 7
        %v5818 = vsub.s32 %v5815, %v5817
        %v5819 = vrot.slane %v5805, %v5818
        %v5820 = vcombine.low %v5796, %v5812
        %v5821 = vcombine.high %v5796, %v5812
        %v5822 = vcombine.low %v5803, %v5819
        %v5823 = vcombine.high %v5803, %v5819
        %v5824 = vcombine.low %v5660, %v5667
        %v5826 = vunpack.c.l.s4 1983009808
        %v5827 = vunpack.c.0.s8 %v5826
        %v5828 = vlaneseq
        %v5829 = vshrl.u32 %v5828, 7
        %v5830 = vsub.s32 %v5827, %v5829
        %v5831 = vrot.slane %v5824, %v5830
        %v5832 = vcombine.low %v5684, %v5685
        %v5834 = vunpack.c.l.s4 1983009808
        %v5835 = vunpack.c.0.s8 %v5834
        %v5836 = vlaneseq
        %v5837 = vshrl.u32 %v5836, 7
        %v5838 = vsub.s32 %v5835, %v5837
        %v5839 = vrot.slane %v5832, %v5838
        %v5840 = vcombine.low %v5676, %v5683
        %v5842 = vunpack.c.l.s4 1983009808
        %v5843 = vunpack.c.0.s8 %v5842
        %v5844 = vlaneseq
        %v5845 = vshrl.u32 %v5844, 7
        %v5846 = vsub.s32 %v5843, %v5845
        %v5847 = vrot.slane %v5840, %v5846
        %v5848 = vcombine.low %v5686, %v5687
        %v5850 = vunpack.c.l.s4 1983009808
        %v5851 = vunpack.c.0.s8 %v5850
        %v5852 = vlaneseq
        %v5853 = vshrl.u32 %v5852, 7
        %v5854 = vsub.s32 %v5851, %v5853
        %v5855 = vrot.slane %v5848, %v5854
        %v5856 = vcombine.low %v5831, %v5839
        %v5857 = vcombine.high %v5831, %v5839
        %v5859 = vunpack.c.l.s4 1934713408
        %v5860 = vunpack.c.0.s8 %v5859
        %v5861 = vlaneseq
        %v5862 = vshrl.u32 %v5861, 7
        %v5863 = vsub.s32 %v5860, %v5862
        %v5864 = vrot.slane %v5856, %v5863
        %v5866 = vunpack.c.l.s4 1934713408
        %v5867 = vunpack.c.0.s8 %v5866
        %v5868 = vlaneseq
        %v5869 = vshrl.u32 %v5868, 7
        %v5870 = vsub.s32 %v5867, %v5869
        %v5871 = vrot.slane %v5857, %v5870
        %v5872 = vcombine.low %v5847, %v5855
        %v5873 = vcombine.high %v5847, %v5855
        %v5875 = vunpack.c.l.s4 1934713408
        %v5876 = vunpack.c.0.s8 %v5875
        %v5877 = vlaneseq
        %v5878 = vshrl.u32 %v5877, 7
        %v5879 = vsub.s32 %v5876, %v5878
        %v5880 = vrot.slane %v5872, %v5879
        %v5882 = vunpack.c.l.s4 1934713408
        %v5883 = vunpack.c.0.s8 %v5882
        %v5884 = vlaneseq
        %v5885 = vshrl.u32 %v5884, 7
        %v5886 = vsub.s32 %v5883, %v5885
        %v5887 = vrot.slane %v5873, %v5886
        %v5888 = vcombine.low %v5864, %v5880
        %v5889 = vcombine.high %v5864, %v5880
        %v5890 = vcombine.low %v5871, %v5887
        %v5891 = vcombine.high %v5871, %v5887
        %5895 = vrot.lane.b32.xlu0 %v5753, 32
        %v5896 = vpop.permute.xlu0 %5895
        %5897 = vrot.lane.b32.xlu0 %v5821, 32
        %v5898 = vpop.permute.xlu0 %5897
        %5899 = vrot.lane.b32.xlu0 %v5889, 32
        %v5900 = vpop.permute.xlu0 %5899
        %5907 = vrot.lane.b32.xlu0 %v5754, 64
        %v5908 = vpop.permute.xlu0 %5907
        %5909 = vrot.lane.b32.xlu0 %v5822, 64
        %v5910 = vpop.permute.xlu0 %5909
        %5911 = vrot.lane.b32.xlu0 %v5890, 64
        %v5912 = vpop.permute.xlu0 %5911
        %5919 = vrot.lane.b32.xlu0 %v5755, 96
        %v5920 = vpop.permute.xlu0 %5919
        %5921 = vrot.lane.b32.xlu0 %v5823, 96
        %v5922 = vpop.permute.xlu0 %5921
        %5923 = vrot.lane.b32.xlu0 %v5891, 96
        %v5924 = vpop.permute.xlu0 %5923
        %v5928 = vsel %vm2472, %v5752, %v5896
        %v5929 = vsel %vm2472, %v5820, %v5898
        %v5930 = vsel %vm2472, %v5888, %v5900
        %v5931 = vsel %vm3530, %v5928, %v5908
        %v5932 = vsel %vm3530, %v5929, %v5910
        %v5933 = vsel %vm3530, %v5930, %v5912
        %v5934 = vsel %vm3534, %v5931, %v5920
        %v5935 = vsel %vm3534, %v5932, %v5922
        %v5936 = vsel %vm3534, %v5933, %v5924
        %v5937 = vpack.c.bf16 %v3536, %v3535
        %v5938 = vpack.c.bf16 %v5934, %v3537
        %v5939 = vpack.c.bf16 %v5936, %v5935
        %v5940 = vld [vmem:[%s590] sm:$0xf]
        %v5941 = vld [vmem:[%s590 + $0x4] sm:$0xf]
        %v5942 = vld [vmem:[%s590 + $0x8] sm:$0xf]
        %v5943 = vld [vmem:[%s590 + $0xc] sm:$0xf]
        %v5944 = vld [vmem:[%s590 + $0x10] sm:$0xf]
        %v5945 = vld [vmem:[%s590 + $0x14] sm:$0xf]
        %v5946 = vld [vmem:[%s590 + $0x18] sm:$0xf]
        %v5947 = vld [vmem:[%s590 + $0x1c] sm:$0xf]
        %v5948 = vld [vmem:[%s590 + $0x20] sm:$0xf]
        %v5949 = vld [vmem:[%s590 + $0x24] sm:$0xf]
        %v5950 = vld [vmem:[%s590 + $0x28] sm:$0xf]
        %v5951 = vld [vmem:[%s590 + $0x2c] sm:$0xf]
        %v5952 = vld [vmem:[%s590 + $0x30] sm:$0xf]
        %v5953 = vld [vmem:[%s590 + $0x34] sm:$0xf]
        %v5954 = vld [vmem:[%s590 + $0x38] sm:$0xf]
        %v5955 = vld [vmem:[%s590 + $0x3c] sm:$0xf]
        %v5956 = vld [vmem:[%s598] sm:$0x1]
        %v5958 = vlaneseq
        %v5959 = vshrl.u32 %v5958, 7
        %v5960 = vsub.s32 0, %v5959
        %v5961 = vrot.slane %v5956, %v5960
        %v5979 = vunpack.c.l.b16 %v5940
        %v5980 = vunpack.c.l.b16 %v5941
        %v5981 = vunpack.c.l.b16 %v5942
        %v5982 = vunpack.c.l.b16 %v5943
        %v5983 = vunpack.c.l.b16 %v5944
        %v5984 = vunpack.c.l.b16 %v5945
        %v5985 = vunpack.c.l.b16 %v5946
        %v5986 = vunpack.c.l.b16 %v5947
        %v5987 = vunpack.c.l.b16 %v5948
        %v5988 = vunpack.c.l.b16 %v5949
        %v5989 = vunpack.c.l.b16 %v5950
        %v5990 = vunpack.c.l.b16 %v5951
        %v5991 = vunpack.c.l.b16 %v5952
        %v5992 = vunpack.c.l.b16 %v5953
        %v5993 = vunpack.c.l.b16 %v5954
        %v5994 = vunpack.c.l.b16 %v5955
        %v5995 = vpack.c.b16 %v5980, %v5979
        %v5996 = vpack.c.b16 %v5982, %v5981
        %v5997 = vpack.c.b16 %v5984, %v5983
        %v5998 = vpack.c.b16 %v5986, %v5985
        %v5999 = vpack.c.b16 %v5988, %v5987
        %v6000 = vpack.c.b16 %v5990, %v5989
        %v6001 = vpack.c.b16 %v5992, %v5991
        %v6002 = vpack.c.b16 %v5994, %v5993
        %6011 = vmatprep.subr.bf16.mxu0 0
        %6012 = vmatpush1.bf16.msra.mxu0 %v5995
        %6013 = vmatprep.subr.bf16.mxu0 0
        %6014 = vmatpush1.bf16.msra.mxu0 %v5996
        %6015 = vmatprep.subr.bf16.mxu0 0
        %6016 = vmatpush1.bf16.msra.mxu0 %v5997
        %6017 = vmatprep.subr.bf16.mxu0 0
        %6018 = vmatpush1.bf16.msra.mxu0 %v5998
        %6019 = vmatprep.subr.bf16.mxu0 0
        %6020 = vmatpush1.bf16.msra.mxu0 %v5999
        %6021 = vmatprep.subr.bf16.mxu0 0
        %6022 = vmatpush1.bf16.msra.mxu0 %v6000
        %6023 = vmatprep.subr.bf16.mxu0 0
        %6024 = vmatpush1.bf16.msra.mxu0 %v6001
        %6025 = vmatprep.subr.bf16.mxu0 0
        %6026 = vmatpush1.bf16.msra.mxu0 %v6002
        %6027 = vmatprep.subr.bf16.mxu0 0
        %6028 = vmatpush1.bf16.msra.mxu0 0
        %6029 = vmatprep.subr.bf16.mxu0 0
        %6030 = vmatpush1.bf16.msra.mxu0 0
        %6031 = vmatprep.subr.bf16.mxu0 0
        %6032 = vmatpush1.bf16.msra.mxu0 0
        %6033 = vmatprep.subr.bf16.mxu0 0
        %6034 = vmatpush1.bf16.msra.mxu0 0
        %6035 = vmatprep.subr.bf16.mxu0 0
        %6036 = vmatpush1.bf16.msra.mxu0 0
        %6037 = vmatprep.subr.bf16.mxu0 0
        %6038 = vmatpush1.bf16.msra.mxu0 0
        %6039 = vmatprep.subr.bf16.mxu0 0
        %6040 = vmatpush1.bf16.msra.mxu0 0
        %6041 = vmatprep.subr.bf16.mxu0 0
        %6042 = vmatpush1.bf16.msra.mxu0 0
        %6043 = vmatprep.mubr.bf16.mxu0 0
        %6044 = vmatmul.mubr.bf16.gmra.mrb[0].mxu0 %v5937
        %v6045 = vpop.f32.mrb[0].mxu0
        %v6046 = vadd.f32 %v5961, %v6045
        %v6047 = vpop.f32.mrb[0].mxu0
        %v6048 = vpop.f32.mrb[0].mxu0
        %v6049 = vadd.f32 %v5961, %v6048
        %v6050 = vpop.f32.mrb[0].mxu0
        %6051 = vmatprep.mubr.bf16.mxu0 0
        %6052 = vmatmul.mubr.bf16.gmra.mrb[0].mxu0 %v5938
        %v6053 = vpop.f32.mrb[0].mxu0
        %v6054 = vadd.f32 %v5961, %v6053
        %v6055 = vpop.f32.mrb[0].mxu0
        %v6056 = vpop.f32.mrb[0].mxu0
        %v6057 = vadd.f32 %v5961, %v6056
        %v6058 = vpop.f32.mrb[0].mxu0
        %6059 = vmatprep.mubr.bf16.mxu0 0
        %6060 = vmatmul.mubr.bf16.gmra.mrb[0].mxu0 %v5939
        %v6061 = vpop.f32.mrb[0].mxu0
        %v6062 = vadd.f32 %v5961, %v6061
        %v6063 = vpop.f32.mrb[0].mxu0
        %v6064 = vpop.f32.mrb[0].mxu0
        %v6065 = vadd.f32 %v5961, %v6064
        %v6066 = vpop.f32.mrb[0].mxu0
        %6067 = vdwg.mxu0
        %v6068 = vlaneseq
        %v6069 = vshrl.u32 %v6068, 7
        %v6070 = vsub.s32 2, %v6069
        %v6071 = vrot.slane %v729, %v6070
        %v6072 = vlaneseq
        %v6073 = vshrl.u32 %v6072, 7
        %v6074 = vsub.s32 2, %v6073
        %v6075 = vrot.slane %v730, %v6074
        %v6076 = vmul.f32 %v6071, %v6046
        %v6077 = vmul.f32 %v6071, %v6049
        %v6078 = vmul.f32 %v6071, %v6054
        %v6079 = vmul.f32 %v6075, %v6057
        %v6080 = vmul.f32 %v6075, %v6062
        %v6081 = vmul.f32 %v6075, %v6065
        %v6082 = vadd.f32 %v723, %v6076
        %v6083 = vadd.f32 %v724, %v6077
        %v6084 = vadd.f32 %v725, %v6078
        %v6085 = vadd.f32 %v726, %v6079
        %v6086 = vadd.f32 %v727, %v6080
        %v6087 = vadd.f32 %v728, %v6081
        %6088 = vadd.xlane.f32.xlu0 %v6082
        %v6089 = vpop.xlane.xlu0 %6088
        %6090 = vadd.xlane.f32.xlu0 %v6083
        %v6091 = vpop.xlane.xlu0 %6090
        %6092 = vadd.xlane.f32.xlu0 %v6084
        %v6093 = vpop.xlane.xlu0 %6092
        %6094 = vadd.xlane.f32.xlu0 %v6085
        %v6095 = vpop.xlane.xlu0 %6094
        %6096 = vadd.xlane.f32.xlu0 %v6086
        %v6097 = vpop.xlane.xlu0 %6096
        %6098 = vadd.xlane.f32.xlu0 %v6087
        %v6099 = vpop.xlane.xlu0 %6098
        %v6100 = vmul.f32 %v6089, %v743
        %v6101 = vmul.f32 %v6091, %v743
        %v6102 = vmul.f32 %v6093, %v743
        %v6103 = vmul.f32 %v6095, %v743
        %v6104 = vmul.f32 %v6097, %v743
        %v6105 = vmul.f32 %v6099, %v743
        %v6106 = vsub.f32 %v6082, %v6100
        %v6107 = vsub.f32 %v6083, %v6101
        %v6108 = vsub.f32 %v6084, %v6102
        %v6109 = vsub.f32 %v6085, %v6103
        %v6110 = vsub.f32 %v6086, %v6104
        %v6111 = vsub.f32 %v6087, %v6105
        %v6112 = vmul.f32 %v6106, %v6106
        %v6113 = vmul.f32 %v6107, %v6107
        %v6114 = vmul.f32 %v6108, %v6108
        %v6115 = vmul.f32 %v6109, %v6109
        %v6116 = vmul.f32 %v6110, %v6110
        %v6117 = vmul.f32 %v6111, %v6111
        %6118 = vadd.xlane.f32.xlu0 %v6112
        %v6119 = vpop.xlane.xlu0 %6118
        %6120 = vadd.xlane.f32.xlu0 %v6113
        %v6121 = vpop.xlane.xlu0 %6120
        %6122 = vadd.xlane.f32.xlu0 %v6114
        %v6123 = vpop.xlane.xlu0 %6122
        %6124 = vadd.xlane.f32.xlu0 %v6115
        %v6125 = vpop.xlane.xlu0 %6124
        %6126 = vadd.xlane.f32.xlu0 %v6116
        %v6127 = vpop.xlane.xlu0 %6126
        %6128 = vadd.xlane.f32.xlu0 %v6117
        %v6129 = vpop.xlane.xlu0 %6128
        %v6130 = vmul.f32 %v6119, %v743
        %v6131 = vmul.f32 %v6121, %v743
        %v6132 = vmul.f32 %v6123, %v743
        %v6133 = vmul.f32 %v6125, %v743
        %v6134 = vmul.f32 %v6127, %v743
        %v6135 = vmul.f32 %v6129, %v743
        %v6136 = vadd.f32 %v6130, 1e-06
        %v6137 = vadd.f32 %v6131, 1e-06
        %v6138 = vadd.f32 %v6132, 1e-06
        %v6139 = vadd.f32 %v6133, 1e-06
        %v6140 = vadd.f32 %v6134, 1e-06
        %v6141 = vadd.f32 %v6135, 1e-06
        %v6142 = vrsqrt.pop %v6136
        %v6143 = vrsqrt.pop %v6137
        %v6144 = vrsqrt.pop %v6138
        %v6145 = vrsqrt.pop %v6139
        %v6146 = vrsqrt.pop %v6140
        %v6147 = vrsqrt.pop %v6141
        %v6148 = vmul.f32 %v6106, %v6142
        %v6149 = vmul.f32 %v6107, %v6143
        %v6150 = vmul.f32 %v6108, %v6144
        %v6151 = vmul.f32 %v6109, %v6145
        %v6152 = vmul.f32 %v6110, %v6146
        %v6153 = vmul.f32 %v6111, %v6147
        %v6154 = vlaneseq
        %v6155 = vshrl.u32 %v6154, 7
        %v6156 = vsub.s32 4, %v6155
        %v6157 = vrot.slane %v798, %v6156
        %v6158 = vlaneseq
        %v6159 = vshrl.u32 %v6158, 7
        %v6160 = vsub.s32 4, %v6159
        %v6161 = vrot.slane %v799, %v6160
        %v6162 = vmul.f32 %v6148, %v6157
        %v6163 = vmul.f32 %v6149, %v6157
        %v6164 = vmul.f32 %v6150, %v6157
        %v6165 = vmul.f32 %v6151, %v6161
        %v6166 = vmul.f32 %v6152, %v6161
        %v6167 = vmul.f32 %v6153, %v6161
        %v6168 = vlaneseq
        %v6169 = vshrl.u32 %v6168, 7
        %v6170 = vsub.s32 3, %v6169
        %v6171 = vrot.slane %v729, %v6170
        %v6172 = vlaneseq
        %v6173 = vshrl.u32 %v6172, 7
        %v6174 = vsub.s32 3, %v6173
        %v6175 = vrot.slane %v730, %v6174
        %v6176 = vadd.f32 %v6162, %v6171
        %v6177 = vadd.f32 %v6163, %v6171
        %v6178 = vadd.f32 %v6164, %v6171
        %v6179 = vadd.f32 %v6165, %v6175
        %v6180 = vadd.f32 %v6166, %v6175
        %v6181 = vadd.f32 %v6167, %v6175
        %v6182 = vpack.c.bf16 %v6177, %v6176
        %v6183 = vpack.c.bf16 %v6179, %v6178
        %v6184 = vpack.c.bf16 %v6181, %v6180
        %v6185 = vld [vmem:[%s607] sm:$0xff]
        %v6186 = vld [vmem:[%s607 + $0x8] sm:$0xff]
        %v6187 = vld [vmem:[%s607 + $0x10] sm:$0xff]
        %v6188 = vld [vmem:[%s607 + $0x18] sm:$0xff]
        %v6189 = vld [vmem:[%s607 + $0x20] sm:$0xff]
        %v6190 = vld [vmem:[%s607 + $0x28] sm:$0xff]
        %v6191 = vld [vmem:[%s607 + $0x30] sm:$0xff]
        %v6192 = vld [vmem:[%s607 + $0x38] sm:$0xff]
        %v6193 = vld [vmem:[%s607 + $0x40] sm:$0xff]
        %v6194 = vld [vmem:[%s607 + $0x48] sm:$0xff]
        %v6195 = vld [vmem:[%s607 + $0x50] sm:$0xff]
        %v6196 = vld [vmem:[%s607 + $0x58] sm:$0xff]
        %v6197 = vld [vmem:[%s607 + $0x60] sm:$0xff]
        %v6198 = vld [vmem:[%s607 + $0x68] sm:$0xff]
        %v6199 = vld [vmem:[%s607 + $0x70] sm:$0xff]
        %v6200 = vld [vmem:[%s607 + $0x78] sm:$0xff]
        %v6201 = vld [vmem:[%s607 + $0x80] sm:$0xff]
        %v6202 = vld [vmem:[%s607 + $0x88] sm:$0xff]
        %v6203 = vld [vmem:[%s607 + $0x90] sm:$0xff]
        %v6204 = vld [vmem:[%s607 + $0x98] sm:$0xff]
        %v6205 = vld [vmem:[%s607 + $0xa0] sm:$0xff]
        %v6206 = vld [vmem:[%s607 + $0xa8] sm:$0xff]
        %v6207 = vld [vmem:[%s607 + $0xb0] sm:$0xff]
        %v6208 = vld [vmem:[%s607 + $0xb8] sm:$0xff]
        %v6209 = vld [vmem:[%s607 + $0xc0] sm:$0xff]
        %v6210 = vld [vmem:[%s607 + $0xc8] sm:$0xff]
        %v6211 = vld [vmem:[%s607 + $0xd0] sm:$0xff]
        %v6212 = vld [vmem:[%s607 + $0xd8] sm:$0xff]
        %v6213 = vld [vmem:[%s607 + $0xe0] sm:$0xff]
        %v6214 = vld [vmem:[%s607 + $0xe8] sm:$0xff]
        %v6215 = vld [vmem:[%s607 + $0xf0] sm:$0xff]
        %v6216 = vld [vmem:[%s607 + $0xf8] sm:$0xff]
        %v6217 = vld [vmem:[%s616] sm:$0xf]
        %v6219 = vlaneseq
        %v6220 = vshrl.u32 %v6219, 7
        %v6221 = vsub.s32 0, %v6220
        %v6222 = vrot.slane %v6217, %v6221
        %v6223 = vlaneseq
        %v6224 = vshrl.u32 %v6223, 7
        %v6225 = vsub.s32 1, %v6224
        %v6226 = vrot.slane %v6217, %v6225
        %v6227 = vlaneseq
        %v6228 = vshrl.u32 %v6227, 7
        %v6229 = vsub.s32 2, %v6228
        %v6230 = vrot.slane %v6217, %v6229
        %v6231 = vlaneseq
        %v6232 = vshrl.u32 %v6231, 7
        %v6233 = vsub.s32 3, %v6232
        %v6234 = vrot.slane %v6217, %v6233
        %v6271 = vunpack.c.l.b16 %v6185
        %v6272 = vunpack.c.h.b16 %v6185
        %v6273 = vunpack.c.l.b16 %v6186
        %v6274 = vunpack.c.h.b16 %v6186
        %v6275 = vunpack.c.l.b16 %v6187
        %v6276 = vunpack.c.h.b16 %v6187
        %v6277 = vunpack.c.l.b16 %v6188
        %v6278 = vunpack.c.h.b16 %v6188
        %v6279 = vunpack.c.l.b16 %v6189
        %v6280 = vunpack.c.h.b16 %v6189
        %v6281 = vunpack.c.l.b16 %v6190
        %v6282 = vunpack.c.h.b16 %v6190
        %v6283 = vunpack.c.l.b16 %v6191
        %v6284 = vunpack.c.h.b16 %v6191
        %v6285 = vunpack.c.l.b16 %v6192
        %v6286 = vunpack.c.h.b16 %v6192
        %v6287 = vunpack.c.l.b16 %v6193
        %v6288 = vunpack.c.h.b16 %v6193
        %v6289 = vunpack.c.l.b16 %v6194
        %v6290 = vunpack.c.h.b16 %v6194
        %v6291 = vunpack.c.l.b16 %v6195
        %v6292 = vunpack.c.h.b16 %v6195
        %v6293 = vunpack.c.l.b16 %v6196
        %v6294 = vunpack.c.h.b16 %v6196
        %v6295 = vunpack.c.l.b16 %v6197
        %v6296 = vunpack.c.h.b16 %v6197
        %v6297 = vunpack.c.l.b16 %v6198
        %v6298 = vunpack.c.h.b16 %v6198
        %v6299 = vunpack.c.l.b16 %v6199
        %v6300 = vunpack.c.h.b16 %v6199
        %v6301 = vunpack.c.l.b16 %v6200
        %v6302 = vunpack.c.h.b16 %v6200
        %v6303 = vunpack.c.l.b16 %v6201
        %v6304 = vunpack.c.h.b16 %v6201
        %v6305 = vunpack.c.l.b16 %v6202
        %v6306 = vunpack.c.h.b16 %v6202
        %v6307 = vunpack.c.l.b16 %v6203
        %v6308 = vunpack.c.h.b16 %v6203
        %v6309 = vunpack.c.l.b16 %v6204
        %v6310 = vunpack.c.h.b16 %v6204
        %v6311 = vunpack.c.l.b16 %v6205
        %v6312 = vunpack.c.h.b16 %v6205
        %v6313 = vunpack.c.l.b16 %v6206
        %v6314 = vunpack.c.h.b16 %v6206
        %v6315 = vunpack.c.l.b16 %v6207
        %v6316 = vunpack.c.h.b16 %v6207
        %v6317 = vunpack.c.l.b16 %v6208
        %v6318 = vunpack.c.h.b16 %v6208
        %v6319 = vunpack.c.l.b16 %v6209
        %v6320 = vunpack.c.h.b16 %v6209
        %v6321 = vunpack.c.l.b16 %v6210
        %v6322 = vunpack.c.h.b16 %v6210
        %v6323 = vunpack.c.l.b16 %v6211
        %v6324 = vunpack.c.h.b16 %v6211
        %v6325 = vunpack.c.l.b16 %v6212
        %v6326 = vunpack.c.h.b16 %v6212
        %v6327 = vunpack.c.l.b16 %v6213
        %v6328 = vunpack.c.h.b16 %v6213
        %v6329 = vunpack.c.l.b16 %v6214
        %v6330 = vunpack.c.h.b16 %v6214
        %v6331 = vunpack.c.l.b16 %v6215
        %v6332 = vunpack.c.h.b16 %v6215
        %v6333 = vunpack.c.l.b16 %v6216
        %v6334 = vunpack.c.h.b16 %v6216
        %v6335 = vpack.c.b16 %v6275, %v6271
        %v6336 = vpack.c.b16 %v6276, %v6272
        %v6337 = vpack.c.b16 %v6277, %v6273
        %v6338 = vpack.c.b16 %v6278, %v6274
        %v6339 = vpack.c.b16 %v6283, %v6279
        %v6340 = vpack.c.b16 %v6284, %v6280
        %v6341 = vpack.c.b16 %v6285, %v6281
        %v6342 = vpack.c.b16 %v6286, %v6282
        %v6343 = vpack.c.b16 %v6291, %v6287
        %v6344 = vpack.c.b16 %v6292, %v6288
        %v6345 = vpack.c.b16 %v6293, %v6289
        %v6346 = vpack.c.b16 %v6294, %v6290
        %v6347 = vpack.c.b16 %v6299, %v6295
        %v6348 = vpack.c.b16 %v6300, %v6296
        %v6349 = vpack.c.b16 %v6301, %v6297
        %v6350 = vpack.c.b16 %v6302, %v6298
        %v6351 = vpack.c.b16 %v6307, %v6303
        %v6352 = vpack.c.b16 %v6308, %v6304
        %v6353 = vpack.c.b16 %v6309, %v6305
        %v6354 = vpack.c.b16 %v6310, %v6306
        %v6355 = vpack.c.b16 %v6315, %v6311
        %v6356 = vpack.c.b16 %v6316, %v6312
        %v6357 = vpack.c.b16 %v6317, %v6313
        %v6358 = vpack.c.b16 %v6318, %v6314
        %v6359 = vpack.c.b16 %v6323, %v6319
        %v6360 = vpack.c.b16 %v6324, %v6320
        %v6361 = vpack.c.b16 %v6325, %v6321
        %v6362 = vpack.c.b16 %v6326, %v6322
        %v6363 = vpack.c.b16 %v6331, %v6327
        %v6364 = vpack.c.b16 %v6332, %v6328
        %v6365 = vpack.c.b16 %v6333, %v6329
        %v6366 = vpack.c.b16 %v6334, %v6330
        %6399 = vmatprep.subr.bf16.mxu0 %v6336
        %6400 = vmatpush1.bf16.msra.mxu0 %v6335
        %6401 = vmatprep.subr.bf16.mxu0 %v6340
        %6402 = vmatpush1.bf16.msra.mxu0 %v6339
        %6403 = vmatprep.subr.bf16.mxu0 %v6344
        %6404 = vmatpush1.bf16.msra.mxu0 %v6343
        %6405 = vmatprep.subr.bf16.mxu0 %v6348
        %6406 = vmatpush1.bf16.msra.mxu0 %v6347
        %6407 = vmatprep.subr.bf16.mxu0 %v6352
        %6408 = vmatpush1.bf16.msra.mxu0 %v6351
        %6409 = vmatprep.subr.bf16.mxu0 %v6356
        %6410 = vmatpush1.bf16.msra.mxu0 %v6355
        %6411 = vmatprep.subr.bf16.mxu0 %v6360
        %6412 = vmatpush1.bf16.msra.mxu0 %v6359
        %6413 = vmatprep.subr.bf16.mxu0 %v6364
        %6414 = vmatpush1.bf16.msra.mxu0 %v6363
        %6415 = vmatprep.subr.bf16.mxu0 0
        %6416 = vmatpush1.bf16.msra.mxu0 0
        %6417 = vmatprep.subr.bf16.mxu0 0
        %6418 = vmatpush1.bf16.msra.mxu0 0
        %6419 = vmatprep.subr.bf16.mxu0 0
        %6420 = vmatpush1.bf16.msra.mxu0 0
        %6421 = vmatprep.subr.bf16.mxu0 0
        %6422 = vmatpush1.bf16.msra.mxu0 0
        %6423 = vmatprep.subr.bf16.mxu0 0
        %6424 = vmatpush1.bf16.msra.mxu0 0
        %6425 = vmatprep.subr.bf16.mxu0 0
        %6426 = vmatpush1.bf16.msra.mxu0 0
        %6427 = vmatprep.subr.bf16.mxu0 0
        %6428 = vmatpush1.bf16.msra.mxu0 0
        %6429 = vmatprep.subr.bf16.mxu0 0
        %6430 = vmatpush1.bf16.msra.mxu0 0
        %6431 = vmatprep.mubr.bf16.mxu0 0
        %6432 = vmatmul.mubr.bf16.gmra.mrb[0].mxu0 %v6182
        %v6433 = vpop.f32.mrb[0].mxu0
        %v6434 = vadd.f32 %v6222, %v6433
        %v6435 = vpop.f32.mrb[0].mxu0
        %v6436 = vadd.f32 %v6226, %v6435
        %v6437 = vpop.f32.mrb[0].mxu0
        %v6438 = vadd.f32 %v6222, %v6437
        %v6439 = vpop.f32.mrb[0].mxu0
        %v6440 = vadd.f32 %v6226, %v6439
        %6441 = vmatprep.mubr.bf16.mxu0 0
        %6442 = vmatmul.mubr.bf16.gmra.mrb[0].mxu0 %v6183
        %v6443 = vpop.f32.mrb[0].mxu0
        %v6444 = vadd.f32 %v6222, %v6443
        %v6445 = vpop.f32.mrb[0].mxu0
        %v6446 = vadd.f32 %v6226, %v6445
        %v6447 = vpop.f32.mrb[0].mxu0
        %v6448 = vadd.f32 %v6222, %v6447
        %v6449 = vpop.f32.mrb[0].mxu0
        %v6450 = vadd.f32 %v6226, %v6449
        %6451 = vmatprep.mubr.bf16.mxu0 0
        %6452 = vmatmul.mubr.bf16.gmra.mrb[0].mxu0 %v6184
        %v6453 = vpop.f32.mrb[0].mxu0
        %v6454 = vadd.f32 %v6222, %v6453
        %v6455 = vpop.f32.mrb[0].mxu0
        %v6456 = vadd.f32 %v6226, %v6455
        %v6457 = vpop.f32.mrb[0].mxu0
        %v6458 = vadd.f32 %v6222, %v6457
        %v6459 = vpop.f32.mrb[0].mxu0
        %v6460 = vadd.f32 %v6226, %v6459
        %6461 = vdwg.mxu0
        %6462 = vmatprep.subr.bf16.mxu0 %v6338
        %6463 = vmatpush1.bf16.msra.mxu0 %v6337
        %6464 = vmatprep.subr.bf16.mxu0 %v6342
        %6465 = vmatpush1.bf16.msra.mxu0 %v6341
        %6466 = vmatprep.subr.bf16.mxu0 %v6346
        %6467 = vmatpush1.bf16.msra.mxu0 %v6345
        %6468 = vmatprep.subr.bf16.mxu0 %v6350
        %6469 = vmatpush1.bf16.msra.mxu0 %v6349
        %6470 = vmatprep.subr.bf16.mxu0 %v6354
        %6471 = vmatpush1.bf16.msra.mxu0 %v6353
        %6472 = vmatprep.subr.bf16.mxu0 %v6358
        %6473 = vmatpush1.bf16.msra.mxu0 %v6357
        %6474 = vmatprep.subr.bf16.mxu0 %v6362
        %6475 = vmatpush1.bf16.msra.mxu0 %v6361
        %6476 = vmatprep.subr.bf16.mxu0 %v6366
        %6477 = vmatpush1.bf16.msra.mxu0 %v6365
        %6478 = vmatprep.subr.bf16.mxu0 0
        %6479 = vmatpush1.bf16.msra.mxu0 0
        %6480 = vmatprep.subr.bf16.mxu0 0
        %6481 = vmatpush1.bf16.msra.mxu0 0
        %6482 = vmatprep.subr.bf16.mxu0 0
        %6483 = vmatpush1.bf16.msra.mxu0 0
        %6484 = vmatprep.subr.bf16.mxu0 0
        %6485 = vmatpush1.bf16.msra.mxu0 0
        %6486 = vmatprep.subr.bf16.mxu0 0
        %6487 = vmatpush1.bf16.msra.mxu0 0
        %6488 = vmatprep.subr.bf16.mxu0 0
        %6489 = vmatpush1.bf16.msra.mxu0 0
        %6490 = vmatprep.subr.bf16.mxu0 0
        %6491 = vmatpush1.bf16.msra.mxu0 0
        %6492 = vmatprep.subr.bf16.mxu0 0
        %6493 = vmatpush1.bf16.msra.mxu0 0
        %6494 = vmatprep.mubr.bf16.mxu0 0
        %6495 = vmatmul.mubr.bf16.gmra.mrb[0].mxu0 %v6182
        %v6496 = vpop.f32.mrb[0].mxu0
        %v6497 = vadd.f32 %v6230, %v6496
        %v6498 = vpop.f32.mrb[0].mxu0
        %v6499 = vadd.f32 %v6234, %v6498
        %v6500 = vpop.f32.mrb[0].mxu0
        %v6501 = vadd.f32 %v6230, %v6500
        %v6502 = vpop.f32.mrb[0].mxu0
        %v6503 = vadd.f32 %v6234, %v6502
        %6504 = vmatprep.mubr.bf16.mxu0 0
        %6505 = vmatmul.mubr.bf16.gmra.mrb[0].mxu0 %v6183
        %v6506 = vpop.f32.mrb[0].mxu0
        %v6507 = vadd.f32 %v6230, %v6506
        %v6508 = vpop.f32.mrb[0].mxu0
        %v6509 = vadd.f32 %v6234, %v6508
        %v6510 = vpop.f32.mrb[0].mxu0
        %v6511 = vadd.f32 %v6230, %v6510
        %v6512 = vpop.f32.mrb[0].mxu0
        %v6513 = vadd.f32 %v6234, %v6512
        %6514 = vmatprep.mubr.bf16.mxu0 0
        %6515 = vmatmul.mubr.bf16.gmra.mrb[0].mxu0 %v6184
        %v6516 = vpop.f32.mrb[0].mxu0
        %v6517 = vadd.f32 %v6230, %v6516
        %v6518 = vpop.f32.mrb[0].mxu0
        %v6519 = vadd.f32 %v6234, %v6518
        %v6520 = vpop.f32.mrb[0].mxu0
        %v6521 = vadd.f32 %v6230, %v6520
        %v6522 = vpop.f32.mrb[0].mxu0
        %v6523 = vadd.f32 %v6234, %v6522
        %6524 = vdwg.mxu0
        %v6525 = vmul.f32 %v6434, %v6434
        %v6526 = vmul.f32 %v6436, %v6436
        %v6527 = vmul.f32 %v6497, %v6497
        %v6528 = vmul.f32 %v6499, %v6499
        %v6529 = vmul.f32 %v6438, %v6438
        %v6530 = vmul.f32 %v6440, %v6440
        %v6531 = vmul.f32 %v6501, %v6501
        %v6532 = vmul.f32 %v6503, %v6503
        %v6533 = vmul.f32 %v6444, %v6444
        %v6534 = vmul.f32 %v6446, %v6446
        %v6535 = vmul.f32 %v6507, %v6507
        %v6536 = vmul.f32 %v6509, %v6509
        %v6537 = vmul.f32 %v6448, %v6448
        %v6538 = vmul.f32 %v6450, %v6450
        %v6539 = vmul.f32 %v6511, %v6511
        %v6540 = vmul.f32 %v6513, %v6513
        %v6541 = vmul.f32 %v6454, %v6454
        %v6542 = vmul.f32 %v6456, %v6456
        %v6543 = vmul.f32 %v6517, %v6517
        %v6544 = vmul.f32 %v6519, %v6519
        %v6545 = vmul.f32 %v6458, %v6458
        %v6546 = vmul.f32 %v6460, %v6460
        %v6547 = vmul.f32 %v6521, %v6521
        %v6548 = vmul.f32 %v6523, %v6523
        %v6549 = vmul.f32 %v6434, %v6525
        %v6550 = vmul.f32 %v6436, %v6526
        %v6551 = vmul.f32 %v6497, %v6527
        %v6552 = vmul.f32 %v6499, %v6528
        %v6553 = vmul.f32 %v6438, %v6529
        %v6554 = vmul.f32 %v6440, %v6530
        %v6555 = vmul.f32 %v6501, %v6531
        %v6556 = vmul.f32 %v6503, %v6532
        %v6557 = vmul.f32 %v6444, %v6533
        %v6558 = vmul.f32 %v6446, %v6534
        %v6559 = vmul.f32 %v6507, %v6535
        %v6560 = vmul.f32 %v6509, %v6536
        %v6561 = vmul.f32 %v6448, %v6537
        %v6562 = vmul.f32 %v6450, %v6538
        %v6563 = vmul.f32 %v6511, %v6539
        %v6564 = vmul.f32 %v6513, %v6540
        %v6565 = vmul.f32 %v6454, %v6541
        %v6566 = vmul.f32 %v6456, %v6542
        %v6567 = vmul.f32 %v6517, %v6543
        %v6568 = vmul.f32 %v6519, %v6544
        %v6569 = vmul.f32 %v6458, %v6545
        %v6570 = vmul.f32 %v6460, %v6546
        %v6571 = vmul.f32 %v6521, %v6547
        %v6572 = vmul.f32 %v6523, %v6548
        %v6573 = vmul.f32 %v6549, 0.044715
        %v6574 = vmul.f32 %v6550, 0.044715
        %v6575 = vmul.f32 %v6551, 0.044715
        %v6576 = vmul.f32 %v6552, 0.044715
        %v6577 = vmul.f32 %v6553, 0.044715
        %v6578 = vmul.f32 %v6554, 0.044715
        %v6579 = vmul.f32 %v6555, 0.044715
        %v6580 = vmul.f32 %v6556, 0.044715
        %v6581 = vmul.f32 %v6557, 0.044715
        %v6582 = vmul.f32 %v6558, 0.044715
        %v6583 = vmul.f32 %v6559, 0.044715
        %v6584 = vmul.f32 %v6560, 0.044715
        %v6585 = vmul.f32 %v6561, 0.044715
        %v6586 = vmul.f32 %v6562, 0.044715
        %v6587 = vmul.f32 %v6563, 0.044715
        %v6588 = vmul.f32 %v6564, 0.044715
        %v6589 = vmul.f32 %v6565, 0.044715
        %v6590 = vmul.f32 %v6566, 0.044715
        %v6591 = vmul.f32 %v6567, 0.044715
        %v6592 = vmul.f32 %v6568, 0.044715
        %v6593 = vmul.f32 %v6569, 0.044715
        %v6594 = vmul.f32 %v6570, 0.044715
        %v6595 = vmul.f32 %v6571, 0.044715
        %v6596 = vmul.f32 %v6572, 0.044715
        %v6597 = vadd.f32 %v6434, %v6573
        %v6598 = vadd.f32 %v6436, %v6574
        %v6599 = vadd.f32 %v6497, %v6575
        %v6600 = vadd.f32 %v6499, %v6576
        %v6601 = vadd.f32 %v6438, %v6577
        %v6602 = vadd.f32 %v6440, %v6578
        %v6603 = vadd.f32 %v6501, %v6579
        %v6604 = vadd.f32 %v6503, %v6580
        %v6605 = vadd.f32 %v6444, %v6581
        %v6606 = vadd.f32 %v6446, %v6582
        %v6607 = vadd.f32 %v6507, %v6583
        %v6608 = vadd.f32 %v6509, %v6584
        %v6609 = vadd.f32 %v6448, %v6585
        %v6610 = vadd.f32 %v6450, %v6586
        %v6611 = vadd.f32 %v6511, %v6587
        %v6612 = vadd.f32 %v6513, %v6588
        %v6613 = vadd.f32 %v6454, %v6589
        %v6614 = vadd.f32 %v6456, %v6590
        %v6615 = vadd.f32 %v6517, %v6591
        %v6616 = vadd.f32 %v6519, %v6592
        %v6617 = vadd.f32 %v6458, %v6593
        %v6618 = vadd.f32 %v6460, %v6594
        %v6619 = vadd.f32 %v6521, %v6595
        %v6620 = vadd.f32 %v6523, %v6596
        %v6621 = vmul.f32 %v6597, 0.7978846
        %v6622 = vmul.f32 %v6598, 0.7978846
        %v6623 = vmul.f32 %v6599, 0.7978846
        %v6624 = vmul.f32 %v6600, 0.7978846
        %v6625 = vmul.f32 %v6601, 0.7978846
        %v6626 = vmul.f32 %v6602, 0.7978846
        %v6627 = vmul.f32 %v6603, 0.7978846
        %v6628 = vmul.f32 %v6604, 0.7978846
        %v6629 = vmul.f32 %v6605, 0.7978846
        %v6630 = vmul.f32 %v6606, 0.7978846
        %v6631 = vmul.f32 %v6607, 0.7978846
        %v6632 = vmul.f32 %v6608, 0.7978846
        %v6633 = vmul.f32 %v6609, 0.7978846
        %v6634 = vmul.f32 %v6610, 0.7978846
        %v6635 = vmul.f32 %v6611, 0.7978846
        %v6636 = vmul.f32 %v6612, 0.7978846
        %v6637 = vmul.f32 %v6613, 0.7978846
        %v6638 = vmul.f32 %v6614, 0.7978846
        %v6639 = vmul.f32 %v6615, 0.7978846
        %v6640 = vmul.f32 %v6616, 0.7978846
        %v6641 = vmul.f32 %v6617, 0.7978846
        %v6642 = vmul.f32 %v6618, 0.7978846
        %v6643 = vmul.f32 %v6619, 0.7978846
        %v6644 = vmul.f32 %v6620, 0.7978846
        %v6645 = vtanh.pop %v6621
        %v6646 = vtanh.pop %v6622
        %v6647 = vtanh.pop %v6623
        %v6648 = vtanh.pop %v6624
        %v6649 = vtanh.pop %v6625
        %v6650 = vtanh.pop %v6626
        %v6651 = vtanh.pop %v6627
        %v6652 = vtanh.pop %v6628
        %v6653 = vtanh.pop %v6629
        %v6654 = vtanh.pop %v6630
        %v6655 = vtanh.pop %v6631
        %v6656 = vtanh.pop %v6632
        %v6657 = vtanh.pop %v6633
        %v6658 = vtanh.pop %v6634
        %v6659 = vtanh.pop %v6635
        %v6660 = vtanh.pop %v6636
        %v6661 = vtanh.pop %v6637
        %v6662 = vtanh.pop %v6638
        %v6663 = vtanh.pop %v6639
        %v6664 = vtanh.pop %v6640
        %v6665 = vtanh.pop %v6641
        %v6666 = vtanh.pop %v6642
        %v6667 = vtanh.pop %v6643
        %v6668 = vtanh.pop %v6644
        %v6669 = vadd.f32 %v6645, 1.0
        %v6670 = vadd.f32 %v6646, 1.0
        %v6671 = vadd.f32 %v6647, 1.0
        %v6672 = vadd.f32 %v6648, 1.0
        %v6673 = vadd.f32 %v6649, 1.0
        %v6674 = vadd.f32 %v6650, 1.0
        %v6675 = vadd.f32 %v6651, 1.0
        %v6676 = vadd.f32 %v6652, 1.0
        %v6677 = vadd.f32 %v6653, 1.0
        %v6678 = vadd.f32 %v6654, 1.0
        %v6679 = vadd.f32 %v6655, 1.0
        %v6680 = vadd.f32 %v6656, 1.0
        %v6681 = vadd.f32 %v6657, 1.0
        %v6682 = vadd.f32 %v6658, 1.0
        %v6683 = vadd.f32 %v6659, 1.0
        %v6684 = vadd.f32 %v6660, 1.0
        %v6685 = vadd.f32 %v6661, 1.0
        %v6686 = vadd.f32 %v6662, 1.0
        %v6687 = vadd.f32 %v6663, 1.0
        %v6688 = vadd.f32 %v6664, 1.0
        %v6689 = vadd.f32 %v6665, 1.0
        %v6690 = vadd.f32 %v6666, 1.0
        %v6691 = vadd.f32 %v6667, 1.0
        %v6692 = vadd.f32 %v6668, 1.0
        %v6693 = vmul.f32 %v6669, 0.5
        %v6694 = vmul.f32 %v6670, 0.5
        %v6695 = vmul.f32 %v6671, 0.5
        %v6696 = vmul.f32 %v6672, 0.5
        %v6697 = vmul.f32 %v6673, 0.5
        %v6698 = vmul.f32 %v6674, 0.5
        %v6699 = vmul.f32 %v6675, 0.5
        %v6700 = vmul.f32 %v6676, 0.5
        %v6701 = vmul.f32 %v6677, 0.5
        %v6702 = vmul.f32 %v6678, 0.5
        %v6703 = vmul.f32 %v6679, 0.5
        %v6704 = vmul.f32 %v6680, 0.5
        %v6705 = vmul.f32 %v6681, 0.5
        %v6706 = vmul.f32 %v6682, 0.5
        %v6707 = vmul.f32 %v6683, 0.5
        %v6708 = vmul.f32 %v6684, 0.5
        %v6709 = vmul.f32 %v6685, 0.5
        %v6710 = vmul.f32 %v6686, 0.5
        %v6711 = vmul.f32 %v6687, 0.5
        %v6712 = vmul.f32 %v6688, 0.5
        %v6713 = vmul.f32 %v6689, 0.5
        %v6714 = vmul.f32 %v6690, 0.5
        %v6715 = vmul.f32 %v6691, 0.5
        %v6716 = vmul.f32 %v6692, 0.5
        %v6717 = vmul.f32 %v6434, %v6693
        %v6718 = vmul.f32 %v6436, %v6694
        %v6719 = vmul.f32 %v6497, %v6695
        %v6720 = vmul.f32 %v6499, %v6696
        %v6721 = vmul.f32 %v6438, %v6697
        %v6722 = vmul.f32 %v6440, %v6698
        %v6723 = vmul.f32 %v6501, %v6699
        %v6724 = vmul.f32 %v6503, %v6700
        %v6725 = vmul.f32 %v6444, %v6701
        %v6726 = vmul.f32 %v6446, %v6702
        %v6727 = vmul.f32 %v6507, %v6703
        %v6728 = vmul.f32 %v6509, %v6704
        %v6729 = vmul.f32 %v6448, %v6705
        %v6730 = vmul.f32 %v6450, %v6706
        %v6731 = vmul.f32 %v6511, %v6707
        %v6732 = vmul.f32 %v6513, %v6708
        %v6733 = vmul.f32 %v6454, %v6709
        %v6734 = vmul.f32 %v6456, %v6710
        %v6735 = vmul.f32 %v6517, %v6711
        %v6736 = vmul.f32 %v6519, %v6712
        %v6737 = vmul.f32 %v6458, %v6713
        %v6738 = vmul.f32 %v6460, %v6714
        %v6739 = vmul.f32 %v6521, %v6715
        %v6740 = vmul.f32 %v6523, %v6716
        %v6741 = vpack.c.bf16 %v6721, %v6717
        %v6742 = vpack.c.bf16 %v6722, %v6718
        %v6743 = vpack.c.bf16 %v6723, %v6719
        %v6744 = vpack.c.bf16 %v6724, %v6720
        %v6745 = vpack.c.bf16 %v6729, %v6725
        %v6746 = vpack.c.bf16 %v6730, %v6726
        %v6747 = vpack.c.bf16 %v6731, %v6727
        %v6748 = vpack.c.bf16 %v6732, %v6728
        %v6749 = vpack.c.bf16 %v6737, %v6733
        %v6750 = vpack.c.bf16 %v6738, %v6734
        %v6751 = vpack.c.bf16 %v6739, %v6735
        %v6752 = vpack.c.bf16 %v6740, %v6736
        %v6753 = vld [vmem:[%s625] sm:$0xf]
        %v6754 = vld [vmem:[%s625 + $0x4] sm:$0xf]
        %v6755 = vld [vmem:[%s625 + $0x8] sm:$0xf]
        %v6756 = vld [vmem:[%s625 + $0xc] sm:$0xf]
        %v6757 = vld [vmem:[%s625 + $0x10] sm:$0xf]
        %v6758 = vld [vmem:[%s625 + $0x14] sm:$0xf]
        %v6759 = vld [vmem:[%s625 + $0x18] sm:$0xf]
        %v6760 = vld [vmem:[%s625 + $0x1c] sm:$0xf]
        %v6761 = vld [vmem:[%s625 + $0x20] sm:$0xf]
        %v6762 = vld [vmem:[%s625 + $0x24] sm:$0xf]
        %v6763 = vld [vmem:[%s625 + $0x28] sm:$0xf]
        %v6764 = vld [vmem:[%s625 + $0x2c] sm:$0xf]
        %v6765 = vld [vmem:[%s625 + $0x30] sm:$0xf]
        %v6766 = vld [vmem:[%s625 + $0x34] sm:$0xf]
        %v6767 = vld [vmem:[%s625 + $0x38] sm:$0xf]
        %v6768 = vld [vmem:[%s625 + $0x3c] sm:$0xf]
        %v6769 = vld [vmem:[%s625 + $0x40] sm:$0xf]
        %v6770 = vld [vmem:[%s625 + $0x44] sm:$0xf]
        %v6771 = vld [vmem:[%s625 + $0x48] sm:$0xf]
        %v6772 = vld [vmem:[%s625 + $0x4c] sm:$0xf]
        %v6773 = vld [vmem:[%s625 + $0x50] sm:$0xf]
        %v6774 = vld [vmem:[%s625 + $0x54] sm:$0xf]
        %v6775 = vld [vmem:[%s625 + $0x58] sm:$0xf]
        %v6776 = vld [vmem:[%s625 + $0x5c] sm:$0xf]
        %v6777 = vld [vmem:[%s625 + $0x60] sm:$0xf]
        %v6778 = vld [vmem:[%s625 + $0x64] sm:$0xf]
        %v6779 = vld [vmem:[%s625 + $0x68] sm:$0xf]
        %v6780 = vld [vmem:[%s625 + $0x6c] sm:$0xf]
        %v6781 = vld [vmem:[%s625 + $0x70] sm:$0xf]
        %v6782 = vld [vmem:[%s625 + $0x74] sm:$0xf]
        %v6783 = vld [vmem:[%s625 + $0x78] sm:$0xf]
        %v6784 = vld [vmem:[%s625 + $0x7c] sm:$0xf]
        %v6785 = vld [vmem:[%s625 + $0x80] sm:$0xf]
        %v6786 = vld [vmem:[%s625 + $0x84] sm:$0xf]
        %v6787 = vld [vmem:[%s625 + $0x88] sm:$0xf]
        %v6788 = vld [vmem:[%s625 + $0x8c] sm:$0xf]
        %v6789 = vld [vmem:[%s625 + $0x90] sm:$0xf]
        %v6790 = vld [vmem:[%s625 + $0x94] sm:$0xf]
        %v6791 = vld [vmem:[%s625 + $0x98] sm:$0xf]
        %v6792 = vld [vmem:[%s625 + $0x9c] sm:$0xf]
        %v6793 = vld [vmem:[%s625 + $0xa0] sm:$0xf]
        %v6794 = vld [vmem:[%s625 + $0xa4] sm:$0xf]
        %v6795 = vld [vmem:[%s625 + $0xa8] sm:$0xf]
        %v6796 = vld [vmem:[%s625 + $0xac] sm:$0xf]
        %v6797 = vld [vmem:[%s625 + $0xb0] sm:$0xf]
        %v6798 = vld [vmem:[%s625 + $0xb4] sm:$0xf]
        %v6799 = vld [vmem:[%s625 + $0xb8] sm:$0xf]
        %v6800 = vld [vmem:[%s625 + $0xbc] sm:$0xf]
        %v6801 = vld [vmem:[%s625 + $0xc0] sm:$0xf]
        %v6802 = vld [vmem:[%s625 + $0xc4] sm:$0xf]
        %v6803 = vld [vmem:[%s625 + $0xc8] sm:$0xf]
        %v6804 = vld [vmem:[%s625 + $0xcc] sm:$0xf]
        %v6805 = vld [vmem:[%s625 + $0xd0] sm:$0xf]
        %v6806 = vld [vmem:[%s625 + $0xd4] sm:$0xf]
        %v6807 = vld [vmem:[%s625 + $0xd8] sm:$0xf]
        %v6808 = vld [vmem:[%s625 + $0xdc] sm:$0xf]
        %v6809 = vld [vmem:[%s625 + $0xe0] sm:$0xf]
        %v6810 = vld [vmem:[%s625 + $0xe4] sm:$0xf]
        %v6811 = vld [vmem:[%s625 + $0xe8] sm:$0xf]
        %v6812 = vld [vmem:[%s625 + $0xec] sm:$0xf]
        %v6813 = vld [vmem:[%s625 + $0xf0] sm:$0xf]
        %v6814 = vld [vmem:[%s625 + $0xf4] sm:$0xf]
        %v6815 = vld [vmem:[%s625 + $0xf8] sm:$0xf]
        %v6816 = vld [vmem:[%s625 + $0xfc] sm:$0xf]
        %v6817 = vld [vmem:[%s633] sm:$0x1]
        %v6819 = vlaneseq
        %v6820 = vshrl.u32 %v6819, 7
        %v6821 = vsub.s32 0, %v6820
        %v6822 = vrot.slane %v6817, %v6821
        %v6888 = vunpack.c.l.b16 %v6753
        %v6889 = vunpack.c.l.b16 %v6754
        %v6890 = vunpack.c.l.b16 %v6755
        %v6891 = vunpack.c.l.b16 %v6756
        %v6892 = vunpack.c.l.b16 %v6757
        %v6893 = vunpack.c.l.b16 %v6758
        %v6894 = vunpack.c.l.b16 %v6759
        %v6895 = vunpack.c.l.b16 %v6760
        %v6896 = vunpack.c.l.b16 %v6761
        %v6897 = vunpack.c.l.b16 %v6762
        %v6898 = vunpack.c.l.b16 %v6763
        %v6899 = vunpack.c.l.b16 %v6764
        %v6900 = vunpack.c.l.b16 %v6765
        %v6901 = vunpack.c.l.b16 %v6766
        %v6902 = vunpack.c.l.b16 %v6767
        %v6903 = vunpack.c.l.b16 %v6768
        %v6904 = vunpack.c.l.b16 %v6769
        %v6905 = vunpack.c.l.b16 %v6770
        %v6906 = vunpack.c.l.b16 %v6771
        %v6907 = vunpack.c.l.b16 %v6772
        %v6908 = vunpack.c.l.b16 %v6773
        %v6909 = vunpack.c.l.b16 %v6774
        %v6910 = vunpack.c.l.b16 %v6775
        %v6911 = vunpack.c.l.b16 %v6776
        %v6912 = vunpack.c.l.b16 %v6777
        %v6913 = vunpack.c.l.b16 %v6778
        %v6914 = vunpack.c.l.b16 %v6779
        %v6915 = vunpack.c.l.b16 %v6780
        %v6916 = vunpack.c.l.b16 %v6781
        %v6917 = vunpack.c.l.b16 %v6782
        %v6918 = vunpack.c.l.b16 %v6783
        %v6919 = vunpack.c.l.b16 %v6784
        %v6920 = vunpack.c.l.b16 %v6785
        %v6921 = vunpack.c.l.b16 %v6786
        %v6922 = vunpack.c.l.b16 %v6787
        %v6923 = vunpack.c.l.b16 %v6788
        %v6924 = vunpack.c.l.b16 %v6789
        %v6925 = vunpack.c.l.b16 %v6790
        %v6926 = vunpack.c.l.b16 %v6791
        %v6927 = vunpack.c.l.b16 %v6792
        %v6928 = vunpack.c.l.b16 %v6793
        %v6929 = vunpack.c.l.b16 %v6794
        %v6930 = vunpack.c.l.b16 %v6795
        %v6931 = vunpack.c.l.b16 %v6796
        %v6932 = vunpack.c.l.b16 %v6797
        %v6933 = vunpack.c.l.b16 %v6798
        %v6934 = vunpack.c.l.b16 %v6799
        %v6935 = vunpack.c.l.b16 %v6800
        %v6936 = vunpack.c.l.b16 %v6801
        %v6937 = vunpack.c.l.b16 %v6802
        %v6938 = vunpack.c.l.b16 %v6803
        %v6939 = vunpack.c.l.b16 %v6804
        %v6940 = vunpack.c.l.b16 %v6805
        %v6941 = vunpack.c.l.b16 %v6806
        %v6942 = vunpack.c.l.b16 %v6807
        %v6943 = vunpack.c.l.b16 %v6808
        %v6944 = vunpack.c.l.b16 %v6809
        %v6945 = vunpack.c.l.b16 %v6810
        %v6946 = vunpack.c.l.b16 %v6811
        %v6947 = vunpack.c.l.b16 %v6812
        %v6948 = vunpack.c.l.b16 %v6813
        %v6949 = vunpack.c.l.b16 %v6814
        %v6950 = vunpack.c.l.b16 %v6815
        %v6951 = vunpack.c.l.b16 %v6816
        %v6952 = vpack.c.b16 %v6889, %v6888
        %v6953 = vpack.c.b16 %v6891, %v6890
        %v6954 = vpack.c.b16 %v6893, %v6892
        %v6955 = vpack.c.b16 %v6895, %v6894
        %v6956 = vpack.c.b16 %v6897, %v6896
        %v6957 = vpack.c.b16 %v6899, %v6898
        %v6958 = vpack.c.b16 %v6901, %v6900
        %v6959 = vpack.c.b16 %v6903, %v6902
        %v6960 = vpack.c.b16 %v6905, %v6904
        %v6961 = vpack.c.b16 %v6907, %v6906
        %v6962 = vpack.c.b16 %v6909, %v6908
        %v6963 = vpack.c.b16 %v6911, %v6910
        %v6964 = vpack.c.b16 %v6913, %v6912
        %v6965 = vpack.c.b16 %v6915, %v6914
        %v6966 = vpack.c.b16 %v6917, %v6916
        %v6967 = vpack.c.b16 %v6919, %v6918
        %v6968 = vpack.c.b16 %v6921, %v6920
        %v6969 = vpack.c.b16 %v6923, %v6922
        %v6970 = vpack.c.b16 %v6925, %v6924
        %v6971 = vpack.c.b16 %v6927, %v6926
        %v6972 = vpack.c.b16 %v6929, %v6928
        %v6973 = vpack.c.b16 %v6931, %v6930
        %v6974 = vpack.c.b16 %v6933, %v6932
        %v6975 = vpack.c.b16 %v6935, %v6934
        %v6976 = vpack.c.b16 %v6937, %v6936
        %v6977 = vpack.c.b16 %v6939, %v6938
        %v6978 = vpack.c.b16 %v6941, %v6940
        %v6979 = vpack.c.b16 %v6943, %v6942
        %v6980 = vpack.c.b16 %v6945, %v6944
        %v6981 = vpack.c.b16 %v6947, %v6946
        %v6982 = vpack.c.b16 %v6949, %v6948
        %v6983 = vpack.c.b16 %v6951, %v6950
        %7016 = vmatprep.subr.bf16.mxu0 0
        %7017 = vmatpush1.bf16.msra.mxu0 %v6952
        %7018 = vmatprep.subr.bf16.mxu0 0
        %7019 = vmatpush1.bf16.msra.mxu0 %v6953
        %7020 = vmatprep.subr.bf16.mxu0 0
        %7021 = vmatpush1.bf16.msra.mxu0 %v6954
        %7022 = vmatprep.subr.bf16.mxu0 0
        %7023 = vmatpush1.bf16.msra.mxu0 %v6955
        %7024 = vmatprep.subr.bf16.mxu0 0
        %7025 = vmatpush1.bf16.msra.mxu0 %v6956
        %7026 = vmatprep.subr.bf16.mxu0 0
        %7027 = vmatpush1.bf16.msra.mxu0 %v6957
        %7028 = vmatprep.subr.bf16.mxu0 0
        %7029 = vmatpush1.bf16.msra.mxu0 %v6958
        %7030 = vmatprep.subr.bf16.mxu0 0
        %7031 = vmatpush1.bf16.msra.mxu0 %v6959
        %7032 = vmatprep.subr.bf16.mxu0 0
        %7033 = vmatpush1.bf16.msra.mxu0 %v6960
        %7034 = vmatprep.subr.bf16.mxu0 0
        %7035 = vmatpush1.bf16.msra.mxu0 %v6961
        %7036 = vmatprep.subr.bf16.mxu0 0
        %7037 = vmatpush1.bf16.msra.mxu0 %v6962
        %7038 = vmatprep.subr.bf16.mxu0 0
        %7039 = vmatpush1.bf16.msra.mxu0 %v6963
        %7040 = vmatprep.subr.bf16.mxu0 0
        %7041 = vmatpush1.bf16.msra.mxu0 %v6964
        %7042 = vmatprep.subr.bf16.mxu0 0
        %7043 = vmatpush1.bf16.msra.mxu0 %v6965
        %7044 = vmatprep.subr.bf16.mxu0 0
        %7045 = vmatpush1.bf16.msra.mxu0 %v6966
        %7046 = vmatprep.subr.bf16.mxu0 0
        %7047 = vmatpush1.bf16.msra.mxu0 %v6967
        %7048 = vmatprep.mubr.bf16.mxu0 %v6742
        %7049 = vmatmul.mubr.bf16.gmra.mrb[0].mxu0 %v6741
        %v7050 = vpop.f32.mrb[0].mxu0
        %v7051 = vadd.f32 %v6822, %v7050
        %v7052 = vpop.f32.mrb[0].mxu0
        %v7053 = vpop.f32.mrb[0].mxu0
        %v7054 = vadd.f32 %v6822, %v7053
        %v7055 = vpop.f32.mrb[0].mxu0
        %7056 = vmatprep.mubr.bf16.mxu0 %v6746
        %7057 = vmatmul.mubr.bf16.gmra.mrb[0].mxu0 %v6745
        %v7058 = vpop.f32.mrb[0].mxu0
        %v7059 = vadd.f32 %v6822, %v7058
        %v7060 = vpop.f32.mrb[0].mxu0
        %v7061 = vpop.f32.mrb[0].mxu0
        %v7062 = vadd.f32 %v6822, %v7061
        %v7063 = vpop.f32.mrb[0].mxu0
        %7064 = vmatprep.mubr.bf16.mxu0 %v6750
        %7065 = vmatmul.mubr.bf16.gmra.mrb[0].mxu0 %v6749
        %v7066 = vpop.f32.mrb[0].mxu0
        %v7067 = vadd.f32 %v6822, %v7066
        %v7068 = vpop.f32.mrb[0].mxu0
        %v7069 = vpop.f32.mrb[0].mxu0
        %v7070 = vadd.f32 %v6822, %v7069
        %v7071 = vpop.f32.mrb[0].mxu0
        %7072 = vdwg.mxu0
        %7073 = vmatprep.subr.bf16.mxu0 0
        %7074 = vmatpush1.bf16.msra.mxu0 %v6968
        %7075 = vmatprep.subr.bf16.mxu0 0
        %7076 = vmatpush1.bf16.msra.mxu0 %v6969
        %7077 = vmatprep.subr.bf16.mxu0 0
        %7078 = vmatpush1.bf16.msra.mxu0 %v6970
        %7079 = vmatprep.subr.bf16.mxu0 0
        %7080 = vmatpush1.bf16.msra.mxu0 %v6971
        %7081 = vmatprep.subr.bf16.mxu0 0
        %7082 = vmatpush1.bf16.msra.mxu0 %v6972
        %7083 = vmatprep.subr.bf16.mxu0 0
        %7084 = vmatpush1.bf16.msra.mxu0 %v6973
        %7085 = vmatprep.subr.bf16.mxu0 0
        %7086 = vmatpush1.bf16.msra.mxu0 %v6974
        %7087 = vmatprep.subr.bf16.mxu0 0
        %7088 = vmatpush1.bf16.msra.mxu0 %v6975
        %7089 = vmatprep.subr.bf16.mxu0 0
        %7090 = vmatpush1.bf16.msra.mxu0 %v6976
        %7091 = vmatprep.subr.bf16.mxu0 0
        %7092 = vmatpush1.bf16.msra.mxu0 %v6977
        %7093 = vmatprep.subr.bf16.mxu0 0
        %7094 = vmatpush1.bf16.msra.mxu0 %v6978
        %7095 = vmatprep.subr.bf16.mxu0 0
        %7096 = vmatpush1.bf16.msra.mxu0 %v6979
        %7097 = vmatprep.subr.bf16.mxu0 0
        %7098 = vmatpush1.bf16.msra.mxu0 %v6980
        %7099 = vmatprep.subr.bf16.mxu0 0
        %7100 = vmatpush1.bf16.msra.mxu0 %v6981
        %7101 = vmatprep.subr.bf16.mxu0 0
        %7102 = vmatpush1.bf16.msra.mxu0 %v6982
        %7103 = vmatprep.subr.bf16.mxu0 0
        %7104 = vmatpush1.bf16.msra.mxu0 %v6983
        %7105 = vmatprep.mubr.bf16.mxu0 %v6744
        %7106 = vmatmul.mubr.bf16.gmra.mrb[0].mxu0 %v6743
        %v7107 = vpop.f32.mrb[0].mxu0
        %v7108 = vadd.f32 %v7051, %v7107
        %v7109 = vpop.f32.mrb[0].mxu0
        %v7110 = vpop.f32.mrb[0].mxu0
        %v7111 = vadd.f32 %v7054, %v7110
        %v7112 = vpop.f32.mrb[0].mxu0
        %7113 = vmatprep.mubr.bf16.mxu0 %v6748
        %7114 = vmatmul.mubr.bf16.gmra.mrb[0].mxu0 %v6747
        %v7115 = vpop.f32.mrb[0].mxu0
        %v7116 = vadd.f32 %v7059, %v7115
        %v7117 = vpop.f32.mrb[0].mxu0
        %v7118 = vpop.f32.mrb[0].mxu0
        %v7119 = vadd.f32 %v7062, %v7118
        %v7120 = vpop.f32.mrb[0].mxu0
        %7121 = vmatprep.mubr.bf16.mxu0 %v6752
        %7122 = vmatmul.mubr.bf16.gmra.mrb[0].mxu0 %v6751
        %v7123 = vpop.f32.mrb[0].mxu0
        %v7124 = vadd.f32 %v7067, %v7123
        %v7125 = vpop.f32.mrb[0].mxu0
        %v7126 = vpop.f32.mrb[0].mxu0
        %v7127 = vadd.f32 %v7070, %v7126
        %v7128 = vpop.f32.mrb[0].mxu0
        %7129 = vdwg.mxu0
        %v7130 = vlaneseq
        %v7131 = vshrl.u32 %v7130, 7
        %v7132 = vsub.s32 5, %v7131
        %v7133 = vrot.slane %v729, %v7132
        %v7134 = vlaneseq
        %v7135 = vshrl.u32 %v7134, 7
        %v7136 = vsub.s32 5, %v7135
        %v7137 = vrot.slane %v730, %v7136
        %v7138 = vmul.f32 %v7133, %v7108
        %v7139 = vmul.f32 %v7133, %v7111
        %v7140 = vmul.f32 %v7133, %v7116
        %v7141 = vmul.f32 %v7137, %v7119
        %v7142 = vmul.f32 %v7137, %v7124
        %v7143 = vmul.f32 %v7137, %v7127
        %v7144 = vadd.f32 %v6082, %v7138
        %v7145 = vadd.f32 %v6083, %v7139
        %v7146 = vadd.f32 %v6084, %v7140
        %v7147 = vadd.f32 %v6085, %v7141
        %v7148 = vadd.f32 %v6086, %v7142
        %v7149 = vadd.f32 %v6087, %v7143
        %7150 = vst [vmem:[#allocation2] sm:$0xff] %v7144
        %7151 = vst [vmem:[#allocation2 + $0x8] sm:$0xff] %v7145
        %7152 = vst [vmem:[#allocation2 + $0x10] sm:$0xff] %v7146
        %7153 = vst [vmem:[#allocation2 + $0x18] sm:$0xff] %v7147
        %7154 = vst [vmem:[#allocation2 + $0x20] sm:$0xff] %v7148
        %7155 = vst [vmem:[#allocation2 + $0x28] sm:$0xff] %v7149
        %p7156 = scmp.eq.s32.totalorder %s43, 1
        // Predicated region
        $region105: #{_lambda_.8} parent=59 // pred_check
          %p7157 = pneg %p7156
        $region106: #{_lambda_.8} parent=59 // pred_check_branch
          %7159 = sbr.rel (%p7157) target = $region108
        $region107: #{_lambda_.8} parent=59 // pred_region
          %v7160 = vld [vmem:[#allocation2] sm:$0xff]
          %v7161 = vld [vmem:[#allocation2 + $0x8] sm:$0xff]
          %v7162 = vld [vmem:[#allocation2 + $0x10] sm:$0xff]
          %v7163 = vld [vmem:[#allocation2 + $0x18] sm:$0xff]
          %v7164 = vld [vmem:[#allocation2 + $0x20] sm:$0xff]
          %v7165 = vld [vmem:[#allocation2 + $0x28] sm:$0xff]
          %7166 = vst [vmem:[#allocation20] sm:$0xff] %v7160
          %7167 = vst [vmem:[#allocation20 + $0x8] sm:$0xff] %v7161
          %7168 = vst [vmem:[#allocation20 + $0x10] sm:$0xff] %v7162
          %7169 = vst [vmem:[#allocation20 + $0x18] sm:$0xff] %v7163
          %7170 = vst [vmem:[#allocation20 + $0x20] sm:$0xff] %v7164
          %7171 = vst [vmem:[#allocation20 + $0x28] sm:$0xff] %v7165
        $region108: #{_lambda_.8} parent=59 // pred_fallthru
          _
        // Predicated region
        $region109: #{_lambda_.8} parent=59 // pred_check
          %p7172 = pneg %p330
        $region110: #{_lambda_.8} parent=59 // pred_check_branch
          %7174 = sbr.rel (%p7172) target = $region112
        $region111: #{_lambda_.8} parent=59 // pred_region
          %s7175 = smul.u32 2, %s42
          %s7177 = ssub.s32 768, 768
          %7178 = vsyncadd [#allocation5], %s7177
          %s7179 = smul.addr %s7175, 3
          %s7180 = smul.addr %s7179, 128
          %s7181 = scalar_lea.hbm %s10, %s7180
          %s7182 = sshll.u32 [#allocation20], 4
          %s7183 = int_to_ptr.vmem [resolvable:$true] %s7182
          %7188 = dma.vmem_to_hbm [thread:$0]  %s7183, 768, %s7181, [#allocation5], 128, 128, 8
        $region112: #{_lambda_.8} parent=59 // pred_fallthru
          _
        // Predicated region
        $region113: #{_lambda_.8} parent=59 // pred_check
          %p7189 = pneg %p330
        $region114: #{_lambda_.8} parent=59 // pred_check_branch
          %7191 = sbr.rel (%p7189) target = $region116
        $region115: #{_lambda_.8} parent=59 // pred_region
          %7192 = dma.done [#allocation5], 768
        $region116: #{_lambda_.8} parent=59 // pred_fallthru
          _
      $region60: #{_lambda_.8} parent=5 // pred_fallthru
        _
      %p7193 = scmp.le.s32.totalorder 2, %s33
      // Predicated region
      $region117: #{_lambda_.8} parent=5 // pred_check
        %p7194 = pneg %p7193
      $region118: #{_lambda_.8} parent=5 // pred_check_branch
        %7196 = sbr.rel (%p7194) target = $region120
      $region119: #{_lambda_.8} parent=5 // pred_region
        %s7197 = ssub.s32 %s33, 2
      $region120: #{_lambda_.8} parent=5 // pred_fallthru
        _
    $region6: #{_lambda_.8} parent=1 // loop_footer
      %s37 = sadd.s32 1, %s33
    $region7: #{_lambda_.8} parent=1 // loop_footer_branch
      %32 = sbr.rel target = $region3
    $region8: #{_lambda_.8} parent=1 // loop_exit
      _
    %7198 = vsyncpa [#allocation4], 1
    %s7199 = scalar_lea.sflag [#allocation4], 1
    %7200 = vsyncpa %s7199, 1
    %7201 = vsyncpa [#allocation7], 1
    %s7202 = scalar_lea.sflag [#allocation7], 1
    %7203 = vsyncpa %s7202, 1
    %7204 = vsyncpa [#allocation10], 1
    %s7205 = scalar_lea.sflag [#allocation10], 1
    %7206 = vsyncpa %s7205, 1
    %7207 = vsyncpa [#allocation13], 1
    %s7208 = scalar_lea.sflag [#allocation13], 1
    %7209 = vsyncpa %s7208, 1
    %7210 = vsyncpa [#allocation16], 1
    %s7211 = scalar_lea.sflag [#allocation16], 1
    %7212 = vsyncpa %s7211, 1
    %7213 = vsyncpa [#allocation19], 1
    %s7214 = scalar_lea.sflag [#allocation19], 1
    %7215 = vsyncpa %s7214, 1
    %7216 = vsyncpa [#allocation5], 1
    %s7217 = scalar_lea.sflag [#allocation5], 1
    %7218 = vsyncpa %s7217, 1

</llo_original>
